<compile_context>
chip_gen: v7x
topology: tpu7x:2x2x1
jax: 0.10.0
libtpu: 0.0.40
codegen_flags: <defaults>
</compile_context>

<pallas_src>
import jax
import jax.numpy as jnp
from jax import lax
from jax.experimental import pallas as pl
from jax.experimental.pallas import tpu as pltpu

_LANE = 128


def _round_up(v, m):
    return (v + m - 1) // m * m


def _sublane(dtype):
    # Sublane packing multiple: f32 -> 8, bf16 -> 16.
    return 8 * (4 // jnp.dtype(dtype).itemsize)


def _make_kernel(nb, H, W, Cp, mxu_dtype):
    """One grid step: nb images, channels padded to Cp (lane-dense)."""
    M = nb * H * W
    taps = [(dy, dx) for dy in range(3) for dx in range(3)]

    def conv3x3(pad_ref, act, w_ref):
        # act: (nb, H, W, Cp) already cast to mxu_dtype.
        # Zero only the 1-pixel border; the interior is fully overwritten each
        # call and scratch columns >= W+2 are never read.  Re-zeroed every
        # step so the "parallel" grid axis carries no cross-step state.
        pad_ref[:, 0:1, 0:W + 2, :] = jnp.zeros((nb, 1, W + 2, Cp), mxu_dtype)
        pad_ref[:, H + 1:H + 2, 0:W + 2, :] = jnp.zeros((nb, 1, W + 2, Cp),
                                                        mxu_dtype)
        pad_ref[:, 1:H + 1, 0:1, :] = jnp.zeros((nb, H, 1, Cp), mxu_dtype)
        pad_ref[:, 1:H + 1, W + 1:W + 2, :] = jnp.zeros((nb, H, 1, Cp),
                                                        mxu_dtype)
        pad_ref[:, 1:H + 1, 1:W + 1, :] = act

        # 9 accumulated per-tap MXU matmuls (no (M, 9*Cp) im2col slab).
        acc = None
        for t, (dy, dx) in enumerate(taps):
            patch = pad_ref[:, dy:dy + H, dx:dx + W, :].reshape(M, Cp)
            part = jnp.dot(patch, w_ref[t * Cp:(t + 1) * Cp, :],
                           preferred_element_type=jnp.float32)
            acc = part if acc is None else acc + part
        return acc.reshape(nb, H, W, Cp)

    def kernel(x_ref, s1_ref, b1_ref, w1_ref, s2_ref, b2_ref, w2_ref,
               out_ref, pad_ref):
        # ---- BN1 (folded scale/bias, eval mode) + ReLU in fp32 on the VPU ----
        a1 = jnp.maximum(x_ref[...] * s1_ref[...] + b1_ref[...], 0.0)
        h1 = conv3x3(pad_ref, a1.astype(mxu_dtype), w1_ref)          # fp32 out

        # ---- BN2 + ReLU (fp32), conv2 reuses the same pad scratch ----
        a2 = jnp.maximum(h1 * s2_ref[...] + b2_ref[...], 0.0)
        h2 = conv3x3(pad_ref, a2.astype(mxu_dtype), w2_ref)

        # ---- identity residual: re-read x_ref (don't keep x live across the
        # two convs).  Lane-dense (Cp = 128k) output store. ----
        out_ref[...] = (h2 + x_ref[...]).astype(out_ref.dtype)

    return kernel


def _fold_bn(gamma, beta, mean, var, eps, Cp):
    s = gamma / jnp.sqrt(var + eps)
    b = beta - mean * s
    s = jnp.pad(s, (0, Cp - s.shape[0]))      # padded channels -> scale 0
    b = jnp.pad(b, (0, Cp - b.shape[0]))      # padded channels -> bias 0
    return s.reshape(1, 1, Cp), b.reshape(1, 1, Cp)


def _im2col_weight(w, Cp, mxu_dtype):
    # (3, 3, Cin, Cout) -> (9*Cp, Cp); row index = (dy, dx, cin), matching the
    # per-tap row slice w_ref[t*Cp:(t+1)*Cp, :] used in the kernel.
    wp = jnp.pad(w, ((0, 0), (0, 0),
                     (0, Cp - w.shape[2]), (0, Cp - w.shape[3])))
    return wp.reshape(9 * Cp, Cp).astype(mxu_dtype)


def _pick_nb(N, H, W):
    # Larger nb grows the matmul M dim and amortizes per-step overhead; prefer
    # grid >= 4 (v7x: 2 TensorCores x >= 2 steps each for DMA/compute overlap),
    # then grid >= 2, else whatever divides N.  Cap M at 4096 rows per step.
    divisors = [d for d in range(1, N + 1) if N % d == 0]
    for min_grid in (4, 2, 1):
        cands = [d for d in divisors if N // d >= min_grid and d * H * W <= 4096]
        if cands:
            return max(cands)
    return 1


def _vmem_limit_bytes():
    # v5e/v6e have 128 MiB physical VMEM -> allow a larger scoped budget.
    # v7x (and unknown chips) -> stay conservative (64 MiB per TensorCore).
    try:
        kind = jax.devices()[0].device_kind.lower()
    except Exception:
        kind = ""
    if "v5" in kind or "v6" in kind:
        return 64 * 1024 * 1024
    return 40 * 1024 * 1024


def preact_basic_block_nhwc(x_nhwc, params, eps=1e-5, nb=None,
                            mxu_dtype=jnp.bfloat16):
    """PreActBasicBlock forward on NHWC input whose channel dim is already
    zero-padded to a multiple of 128.  Returns NHWC with the same padded
    channel count.  Use this entry point when stacking blocks to avoid
    per-block NCHW<->NHWC transposes and channel pad/slice round trips."""
    N, H, W, Cp = x_nhwc.shape
    assert Cp % _LANE == 0
    w1, w2 = params["conv1_w"], params["conv2_w"]
    Cin, Cout = w1.shape[2], w1.shape[3]
    assert Cin == Cout, "identity residual requires inplanes == planes"
    assert w2.shape[2] == w2.shape[3] == Cout

    if nb is None:
        nb = _pick_nb(N, H, W)
    assert N % nb == 0

    # Fold eval-mode BN into per-channel scale/bias (plain-JAX glue).
    s1, b1 = _fold_bn(params["bn1_gamma"], params["bn1_beta"],
                      params["bn1_mean"], params["bn1_var"], eps, Cp)
    s2, b2 = _fold_bn(params["bn2_gamma"], params["bn2_beta"],
                      params["bn2_mean"], params["bn2_var"], eps, Cp)
    w1m = _im2col_weight(w1, Cp, mxu_dtype)
    w2m = _im2col_weight(w2, Cp, mxu_dtype)

    # Sublane-aligned padded scratch (second-to-last dim rounded up).
    Wp = _round_up(W + 2, _sublane(mxu_dtype))

    kernel = _make_kernel(nb, H, W, Cp, mxu_dtype)

    # FLOPs on the true channel counts; bytes are the actual (padded) traffic.
    wbytes = 2 * 9 * Cp * Cp * jnp.dtype(mxu_dtype).itemsize
    cost = pl.CostEstimate(
        flops=2 * (2 * N * H * W * 9 * Cin * Cout),   # two convs, 2 flop/MAC
        transcendentals=0,
        bytes_accessed=2 * N * H * W * Cp * 4 + wbytes + 4 * Cp * 4)

    out = pl.pallas_call(
        kernel,
        out_shape=jax.ShapeDtypeStruct((N, H, W, Cp), jnp.float32),
        grid_spec=pltpu.PrefetchScalarGridSpec(
            num_scalar_prefetch=0,
            grid=(N // nb,),
            in_specs=[
                pl.BlockSpec((nb, H, W, Cp), lambda g: (g, 0, 0, 0)),
                pl.BlockSpec((1, 1, Cp), lambda g: (0, 0, 0)),
                pl.BlockSpec((1, 1, Cp), lambda g: (0, 0, 0)),
                pl.BlockSpec((9 * Cp, Cp), lambda g: (0, 0)),
                pl.BlockSpec((1, 1, Cp), lambda g: (0, 0, 0)),
                pl.BlockSpec((1, 1, Cp), lambda g: (0, 0, 0)),
                pl.BlockSpec((9 * Cp, Cp), lambda g: (0, 0)),
            ],
            out_specs=pl.BlockSpec((nb, H, W, Cp), lambda g: (g, 0, 0, 0)),
            scratch_shapes=[
                # Single padded-activation scratch, reused by both convs.
                pltpu.VMEM((nb, H + 2, Wp, Cp), mxu_dtype),
            ],
        ),
        compiler_params=pltpu.CompilerParams(
            dimension_semantics=("parallel",),
            vmem_limit_bytes=_vmem_limit_bytes()),
        cost_estimate=cost,
    )(x_nhwc.astype(jnp.float32), s1, b1, w1m, s2, b2, w2m)
    return out


def preact_basic_block(x_nchw, params, eps=1e-5, nb=None,
                       mxu_dtype=jnp.bfloat16):
    """PreActBasicBlock forward, NCHW in / NCHW out (PyTorch layout).
    stride=1, downsample=None."""
    x = jnp.transpose(x_nchw, (0, 2, 3, 1)).astype(jnp.float32)   # -> NHWC
    N, H, W, Cin = x.shape
    Cout = params["conv1_w"].shape[-1]
    Cp = _round_up(max(Cin, Cout, _LANE), _LANE)
    x_p = jnp.pad(x, ((0, 0), (0, 0), (0, 0), (0, Cp - Cin)))
    out_p = preact_basic_block_nhwc(x_p, params, eps=eps, nb=nb,
                                    mxu_dtype=mxu_dtype)
    return jnp.transpose(out_p[..., :Cout], (0, 3, 1, 2))         # -> NCHW


def _reference(x_nchw, p, eps=1e-5):
    """Pure-JAX reference with the same eval-mode-BN semantics."""
    xh = jnp.transpose(x_nchw, (0, 2, 3, 1))
    s1 = p["bn1_gamma"] / jnp.sqrt(p["bn1_var"] + eps)
    b1 = p["bn1_beta"] - p["bn1_mean"] * s1
    s2 = p["bn2_gamma"] / jnp.sqrt(p["bn2_var"] + eps)
    b2 = p["bn2_beta"] - p["bn2_mean"] * s2
    a1 = jnp.maximum(xh * s1 + b1, 0.0)
    c1 = lax.conv_general_dilated(a1, p["conv1_w"], (1, 1), "SAME",
                                  dimension_numbers=("NHWC", "HWIO", "NHWC"))
    a2 = jnp.maximum(c1 * s2 + b2, 0.0)
    c2 = lax.conv_general_dilated(a2, p["conv2_w"], (1, 1), "SAME",
                                  dimension_numbers=("NHWC", "HWIO", "NHWC"))
    return jnp.transpose(c2 + xh, (0, 3, 1, 2))


if __name__ == "__main__":
    # Small shapes: inplanes = planes = 4, stride = 1, downsample = None.
    N, C, Hs, Ws = 2, 4, 16, 16
    key = jax.random.PRNGKey(0)
    ks = jax.random.split(key, 11)

    x = jax.random.normal(ks[0], (N, C, Hs, Ws), jnp.float32)
    params = {
        "bn1_gamma": jax.random.uniform(ks[1], (C,), jnp.float32, 0.5, 1.5),
        "bn1_beta":  jax.random.normal(ks[2], (C,), jnp.float32) * 0.1,
        "bn1_mean":  jax.random.normal(ks[3], (C,), jnp.float32) * 0.1,
        "bn1_var":   jax.random.uniform(ks[4], (C,), jnp.float32, 0.5, 1.5),
        "conv1_w":   jax.random.normal(ks[5], (3, 3, C, C), jnp.float32) * 0.1,
        "bn2_gamma": jax.random.uniform(ks[6], (C,), jnp.float32, 0.5, 1.5),
        "bn2_beta":  jax.random.normal(ks[7], (C,), jnp.float32) * 0.1,
        "bn2_mean":  jax.random.normal(ks[8], (C,), jnp.float32) * 0.1,
        "bn2_var":   jax.random.uniform(ks[9], (C,), jnp.float32, 0.5, 1.5),
        "conv2_w":   jax.random.normal(ks[10], (3, 3, C, C), jnp.float32) * 0.1,
    }

    ref = _reference(x, params)

    # fp32-MXU path: checks exact module semantics.
    out_f32 = jax.block_until_ready(
        preact_basic_block(x, params, mxu_dtype=jnp.float32))
    assert out_f32.shape == ref.shape, (out_f32.shape, ref.shape)
    assert jnp.allclose(out_f32, ref, atol=1e-2, rtol=1e-2), \
        float(jnp.max(jnp.abs(out_f32 - ref)))

    # Default fast path: bf16 MXU operands, fp32 accumulation / BN / ReLU.
    out_bf16 = jax.block_until_ready(preact_basic_block(x, params))
    assert out_bf16.shape == ref.shape, (out_bf16.shape, ref.shape)
    assert jnp.allclose(out_bf16, ref, atol=5e-2, rtol=5e-2), \
        float(jnp.max(jnp.abs(out_bf16 - ref)))

    print("KERNEL_OK")
</pallas_src>

<mosaic_0001>
module attributes {stable_mosaic.version = 11 : i64} {
  func.func @kernel(%arg0: i32, %arg1: memref<1x16x16x128xf32, #tpu.memory_space<vmem>>, %arg2: memref<1x1x128xf32, #tpu.memory_space<vmem>>, %arg3: memref<1x1x128xf32, #tpu.memory_space<vmem>>, %arg4: memref<1152x128xf32, #tpu.memory_space<vmem>>, %arg5: memref<1x1x128xf32, #tpu.memory_space<vmem>>, %arg6: memref<1x1x128xf32, #tpu.memory_space<vmem>>, %arg7: memref<1152x128xf32, #tpu.memory_space<vmem>>, %arg8: memref<1x16x16x128xf32, #tpu.memory_space<vmem>>, %arg9: memref<1x18x24x128xf32, #tpu.memory_space<vmem>>) attributes {dimension_semantics = [#tpu.dimension_semantics<parallel>], iteration_bounds = array<i64: 2>, scalar_prefetch = 0 : i64, scratch_operands = 1 : i64, tpu.core_type = #tpu.core_type<tc>, window_params = [{transform_indices = @transform_0, window_bounds = array<i64: 1, 16, 16, 128>}, {pipeline_mode = #tpu.pipeline_mode<synchronous>, transform_indices = @transform_1, window_bounds = array<i64: 1, 1, 128>}, {pipeline_mode = #tpu.pipeline_mode<synchronous>, transform_indices = @transform_2, window_bounds = array<i64: 1, 1, 128>}, {pipeline_mode = #tpu.pipeline_mode<synchronous>, transform_indices = @transform_3, window_bounds = array<i64: 1152, 128>}, {pipeline_mode = #tpu.pipeline_mode<synchronous>, transform_indices = @transform_4, window_bounds = array<i64: 1, 1, 128>}, {pipeline_mode = #tpu.pipeline_mode<synchronous>, transform_indices = @transform_5, window_bounds = array<i64: 1, 1, 128>}, {pipeline_mode = #tpu.pipeline_mode<synchronous>, transform_indices = @transform_6, window_bounds = array<i64: 1152, 128>}, {transform_indices = @transform_7, window_bounds = array<i64: 1, 16, 16, 128>}]} {
    %c0 = arith.constant 0 : index
    %c0_0 = arith.constant 0 : index
    %c0_1 = arith.constant 0 : index
    %c0_2 = arith.constant 0 : index
    %0 = vector.load %arg1[%c0, %c0_0, %c0_1, %c0_2] : memref<1x16x16x128xf32, #tpu.memory_space<vmem>>, vector<1x16x16x128xf32>
    %c0_3 = arith.constant 0 : index
    %c0_4 = arith.constant 0 : index
    %c0_5 = arith.constant 0 : index
    %1 = vector.load %arg2[%c0_3, %c0_4, %c0_5] : memref<1x1x128xf32, #tpu.memory_space<vmem>>, vector<1x1x128xf32>
    %2 = vector.shape_cast %1 : vector<1x1x128xf32> to vector<1x1x1x128xf32>
    %3 = vector.broadcast %2 : vector<1x1x1x128xf32> to vector<1x16x16x128xf32>
    %4 = arith.mulf %0, %3 : vector<1x16x16x128xf32>
    %c0_6 = arith.constant 0 : index
    %c0_7 = arith.constant 0 : index
    %c0_8 = arith.constant 0 : index
    %5 = vector.load %arg3[%c0_6, %c0_7, %c0_8] : memref<1x1x128xf32, #tpu.memory_space<vmem>>, vector<1x1x128xf32>
    %6 = vector.shape_cast %5 : vector<1x1x128xf32> to vector<1x1x1x128xf32>
    %7 = vector.broadcast %6 : vector<1x1x1x128xf32> to vector<1x16x16x128xf32>
    %8 = arith.addf %4, %7 : vector<1x16x16x128xf32>
    %cst = arith.constant 0.000000e+00 : f32
    %9 = vector.broadcast %cst : f32 to vector<1x16x16x128xf32>
    %10 = arith.maximumf %8, %9 : vector<1x16x16x128xf32>
    %cst_9 = arith.constant 0.000000e+00 : f32
    %11 = vector.broadcast %cst_9 : f32 to vector<1x1x18x128xf32>
    %c0_10 = arith.constant 0 : index
    %c0_11 = arith.constant 0 : index
    %c0_12 = arith.constant 0 : index
    %c0_13 = arith.constant 0 : index
    %12 = vector.load %arg9[%c0_10, %c0_11, %c0_12, %c0_13] : memref<1x18x24x128xf32, #tpu.memory_space<vmem>>, vector<1x1x18x128xf32>
    tpu.vector_store %arg9[%c0_10, %c0_11, %c0_12, %c0_13], %11 {strides = array<i32>} : memref<1x18x24x128xf32, #tpu.memory_space<vmem>>, vector<1x1x18x128xf32>,
    %cst_14 = arith.constant 0.000000e+00 : f32
    %13 = vector.broadcast %cst_14 : f32 to vector<1x1x18x128xf32>
    %c0_15 = arith.constant 0 : index
    %c17 = arith.constant 17 : index
    %c0_16 = arith.constant 0 : index
    %c0_17 = arith.constant 0 : index
    %14 = vector.load %arg9[%c0_15, %c17, %c0_16, %c0_17] : memref<1x18x24x128xf32, #tpu.memory_space<vmem>>, vector<1x1x18x128xf32>
    tpu.vector_store %arg9[%c0_15, %c17, %c0_16, %c0_17], %13 {strides = array<i32>} : memref<1x18x24x128xf32, #tpu.memory_space<vmem>>, vector<1x1x18x128xf32>,
    %cst_18 = arith.constant 0.000000e+00 : f32
    %15 = vector.broadcast %cst_18 : f32 to vector<1x16x1x128xf32>
    %c0_19 = arith.constant 0 : index
    %c1 = arith.constant 1 : index
    %c0_20 = arith.constant 0 : index
    %c0_21 = arith.constant 0 : index
    %16 = vector.load %arg9[%c0_19, %c1, %c0_20, %c0_21] : memref<1x18x24x128xf32, #tpu.memory_space<vmem>>, vector<1x16x1x128xf32>
    tpu.vector_store %arg9[%c0_19, %c1, %c0_20, %c0_21], %15 {strides = array<i32>} : memref<1x18x24x128xf32, #tpu.memory_space<vmem>>, vector<1x16x1x128xf32>,
    %cst_22 = arith.constant 0.000000e+00 : f32
    %17 = vector.broadcast %cst_22 : f32 to vector<1x16x1x128xf32>
    %c0_23 = arith.constant 0 : index
    %c1_24 = arith.constant 1 : index
    %c17_25 = arith.constant 17 : index
    %c0_26 = arith.constant 0 : index
    %18 = vector.load %arg9[%c0_23, %c1_24, %c17_25, %c0_26] : memref<1x18x24x128xf32, #tpu.memory_space<vmem>>, vector<1x16x1x128xf32>
    tpu.vector_store %arg9[%c0_23, %c1_24, %c17_25, %c0_26], %17 {strides = array<i32>} : memref<1x18x24x128xf32, #tpu.memory_space<vmem>>, vector<1x16x1x128xf32>,
    %c0_27 = arith.constant 0 : index
    %c1_28 = arith.constant 1 : index
    %c1_29 = arith.constant 1 : index
    %c0_30 = arith.constant 0 : index
    %19 = vector.load %arg9[%c0_27, %c1_28, %c1_29, %c0_30] : memref<1x18x24x128xf32, #tpu.memory_space<vmem>>, vector<1x16x16x128xf32>
    tpu.vector_store %arg9[%c0_27, %c1_28, %c1_29, %c0_30], %10 {strides = array<i32>} : memref<1x18x24x128xf32, #tpu.memory_space<vmem>>, vector<1x16x16x128xf32>,
    %c0_31 = arith.constant 0 : index
    %c0_32 = arith.constant 0 : index
    %c0_33 = arith.constant 0 : index
    %c0_34 = arith.constant 0 : index
    %20 = vector.load %arg9[%c0_31, %c0_32, %c0_33, %c0_34] : memref<1x18x24x128xf32, #tpu.memory_space<vmem>>, vector<1x16x16x128xf32>
    %21 = vector.shape_cast %20 : vector<1x16x16x128xf32> to vector<256x128xf32>
    %c0_35 = arith.constant 0 : index
    %c0_36 = arith.constant 0 : index
    %22 = vector.load %arg4[%c0_35, %c0_36] : memref<1152x128xf32, #tpu.memory_space<vmem>>, vector<128x128xf32>
    %cst_37 = arith.constant dense<0.000000e+00> : vector<256x128xf32>
    %23 = tpu.matmul %21, %22, %cst_37 {dimension_numbers = #tpu.dot_dimension_numbers<[1], [0], [0], [1], [0, 0, 1, 1], [], []>} : vector<256x128xf32>, vector<128x128xf32>, vector<256x128xf32> -> vector<256x128xf32>
    %c0_38 = arith.constant 0 : index
    %c0_39 = arith.constant 0 : index
    %c1_40 = arith.constant 1 : index
    %c0_41 = arith.constant 0 : index
    %24 = vector.load %arg9[%c0_38, %c0_39, %c1_40, %c0_41] : memref<1x18x24x128xf32, #tpu.memory_space<vmem>>, vector<1x16x16x128xf32>
    %25 = vector.shape_cast %24 : vector<1x16x16x128xf32> to vector<256x128xf32>
    %c128 = arith.constant 128 : index
    %c0_42 = arith.constant 0 : index
    %26 = vector.load %arg4[%c128, %c0_42] : memref<1152x128xf32, #tpu.memory_space<vmem>>, vector<128x128xf32>
    %cst_43 = arith.constant dense<0.000000e+00> : vector<256x128xf32>
    %27 = tpu.matmul %25, %26, %cst_43 {dimension_numbers = #tpu.dot_dimension_numbers<[1], [0], [0], [1], [0, 0, 1, 1], [], []>} : vector<256x128xf32>, vector<128x128xf32>, vector<256x128xf32> -> vector<256x128xf32>
    %28 = arith.addf %23, %27 : vector<256x128xf32>
    %c0_44 = arith.constant 0 : index
    %c0_45 = arith.constant 0 : index
    %c2 = arith.constant 2 : index
    %c0_46 = arith.constant 0 : index
    %29 = vector.load %arg9[%c0_44, %c0_45, %c2, %c0_46] : memref<1x18x24x128xf32, #tpu.memory_space<vmem>>, vector<1x16x16x128xf32>
    %30 = vector.shape_cast %29 : vector<1x16x16x128xf32> to vector<256x128xf32>
    %c256 = arith.constant 256 : index
    %c0_47 = arith.constant 0 : index
    %31 = vector.load %arg4[%c256, %c0_47] : memref<1152x128xf32, #tpu.memory_space<vmem>>, vector<128x128xf32>
    %cst_48 = arith.constant dense<0.000000e+00> : vector<256x128xf32>
    %32 = tpu.matmul %30, %31, %cst_48 {dimension_numbers = #tpu.dot_dimension_numbers<[1], [0], [0], [1], [0, 0, 1, 1], [], []>} : vector<256x128xf32>, vector<128x128xf32>, vector<256x128xf32> -> vector<256x128xf32>
    %33 = arith.addf %28, %32 : vector<256x128xf32>
    %c0_49 = arith.constant 0 : index
    %c1_50 = arith.constant 1 : index
    %c0_51 = arith.constant 0 : index
    %c0_52 = arith.constant 0 : index
    %34 = vector.load %arg9[%c0_49, %c1_50, %c0_51, %c0_52] : memref<1x18x24x128xf32, #tpu.memory_space<vmem>>, vector<1x16x16x128xf32>
    %35 = vector.shape_cast %34 : vector<1x16x16x128xf32> to vector<256x128xf32>
    %c384 = arith.constant 384 : index
    %c0_53 = arith.constant 0 : index
    %36 = vector.load %arg4[%c384, %c0_53] : memref<1152x128xf32, #tpu.memory_space<vmem>>, vector<128x128xf32>
    %cst_54 = arith.constant dense<0.000000e+00> : vector<256x128xf32>
    %37 = tpu.matmul %35, %36, %cst_54 {dimension_numbers = #tpu.dot_dimension_numbers<[1], [0], [0], [1], [0, 0, 1, 1], [], []>} : vector<256x128xf32>, vector<128x128xf32>, vector<256x128xf32> -> vector<256x128xf32>
    %38 = arith.addf %33, %37 : vector<256x128xf32>
    %c0_55 = arith.constant 0 : index
    %c1_56 = arith.constant 1 : index
    %c1_57 = arith.constant 1 : index
    %c0_58 = arith.constant 0 : index
    %39 = vector.load %arg9[%c0_55, %c1_56, %c1_57, %c0_58] : memref<1x18x24x128xf32, #tpu.memory_space<vmem>>, vector<1x16x16x128xf32>
    %40 = vector.shape_cast %39 : vector<1x16x16x128xf32> to vector<256x128xf32>
    %c512 = arith.constant 512 : index
    %c0_59 = arith.constant 0 : index
    %41 = vector.load %arg4[%c512, %c0_59] : memref<1152x128xf32, #tpu.memory_space<vmem>>, vector<128x128xf32>
    %cst_60 = arith.constant dense<0.000000e+00> : vector<256x128xf32>
    %42 = tpu.matmul %40, %41, %cst_60 {dimension_numbers = #tpu.dot_dimension_numbers<[1], [0], [0], [1], [0, 0, 1, 1], [], []>} : vector<256x128xf32>, vector<128x128xf32>, vector<256x128xf32> -> vector<256x128xf32>
    %43 = arith.addf %38, %42 : vector<256x128xf32>
    %c0_61 = arith.constant 0 : index
    %c1_62 = arith.constant 1 : index
    %c2_63 = arith.constant 2 : index
    %c0_64 = arith.constant 0 : index
    %44 = vector.load %arg9[%c0_61, %c1_62, %c2_63, %c0_64] : memref<1x18x24x128xf32, #tpu.memory_space<vmem>>, vector<1x16x16x128xf32>
    %45 = vector.shape_cast %44 : vector<1x16x16x128xf32> to vector<256x128xf32>
    %c640 = arith.constant 640 : index
    %c0_65 = arith.constant 0 : index
    %46 = vector.load %arg4[%c640, %c0_65] : memref<1152x128xf32, #tpu.memory_space<vmem>>, vector<128x128xf32>
    %cst_66 = arith.constant dense<0.000000e+00> : vector<256x128xf32>
    %47 = tpu.matmul %45, %46, %cst_66 {dimension_numbers = #tpu.dot_dimension_numbers<[1], [0], [0], [1], [0, 0, 1, 1], [], []>} : vector<256x128xf32>, vector<128x128xf32>, vector<256x128xf32> -> vector<256x128xf32>
    %48 = arith.addf %43, %47 : vector<256x128xf32>
    %c0_67 = arith.constant 0 : index
    %c2_68 = arith.constant 2 : index
    %c0_69 = arith.constant 0 : index
    %c0_70 = arith.constant 0 : index
    %49 = vector.load %arg9[%c0_67, %c2_68, %c0_69, %c0_70] : memref<1x18x24x128xf32, #tpu.memory_space<vmem>>, vector<1x16x16x128xf32>
    %50 = vector.shape_cast %49 : vector<1x16x16x128xf32> to vector<256x128xf32>
    %c768 = arith.constant 768 : index
    %c0_71 = arith.constant 0 : index
    %51 = vector.load %arg4[%c768, %c0_71] : memref<1152x128xf32, #tpu.memory_space<vmem>>, vector<128x128xf32>
    %cst_72 = arith.constant dense<0.000000e+00> : vector<256x128xf32>
    %52 = tpu.matmul %50, %51, %cst_72 {dimension_numbers = #tpu.dot_dimension_numbers<[1], [0], [0], [1], [0, 0, 1, 1], [], []>} : vector<256x128xf32>, vector<128x128xf32>, vector<256x128xf32> -> vector<256x128xf32>
    %53 = arith.addf %48, %52 : vector<256x128xf32>
    %c0_73 = arith.constant 0 : index
    %c2_74 = arith.constant 2 : index
    %c1_75 = arith.constant 1 : index
    %c0_76 = arith.constant 0 : index
    %54 = vector.load %arg9[%c0_73, %c2_74, %c1_75, %c0_76] : memref<1x18x24x128xf32, #tpu.memory_space<vmem>>, vector<1x16x16x128xf32>
    %55 = vector.shape_cast %54 : vector<1x16x16x128xf32> to vector<256x128xf32>
    %c896 = arith.constant 896 : index
    %c0_77 = arith.constant 0 : index
    %56 = vector.load %arg4[%c896, %c0_77] : memref<1152x128xf32, #tpu.memory_space<vmem>>, vector<128x128xf32>
    %cst_78 = arith.constant dense<0.000000e+00> : vector<256x128xf32>
    %57 = tpu.matmul %55, %56, %cst_78 {dimension_numbers = #tpu.dot_dimension_numbers<[1], [0], [0], [1], [0, 0, 1, 1], [], []>} : vector<256x128xf32>, vector<128x128xf32>, vector<256x128xf32> -> vector<256x128xf32>
    %58 = arith.addf %53, %57 : vector<256x128xf32>
    %c0_79 = arith.constant 0 : index
    %c2_80 = arith.constant 2 : index
    %c2_81 = arith.constant 2 : index
    %c0_82 = arith.constant 0 : index
    %59 = vector.load %arg9[%c0_79, %c2_80, %c2_81, %c0_82] : memref<1x18x24x128xf32, #tpu.memory_space<vmem>>, vector<1x16x16x128xf32>
    %60 = vector.shape_cast %59 : vector<1x16x16x128xf32> to vector<256x128xf32>
    %c1024 = arith.constant 1024 : index
    %c0_83 = arith.constant 0 : index
    %61 = vector.load %arg4[%c1024, %c0_83] : memref<1152x128xf32, #tpu.memory_space<vmem>>, vector<128x128xf32>
    %cst_84 = arith.constant dense<0.000000e+00> : vector<256x128xf32>
    %62 = tpu.matmul %60, %61, %cst_84 {dimension_numbers = #tpu.dot_dimension_numbers<[1], [0], [0], [1], [0, 0, 1, 1], [], []>} : vector<256x128xf32>, vector<128x128xf32>, vector<256x128xf32> -> vector<256x128xf32>
    %63 = arith.addf %58, %62 : vector<256x128xf32>
    %64 = vector.shape_cast %63 : vector<256x128xf32> to vector<1x16x16x128xf32>
    %c0_85 = arith.constant 0 : index
    %c0_86 = arith.constant 0 : index
    %c0_87 = arith.constant 0 : index
    %65 = vector.load %arg5[%c0_85, %c0_86, %c0_87] : memref<1x1x128xf32, #tpu.memory_space<vmem>>, vector<1x1x128xf32>
    %66 = vector.shape_cast %65 : vector<1x1x128xf32> to vector<1x1x1x128xf32>
    %67 = vector.broadcast %66 : vector<1x1x1x128xf32> to vector<1x16x16x128xf32>
    %68 = arith.mulf %64, %67 : vector<1x16x16x128xf32>
    %c0_88 = arith.constant 0 : index
    %c0_89 = arith.constant 0 : index
    %c0_90 = arith.constant 0 : index
    %69 = vector.load %arg6[%c0_88, %c0_89, %c0_90] : memref<1x1x128xf32, #tpu.memory_space<vmem>>, vector<1x1x128xf32>
    %70 = vector.shape_cast %69 : vector<1x1x128xf32> to vector<1x1x1x128xf32>
    %71 = vector.broadcast %70 : vector<1x1x1x128xf32> to vector<1x16x16x128xf32>
    %72 = arith.addf %68, %71 : vector<1x16x16x128xf32>
    %cst_91 = arith.constant 0.000000e+00 : f32
    %73 = vector.broadcast %cst_91 : f32 to vector<1x16x16x128xf32>
    %74 = arith.maximumf %72, %73 : vector<1x16x16x128xf32>
    %cst_92 = arith.constant 0.000000e+00 : f32
    %75 = vector.broadcast %cst_92 : f32 to vector<1x1x18x128xf32>
    %c0_93 = arith.constant 0 : index
    %c0_94 = arith.constant 0 : index
    %c0_95 = arith.constant 0 : index
    %c0_96 = arith.constant 0 : index
    %76 = vector.load %arg9[%c0_93, %c0_94, %c0_95, %c0_96] : memref<1x18x24x128xf32, #tpu.memory_space<vmem>>, vector<1x1x18x128xf32>
    tpu.vector_store %arg9[%c0_93, %c0_94, %c0_95, %c0_96], %75 {strides = array<i32>} : memref<1x18x24x128xf32, #tpu.memory_space<vmem>>, vector<1x1x18x128xf32>,
    %cst_97 = arith.constant 0.000000e+00 : f32
    %77 = vector.broadcast %cst_97 : f32 to vector<1x1x18x128xf32>
    %c0_98 = arith.constant 0 : index
    %c17_99 = arith.constant 17 : index
    %c0_100 = arith.constant 0 : index
    %c0_101 = arith.constant 0 : index
    %78 = vector.load %arg9[%c0_98, %c17_99, %c0_100, %c0_101] : memref<1x18x24x128xf32, #tpu.memory_space<vmem>>, vector<1x1x18x128xf32>
    tpu.vector_store %arg9[%c0_98, %c17_99, %c0_100, %c0_101], %77 {strides = array<i32>} : memref<1x18x24x128xf32, #tpu.memory_space<vmem>>, vector<1x1x18x128xf32>,
    %cst_102 = arith.constant 0.000000e+00 : f32
    %79 = vector.broadcast %cst_102 : f32 to vector<1x16x1x128xf32>
    %c0_103 = arith.constant 0 : index
    %c1_104 = arith.constant 1 : index
    %c0_105 = arith.constant 0 : index
    %c0_106 = arith.constant 0 : index
    %80 = vector.load %arg9[%c0_103, %c1_104, %c0_105, %c0_106] : memref<1x18x24x128xf32, #tpu.memory_space<vmem>>, vector<1x16x1x128xf32>
    tpu.vector_store %arg9[%c0_103, %c1_104, %c0_105, %c0_106], %79 {strides = array<i32>} : memref<1x18x24x128xf32, #tpu.memory_space<vmem>>, vector<1x16x1x128xf32>,
    %cst_107 = arith.constant 0.000000e+00 : f32
    %81 = vector.broadcast %cst_107 : f32 to vector<1x16x1x128xf32>
    %c0_108 = arith.constant 0 : index
    %c1_109 = arith.constant 1 : index
    %c17_110 = arith.constant 17 : index
    %c0_111 = arith.constant 0 : index
    %82 = vector.load %arg9[%c0_108, %c1_109, %c17_110, %c0_111] : memref<1x18x24x128xf32, #tpu.memory_space<vmem>>, vector<1x16x1x128xf32>
    tpu.vector_store %arg9[%c0_108, %c1_109, %c17_110, %c0_111], %81 {strides = array<i32>} : memref<1x18x24x128xf32, #tpu.memory_space<vmem>>, vector<1x16x1x128xf32>,
    %c0_112 = arith.constant 0 : index
    %c1_113 = arith.constant 1 : index
    %c1_114 = arith.constant 1 : index
    %c0_115 = arith.constant 0 : index
    %83 = vector.load %arg9[%c0_112, %c1_113, %c1_114, %c0_115] : memref<1x18x24x128xf32, #tpu.memory_space<vmem>>, vector<1x16x16x128xf32>
    tpu.vector_store %arg9[%c0_112, %c1_113, %c1_114, %c0_115], %74 {strides = array<i32>} : memref<1x18x24x128xf32, #tpu.memory_space<vmem>>, vector<1x16x16x128xf32>,
    %c0_116 = arith.constant 0 : index
    %c0_117 = arith.constant 0 : index
    %c0_118 = arith.constant 0 : index
    %c0_119 = arith.constant 0 : index
    %84 = vector.load %arg9[%c0_116, %c0_117, %c0_118, %c0_119] : memref<1x18x24x128xf32, #tpu.memory_space<vmem>>, vector<1x16x16x128xf32>
    %85 = vector.shape_cast %84 : vector<1x16x16x128xf32> to vector<256x128xf32>
    %c0_120 = arith.constant 0 : index
    %c0_121 = arith.constant 0 : index
    %86 = vector.load %arg7[%c0_120, %c0_121] : memref<1152x128xf32, #tpu.memory_space<vmem>>, vector<128x128xf32>
    %cst_122 = arith.constant dense<0.000000e+00> : vector<256x128xf32>
    %87 = tpu.matmul %85, %86, %cst_122 {dimension_numbers = #tpu.dot_dimension_numbers<[1], [0], [0], [1], [0, 0, 1, 1], [], []>} : vector<256x128xf32>, vector<128x128xf32>, vector<256x128xf32> -> vector<256x128xf32>
    %c0_123 = arith.constant 0 : index
    %c0_124 = arith.constant 0 : index
    %c1_125 = arith.constant 1 : index
    %c0_126 = arith.constant 0 : index
    %88 = vector.load %arg9[%c0_123, %c0_124, %c1_125, %c0_126] : memref<1x18x24x128xf32, #tpu.memory_space<vmem>>, vector<1x16x16x128xf32>
    %89 = vector.shape_cast %88 : vector<1x16x16x128xf32> to vector<256x128xf32>
    %c128_127 = arith.constant 128 : index
    %c0_128 = arith.constant 0 : index
    %90 = vector.load %arg7[%c128_127, %c0_128] : memref<1152x128xf32, #tpu.memory_space<vmem>>, vector<128x128xf32>
    %cst_129 = arith.constant dense<0.000000e+00> : vector<256x128xf32>
    %91 = tpu.matmul %89, %90, %cst_129 {dimension_numbers = #tpu.dot_dimension_numbers<[1], [0], [0], [1], [0, 0, 1, 1], [], []>} : vector<256x128xf32>, vector<128x128xf32>, vector<256x128xf32> -> vector<256x128xf32>
    %92 = arith.addf %87, %91 : vector<256x128xf32>
    %c0_130 = arith.constant 0 : index
    %c0_131 = arith.constant 0 : index
    %c2_132 = arith.constant 2 : index
    %c0_133 = arith.constant 0 : index
    %93 = vector.load %arg9[%c0_130, %c0_131, %c2_132, %c0_133] : memref<1x18x24x128xf32, #tpu.memory_space<vmem>>, vector<1x16x16x128xf32>
    %94 = vector.shape_cast %93 : vector<1x16x16x128xf32> to vector<256x128xf32>
    %c256_134 = arith.constant 256 : index
    %c0_135 = arith.constant 0 : index
    %95 = vector.load %arg7[%c256_134, %c0_135] : memref<1152x128xf32, #tpu.memory_space<vmem>>, vector<128x128xf32>
    %cst_136 = arith.constant dense<0.000000e+00> : vector<256x128xf32>
    %96 = tpu.matmul %94, %95, %cst_136 {dimension_numbers = #tpu.dot_dimension_numbers<[1], [0], [0], [1], [0, 0, 1, 1], [], []>} : vector<256x128xf32>, vector<128x128xf32>, vector<256x128xf32> -> vector<256x128xf32>
    %97 = arith.addf %92, %96 : vector<256x128xf32>
    %c0_137 = arith.constant 0 : index
    %c1_138 = arith.constant 1 : index
    %c0_139 = arith.constant 0 : index
    %c0_140 = arith.constant 0 : index
    %98 = vector.load %arg9[%c0_137, %c1_138, %c0_139, %c0_140] : memref<1x18x24x128xf32, #tpu.memory_space<vmem>>, vector<1x16x16x128xf32>
    %99 = vector.shape_cast %98 : vector<1x16x16x128xf32> to vector<256x128xf32>
    %c384_141 = arith.constant 384 : index
    %c0_142 = arith.constant 0 : index
    %100 = vector.load %arg7[%c384_141, %c0_142] : memref<1152x128xf32, #tpu.memory_space<vmem>>, vector<128x128xf32>
    %cst_143 = arith.constant dense<0.000000e+00> : vector<256x128xf32>
    %101 = tpu.matmul %99, %100, %cst_143 {dimension_numbers = #tpu.dot_dimension_numbers<[1], [0], [0], [1], [0, 0, 1, 1], [], []>} : vector<256x128xf32>, vector<128x128xf32>, vector<256x128xf32> -> vector<256x128xf32>
    %102 = arith.addf %97, %101 : vector<256x128xf32>
    %c0_144 = arith.constant 0 : index
    %c1_145 = arith.constant 1 : index
    %c1_146 = arith.constant 1 : index
    %c0_147 = arith.constant 0 : index
    %103 = vector.load %arg9[%c0_144, %c1_145, %c1_146, %c0_147] : memref<1x18x24x128xf32, #tpu.memory_space<vmem>>, vector<1x16x16x128xf32>
    %104 = vector.shape_cast %103 : vector<1x16x16x128xf32> to vector<256x128xf32>
    %c512_148 = arith.constant 512 : index
    %c0_149 = arith.constant 0 : index
    %105 = vector.load %arg7[%c512_148, %c0_149] : memref<1152x128xf32, #tpu.memory_space<vmem>>, vector<128x128xf32>
    %cst_150 = arith.constant dense<0.000000e+00> : vector<256x128xf32>
    %106 = tpu.matmul %104, %105, %cst_150 {dimension_numbers = #tpu.dot_dimension_numbers<[1], [0], [0], [1], [0, 0, 1, 1], [], []>} : vector<256x128xf32>, vector<128x128xf32>, vector<256x128xf32> -> vector<256x128xf32>
    %107 = arith.addf %102, %106 : vector<256x128xf32>
    %c0_151 = arith.constant 0 : index
    %c1_152 = arith.constant 1 : index
    %c2_153 = arith.constant 2 : index
    %c0_154 = arith.constant 0 : index
    %108 = vector.load %arg9[%c0_151, %c1_152, %c2_153, %c0_154] : memref<1x18x24x128xf32, #tpu.memory_space<vmem>>, vector<1x16x16x128xf32>
    %109 = vector.shape_cast %108 : vector<1x16x16x128xf32> to vector<256x128xf32>
    %c640_155 = arith.constant 640 : index
    %c0_156 = arith.constant 0 : index
    %110 = vector.load %arg7[%c640_155, %c0_156] : memref<1152x128xf32, #tpu.memory_space<vmem>>, vector<128x128xf32>
    %cst_157 = arith.constant dense<0.000000e+00> : vector<256x128xf32>
    %111 = tpu.matmul %109, %110, %cst_157 {dimension_numbers = #tpu.dot_dimension_numbers<[1], [0], [0], [1], [0, 0, 1, 1], [], []>} : vector<256x128xf32>, vector<128x128xf32>, vector<256x128xf32> -> vector<256x128xf32>
    %112 = arith.addf %107, %111 : vector<256x128xf32>
    %c0_158 = arith.constant 0 : index
    %c2_159 = arith.constant 2 : index
    %c0_160 = arith.constant 0 : index
    %c0_161 = arith.constant 0 : index
    %113 = vector.load %arg9[%c0_158, %c2_159, %c0_160, %c0_161] : memref<1x18x24x128xf32, #tpu.memory_space<vmem>>, vector<1x16x16x128xf32>
    %114 = vector.shape_cast %113 : vector<1x16x16x128xf32> to vector<256x128xf32>
    %c768_162 = arith.constant 768 : index
    %c0_163 = arith.constant 0 : index
    %115 = vector.load %arg7[%c768_162, %c0_163] : memref<1152x128xf32, #tpu.memory_space<vmem>>, vector<128x128xf32>
    %cst_164 = arith.constant dense<0.000000e+00> : vector<256x128xf32>
    %116 = tpu.matmul %114, %115, %cst_164 {dimension_numbers = #tpu.dot_dimension_numbers<[1], [0], [0], [1], [0, 0, 1, 1], [], []>} : vector<256x128xf32>, vector<128x128xf32>, vector<256x128xf32> -> vector<256x128xf32>
    %117 = arith.addf %112, %116 : vector<256x128xf32>
    %c0_165 = arith.constant 0 : index
    %c2_166 = arith.constant 2 : index
    %c1_167 = arith.constant 1 : index
    %c0_168 = arith.constant 0 : index
    %118 = vector.load %arg9[%c0_165, %c2_166, %c1_167, %c0_168] : memref<1x18x24x128xf32, #tpu.memory_space<vmem>>, vector<1x16x16x128xf32>
    %119 = vector.shape_cast %118 : vector<1x16x16x128xf32> to vector<256x128xf32>
    %c896_169 = arith.constant 896 : index
    %c0_170 = arith.constant 0 : index
    %120 = vector.load %arg7[%c896_169, %c0_170] : memref<1152x128xf32, #tpu.memory_space<vmem>>, vector<128x128xf32>
    %cst_171 = arith.constant dense<0.000000e+00> : vector<256x128xf32>
    %121 = tpu.matmul %119, %120, %cst_171 {dimension_numbers = #tpu.dot_dimension_numbers<[1], [0], [0], [1], [0, 0, 1, 1], [], []>} : vector<256x128xf32>, vector<128x128xf32>, vector<256x128xf32> -> vector<256x128xf32>
    %122 = arith.addf %117, %121 : vector<256x128xf32>
    %c0_172 = arith.constant 0 : index
    %c2_173 = arith.constant 2 : index
    %c2_174 = arith.constant 2 : index
    %c0_175 = arith.constant 0 : index
    %123 = vector.load %arg9[%c0_172, %c2_173, %c2_174, %c0_175] : memref<1x18x24x128xf32, #tpu.memory_space<vmem>>, vector<1x16x16x128xf32>
    %124 = vector.shape_cast %123 : vector<1x16x16x128xf32> to vector<256x128xf32>
    %c1024_176 = arith.constant 1024 : index
    %c0_177 = arith.constant 0 : index
    %125 = vector.load %arg7[%c1024_176, %c0_177] : memref<1152x128xf32, #tpu.memory_space<vmem>>, vector<128x128xf32>
    %cst_178 = arith.constant dense<0.000000e+00> : vector<256x128xf32>
    %126 = tpu.matmul %124, %125, %cst_178 {dimension_numbers = #tpu.dot_dimension_numbers<[1], [0], [0], [1], [0, 0, 1, 1], [], []>} : vector<256x128xf32>, vector<128x128xf32>, vector<256x128xf32> -> vector<256x128xf32>
    %127 = arith.addf %122, %126 : vector<256x128xf32>
    %128 = vector.shape_cast %127 : vector<256x128xf32> to vector<1x16x16x128xf32>
    %c0_179 = arith.constant 0 : index
    %c0_180 = arith.constant 0 : index
    %c0_181 = arith.constant 0 : index
    %c0_182 = arith.constant 0 : index
    %129 = vector.load %arg1[%c0_179, %c0_180, %c0_181, %c0_182] : memref<1x16x16x128xf32, #tpu.memory_space<vmem>>, vector<1x16x16x128xf32>
    %130 = arith.addf %128, %129 : vector<1x16x16x128xf32>
    %c0_183 = arith.constant 0 : index
    %c0_184 = arith.constant 0 : index
    %c0_185 = arith.constant 0 : index
    %c0_186 = arith.constant 0 : index
    %131 = vector.load %arg8[%c0_183, %c0_184, %c0_185, %c0_186] : memref<1x16x16x128xf32, #tpu.memory_space<vmem>>, vector<1x16x16x128xf32>
    tpu.vector_store %arg8[%c0_183, %c0_184, %c0_185, %c0_186], %130 {strides = array<i32>} : memref<1x16x16x128xf32, #tpu.memory_space<vmem>>, vector<1x16x16x128xf32>,
    return
  }
  func.func @transform_0(%arg0: i32) -> (i32, i32, i32, i32) {
    %c0_i32 = arith.constant 0 : i32
    %c0_i32_0 = arith.constant 0 : i32
    %c0_i32_1 = arith.constant 0 : i32
    %c0_i32_2 = arith.constant 0 : i32
    return %arg0, %c0_i32, %c0_i32_0, %c0_i32_1 : i32, i32, i32, i32
  }
  func.func @transform_1(%arg0: i32) -> (i32, i32, i32) {
    %c0_i32 = arith.constant 0 : i32
    %c0_i32_0 = arith.constant 0 : i32
    %c0_i32_1 = arith.constant 0 : i32
    %c0_i32_2 = arith.constant 0 : i32
    return %c0_i32, %c0_i32_0, %c0_i32_1 : i32, i32, i32
  }
  func.func @transform_2(%arg0: i32) -> (i32, i32, i32) {
    %c0_i32 = arith.constant 0 : i32
    %c0_i32_0 = arith.constant 0 : i32
    %c0_i32_1 = arith.constant 0 : i32
    %c0_i32_2 = arith.constant 0 : i32
    return %c0_i32, %c0_i32_0, %c0_i32_1 : i32, i32, i32
  }
  func.func @transform_3(%arg0: i32) -> (i32, i32) {
    %c0_i32 = arith.constant 0 : i32
    %c0_i32_0 = arith.constant 0 : i32
    %c0_i32_1 = arith.constant 0 : i32
    return %c0_i32, %c0_i32_0 : i32, i32
  }
  func.func @transform_4(%arg0: i32) -> (i32, i32, i32) {
    %c0_i32 = arith.constant 0 : i32
    %c0_i32_0 = arith.constant 0 : i32
    %c0_i32_1 = arith.constant 0 : i32
    %c0_i32_2 = arith.constant 0 : i32
    return %c0_i32, %c0_i32_0, %c0_i32_1 : i32, i32, i32
  }
  func.func @transform_5(%arg0: i32) -> (i32, i32, i32) {
    %c0_i32 = arith.constant 0 : i32
    %c0_i32_0 = arith.constant 0 : i32
    %c0_i32_1 = arith.constant 0 : i32
    %c0_i32_2 = arith.constant 0 : i32
    return %c0_i32, %c0_i32_0, %c0_i32_1 : i32, i32, i32
  }
  func.func @transform_6(%arg0: i32) -> (i32, i32) {
    %c0_i32 = arith.constant 0 : i32
    %c0_i32_0 = arith.constant 0 : i32
    %c0_i32_1 = arith.constant 0 : i32
    return %c0_i32, %c0_i32_0 : i32, i32
  }
  func.func @transform_7(%arg0: i32) -> (i32, i32, i32, i32) {
    %c0_i32 = arith.constant 0 : i32
    %c0_i32_0 = arith.constant 0 : i32
    %c0_i32_1 = arith.constant 0 : i32
    %c0_i32_2 = arith.constant 0 : i32
    return %arg0, %c0_i32, %c0_i32_0, %c0_i32_1 : i32, i32, i32, i32
  }
}

</mosaic_0001>

<llo_original>
// kernel: tpu_custom_call.1
$region0: #{tpu_custom_call.1}
  #allocation0 [shape = 'u32[]', space=smem, size = 0x4, offset = 0x4, fixed_abs, tag = 'smem constant byte address 0x4 - core index']
  #allocation1 [shape = 'u32[144,128]{1,0:T(1,128)}', space=vmem, size = 0x12000, scoped, tag = 'internal scratch']
  #allocation2 [shape = 'f32[1,18,24,128]{3,2,1,0:T(8,128)}', space=vmem, size = 0x36000, scoped, tag = 'scratch operand']
  %s0 = inlined_call_operand.hbm [shape: f32[2,16,16,128], index: 0, kind: input, shape index: {}]
  %s1 = inlined_call_operand.vmem [shape: f32[1,1,128], index: 1, kind: input, shape index: {}]
  %s2 = inlined_call_operand.vmem [shape: f32[1,1,128], index: 2, kind: input, shape index: {}]
  %s3 = inlined_call_operand.hbm [shape: f32[1152,128], index: 3, kind: input, shape index: {}]
  %s4 = inlined_call_operand.vmem [shape: f32[1,1,128], index: 4, kind: input, shape index: {}]
  %s5 = inlined_call_operand.vmem [shape: f32[1,1,128], index: 5, kind: input, shape index: {}]
  %s6 = inlined_call_operand.hbm [shape: f32[1152,128], index: 6, kind: input, shape index: {}]
  %s7 = inlined_call_operand.hbm [shape: f32[2,16,16,128], index: 7, kind: output, shape index: {}]
  %s8 = sld [smem:[#allocation0]]
  $region73: #{tpu_custom_call.1} parent=0
    _
  %s10 = ssub.s32 1, %s8
  %s11 = scalar_select 0, %s10, %s8
  $region1: #{tpu_custom_call.1} parent=0
    #allocation3 [shape = 'u8[262144]{0}', space=vmem, size = 0x40000, scoped, tag = 'input window, operand 0']
    #allocation4 [shape = 's32[2]{0}', space=sflag, size = 0x8, scoped, tag = 'scoped memory for tpu_custom_call.1']
    #allocation5 [shape = 's32[2]{0}', space=sflag, size = 0x8, scoped, tag = 'scoped memory for tpu_custom_call.1']
    #allocation6 [shape = 'u8[589824]{0}', space=vmem, size = 0x90000, scoped, tag = 'input window, operand 3, single buffered']
    #allocation7 [shape = 's32[1]{0}', space=sflag, size = 0x4, scoped, tag = 'scoped memory for tpu_custom_call.1']
    #allocation8 [shape = 'u8[589824]{0}', space=vmem, size = 0x90000, scoped, tag = 'input window, operand 6, single buffered']
    #allocation9 [shape = 'u8[262144]{0}', space=vmem, size = 0x40000, scoped, tag = 'output window, operand 0']
    %12 = vsyncpa [#allocation4], 0
    %s13 = scalar_lea.sflag [#allocation4], 1
    %14 = vsyncpa %s13, 0
    %15 = vsyncpa [#allocation7], 0
    %16 = vsyncpa [#allocation5], 0
    %s17 = scalar_lea.sflag [#allocation5], 1
    %18 = vsyncpa %s17, 0
    loop: start=0, step=1, limit=4
    $region2: #{tpu_custom_call.1} parent=1 // loop_pre_header
      _
    $region3: #{tpu_custom_call.1} parent=1 // loop_header
      %s20 = sphi 0, %s24
      %p21 = scmp.ge.s32.totalorder %s20, 4
      %s30 = sphi 0, %s32
      %s33 = sphi 0, %s30
      %s34 = sphi 0, %s33
      %s50 = sphi 0, %s34
      %s54 = sphi 0, %s54
      %s56 = sphi 0, %s54
      %s57 = sphi 0, %s56
      %s71 = sphi 0, %s57
      %s75 = sphi 0, %s75
      %s77 = sphi 0, %s75
      %s78 = sphi 0, %s77
      %s92 = sphi 0, %s78
      %s96 = sphi 0, %s96
      %s98 = sphi 0, %s96
      %s99 = sphi 0, %s98
      %s113 = sphi 0, %s99
      %s117 = sphi 0, %s117
      %s119 = sphi 0, %s117
      %s120 = sphi 0, %s119
      %s134 = sphi 0, %s120
      %s138 = sphi 0, %s138
      %s140 = sphi 0, %s138
      %s141 = sphi 0, %s140
      %s155 = sphi 0, %s141
      %s159 = sphi 0, %s159
      %s161 = sphi 0, %s159
      %s162 = sphi 0, %s161
      %s176 = sphi 0, %s162
      %s182 = sphi 0, %s184
      %s185 = sphi 0, %s182
      %s186 = sphi 0, %s185
      %s202 = sphi 0, %s186
    $region4: #{tpu_custom_call.1} parent=1 // loop_header_branch
      %23 = sbr.rel (%p21) target = $region8
    $region5: #{tpu_custom_call.1} parent=1 // loop_body
      %s25 = ssub.s32 %s20, 1
      %s26 = ssub.s32 %s20, 2
      %s27 = sadd.s32 %s20, 1
      %s28 = ssub.s32 %s20, %s27
      %p29 = scmp.eq.s32.totalorder %s28, 0
      %s31 = sadd.s32 %s30, 1
      %s32 = scalar_select %p29, %s30, %s31
      %p35 = pneg %p29
      %p36 = scmp.eq.s32.totalorder %s20, 1
      %p37 = por %p35, %p36
      %p38 = scmp.ne.s32.totalorder %s30, %s33
      %p39 = scmp.eq.s32.totalorder %s20, 0
      %p40 = por %p38, %p39
      %p41 = scmp.ne.s32.totalorder %s30, %s33
      %p42 = scmp.eq.s32.totalorder %s25, 1
      %p43 = por %p41, %p42
      %p44 = scmp.ne.s32.totalorder %s33, %s34
      %p45 = scmp.eq.s32.totalorder %s25, 0
      %p46 = por %p44, %p45
      %p47 = scmp.ne.s32.totalorder %s33, %s34
      %p48 = scmp.eq.s32.totalorder %s26, 1
      %p49 = por %p47, %p48
      %p51 = scmp.ne.s32.totalorder %s34, %s50
      %p52 = scmp.eq.s32.totalorder %s26, 0
      %p53 = por %p51, %p52
      %s55 = sadd.s32 %s54, 1
      %p58 = scmp.eq.s32.totalorder %s20, 1
      %p59 = scmp.ne.s32.totalorder %s54, %s56
      %p60 = scmp.eq.s32.totalorder %s20, 0
      %p61 = por %p59, %p60
      %p62 = scmp.ne.s32.totalorder %s54, %s56
      %p63 = scmp.eq.s32.totalorder %s25, 1
      %p64 = por %p62, %p63
      %p65 = scmp.ne.s32.totalorder %s56, %s57
      %p66 = scmp.eq.s32.totalorder %s25, 0
      %p67 = por %p65, %p66
      %p68 = scmp.ne.s32.totalorder %s56, %s57
      %p69 = scmp.eq.s32.totalorder %s26, 1
      %p70 = por %p68, %p69
      %p72 = scmp.ne.s32.totalorder %s57, %s71
      %p73 = scmp.eq.s32.totalorder %s26, 0
      %p74 = por %p72, %p73
      %s76 = sadd.s32 %s75, 1
      %p79 = scmp.eq.s32.totalorder %s20, 1
      %p80 = scmp.ne.s32.totalorder %s75, %s77
      %p81 = scmp.eq.s32.totalorder %s20, 0
      %p82 = por %p80, %p81
      %p83 = scmp.ne.s32.totalorder %s75, %s77
      %p84 = scmp.eq.s32.totalorder %s25, 1
      %p85 = por %p83, %p84
      %p86 = scmp.ne.s32.totalorder %s77, %s78
      %p87 = scmp.eq.s32.totalorder %s25, 0
      %p88 = por %p86, %p87
      %p89 = scmp.ne.s32.totalorder %s77, %s78
      %p90 = scmp.eq.s32.totalorder %s26, 1
      %p91 = por %p89, %p90
      %p93 = scmp.ne.s32.totalorder %s78, %s92
      %p94 = scmp.eq.s32.totalorder %s26, 0
      %p95 = por %p93, %p94
      %s97 = sadd.s32 %s96, 1
      %p100 = scmp.eq.s32.totalorder %s20, 1
      %p101 = scmp.ne.s32.totalorder %s96, %s98
      %p102 = scmp.eq.s32.totalorder %s20, 0
      %p103 = por %p101, %p102
      %p104 = scmp.ne.s32.totalorder %s96, %s98
      %p105 = scmp.eq.s32.totalorder %s25, 1
      %p106 = por %p104, %p105
      %p107 = scmp.ne.s32.totalorder %s98, %s99
      %p108 = scmp.eq.s32.totalorder %s25, 0
      %p109 = por %p107, %p108
      %p110 = scmp.ne.s32.totalorder %s98, %s99
      %p111 = scmp.eq.s32.totalorder %s26, 1
      %p112 = por %p110, %p111
      %p114 = scmp.ne.s32.totalorder %s99, %s113
      %p115 = scmp.eq.s32.totalorder %s26, 0
      %p116 = por %p114, %p115
      %s118 = sadd.s32 %s117, 1
      %p121 = scmp.eq.s32.totalorder %s20, 1
      %p122 = scmp.ne.s32.totalorder %s117, %s119
      %p123 = scmp.eq.s32.totalorder %s20, 0
      %p124 = por %p122, %p123
      %p125 = scmp.ne.s32.totalorder %s117, %s119
      %p126 = scmp.eq.s32.totalorder %s25, 1
      %p127 = por %p125, %p126
      %p128 = scmp.ne.s32.totalorder %s119, %s120
      %p129 = scmp.eq.s32.totalorder %s25, 0
      %p130 = por %p128, %p129
      %p131 = scmp.ne.s32.totalorder %s119, %s120
      %p132 = scmp.eq.s32.totalorder %s26, 1
      %p133 = por %p131, %p132
      %p135 = scmp.ne.s32.totalorder %s120, %s134
      %p136 = scmp.eq.s32.totalorder %s26, 0
      %p137 = por %p135, %p136
      %s139 = sadd.s32 %s138, 1
      %p142 = scmp.eq.s32.totalorder %s20, 1
      %p143 = scmp.ne.s32.totalorder %s138, %s140
      %p144 = scmp.eq.s32.totalorder %s20, 0
      %p145 = por %p143, %p144
      %p146 = scmp.ne.s32.totalorder %s138, %s140
      %p147 = scmp.eq.s32.totalorder %s25, 1
      %p148 = por %p146, %p147
      %p149 = scmp.ne.s32.totalorder %s140, %s141
      %p150 = scmp.eq.s32.totalorder %s25, 0
      %p151 = por %p149, %p150
      %p152 = scmp.ne.s32.totalorder %s140, %s141
      %p153 = scmp.eq.s32.totalorder %s26, 1
      %p154 = por %p152, %p153
      %p156 = scmp.ne.s32.totalorder %s141, %s155
      %p157 = scmp.eq.s32.totalorder %s26, 0
      %p158 = por %p156, %p157
      %s160 = sadd.s32 %s159, 1
      %p163 = scmp.eq.s32.totalorder %s20, 1
      %p164 = scmp.ne.s32.totalorder %s159, %s161
      %p165 = scmp.eq.s32.totalorder %s20, 0
      %p166 = por %p164, %p165
      %p167 = scmp.ne.s32.totalorder %s159, %s161
      %p168 = scmp.eq.s32.totalorder %s25, 1
      %p169 = por %p167, %p168
      %p170 = scmp.ne.s32.totalorder %s161, %s162
      %p171 = scmp.eq.s32.totalorder %s25, 0
      %p172 = por %p170, %p171
      %p173 = scmp.ne.s32.totalorder %s161, %s162
      %p174 = scmp.eq.s32.totalorder %s26, 1
      %p175 = por %p173, %p174
      %p177 = scmp.ne.s32.totalorder %s162, %s176
      %p178 = scmp.eq.s32.totalorder %s26, 0
      %p179 = por %p177, %p178
      %s180 = ssub.s32 %s20, %s27
      %p181 = scmp.eq.s32.totalorder %s180, 0
      %s183 = sadd.s32 %s182, 1
      %s184 = scalar_select %p181, %s182, %s183
      %p187 = pneg %p181
      %p188 = scmp.eq.s32.totalorder %s20, 1
      %p189 = por %p187, %p188
      %p190 = scmp.ne.s32.totalorder %s182, %s185
      %p191 = scmp.eq.s32.totalorder %s20, 0
      %p192 = por %p190, %p191
      %p193 = scmp.ne.s32.totalorder %s182, %s185
      %p194 = scmp.eq.s32.totalorder %s25, 1
      %p195 = por %p193, %p194
      %p196 = scmp.ne.s32.totalorder %s185, %s186
      %p197 = scmp.eq.s32.totalorder %s25, 0
      %p198 = por %p196, %p197
      %p199 = scmp.ne.s32.totalorder %s185, %s186
      %p200 = scmp.eq.s32.totalorder %s26, 1
      %p201 = por %p199, %p200
      %p203 = scmp.ne.s32.totalorder %s186, %s202
      %p204 = scmp.eq.s32.totalorder %s26, 0
      %p205 = por %p203, %p204
      %p206 = scmp.le.s32.totalorder 1, %s20
      %p207 = scmp.lt.s32.totalorder %s20, 3
      %p208 = pnand %p206, %p207
      %p209 = pneg %p208
      // Predicated region
      $region9: #{tpu_custom_call.1} parent=5 // pred_check
        _
      $region10: #{tpu_custom_call.1} parent=5 // pred_check_branch
        %211 = sbr.rel (%p208) target = $region12
      $region11: #{tpu_custom_call.1} parent=5 // pred_region
        %s212 = ssub.s32 %s20, 1
        // Predicated region
        $region13: #{tpu_custom_call.1} parent=11 // pred_check
          %p213 = pneg %p67
        $region14: #{tpu_custom_call.1} parent=11 // pred_check_branch
          %215 = sbr.rel (%p213) target = $region16
        $region15: #{tpu_custom_call.1} parent=11 // pred_region
          _
        $region16: #{tpu_custom_call.1} parent=11 // pred_fallthru
          _
        // Predicated region
        $region17: #{tpu_custom_call.1} parent=11 // pred_check
          %p216 = pneg %p88
        $region18: #{tpu_custom_call.1} parent=11 // pred_check_branch
          %218 = sbr.rel (%p216) target = $region20
        $region19: #{tpu_custom_call.1} parent=11 // pred_region
          _
        $region20: #{tpu_custom_call.1} parent=11 // pred_fallthru
          _
        // Predicated region
        $region21: #{tpu_custom_call.1} parent=11 // pred_check
          %p219 = pneg %p109
        $region22: #{tpu_custom_call.1} parent=11 // pred_check_branch
          %221 = sbr.rel (%p219) target = $region24
        $region23: #{tpu_custom_call.1} parent=11 // pred_region
          %s223 = ssub.s32 18432, 18432
          %224 = vsyncadd [#allocation7], %s223
          %s225 = sshll.u32 [#allocation6], 4
          %s226 = int_to_ptr.vmem [resolvable:$true] %s225
          %231 = dma.hbm_to_vmem [thread:$0]  %s3, 18432, %s226, [#allocation7], 128, 128, 8
        $region24: #{tpu_custom_call.1} parent=11 // pred_fallthru
          _
        // Predicated region
        $region25: #{tpu_custom_call.1} parent=11 // pred_check
          %p232 = pneg %p130
        $region26: #{tpu_custom_call.1} parent=11 // pred_check_branch
          %234 = sbr.rel (%p232) target = $region28
        $region27: #{tpu_custom_call.1} parent=11 // pred_region
          _
        $region28: #{tpu_custom_call.1} parent=11 // pred_fallthru
          _
        // Predicated region
        $region29: #{tpu_custom_call.1} parent=11 // pred_check
          %p235 = pneg %p151
        $region30: #{tpu_custom_call.1} parent=11 // pred_check_branch
          %237 = sbr.rel (%p235) target = $region32
        $region31: #{tpu_custom_call.1} parent=11 // pred_region
          _
        $region32: #{tpu_custom_call.1} parent=11 // pred_fallthru
          _
        // Predicated region
        $region33: #{tpu_custom_call.1} parent=11 // pred_check
          %p238 = pneg %p172
        $region34: #{tpu_custom_call.1} parent=11 // pred_check_branch
          %240 = sbr.rel (%p238) target = $region36
        $region35: #{tpu_custom_call.1} parent=11 // pred_region
          %s242 = ssub.s32 18432, 18432
          %243 = vsyncadd [#allocation7], %s242
          %s244 = sshll.u32 [#allocation8], 4
          %s245 = int_to_ptr.vmem [resolvable:$true] %s244
          %250 = dma.hbm_to_vmem [thread:$0]  %s6, 18432, %s245, [#allocation7], 128, 128, 8
        $region36: #{tpu_custom_call.1} parent=11 // pred_fallthru
          _
      $region12: #{tpu_custom_call.1} parent=5 // pred_fallthru
        _
      %p251 = scmp.lt.s32.totalorder %s20, 2
      // Predicated region
      $region37: #{tpu_custom_call.1} parent=5 // pred_check
        %p252 = pneg %p251
      $region38: #{tpu_custom_call.1} parent=5 // pred_check_branch
        %254 = sbr.rel (%p252) target = $region40
      $region39: #{tpu_custom_call.1} parent=5 // pred_region
        // Predicated region
        $region41: #{tpu_custom_call.1} parent=39 // pred_check
          %p255 = pneg %p40
        $region42: #{tpu_custom_call.1} parent=39 // pred_check_branch
          %257 = sbr.rel (%p255) target = $region44
        $region43: #{tpu_custom_call.1} parent=39 // pred_region
          %s258 = sand.u32 %s30, 1
          %s259 = scalar_lea.sflag [#allocation4], %s258
          %s260 = sand.u32 %s30, 1
          %s261 = smul.addr %s260, 256
          %s262 = scalar_lea.vmem [#allocation3], %s261
          %s264 = ssub.s32 4096, 4096
          %265 = vsyncadd %s259, %s264
          %s266 = smul.addr %s20, 32
          %s267 = smul.addr %s266, 128
          %s268 = scalar_lea.hbm %s0, %s267
          %s269 = sshll.u32 %s262, 4
          %s270 = int_to_ptr.vmem [resolvable:$true] %s269
          %275 = dma.hbm_to_vmem [thread:$0]  %s268, 4096, %s270, %s259, 128, 128, 8
        $region44: #{tpu_custom_call.1} parent=39 // pred_fallthru
          _
      $region40: #{tpu_custom_call.1} parent=5 // pred_fallthru
        _
      %p276 = scmp.le.s32.totalorder 1, %s20
      %p277 = scmp.lt.s32.totalorder %s20, 3
      %p278 = pnand %p276, %p277
      %p279 = pneg %p278
      // Predicated region
      $region45: #{tpu_custom_call.1} parent=5 // pred_check
        _
      $region46: #{tpu_custom_call.1} parent=5 // pred_check_branch
        %281 = sbr.rel (%p278) target = $region48
      $region47: #{tpu_custom_call.1} parent=5 // pred_region
        %s282 = ssub.s32 %s20, 1
        %s283 = sand.u32 %s33, 1
        %s284 = scalar_lea.sflag [#allocation4], %s283
        %s285 = sand.u32 %s33, 1
        %s286 = smul.addr %s285, 256
        %s287 = scalar_lea.vmem [#allocation3], %s286
        // Predicated region
        $region49: #{tpu_custom_call.1} parent=47 // pred_check
          %p288 = pneg %p46
        $region50: #{tpu_custom_call.1} parent=47 // pred_check_branch
          %290 = sbr.rel (%p288) target = $region52
        $region51: #{tpu_custom_call.1} parent=47 // pred_region
          %291 = dma.done %s284, 4096
        $region52: #{tpu_custom_call.1} parent=47 // pred_fallthru
          _
        // Predicated region
        $region53: #{tpu_custom_call.1} parent=47 // pred_check
          %p292 = pneg %p109
        $region54: #{tpu_custom_call.1} parent=47 // pred_check_branch
          %294 = sbr.rel (%p292) target = $region56
        $region55: #{tpu_custom_call.1} parent=47 // pred_region
          %295 = dma.done [#allocation7], 18432
        $region56: #{tpu_custom_call.1} parent=47 // pred_fallthru
          _
        // Predicated region
        $region57: #{tpu_custom_call.1} parent=47 // pred_check
          %p296 = pneg %p172
        $region58: #{tpu_custom_call.1} parent=47 // pred_check_branch
          %298 = sbr.rel (%p296) target = $region60
        $region59: #{tpu_custom_call.1} parent=47 // pred_region
          %299 = dma.done [#allocation7], 18432
        $region60: #{tpu_custom_call.1} parent=47 // pred_fallthru
          _
        %s300 = sand.u32 %s33, 1
        %s301 = scalar_lea.sflag [#allocation4], %s300
        %s302 = sand.u32 %s33, 1
        %s303 = smul.addr %s302, 256
        %s304 = scalar_lea.vmem [#allocation3], %s303
        %p305 = pneg %p46
        %p306 = pneg %p43
        %p307 = pneg %p67
        %p308 = pneg %p64
        %p309 = pneg %p88
        %p310 = pneg %p85
        %p311 = pneg %p109
        %p312 = pneg %p106
        %p313 = pneg %p130
        %p314 = pneg %p127
        %p315 = pneg %p151
        %p316 = pneg %p148
        %p317 = pneg %p172
        %p318 = pneg %p169
        %p319 = pneg %p198
        %p320 = pneg %p195
        %s321 = sand.u32 %s185, 1
        %s322 = scalar_lea.sflag [#allocation5], %s321
        %s323 = sand.u32 %s185, 1
        %s324 = smul.addr %s323, 256
        %s325 = scalar_lea.vmem [#allocation9], %s324
        %v326 = vld [vmem:[%s287] sm:$0xff]
        %v327 = vld [vmem:[%s287 + $0x8] sm:$0xff]
        %v328 = vld [vmem:[%s287 + $0x10] sm:$0xff]
        %v329 = vld [vmem:[%s287 + $0x18] sm:$0xff]
        %v330 = vld [vmem:[%s287 + $0x20] sm:$0xff]
        %v331 = vld [vmem:[%s287 + $0x28] sm:$0xff]
        %v332 = vld [vmem:[%s287 + $0x30] sm:$0xff]
        %v333 = vld [vmem:[%s287 + $0x38] sm:$0xff]
        %v334 = vld [vmem:[%s287 + $0x40] sm:$0xff]
        %v335 = vld [vmem:[%s287 + $0x48] sm:$0xff]
        %v336 = vld [vmem:[%s287 + $0x50] sm:$0xff]
        %v337 = vld [vmem:[%s287 + $0x58] sm:$0xff]
        %v338 = vld [vmem:[%s287 + $0x60] sm:$0xff]
        %v339 = vld [vmem:[%s287 + $0x68] sm:$0xff]
        %v340 = vld [vmem:[%s287 + $0x70] sm:$0xff]
        %v341 = vld [vmem:[%s287 + $0x78] sm:$0xff]
        %v342 = vld [vmem:[%s287 + $0x80] sm:$0xff]
        %v343 = vld [vmem:[%s287 + $0x88] sm:$0xff]
        %v344 = vld [vmem:[%s287 + $0x90] sm:$0xff]
        %v345 = vld [vmem:[%s287 + $0x98] sm:$0xff]
        %v346 = vld [vmem:[%s287 + $0xa0] sm:$0xff]
        %v347 = vld [vmem:[%s287 + $0xa8] sm:$0xff]
        %v348 = vld [vmem:[%s287 + $0xb0] sm:$0xff]
        %v349 = vld [vmem:[%s287 + $0xb8] sm:$0xff]
        %v350 = vld [vmem:[%s287 + $0xc0] sm:$0xff]
        %v351 = vld [vmem:[%s287 + $0xc8] sm:$0xff]
        %v352 = vld [vmem:[%s287 + $0xd0] sm:$0xff]
        %v353 = vld [vmem:[%s287 + $0xd8] sm:$0xff]
        %v354 = vld [vmem:[%s287 + $0xe0] sm:$0xff]
        %v355 = vld [vmem:[%s287 + $0xe8] sm:$0xff]
        %v356 = vld [vmem:[%s287 + $0xf0] sm:$0xff]
        %v357 = vld [vmem:[%s287 + $0xf8] sm:$0xff]
        %v358 = vld [vmem:[%s1] sm:$0x1]
        %v360 = vlaneseq
        %v361 = vshrl.u32 %v360, 7
        %v362 = vsub.s32 0, %v361
        %v363 = vrot.slane %v358, %v362
        %v365 = vmul.f32 %v326, %v363
        %v366 = vmul.f32 %v327, %v363
        %v367 = vmul.f32 %v328, %v363
        %v368 = vmul.f32 %v329, %v363
        %v369 = vmul.f32 %v330, %v363
        %v370 = vmul.f32 %v331, %v363
        %v371 = vmul.f32 %v332, %v363
        %v372 = vmul.f32 %v333, %v363
        %v373 = vmul.f32 %v334, %v363
        %v374 = vmul.f32 %v335, %v363
        %v375 = vmul.f32 %v336, %v363
        %v376 = vmul.f32 %v337, %v363
        %v377 = vmul.f32 %v338, %v363
        %v378 = vmul.f32 %v339, %v363
        %v379 = vmul.f32 %v340, %v363
        %v380 = vmul.f32 %v341, %v363
        %v381 = vmul.f32 %v342, %v363
        %v382 = vmul.f32 %v343, %v363
        %v383 = vmul.f32 %v344, %v363
        %v384 = vmul.f32 %v345, %v363
        %v385 = vmul.f32 %v346, %v363
        %v386 = vmul.f32 %v347, %v363
        %v387 = vmul.f32 %v348, %v363
        %v388 = vmul.f32 %v349, %v363
        %v389 = vmul.f32 %v350, %v363
        %v390 = vmul.f32 %v351, %v363
        %v391 = vmul.f32 %v352, %v363
        %v392 = vmul.f32 %v353, %v363
        %v393 = vmul.f32 %v354, %v363
        %v394 = vmul.f32 %v355, %v363
        %v395 = vmul.f32 %v356, %v363
        %v396 = vmul.f32 %v357, %v363
        %v397 = vld [vmem:[%s2] sm:$0x1]
        %v399 = vlaneseq
        %v400 = vshrl.u32 %v399, 7
        %v401 = vsub.s32 0, %v400
        %v402 = vrot.slane %v397, %v401
        %v404 = vadd.f32 %v365, %v402
        %v405 = vadd.f32 %v366, %v402
        %v406 = vadd.f32 %v367, %v402
        %v407 = vadd.f32 %v368, %v402
        %v408 = vadd.f32 %v369, %v402
        %v409 = vadd.f32 %v370, %v402
        %v410 = vadd.f32 %v371, %v402
        %v411 = vadd.f32 %v372, %v402
        %v412 = vadd.f32 %v373, %v402
        %v413 = vadd.f32 %v374, %v402
        %v414 = vadd.f32 %v375, %v402
        %v415 = vadd.f32 %v376, %v402
        %v416 = vadd.f32 %v377, %v402
        %v417 = vadd.f32 %v378, %v402
        %v418 = vadd.f32 %v379, %v402
        %v419 = vadd.f32 %v380, %v402
        %v420 = vadd.f32 %v381, %v402
        %v421 = vadd.f32 %v382, %v402
        %v422 = vadd.f32 %v383, %v402
        %v423 = vadd.f32 %v384, %v402
        %v424 = vadd.f32 %v385, %v402
        %v425 = vadd.f32 %v386, %v402
        %v426 = vadd.f32 %v387, %v402
        %v427 = vadd.f32 %v388, %v402
        %v428 = vadd.f32 %v389, %v402
        %v429 = vadd.f32 %v390, %v402
        %v430 = vadd.f32 %v391, %v402
        %v431 = vadd.f32 %v392, %v402
        %v432 = vadd.f32 %v393, %v402
        %v433 = vadd.f32 %v394, %v402
        %v434 = vadd.f32 %v395, %v402
        %v435 = vadd.f32 %v396, %v402
        %v436 = vmax.f32 %v404, 0.0
        %v437 = vmax.f32 %v405, 0.0
        %v438 = vmax.f32 %v406, 0.0
        %v439 = vmax.f32 %v407, 0.0
        %v440 = vmax.f32 %v408, 0.0
        %v441 = vmax.f32 %v409, 0.0
        %v442 = vmax.f32 %v410, 0.0
        %v443 = vmax.f32 %v411, 0.0
        %v444 = vmax.f32 %v412, 0.0
        %v445 = vmax.f32 %v413, 0.0
        %v446 = vmax.f32 %v414, 0.0
        %v447 = vmax.f32 %v415, 0.0
        %v448 = vmax.f32 %v416, 0.0
        %v449 = vmax.f32 %v417, 0.0
        %v450 = vmax.f32 %v418, 0.0
        %v451 = vmax.f32 %v419, 0.0
        %v452 = vmax.f32 %v420, 0.0
        %v453 = vmax.f32 %v421, 0.0
        %v454 = vmax.f32 %v422, 0.0
        %v455 = vmax.f32 %v423, 0.0
        %v456 = vmax.f32 %v424, 0.0
        %v457 = vmax.f32 %v425, 0.0
        %v458 = vmax.f32 %v426, 0.0
        %v459 = vmax.f32 %v427, 0.0
        %v460 = vmax.f32 %v428, 0.0
        %v461 = vmax.f32 %v429, 0.0
        %v462 = vmax.f32 %v430, 0.0
        %v463 = vmax.f32 %v431, 0.0
        %v464 = vmax.f32 %v432, 0.0
        %v465 = vmax.f32 %v433, 0.0
        %v466 = vmax.f32 %v434, 0.0
        %v467 = vmax.f32 %v435, 0.0
        %468 = vst [vmem:[#allocation2] sm:$0xff] 0.0
        %469 = vst [vmem:[#allocation2 + $0x8] sm:$0xff] 0.0
        %470 = vst [vmem:[#allocation2 + $0x10] sm:$0x3] 0.0
        %s471 = scalar_lea.vmem [#allocation2], 408
        %472 = vst [vmem:[%s471] sm:$0xff] 0.0
        %473 = vst [vmem:[%s471 + $0x8] sm:$0xff] 0.0
        %474 = vst [vmem:[%s471 + $0x10] sm:$0x3] 0.0
        %s475 = scalar_lea.vmem [#allocation2], 24
        %476 = vst [vmem:[%s475] sm:$0x1] 0.0
        %477 = vst [vmem:[%s475 + $0x18] sm:$0x1] 0.0
        %478 = vst [vmem:[%s475 + $0x30] sm:$0x1] 0.0
        %479 = vst [vmem:[%s475 + $0x48] sm:$0x1] 0.0
        %480 = vst [vmem:[%s475 + $0x60] sm:$0x1] 0.0
        %481 = vst [vmem:[%s475 + $0x78] sm:$0x1] 0.0
        %482 = vst [vmem:[%s475 + $0x90] sm:$0x1] 0.0
        %483 = vst [vmem:[%s475 + $0xa8] sm:$0x1] 0.0
        %484 = vst [vmem:[%s475 + $0xc0] sm:$0x1] 0.0
        %485 = vst [vmem:[%s475 + $0xd8] sm:$0x1] 0.0
        %486 = vst [vmem:[%s475 + $0xf0] sm:$0x1] 0.0
        %487 = vst [vmem:[%s475 + $0x108] sm:$0x1] 0.0
        %488 = vst [vmem:[%s475 + $0x120] sm:$0x1] 0.0
        %489 = vst [vmem:[%s475 + $0x138] sm:$0x1] 0.0
        %490 = vst [vmem:[%s475 + $0x150] sm:$0x1] 0.0
        %491 = vst [vmem:[%s475 + $0x168] sm:$0x1] 0.0
        %492 = vst [vmem:[%s475 + $0x11] sm:$0x1] 0.0
        %493 = vst [vmem:[%s475 + $0x29] sm:$0x1] 0.0
        %494 = vst [vmem:[%s475 + $0x41] sm:$0x1] 0.0
        %495 = vst [vmem:[%s475 + $0x59] sm:$0x1] 0.0
        %496 = vst [vmem:[%s475 + $0x71] sm:$0x1] 0.0
        %497 = vst [vmem:[%s475 + $0x89] sm:$0x1] 0.0
        %498 = vst [vmem:[%s475 + $0xa1] sm:$0x1] 0.0
        %499 = vst [vmem:[%s475 + $0xb9] sm:$0x1] 0.0
        %500 = vst [vmem:[%s475 + $0xd1] sm:$0x1] 0.0
        %501 = vst [vmem:[%s475 + $0xe9] sm:$0x1] 0.0
        %502 = vst [vmem:[%s475 + $0x101] sm:$0x1] 0.0
        %503 = vst [vmem:[%s475 + $0x119] sm:$0x1] 0.0
        %504 = vst [vmem:[%s475 + $0x131] sm:$0x1] 0.0
        %505 = vst [vmem:[%s475 + $0x149] sm:$0x1] 0.0
        %506 = vst [vmem:[%s475 + $0x161] sm:$0x1] 0.0
        %507 = vst [vmem:[%s475 + $0x179] sm:$0x1] 0.0
        %508 = vst [vmem:[%s475 + $0x1] sm:$0xff] %v436
        %509 = vst [vmem:[%s475 + $0x9] sm:$0xff] %v437
        %510 = vst [vmem:[%s475 + $0x19] sm:$0xff] %v438
        %511 = vst [vmem:[%s475 + $0x21] sm:$0xff] %v439
        %512 = vst [vmem:[%s475 + $0x31] sm:$0xff] %v440
        %513 = vst [vmem:[%s475 + $0x39] sm:$0xff] %v441
        %514 = vst [vmem:[%s475 + $0x49] sm:$0xff] %v442
        %515 = vst [vmem:[%s475 + $0x51] sm:$0xff] %v443
        %516 = vst [vmem:[%s475 + $0x61] sm:$0xff] %v444
        %517 = vst [vmem:[%s475 + $0x69] sm:$0xff] %v445
        %518 = vst [vmem:[%s475 + $0x79] sm:$0xff] %v446
        %519 = vst [vmem:[%s475 + $0x81] sm:$0xff] %v447
        %520 = vst [vmem:[%s475 + $0x91] sm:$0xff] %v448
        %521 = vst [vmem:[%s475 + $0x99] sm:$0xff] %v449
        %522 = vst [vmem:[%s475 + $0xa9] sm:$0xff] %v450
        %523 = vst [vmem:[%s475 + $0xb1] sm:$0xff] %v451
        %524 = vst [vmem:[%s475 + $0xc1] sm:$0xff] %v452
        %525 = vst [vmem:[%s475 + $0xc9] sm:$0xff] %v453
        %526 = vst [vmem:[%s475 + $0xd9] sm:$0xff] %v454
        %527 = vst [vmem:[%s475 + $0xe1] sm:$0xff] %v455
        %528 = vst [vmem:[%s475 + $0xf1] sm:$0xff] %v456
        %529 = vst [vmem:[%s475 + $0xf9] sm:$0xff] %v457
        %530 = vst [vmem:[%s475 + $0x109] sm:$0xff] %v458
        %531 = vst [vmem:[%s475 + $0x111] sm:$0xff] %v459
        %532 = vst [vmem:[%s475 + $0x121] sm:$0xff] %v460
        %533 = vst [vmem:[%s475 + $0x129] sm:$0xff] %v461
        %534 = vst [vmem:[%s475 + $0x139] sm:$0xff] %v462
        %535 = vst [vmem:[%s475 + $0x141] sm:$0xff] %v463
        %536 = vst [vmem:[%s475 + $0x151] sm:$0xff] %v464
        %537 = vst [vmem:[%s475 + $0x159] sm:$0xff] %v465
        %538 = vst [vmem:[%s475 + $0x169] sm:$0xff] %v466
        %539 = vst [vmem:[%s475 + $0x171] sm:$0xff] %v467
        %v540 = vld [vmem:[#allocation2] sm:$0xff]
        %v541 = vld [vmem:[#allocation2 + $0x8] sm:$0xff]
        %v542 = vld [vmem:[#allocation2 + $0x18] sm:$0xff]
        %v543 = vld [vmem:[#allocation2 + $0x20] sm:$0xff]
        %v544 = vld [vmem:[#allocation2 + $0x30] sm:$0xff]
        %v545 = vld [vmem:[#allocation2 + $0x38] sm:$0xff]
        %v546 = vld [vmem:[#allocation2 + $0x48] sm:$0xff]
        %v547 = vld [vmem:[#allocation2 + $0x50] sm:$0xff]
        %v548 = vld [vmem:[#allocation2 + $0x60] sm:$0xff]
        %v549 = vld [vmem:[#allocation2 + $0x68] sm:$0xff]
        %v550 = vld [vmem:[#allocation2 + $0x78] sm:$0xff]
        %v551 = vld [vmem:[#allocation2 + $0x80] sm:$0xff]
        %v552 = vld [vmem:[#allocation2 + $0x90] sm:$0xff]
        %v553 = vld [vmem:[#allocation2 + $0x98] sm:$0xff]
        %v554 = vld [vmem:[#allocation2 + $0xa8] sm:$0xff]
        %v555 = vld [vmem:[#allocation2 + $0xb0] sm:$0xff]
        %v556 = vld [vmem:[#allocation2 + $0xc0] sm:$0xff]
        %v557 = vld [vmem:[#allocation2 + $0xc8] sm:$0xff]
        %v558 = vld [vmem:[#allocation2 + $0xd8] sm:$0xff]
        %v559 = vld [vmem:[#allocation2 + $0xe0] sm:$0xff]
        %v560 = vld [vmem:[#allocation2 + $0xf0] sm:$0xff]
        %v561 = vld [vmem:[#allocation2 + $0xf8] sm:$0xff]
        %v562 = vld [vmem:[#allocation2 + $0x108] sm:$0xff]
        %v563 = vld [vmem:[#allocation2 + $0x110] sm:$0xff]
        %v564 = vld [vmem:[#allocation2 + $0x120] sm:$0xff]
        %v565 = vld [vmem:[#allocation2 + $0x128] sm:$0xff]
        %v566 = vld [vmem:[#allocation2 + $0x138] sm:$0xff]
        %v567 = vld [vmem:[#allocation2 + $0x140] sm:$0xff]
        %v568 = vld [vmem:[#allocation2 + $0x150] sm:$0xff]
        %v569 = vld [vmem:[#allocation2 + $0x158] sm:$0xff]
        %v570 = vld [vmem:[#allocation2 + $0x168] sm:$0xff]
        %v571 = vld [vmem:[#allocation2 + $0x170] sm:$0xff]
        %v572 = vld [vmem:[#allocation6] sm:$0xff]
        %v573 = vld [vmem:[#allocation6 + $0x8] sm:$0xff]
        %v574 = vld [vmem:[#allocation6 + $0x10] sm:$0xff]
        %v575 = vld [vmem:[#allocation6 + $0x18] sm:$0xff]
        %v576 = vld [vmem:[#allocation6 + $0x20] sm:$0xff]
        %v577 = vld [vmem:[#allocation6 + $0x28] sm:$0xff]
        %v578 = vld [vmem:[#allocation6 + $0x30] sm:$0xff]
        %v579 = vld [vmem:[#allocation6 + $0x38] sm:$0xff]
        %v580 = vld [vmem:[#allocation6 + $0x40] sm:$0xff]
        %v581 = vld [vmem:[#allocation6 + $0x48] sm:$0xff]
        %v582 = vld [vmem:[#allocation6 + $0x50] sm:$0xff]
        %v583 = vld [vmem:[#allocation6 + $0x58] sm:$0xff]
        %v584 = vld [vmem:[#allocation6 + $0x60] sm:$0xff]
        %v585 = vld [vmem:[#allocation6 + $0x68] sm:$0xff]
        %v586 = vld [vmem:[#allocation6 + $0x70] sm:$0xff]
        %v587 = vld [vmem:[#allocation6 + $0x78] sm:$0xff]
        %v588 = vld [vmem:[#allocation2 + $0x1] sm:$0xff]
        %v589 = vld [vmem:[#allocation2 + $0x9] sm:$0xff]
        %v590 = vld [vmem:[#allocation2 + $0x19] sm:$0xff]
        %v591 = vld [vmem:[#allocation2 + $0x21] sm:$0xff]
        %v592 = vld [vmem:[#allocation2 + $0x31] sm:$0xff]
        %v593 = vld [vmem:[#allocation2 + $0x39] sm:$0xff]
        %v594 = vld [vmem:[#allocation2 + $0x49] sm:$0xff]
        %v595 = vld [vmem:[#allocation2 + $0x51] sm:$0xff]
        %v596 = vld [vmem:[#allocation2 + $0x61] sm:$0xff]
        %v597 = vld [vmem:[#allocation2 + $0x69] sm:$0xff]
        %v598 = vld [vmem:[#allocation2 + $0x79] sm:$0xff]
        %v599 = vld [vmem:[#allocation2 + $0x81] sm:$0xff]
        %v600 = vld [vmem:[#allocation2 + $0x91] sm:$0xff]
        %v601 = vld [vmem:[#allocation2 + $0x99] sm:$0xff]
        %v602 = vld [vmem:[#allocation2 + $0xa9] sm:$0xff]
        %v603 = vld [vmem:[#allocation2 + $0xb1] sm:$0xff]
        %v604 = vld [vmem:[#allocation2 + $0xc1] sm:$0xff]
        %v605 = vld [vmem:[#allocation2 + $0xc9] sm:$0xff]
        %v606 = vld [vmem:[#allocation2 + $0xd9] sm:$0xff]
        %v607 = vld [vmem:[#allocation2 + $0xe1] sm:$0xff]
        %v608 = vld [vmem:[#allocation2 + $0xf1] sm:$0xff]
        %v609 = vld [vmem:[#allocation2 + $0xf9] sm:$0xff]
        %v610 = vld [vmem:[#allocation2 + $0x109] sm:$0xff]
        %v611 = vld [vmem:[#allocation2 + $0x111] sm:$0xff]
        %v612 = vld [vmem:[#allocation2 + $0x121] sm:$0xff]
        %v613 = vld [vmem:[#allocation2 + $0x129] sm:$0xff]
        %v614 = vld [vmem:[#allocation2 + $0x139] sm:$0xff]
        %v615 = vld [vmem:[#allocation2 + $0x141] sm:$0xff]
        %v616 = vld [vmem:[#allocation2 + $0x151] sm:$0xff]
        %v617 = vld [vmem:[#allocation2 + $0x159] sm:$0xff]
        %v618 = vld [vmem:[#allocation2 + $0x169] sm:$0xff]
        %v619 = vld [vmem:[#allocation2 + $0x171] sm:$0xff]
        %v620 = vld [vmem:[#allocation6 + $0x80] sm:$0xff]
        %v621 = vld [vmem:[#allocation6 + $0x88] sm:$0xff]
        %v622 = vld [vmem:[#allocation6 + $0x90] sm:$0xff]
        %v623 = vld [vmem:[#allocation6 + $0x98] sm:$0xff]
        %v624 = vld [vmem:[#allocation6 + $0xa0] sm:$0xff]
        %v625 = vld [vmem:[#allocation6 + $0xa8] sm:$0xff]
        %v626 = vld [vmem:[#allocation6 + $0xb0] sm:$0xff]
        %v627 = vld [vmem:[#allocation6 + $0xb8] sm:$0xff]
        %v628 = vld [vmem:[#allocation6 + $0xc0] sm:$0xff]
        %v629 = vld [vmem:[#allocation6 + $0xc8] sm:$0xff]
        %v630 = vld [vmem:[#allocation6 + $0xd0] sm:$0xff]
        %v631 = vld [vmem:[#allocation6 + $0xd8] sm:$0xff]
        %v632 = vld [vmem:[#allocation6 + $0xe0] sm:$0xff]
        %v633 = vld [vmem:[#allocation6 + $0xe8] sm:$0xff]
        %v634 = vld [vmem:[#allocation6 + $0xf0] sm:$0xff]
        %v635 = vld [vmem:[#allocation6 + $0xf8] sm:$0xff]
        %636 = vmatprep.subr.mxu0 0.0
        %637 = vmatpush1.msra.mxu0 %v620
        %638 = vmatprep.subr.mxu0 0.0
        %639 = vmatpush1.msra.mxu0 %v621
        %640 = vmatprep.subr.mxu0 0.0
        %641 = vmatpush1.msra.mxu0 %v622
        %642 = vmatprep.subr.mxu0 0.0
        %643 = vmatpush1.msra.mxu0 %v623
        %644 = vmatprep.subr.mxu0 0.0
        %645 = vmatpush1.msra.mxu0 %v624
        %646 = vmatprep.subr.mxu0 0.0
        %647 = vmatpush1.msra.mxu0 %v625
        %648 = vmatprep.subr.mxu0 0.0
        %649 = vmatpush1.msra.mxu0 %v626
        %650 = vmatprep.subr.mxu0 0.0
        %651 = vmatpush1.msra.mxu0 %v627
        %652 = vmatprep.subr.mxu0 0.0
        %653 = vmatpush1.msra.mxu0 %v628
        %654 = vmatprep.subr.mxu0 0.0
        %655 = vmatpush1.msra.mxu0 %v629
        %656 = vmatprep.subr.mxu0 0.0
        %657 = vmatpush1.msra.mxu0 %v630
        %658 = vmatprep.subr.mxu0 0.0
        %659 = vmatpush1.msra.mxu0 %v631
        %660 = vmatprep.subr.mxu0 0.0
        %661 = vmatpush1.msra.mxu0 %v632
        %662 = vmatprep.subr.mxu0 0.0
        %663 = vmatpush1.msra.mxu0 %v633
        %664 = vmatprep.subr.mxu0 0.0
        %665 = vmatpush1.msra.mxu0 %v634
        %666 = vmatprep.subr.mxu0 0.0
        %667 = vmatpush1.msra.mxu0 %v635
        %668 = vmatprep.subr.mxu0 0.0
        %669 = vmatpush1.msra.mxu0 0.0
        %670 = vmatprep.subr.mxu0 0.0
        %671 = vmatpush1.msra.mxu0 0.0
        %672 = vmatprep.subr.mxu0 0.0
        %673 = vmatpush1.msra.mxu0 0.0
        %674 = vmatprep.subr.mxu0 0.0
        %675 = vmatpush1.msra.mxu0 0.0
        %676 = vmatprep.subr.mxu0 0.0
        %677 = vmatpush1.msra.mxu0 0.0
        %678 = vmatprep.subr.mxu0 0.0
        %679 = vmatpush1.msra.mxu0 0.0
        %680 = vmatprep.subr.mxu0 0.0
        %681 = vmatpush1.msra.mxu0 0.0
        %682 = vmatprep.subr.mxu0 0.0
        %683 = vmatpush1.msra.mxu0 0.0
        %684 = vmatprep.subr.mxu0 0.0
        %685 = vmatpush1.msra.mxu0 0.0
        %686 = vmatprep.subr.mxu0 0.0
        %687 = vmatpush1.msra.mxu0 0.0
        %688 = vmatprep.subr.mxu0 0.0
        %689 = vmatpush1.msra.mxu0 0.0
        %690 = vmatprep.subr.mxu0 0.0
        %691 = vmatpush1.msra.mxu0 0.0
        %692 = vmatprep.subr.mxu0 0.0
        %693 = vmatpush1.msra.mxu0 0.0
        %694 = vmatprep.subr.mxu0 0.0
        %695 = vmatpush1.msra.mxu0 0.0
        %696 = vmatprep.subr.mxu0 0.0
        %697 = vmatpush1.msra.mxu0 0.0
        %698 = vmatprep.subr.mxu0 0.0
        %699 = vmatpush1.msra.mxu0 0.0
        %700 = vmatprep.mubr.f32.mxu0 0.0
        %701 = vmatmul.mubr.f32.gmra.mrb[0].mxu0 %v588
        %v702 = vpop.f32.mrb[0].mxu0
        %v703 = vadd.f32 0.0, %v702
        %v704 = vpop.f32.mrb[0].mxu0
        %705 = vmatprep.mubr.f32.mxu0 0.0
        %706 = vmatmul.mubr.f32.gmra.mrb[0].mxu0 %v589
        %v707 = vpop.f32.mrb[0].mxu0
        %v708 = vadd.f32 0.0, %v707
        %v709 = vpop.f32.mrb[0].mxu0
        %710 = vmatprep.mubr.f32.mxu0 0.0
        %711 = vmatmul.mubr.f32.gmra.mrb[0].mxu0 %v590
        %v712 = vpop.f32.mrb[0].mxu0
        %v713 = vadd.f32 0.0, %v712
        %v714 = vpop.f32.mrb[0].mxu0
        %715 = vmatprep.mubr.f32.mxu0 0.0
        %716 = vmatmul.mubr.f32.gmra.mrb[0].mxu0 %v591
        %v717 = vpop.f32.mrb[0].mxu0
        %v718 = vadd.f32 0.0, %v717
        %v719 = vpop.f32.mrb[0].mxu0
        %720 = vmatprep.mubr.f32.mxu0 0.0
        %721 = vmatmul.mubr.f32.gmra.mrb[0].mxu0 %v592
        %v722 = vpop.f32.mrb[0].mxu0
        %v723 = vadd.f32 0.0, %v722
        %v724 = vpop.f32.mrb[0].mxu0
        %725 = vmatprep.mubr.f32.mxu0 0.0
        %726 = vmatmul.mubr.f32.gmra.mrb[0].mxu0 %v593
        %v727 = vpop.f32.mrb[0].mxu0
        %v728 = vadd.f32 0.0, %v727
        %v729 = vpop.f32.mrb[0].mxu0
        %730 = vmatprep.mubr.f32.mxu0 0.0
        %731 = vmatmul.mubr.f32.gmra.mrb[0].mxu0 %v594
        %v732 = vpop.f32.mrb[0].mxu0
        %v733 = vadd.f32 0.0, %v732
        %v734 = vpop.f32.mrb[0].mxu0
        %735 = vmatprep.mubr.f32.mxu0 0.0
        %736 = vmatmul.mubr.f32.gmra.mrb[0].mxu0 %v595
        %v737 = vpop.f32.mrb[0].mxu0
        %v738 = vadd.f32 0.0, %v737
        %v739 = vpop.f32.mrb[0].mxu0
        %740 = vmatprep.mubr.f32.mxu0 0.0
        %741 = vmatmul.mubr.f32.gmra.mrb[0].mxu0 %v596
        %v742 = vpop.f32.mrb[0].mxu0
        %v743 = vadd.f32 0.0, %v742
        %v744 = vpop.f32.mrb[0].mxu0
        %745 = vmatprep.mubr.f32.mxu0 0.0
        %746 = vmatmul.mubr.f32.gmra.mrb[0].mxu0 %v597
        %v747 = vpop.f32.mrb[0].mxu0
        %v748 = vadd.f32 0.0, %v747
        %v749 = vpop.f32.mrb[0].mxu0
        %750 = vmatprep.mubr.f32.mxu0 0.0
        %751 = vmatmul.mubr.f32.gmra.mrb[0].mxu0 %v598
        %v752 = vpop.f32.mrb[0].mxu0
        %v753 = vadd.f32 0.0, %v752
        %v754 = vpop.f32.mrb[0].mxu0
        %755 = vmatprep.mubr.f32.mxu0 0.0
        %756 = vmatmul.mubr.f32.gmra.mrb[0].mxu0 %v599
        %v757 = vpop.f32.mrb[0].mxu0
        %v758 = vadd.f32 0.0, %v757
        %v759 = vpop.f32.mrb[0].mxu0
        %760 = vmatprep.mubr.f32.mxu0 0.0
        %761 = vmatmul.mubr.f32.gmra.mrb[0].mxu0 %v600
        %v762 = vpop.f32.mrb[0].mxu0
        %v763 = vadd.f32 0.0, %v762
        %v764 = vpop.f32.mrb[0].mxu0
        %765 = vmatprep.mubr.f32.mxu0 0.0
        %766 = vmatmul.mubr.f32.gmra.mrb[0].mxu0 %v601
        %v767 = vpop.f32.mrb[0].mxu0
        %v768 = vadd.f32 0.0, %v767
        %v769 = vpop.f32.mrb[0].mxu0
        %770 = vmatprep.mubr.f32.mxu0 0.0
        %771 = vmatmul.mubr.f32.gmra.mrb[0].mxu0 %v602
        %v772 = vpop.f32.mrb[0].mxu0
        %v773 = vadd.f32 0.0, %v772
        %v774 = vpop.f32.mrb[0].mxu0
        %775 = vmatprep.mubr.f32.mxu0 0.0
        %776 = vmatmul.mubr.f32.gmra.mrb[0].mxu0 %v603
        %v777 = vpop.f32.mrb[0].mxu0
        %v778 = vadd.f32 0.0, %v777
        %v779 = vpop.f32.mrb[0].mxu0
        %780 = vmatprep.mubr.f32.mxu0 0.0
        %781 = vmatmul.mubr.f32.gmra.mrb[0].mxu0 %v604
        %v782 = vpop.f32.mrb[0].mxu0
        %v783 = vadd.f32 0.0, %v782
        %v784 = vpop.f32.mrb[0].mxu0
        %785 = vmatprep.mubr.f32.mxu0 0.0
        %786 = vmatmul.mubr.f32.gmra.mrb[0].mxu0 %v605
        %v787 = vpop.f32.mrb[0].mxu0
        %v788 = vadd.f32 0.0, %v787
        %v789 = vpop.f32.mrb[0].mxu0
        %790 = vmatprep.mubr.f32.mxu0 0.0
        %791 = vmatmul.mubr.f32.gmra.mrb[0].mxu0 %v606
        %v792 = vpop.f32.mrb[0].mxu0
        %v793 = vadd.f32 0.0, %v792
        %v794 = vpop.f32.mrb[0].mxu0
        %795 = vmatprep.mubr.f32.mxu0 0.0
        %796 = vmatmul.mubr.f32.gmra.mrb[0].mxu0 %v607
        %v797 = vpop.f32.mrb[0].mxu0
        %v798 = vadd.f32 0.0, %v797
        %v799 = vpop.f32.mrb[0].mxu0
        %800 = vmatprep.mubr.f32.mxu0 0.0
        %801 = vmatmul.mubr.f32.gmra.mrb[0].mxu0 %v608
        %v802 = vpop.f32.mrb[0].mxu0
        %v803 = vadd.f32 0.0, %v802
        %v804 = vpop.f32.mrb[0].mxu0
        %805 = vmatprep.mubr.f32.mxu0 0.0
        %806 = vmatmul.mubr.f32.gmra.mrb[0].mxu0 %v609
        %v807 = vpop.f32.mrb[0].mxu0
        %v808 = vadd.f32 0.0, %v807
        %v809 = vpop.f32.mrb[0].mxu0
        %810 = vmatprep.mubr.f32.mxu0 0.0
        %811 = vmatmul.mubr.f32.gmra.mrb[0].mxu0 %v610
        %v812 = vpop.f32.mrb[0].mxu0
        %v813 = vadd.f32 0.0, %v812
        %v814 = vpop.f32.mrb[0].mxu0
        %815 = vmatprep.mubr.f32.mxu0 0.0
        %816 = vmatmul.mubr.f32.gmra.mrb[0].mxu0 %v611
        %v817 = vpop.f32.mrb[0].mxu0
        %v818 = vadd.f32 0.0, %v817
        %v819 = vpop.f32.mrb[0].mxu0
        %820 = vmatprep.mubr.f32.mxu0 0.0
        %821 = vmatmul.mubr.f32.gmra.mrb[0].mxu0 %v612
        %v822 = vpop.f32.mrb[0].mxu0
        %v823 = vadd.f32 0.0, %v822
        %v824 = vpop.f32.mrb[0].mxu0
        %825 = vmatprep.mubr.f32.mxu0 0.0
        %826 = vmatmul.mubr.f32.gmra.mrb[0].mxu0 %v613
        %v827 = vpop.f32.mrb[0].mxu0
        %v828 = vadd.f32 0.0, %v827
        %v829 = vpop.f32.mrb[0].mxu0
        %830 = vmatprep.mubr.f32.mxu0 0.0
        %831 = vmatmul.mubr.f32.gmra.mrb[0].mxu0 %v614
        %v832 = vpop.f32.mrb[0].mxu0
        %v833 = vadd.f32 0.0, %v832
        %v834 = vpop.f32.mrb[0].mxu0
        %835 = vmatprep.mubr.f32.mxu0 0.0
        %836 = vmatmul.mubr.f32.gmra.mrb[0].mxu0 %v615
        %v837 = vpop.f32.mrb[0].mxu0
        %v838 = vadd.f32 0.0, %v837
        %v839 = vpop.f32.mrb[0].mxu0
        %840 = vmatprep.mubr.f32.mxu0 0.0
        %841 = vmatmul.mubr.f32.gmra.mrb[0].mxu0 %v616
        %v842 = vpop.f32.mrb[0].mxu0
        %v843 = vadd.f32 0.0, %v842
        %v844 = vpop.f32.mrb[0].mxu0
        %845 = vmatprep.mubr.f32.mxu0 0.0
        %846 = vmatmul.mubr.f32.gmra.mrb[0].mxu0 %v617
        %v847 = vpop.f32.mrb[0].mxu0
        %v848 = vadd.f32 0.0, %v847
        %v849 = vpop.f32.mrb[0].mxu0
        %850 = vmatprep.mubr.f32.mxu0 0.0
        %851 = vmatmul.mubr.f32.gmra.mrb[0].mxu0 %v618
        %v852 = vpop.f32.mrb[0].mxu0
        %v853 = vadd.f32 0.0, %v852
        %v854 = vpop.f32.mrb[0].mxu0
        %855 = vmatprep.mubr.f32.mxu0 0.0
        %856 = vmatmul.mubr.f32.gmra.mrb[0].mxu0 %v619
        %v857 = vpop.f32.mrb[0].mxu0
        %v858 = vadd.f32 0.0, %v857
        %v859 = vpop.f32.mrb[0].mxu0
        %860 = vdwg.mxu0
        %861 = vmatprep.subr.mxu0 0.0
        %862 = vmatpush1.msra.mxu0 %v572
        %863 = vmatprep.subr.mxu0 0.0
        %864 = vmatpush1.msra.mxu0 %v573
        %865 = vmatprep.subr.mxu0 0.0
        %866 = vmatpush1.msra.mxu0 %v574
        %867 = vmatprep.subr.mxu0 0.0
        %868 = vmatpush1.msra.mxu0 %v575
        %869 = vmatprep.subr.mxu0 0.0
        %870 = vmatpush1.msra.mxu0 %v576
        %871 = vmatprep.subr.mxu0 0.0
        %872 = vmatpush1.msra.mxu0 %v577
        %873 = vmatprep.subr.mxu0 0.0
        %874 = vmatpush1.msra.mxu0 %v578
        %875 = vmatprep.subr.mxu0 0.0
        %876 = vmatpush1.msra.mxu0 %v579
        %877 = vmatprep.subr.mxu0 0.0
        %878 = vmatpush1.msra.mxu0 %v580
        %879 = vmatprep.subr.mxu0 0.0
        %880 = vmatpush1.msra.mxu0 %v581
        %881 = vmatprep.subr.mxu0 0.0
        %882 = vmatpush1.msra.mxu0 %v582
        %883 = vmatprep.subr.mxu0 0.0
        %884 = vmatpush1.msra.mxu0 %v583
        %885 = vmatprep.subr.mxu0 0.0
        %886 = vmatpush1.msra.mxu0 %v584
        %887 = vmatprep.subr.mxu0 0.0
        %888 = vmatpush1.msra.mxu0 %v585
        %889 = vmatprep.subr.mxu0 0.0
        %890 = vmatpush1.msra.mxu0 %v586
        %891 = vmatprep.subr.mxu0 0.0
        %892 = vmatpush1.msra.mxu0 %v587
        %893 = vmatprep.subr.mxu0 0.0
        %894 = vmatpush1.msra.mxu0 0.0
        %895 = vmatprep.subr.mxu0 0.0
        %896 = vmatpush1.msra.mxu0 0.0
        %897 = vmatprep.subr.mxu0 0.0
        %898 = vmatpush1.msra.mxu0 0.0
        %899 = vmatprep.subr.mxu0 0.0
        %900 = vmatpush1.msra.mxu0 0.0
        %901 = vmatprep.subr.mxu0 0.0
        %902 = vmatpush1.msra.mxu0 0.0
        %903 = vmatprep.subr.mxu0 0.0
        %904 = vmatpush1.msra.mxu0 0.0
        %905 = vmatprep.subr.mxu0 0.0
        %906 = vmatpush1.msra.mxu0 0.0
        %907 = vmatprep.subr.mxu0 0.0
        %908 = vmatpush1.msra.mxu0 0.0
        %909 = vmatprep.subr.mxu0 0.0
        %910 = vmatpush1.msra.mxu0 0.0
        %911 = vmatprep.subr.mxu0 0.0
        %912 = vmatpush1.msra.mxu0 0.0
        %913 = vmatprep.subr.mxu0 0.0
        %914 = vmatpush1.msra.mxu0 0.0
        %915 = vmatprep.subr.mxu0 0.0
        %916 = vmatpush1.msra.mxu0 0.0
        %917 = vmatprep.subr.mxu0 0.0
        %918 = vmatpush1.msra.mxu0 0.0
        %919 = vmatprep.subr.mxu0 0.0
        %920 = vmatpush1.msra.mxu0 0.0
        %921 = vmatprep.subr.mxu0 0.0
        %922 = vmatpush1.msra.mxu0 0.0
        %923 = vmatprep.subr.mxu0 0.0
        %924 = vmatpush1.msra.mxu0 0.0
        %925 = vmatprep.mubr.f32.mxu0 0.0
        %926 = vmatmul.mubr.f32.gmra.mrb[0].mxu0 %v540
        %v927 = vpop.f32.mrb[0].mxu0
        %v928 = vadd.f32 %v703, %v927
        %v929 = vpop.f32.mrb[0].mxu0
        %930 = vmatprep.mubr.f32.mxu0 0.0
        %931 = vmatmul.mubr.f32.gmra.mrb[0].mxu0 %v541
        %v932 = vpop.f32.mrb[0].mxu0
        %v933 = vadd.f32 %v708, %v932
        %v934 = vpop.f32.mrb[0].mxu0
        %935 = vmatprep.mubr.f32.mxu0 0.0
        %936 = vmatmul.mubr.f32.gmra.mrb[0].mxu0 %v542
        %v937 = vpop.f32.mrb[0].mxu0
        %v938 = vadd.f32 %v713, %v937
        %v939 = vpop.f32.mrb[0].mxu0
        %940 = vmatprep.mubr.f32.mxu0 0.0
        %941 = vmatmul.mubr.f32.gmra.mrb[0].mxu0 %v543
        %v942 = vpop.f32.mrb[0].mxu0
        %v943 = vadd.f32 %v718, %v942
        %v944 = vpop.f32.mrb[0].mxu0
        %945 = vmatprep.mubr.f32.mxu0 0.0
        %946 = vmatmul.mubr.f32.gmra.mrb[0].mxu0 %v544
        %v947 = vpop.f32.mrb[0].mxu0
        %v948 = vadd.f32 %v723, %v947
        %v949 = vpop.f32.mrb[0].mxu0
        %950 = vmatprep.mubr.f32.mxu0 0.0
        %951 = vmatmul.mubr.f32.gmra.mrb[0].mxu0 %v545
        %v952 = vpop.f32.mrb[0].mxu0
        %v953 = vadd.f32 %v728, %v952
        %v954 = vpop.f32.mrb[0].mxu0
        %955 = vmatprep.mubr.f32.mxu0 0.0
        %956 = vmatmul.mubr.f32.gmra.mrb[0].mxu0 %v546
        %v957 = vpop.f32.mrb[0].mxu0
        %v958 = vadd.f32 %v733, %v957
        %v959 = vpop.f32.mrb[0].mxu0
        %960 = vmatprep.mubr.f32.mxu0 0.0
        %961 = vmatmul.mubr.f32.gmra.mrb[0].mxu0 %v547
        %v962 = vpop.f32.mrb[0].mxu0
        %v963 = vadd.f32 %v738, %v962
        %v964 = vpop.f32.mrb[0].mxu0
        %965 = vmatprep.mubr.f32.mxu0 0.0
        %966 = vmatmul.mubr.f32.gmra.mrb[0].mxu0 %v548
        %v967 = vpop.f32.mrb[0].mxu0
        %v968 = vadd.f32 %v743, %v967
        %v969 = vpop.f32.mrb[0].mxu0
        %970 = vmatprep.mubr.f32.mxu0 0.0
        %971 = vmatmul.mubr.f32.gmra.mrb[0].mxu0 %v549
        %v972 = vpop.f32.mrb[0].mxu0
        %v973 = vadd.f32 %v748, %v972
        %v974 = vpop.f32.mrb[0].mxu0
        %975 = vmatprep.mubr.f32.mxu0 0.0
        %976 = vmatmul.mubr.f32.gmra.mrb[0].mxu0 %v550
        %v977 = vpop.f32.mrb[0].mxu0
        %v978 = vadd.f32 %v753, %v977
        %v979 = vpop.f32.mrb[0].mxu0
        %980 = vmatprep.mubr.f32.mxu0 0.0
        %981 = vmatmul.mubr.f32.gmra.mrb[0].mxu0 %v551
        %v982 = vpop.f32.mrb[0].mxu0
        %v983 = vadd.f32 %v758, %v982
        %v984 = vpop.f32.mrb[0].mxu0
        %985 = vmatprep.mubr.f32.mxu0 0.0
        %986 = vmatmul.mubr.f32.gmra.mrb[0].mxu0 %v552
        %v987 = vpop.f32.mrb[0].mxu0
        %v988 = vadd.f32 %v763, %v987
        %v989 = vpop.f32.mrb[0].mxu0
        %990 = vmatprep.mubr.f32.mxu0 0.0
        %991 = vmatmul.mubr.f32.gmra.mrb[0].mxu0 %v553
        %v992 = vpop.f32.mrb[0].mxu0
        %v993 = vadd.f32 %v768, %v992
        %v994 = vpop.f32.mrb[0].mxu0
        %995 = vmatprep.mubr.f32.mxu0 0.0
        %996 = vmatmul.mubr.f32.gmra.mrb[0].mxu0 %v554
        %v997 = vpop.f32.mrb[0].mxu0
        %v998 = vadd.f32 %v773, %v997
        %v999 = vpop.f32.mrb[0].mxu0
        %1000 = vmatprep.mubr.f32.mxu0 0.0
        %1001 = vmatmul.mubr.f32.gmra.mrb[0].mxu0 %v555
        %v1002 = vpop.f32.mrb[0].mxu0
        %v1003 = vadd.f32 %v778, %v1002
        %v1004 = vpop.f32.mrb[0].mxu0
        %1005 = vmatprep.mubr.f32.mxu0 0.0
        %1006 = vmatmul.mubr.f32.gmra.mrb[0].mxu0 %v556
        %v1007 = vpop.f32.mrb[0].mxu0
        %v1008 = vadd.f32 %v783, %v1007
        %v1009 = vpop.f32.mrb[0].mxu0
        %1010 = vmatprep.mubr.f32.mxu0 0.0
        %1011 = vmatmul.mubr.f32.gmra.mrb[0].mxu0 %v557
        %v1012 = vpop.f32.mrb[0].mxu0
        %v1013 = vadd.f32 %v788, %v1012
        %v1014 = vpop.f32.mrb[0].mxu0
        %1015 = vmatprep.mubr.f32.mxu0 0.0
        %1016 = vmatmul.mubr.f32.gmra.mrb[0].mxu0 %v558
        %v1017 = vpop.f32.mrb[0].mxu0
        %v1018 = vadd.f32 %v793, %v1017
        %v1019 = vpop.f32.mrb[0].mxu0
        %1020 = vmatprep.mubr.f32.mxu0 0.0
        %1021 = vmatmul.mubr.f32.gmra.mrb[0].mxu0 %v559
        %v1022 = vpop.f32.mrb[0].mxu0
        %v1023 = vadd.f32 %v798, %v1022
        %v1024 = vpop.f32.mrb[0].mxu0
        %1025 = vmatprep.mubr.f32.mxu0 0.0
        %1026 = vmatmul.mubr.f32.gmra.mrb[0].mxu0 %v560
        %v1027 = vpop.f32.mrb[0].mxu0
        %v1028 = vadd.f32 %v803, %v1027
        %v1029 = vpop.f32.mrb[0].mxu0
        %1030 = vmatprep.mubr.f32.mxu0 0.0
        %1031 = vmatmul.mubr.f32.gmra.mrb[0].mxu0 %v561
        %v1032 = vpop.f32.mrb[0].mxu0
        %v1033 = vadd.f32 %v808, %v1032
        %v1034 = vpop.f32.mrb[0].mxu0
        %1035 = vmatprep.mubr.f32.mxu0 0.0
        %1036 = vmatmul.mubr.f32.gmra.mrb[0].mxu0 %v562
        %v1037 = vpop.f32.mrb[0].mxu0
        %v1038 = vadd.f32 %v813, %v1037
        %v1039 = vpop.f32.mrb[0].mxu0
        %1040 = vmatprep.mubr.f32.mxu0 0.0
        %1041 = vmatmul.mubr.f32.gmra.mrb[0].mxu0 %v563
        %v1042 = vpop.f32.mrb[0].mxu0
        %v1043 = vadd.f32 %v818, %v1042
        %v1044 = vpop.f32.mrb[0].mxu0
        %1045 = vmatprep.mubr.f32.mxu0 0.0
        %1046 = vmatmul.mubr.f32.gmra.mrb[0].mxu0 %v564
        %v1047 = vpop.f32.mrb[0].mxu0
        %v1048 = vadd.f32 %v823, %v1047
        %v1049 = vpop.f32.mrb[0].mxu0
        %1050 = vmatprep.mubr.f32.mxu0 0.0
        %1051 = vmatmul.mubr.f32.gmra.mrb[0].mxu0 %v565
        %v1052 = vpop.f32.mrb[0].mxu0
        %v1053 = vadd.f32 %v828, %v1052
        %v1054 = vpop.f32.mrb[0].mxu0
        %1055 = vmatprep.mubr.f32.mxu0 0.0
        %1056 = vmatmul.mubr.f32.gmra.mrb[0].mxu0 %v566
        %v1057 = vpop.f32.mrb[0].mxu0
        %v1058 = vadd.f32 %v833, %v1057
        %v1059 = vpop.f32.mrb[0].mxu0
        %1060 = vmatprep.mubr.f32.mxu0 0.0
        %1061 = vmatmul.mubr.f32.gmra.mrb[0].mxu0 %v567
        %v1062 = vpop.f32.mrb[0].mxu0
        %v1063 = vadd.f32 %v838, %v1062
        %v1064 = vpop.f32.mrb[0].mxu0
        %1065 = vmatprep.mubr.f32.mxu0 0.0
        %1066 = vmatmul.mubr.f32.gmra.mrb[0].mxu0 %v568
        %v1067 = vpop.f32.mrb[0].mxu0
        %v1068 = vadd.f32 %v843, %v1067
        %v1069 = vpop.f32.mrb[0].mxu0
        %1070 = vmatprep.mubr.f32.mxu0 0.0
        %1071 = vmatmul.mubr.f32.gmra.mrb[0].mxu0 %v569
        %v1072 = vpop.f32.mrb[0].mxu0
        %v1073 = vadd.f32 %v848, %v1072
        %v1074 = vpop.f32.mrb[0].mxu0
        %1075 = vmatprep.mubr.f32.mxu0 0.0
        %1076 = vmatmul.mubr.f32.gmra.mrb[0].mxu0 %v570
        %v1077 = vpop.f32.mrb[0].mxu0
        %v1078 = vadd.f32 %v853, %v1077
        %v1079 = vpop.f32.mrb[0].mxu0
        %1080 = vmatprep.mubr.f32.mxu0 0.0
        %1081 = vmatmul.mubr.f32.gmra.mrb[0].mxu0 %v571
        %v1082 = vpop.f32.mrb[0].mxu0
        %v1083 = vadd.f32 %v858, %v1082
        %v1084 = vpop.f32.mrb[0].mxu0
        %1085 = vdwg.mxu0
        %v1086 = vld [vmem:[#allocation2 + $0x2] sm:$0xff]
        %v1087 = vld [vmem:[#allocation2 + $0xa] sm:$0xff]
        %v1088 = vld [vmem:[#allocation2 + $0x1a] sm:$0xff]
        %v1089 = vld [vmem:[#allocation2 + $0x22] sm:$0xff]
        %v1090 = vld [vmem:[#allocation2 + $0x32] sm:$0xff]
        %v1091 = vld [vmem:[#allocation2 + $0x3a] sm:$0xff]
        %v1092 = vld [vmem:[#allocation2 + $0x4a] sm:$0xff]
        %v1093 = vld [vmem:[#allocation2 + $0x52] sm:$0xff]
        %v1094 = vld [vmem:[#allocation2 + $0x62] sm:$0xff]
        %v1095 = vld [vmem:[#allocation2 + $0x6a] sm:$0xff]
        %v1096 = vld [vmem:[#allocation2 + $0x7a] sm:$0xff]
        %v1097 = vld [vmem:[#allocation2 + $0x82] sm:$0xff]
        %v1098 = vld [vmem:[#allocation2 + $0x92] sm:$0xff]
        %v1099 = vld [vmem:[#allocation2 + $0x9a] sm:$0xff]
        %v1100 = vld [vmem:[#allocation2 + $0xaa] sm:$0xff]
        %v1101 = vld [vmem:[#allocation2 + $0xb2] sm:$0xff]
        %v1102 = vld [vmem:[#allocation2 + $0xc2] sm:$0xff]
        %v1103 = vld [vmem:[#allocation2 + $0xca] sm:$0xff]
        %v1104 = vld [vmem:[#allocation2 + $0xda] sm:$0xff]
        %v1105 = vld [vmem:[#allocation2 + $0xe2] sm:$0xff]
        %v1106 = vld [vmem:[#allocation2 + $0xf2] sm:$0xff]
        %v1107 = vld [vmem:[#allocation2 + $0xfa] sm:$0xff]
        %v1108 = vld [vmem:[#allocation2 + $0x10a] sm:$0xff]
        %v1109 = vld [vmem:[#allocation2 + $0x112] sm:$0xff]
        %v1110 = vld [vmem:[#allocation2 + $0x122] sm:$0xff]
        %v1111 = vld [vmem:[#allocation2 + $0x12a] sm:$0xff]
        %v1112 = vld [vmem:[#allocation2 + $0x13a] sm:$0xff]
        %v1113 = vld [vmem:[#allocation2 + $0x142] sm:$0xff]
        %v1114 = vld [vmem:[#allocation2 + $0x152] sm:$0xff]
        %v1115 = vld [vmem:[#allocation2 + $0x15a] sm:$0xff]
        %v1116 = vld [vmem:[#allocation2 + $0x16a] sm:$0xff]
        %v1117 = vld [vmem:[#allocation2 + $0x172] sm:$0xff]
        %v1118 = vld [vmem:[#allocation6 + $0x100] sm:$0xff]
        %v1119 = vld [vmem:[#allocation6 + $0x108] sm:$0xff]
        %v1120 = vld [vmem:[#allocation6 + $0x110] sm:$0xff]
        %v1121 = vld [vmem:[#allocation6 + $0x118] sm:$0xff]
        %v1122 = vld [vmem:[#allocation6 + $0x120] sm:$0xff]
        %v1123 = vld [vmem:[#allocation6 + $0x128] sm:$0xff]
        %v1124 = vld [vmem:[#allocation6 + $0x130] sm:$0xff]
        %v1125 = vld [vmem:[#allocation6 + $0x138] sm:$0xff]
        %v1126 = vld [vmem:[#allocation6 + $0x140] sm:$0xff]
        %v1127 = vld [vmem:[#allocation6 + $0x148] sm:$0xff]
        %v1128 = vld [vmem:[#allocation6 + $0x150] sm:$0xff]
        %v1129 = vld [vmem:[#allocation6 + $0x158] sm:$0xff]
        %v1130 = vld [vmem:[#allocation6 + $0x160] sm:$0xff]
        %v1131 = vld [vmem:[#allocation6 + $0x168] sm:$0xff]
        %v1132 = vld [vmem:[#allocation6 + $0x170] sm:$0xff]
        %v1133 = vld [vmem:[#allocation6 + $0x178] sm:$0xff]
        %1134 = vmatprep.subr.mxu0 0.0
        %1135 = vmatpush1.msra.mxu0 %v1118
        %1136 = vmatprep.subr.mxu0 0.0
        %1137 = vmatpush1.msra.mxu0 %v1119
        %1138 = vmatprep.subr.mxu0 0.0
        %1139 = vmatpush1.msra.mxu0 %v1120
        %1140 = vmatprep.subr.mxu0 0.0
        %1141 = vmatpush1.msra.mxu0 %v1121
        %1142 = vmatprep.subr.mxu0 0.0
        %1143 = vmatpush1.msra.mxu0 %v1122
        %1144 = vmatprep.subr.mxu0 0.0
        %1145 = vmatpush1.msra.mxu0 %v1123
        %1146 = vmatprep.subr.mxu0 0.0
        %1147 = vmatpush1.msra.mxu0 %v1124
        %1148 = vmatprep.subr.mxu0 0.0
        %1149 = vmatpush1.msra.mxu0 %v1125
        %1150 = vmatprep.subr.mxu0 0.0
        %1151 = vmatpush1.msra.mxu0 %v1126
        %1152 = vmatprep.subr.mxu0 0.0
        %1153 = vmatpush1.msra.mxu0 %v1127
        %1154 = vmatprep.subr.mxu0 0.0
        %1155 = vmatpush1.msra.mxu0 %v1128
        %1156 = vmatprep.subr.mxu0 0.0
        %1157 = vmatpush1.msra.mxu0 %v1129
        %1158 = vmatprep.subr.mxu0 0.0
        %1159 = vmatpush1.msra.mxu0 %v1130
        %1160 = vmatprep.subr.mxu0 0.0
        %1161 = vmatpush1.msra.mxu0 %v1131
        %1162 = vmatprep.subr.mxu0 0.0
        %1163 = vmatpush1.msra.mxu0 %v1132
        %1164 = vmatprep.subr.mxu0 0.0
        %1165 = vmatpush1.msra.mxu0 %v1133
        %1166 = vmatprep.subr.mxu0 0.0
        %1167 = vmatpush1.msra.mxu0 0.0
        %1168 = vmatprep.subr.mxu0 0.0
        %1169 = vmatpush1.msra.mxu0 0.0
        %1170 = vmatprep.subr.mxu0 0.0
        %1171 = vmatpush1.msra.mxu0 0.0
        %1172 = vmatprep.subr.mxu0 0.0
        %1173 = vmatpush1.msra.mxu0 0.0
        %1174 = vmatprep.subr.mxu0 0.0
        %1175 = vmatpush1.msra.mxu0 0.0
        %1176 = vmatprep.subr.mxu0 0.0
        %1177 = vmatpush1.msra.mxu0 0.0
        %1178 = vmatprep.subr.mxu0 0.0
        %1179 = vmatpush1.msra.mxu0 0.0
        %1180 = vmatprep.subr.mxu0 0.0
        %1181 = vmatpush1.msra.mxu0 0.0
        %1182 = vmatprep.subr.mxu0 0.0
        %1183 = vmatpush1.msra.mxu0 0.0
        %1184 = vmatprep.subr.mxu0 0.0
        %1185 = vmatpush1.msra.mxu0 0.0
        %1186 = vmatprep.subr.mxu0 0.0
        %1187 = vmatpush1.msra.mxu0 0.0
        %1188 = vmatprep.subr.mxu0 0.0
        %1189 = vmatpush1.msra.mxu0 0.0
        %1190 = vmatprep.subr.mxu0 0.0
        %1191 = vmatpush1.msra.mxu0 0.0
        %1192 = vmatprep.subr.mxu0 0.0
        %1193 = vmatpush1.msra.mxu0 0.0
        %1194 = vmatprep.subr.mxu0 0.0
        %1195 = vmatpush1.msra.mxu0 0.0
        %1196 = vmatprep.subr.mxu0 0.0
        %1197 = vmatpush1.msra.mxu0 0.0
        %1198 = vmatprep.mubr.f32.mxu0 0.0
        %1199 = vmatmul.mubr.f32.gmra.mrb[0].mxu0 %v1086
        %v1200 = vpop.f32.mrb[0].mxu0
        %v1201 = vadd.f32 0.0, %v1200
        %v1202 = vpop.f32.mrb[0].mxu0
        %1203 = vmatprep.mubr.f32.mxu0 0.0
        %1204 = vmatmul.mubr.f32.gmra.mrb[0].mxu0 %v1087
        %v1205 = vpop.f32.mrb[0].mxu0
        %v1206 = vadd.f32 0.0, %v1205
        %v1207 = vpop.f32.mrb[0].mxu0
        %1208 = vmatprep.mubr.f32.mxu0 0.0
        %1209 = vmatmul.mubr.f32.gmra.mrb[0].mxu0 %v1088
        %v1210 = vpop.f32.mrb[0].mxu0
        %v1211 = vadd.f32 0.0, %v1210
        %v1212 = vpop.f32.mrb[0].mxu0
        %1213 = vmatprep.mubr.f32.mxu0 0.0
        %1214 = vmatmul.mubr.f32.gmra.mrb[0].mxu0 %v1089
        %v1215 = vpop.f32.mrb[0].mxu0
        %v1216 = vadd.f32 0.0, %v1215
        %v1217 = vpop.f32.mrb[0].mxu0
        %1218 = vmatprep.mubr.f32.mxu0 0.0
        %1219 = vmatmul.mubr.f32.gmra.mrb[0].mxu0 %v1090
        %v1220 = vpop.f32.mrb[0].mxu0
        %v1221 = vadd.f32 0.0, %v1220
        %v1222 = vpop.f32.mrb[0].mxu0
        %1223 = vmatprep.mubr.f32.mxu0 0.0
        %1224 = vmatmul.mubr.f32.gmra.mrb[0].mxu0 %v1091
        %v1225 = vpop.f32.mrb[0].mxu0
        %v1226 = vadd.f32 0.0, %v1225
        %v1227 = vpop.f32.mrb[0].mxu0
        %1228 = vmatprep.mubr.f32.mxu0 0.0
        %1229 = vmatmul.mubr.f32.gmra.mrb[0].mxu0 %v1092
        %v1230 = vpop.f32.mrb[0].mxu0
        %v1231 = vadd.f32 0.0, %v1230
        %v1232 = vpop.f32.mrb[0].mxu0
        %1233 = vmatprep.mubr.f32.mxu0 0.0
        %1234 = vmatmul.mubr.f32.gmra.mrb[0].mxu0 %v1093
        %v1235 = vpop.f32.mrb[0].mxu0
        %v1236 = vadd.f32 0.0, %v1235
        %v1237 = vpop.f32.mrb[0].mxu0
        %1238 = vmatprep.mubr.f32.mxu0 0.0
        %1239 = vmatmul.mubr.f32.gmra.mrb[0].mxu0 %v1094
        %v1240 = vpop.f32.mrb[0].mxu0
        %v1241 = vadd.f32 0.0, %v1240
        %v1242 = vpop.f32.mrb[0].mxu0
        %1243 = vmatprep.mubr.f32.mxu0 0.0
        %1244 = vmatmul.mubr.f32.gmra.mrb[0].mxu0 %v1095
        %v1245 = vpop.f32.mrb[0].mxu0
        %v1246 = vadd.f32 0.0, %v1245
        %v1247 = vpop.f32.mrb[0].mxu0
        %1248 = vmatprep.mubr.f32.mxu0 0.0
        %1249 = vmatmul.mubr.f32.gmra.mrb[0].mxu0 %v1096
        %v1250 = vpop.f32.mrb[0].mxu0
        %v1251 = vadd.f32 0.0, %v1250
        %v1252 = vpop.f32.mrb[0].mxu0
        %1253 = vmatprep.mubr.f32.mxu0 0.0
        %1254 = vmatmul.mubr.f32.gmra.mrb[0].mxu0 %v1097
        %v1255 = vpop.f32.mrb[0].mxu0
        %v1256 = vadd.f32 0.0, %v1255
        %v1257 = vpop.f32.mrb[0].mxu0
        %1258 = vmatprep.mubr.f32.mxu0 0.0
        %1259 = vmatmul.mubr.f32.gmra.mrb[0].mxu0 %v1098
        %v1260 = vpop.f32.mrb[0].mxu0
        %v1261 = vadd.f32 0.0, %v1260
        %v1262 = vpop.f32.mrb[0].mxu0
        %1263 = vmatprep.mubr.f32.mxu0 0.0
        %1264 = vmatmul.mubr.f32.gmra.mrb[0].mxu0 %v1099
        %v1265 = vpop.f32.mrb[0].mxu0
        %v1266 = vadd.f32 0.0, %v1265
        %v1267 = vpop.f32.mrb[0].mxu0
        %1268 = vmatprep.mubr.f32.mxu0 0.0
        %1269 = vmatmul.mubr.f32.gmra.mrb[0].mxu0 %v1100
        %v1270 = vpop.f32.mrb[0].mxu0
        %v1271 = vadd.f32 0.0, %v1270
        %v1272 = vpop.f32.mrb[0].mxu0
        %1273 = vmatprep.mubr.f32.mxu0 0.0
        %1274 = vmatmul.mubr.f32.gmra.mrb[0].mxu0 %v1101
        %v1275 = vpop.f32.mrb[0].mxu0
        %v1276 = vadd.f32 0.0, %v1275
        %v1277 = vpop.f32.mrb[0].mxu0
        %1278 = vmatprep.mubr.f32.mxu0 0.0
        %1279 = vmatmul.mubr.f32.gmra.mrb[0].mxu0 %v1102
        %v1280 = vpop.f32.mrb[0].mxu0
        %v1281 = vadd.f32 0.0, %v1280
        %v1282 = vpop.f32.mrb[0].mxu0
        %1283 = vmatprep.mubr.f32.mxu0 0.0
        %1284 = vmatmul.mubr.f32.gmra.mrb[0].mxu0 %v1103
        %v1285 = vpop.f32.mrb[0].mxu0
        %v1286 = vadd.f32 0.0, %v1285
        %v1287 = vpop.f32.mrb[0].mxu0
        %1288 = vmatprep.mubr.f32.mxu0 0.0
        %1289 = vmatmul.mubr.f32.gmra.mrb[0].mxu0 %v1104
        %v1290 = vpop.f32.mrb[0].mxu0
        %v1291 = vadd.f32 0.0, %v1290
        %v1292 = vpop.f32.mrb[0].mxu0
        %1293 = vmatprep.mubr.f32.mxu0 0.0
        %1294 = vmatmul.mubr.f32.gmra.mrb[0].mxu0 %v1105
        %v1295 = vpop.f32.mrb[0].mxu0
        %v1296 = vadd.f32 0.0, %v1295
        %v1297 = vpop.f32.mrb[0].mxu0
        %1298 = vmatprep.mubr.f32.mxu0 0.0
        %1299 = vmatmul.mubr.f32.gmra.mrb[0].mxu0 %v1106
        %v1300 = vpop.f32.mrb[0].mxu0
        %v1301 = vadd.f32 0.0, %v1300
        %v1302 = vpop.f32.mrb[0].mxu0
        %1303 = vmatprep.mubr.f32.mxu0 0.0
        %1304 = vmatmul.mubr.f32.gmra.mrb[0].mxu0 %v1107
        %v1305 = vpop.f32.mrb[0].mxu0
        %v1306 = vadd.f32 0.0, %v1305
        %v1307 = vpop.f32.mrb[0].mxu0
        %1308 = vmatprep.mubr.f32.mxu0 0.0
        %1309 = vmatmul.mubr.f32.gmra.mrb[0].mxu0 %v1108
        %v1310 = vpop.f32.mrb[0].mxu0
        %v1311 = vadd.f32 0.0, %v1310
        %v1312 = vpop.f32.mrb[0].mxu0
        %1313 = vmatprep.mubr.f32.mxu0 0.0
        %1314 = vmatmul.mubr.f32.gmra.mrb[0].mxu0 %v1109
        %v1315 = vpop.f32.mrb[0].mxu0
        %v1316 = vadd.f32 0.0, %v1315
        %v1317 = vpop.f32.mrb[0].mxu0
        %1318 = vmatprep.mubr.f32.mxu0 0.0
        %1319 = vmatmul.mubr.f32.gmra.mrb[0].mxu0 %v1110
        %v1320 = vpop.f32.mrb[0].mxu0
        %v1321 = vadd.f32 0.0, %v1320
        %v1322 = vpop.f32.mrb[0].mxu0
        %1323 = vmatprep.mubr.f32.mxu0 0.0
        %1324 = vmatmul.mubr.f32.gmra.mrb[0].mxu0 %v1111
        %v1325 = vpop.f32.mrb[0].mxu0
        %v1326 = vadd.f32 0.0, %v1325
        %v1327 = vpop.f32.mrb[0].mxu0
        %1328 = vmatprep.mubr.f32.mxu0 0.0
        %1329 = vmatmul.mubr.f32.gmra.mrb[0].mxu0 %v1112
        %v1330 = vpop.f32.mrb[0].mxu0
        %v1331 = vadd.f32 0.0, %v1330
        %v1332 = vpop.f32.mrb[0].mxu0
        %1333 = vmatprep.mubr.f32.mxu0 0.0
        %1334 = vmatmul.mubr.f32.gmra.mrb[0].mxu0 %v1113
        %v1335 = vpop.f32.mrb[0].mxu0
        %v1336 = vadd.f32 0.0, %v1335
        %v1337 = vpop.f32.mrb[0].mxu0
        %1338 = vmatprep.mubr.f32.mxu0 0.0
        %1339 = vmatmul.mubr.f32.gmra.mrb[0].mxu0 %v1114
        %v1340 = vpop.f32.mrb[0].mxu0
        %v1341 = vadd.f32 0.0, %v1340
        %v1342 = vpop.f32.mrb[0].mxu0
        %1343 = vmatprep.mubr.f32.mxu0 0.0
        %1344 = vmatmul.mubr.f32.gmra.mrb[0].mxu0 %v1115
        %v1345 = vpop.f32.mrb[0].mxu0
        %v1346 = vadd.f32 0.0, %v1345
        %v1347 = vpop.f32.mrb[0].mxu0
        %1348 = vmatprep.mubr.f32.mxu0 0.0
        %1349 = vmatmul.mubr.f32.gmra.mrb[0].mxu0 %v1116
        %v1350 = vpop.f32.mrb[0].mxu0
        %v1351 = vadd.f32 0.0, %v1350
        %v1352 = vpop.f32.mrb[0].mxu0
        %1353 = vmatprep.mubr.f32.mxu0 0.0
        %1354 = vmatmul.mubr.f32.gmra.mrb[0].mxu0 %v1117
        %v1355 = vpop.f32.mrb[0].mxu0
        %v1356 = vadd.f32 0.0, %v1355
        %v1357 = vpop.f32.mrb[0].mxu0
        %1358 = vdwg.mxu0
        %v1359 = vadd.f32 %v928, %v1201
        %v1360 = vadd.f32 %v933, %v1206
        %v1361 = vadd.f32 %v938, %v1211
        %v1362 = vadd.f32 %v943, %v1216
        %v1363 = vadd.f32 %v948, %v1221
        %v1364 = vadd.f32 %v953, %v1226
        %v1365 = vadd.f32 %v958, %v1231
        %v1366 = vadd.f32 %v963, %v1236
        %v1367 = vadd.f32 %v968, %v1241
        %v1368 = vadd.f32 %v973, %v1246
        %v1369 = vadd.f32 %v978, %v1251
        %v1370 = vadd.f32 %v983, %v1256
        %v1371 = vadd.f32 %v988, %v1261
        %v1372 = vadd.f32 %v993, %v1266
        %v1373 = vadd.f32 %v998, %v1271
        %v1374 = vadd.f32 %v1003, %v1276
        %v1375 = vadd.f32 %v1008, %v1281
        %v1376 = vadd.f32 %v1013, %v1286
        %v1377 = vadd.f32 %v1018, %v1291
        %v1378 = vadd.f32 %v1023, %v1296
        %v1379 = vadd.f32 %v1028, %v1301
        %v1380 = vadd.f32 %v1033, %v1306
        %v1381 = vadd.f32 %v1038, %v1311
        %v1382 = vadd.f32 %v1043, %v1316
        %v1383 = vadd.f32 %v1048, %v1321
        %v1384 = vadd.f32 %v1053, %v1326
        %v1385 = vadd.f32 %v1058, %v1331
        %v1386 = vadd.f32 %v1063, %v1336
        %v1387 = vadd.f32 %v1068, %v1341
        %v1388 = vadd.f32 %v1073, %v1346
        %v1389 = vadd.f32 %v1078, %v1351
        %v1390 = vadd.f32 %v1083, %v1356
        %v1391 = vld [vmem:[%s475] sm:$0xff]
        %v1392 = vld [vmem:[%s475 + $0x8] sm:$0xff]
        %v1393 = vld [vmem:[%s475 + $0x18] sm:$0xff]
        %v1394 = vld [vmem:[%s475 + $0x20] sm:$0xff]
        %v1395 = vld [vmem:[%s475 + $0x30] sm:$0xff]
        %v1396 = vld [vmem:[%s475 + $0x38] sm:$0xff]
        %v1397 = vld [vmem:[%s475 + $0x48] sm:$0xff]
        %v1398 = vld [vmem:[%s475 + $0x50] sm:$0xff]
        %v1399 = vld [vmem:[%s475 + $0x60] sm:$0xff]
        %v1400 = vld [vmem:[%s475 + $0x68] sm:$0xff]
        %v1401 = vld [vmem:[%s475 + $0x78] sm:$0xff]
        %v1402 = vld [vmem:[%s475 + $0x80] sm:$0xff]
        %v1403 = vld [vmem:[%s475 + $0x90] sm:$0xff]
        %v1404 = vld [vmem:[%s475 + $0x98] sm:$0xff]
        %v1405 = vld [vmem:[%s475 + $0xa8] sm:$0xff]
        %v1406 = vld [vmem:[%s475 + $0xb0] sm:$0xff]
        %v1407 = vld [vmem:[%s475 + $0xc0] sm:$0xff]
        %v1408 = vld [vmem:[%s475 + $0xc8] sm:$0xff]
        %v1409 = vld [vmem:[%s475 + $0xd8] sm:$0xff]
        %v1410 = vld [vmem:[%s475 + $0xe0] sm:$0xff]
        %v1411 = vld [vmem:[%s475 + $0xf0] sm:$0xff]
        %v1412 = vld [vmem:[%s475 + $0xf8] sm:$0xff]
        %v1413 = vld [vmem:[%s475 + $0x108] sm:$0xff]
        %v1414 = vld [vmem:[%s475 + $0x110] sm:$0xff]
        %v1415 = vld [vmem:[%s475 + $0x120] sm:$0xff]
        %v1416 = vld [vmem:[%s475 + $0x128] sm:$0xff]
        %v1417 = vld [vmem:[%s475 + $0x138] sm:$0xff]
        %v1418 = vld [vmem:[%s475 + $0x140] sm:$0xff]
        %v1419 = vld [vmem:[%s475 + $0x150] sm:$0xff]
        %v1420 = vld [vmem:[%s475 + $0x158] sm:$0xff]
        %v1421 = vld [vmem:[%s475 + $0x168] sm:$0xff]
        %v1422 = vld [vmem:[%s475 + $0x170] sm:$0xff]
        %v1423 = vld [vmem:[#allocation6 + $0x180] sm:$0xff]
        %v1424 = vld [vmem:[#allocation6 + $0x188] sm:$0xff]
        %v1425 = vld [vmem:[#allocation6 + $0x190] sm:$0xff]
        %v1426 = vld [vmem:[#allocation6 + $0x198] sm:$0xff]
        %v1427 = vld [vmem:[#allocation6 + $0x1a0] sm:$0xff]
        %v1428 = vld [vmem:[#allocation6 + $0x1a8] sm:$0xff]
        %v1429 = vld [vmem:[#allocation6 + $0x1b0] sm:$0xff]
        %v1430 = vld [vmem:[#allocation6 + $0x1b8] sm:$0xff]
        %v1431 = vld [vmem:[#allocation6 + $0x1c0] sm:$0xff]
        %v1432 = vld [vmem:[#allocation6 + $0x1c8] sm:$0xff]
        %v1433 = vld [vmem:[#allocation6 + $0x1d0] sm:$0xff]
        %v1434 = vld [vmem:[#allocation6 + $0x1d8] sm:$0xff]
        %v1435 = vld [vmem:[#allocation6 + $0x1e0] sm:$0xff]
        %v1436 = vld [vmem:[#allocation6 + $0x1e8] sm:$0xff]
        %v1437 = vld [vmem:[#allocation6 + $0x1f0] sm:$0xff]
        %v1438 = vld [vmem:[#allocation6 + $0x1f8] sm:$0xff]
        %1439 = vmatprep.subr.mxu0 0.0
        %1440 = vmatpush1.msra.mxu0 %v1423
        %1441 = vmatprep.subr.mxu0 0.0
        %1442 = vmatpush1.msra.mxu0 %v1424
        %1443 = vmatprep.subr.mxu0 0.0
        %1444 = vmatpush1.msra.mxu0 %v1425
        %1445 = vmatprep.subr.mxu0 0.0
        %1446 = vmatpush1.msra.mxu0 %v1426
        %1447 = vmatprep.subr.mxu0 0.0
        %1448 = vmatpush1.msra.mxu0 %v1427
        %1449 = vmatprep.subr.mxu0 0.0
        %1450 = vmatpush1.msra.mxu0 %v1428
        %1451 = vmatprep.subr.mxu0 0.0
        %1452 = vmatpush1.msra.mxu0 %v1429
        %1453 = vmatprep.subr.mxu0 0.0
        %1454 = vmatpush1.msra.mxu0 %v1430
        %1455 = vmatprep.subr.mxu0 0.0
        %1456 = vmatpush1.msra.mxu0 %v1431
        %1457 = vmatprep.subr.mxu0 0.0
        %1458 = vmatpush1.msra.mxu0 %v1432
        %1459 = vmatprep.subr.mxu0 0.0
        %1460 = vmatpush1.msra.mxu0 %v1433
        %1461 = vmatprep.subr.mxu0 0.0
        %1462 = vmatpush1.msra.mxu0 %v1434
        %1463 = vmatprep.subr.mxu0 0.0
        %1464 = vmatpush1.msra.mxu0 %v1435
        %1465 = vmatprep.subr.mxu0 0.0
        %1466 = vmatpush1.msra.mxu0 %v1436
        %1467 = vmatprep.subr.mxu0 0.0
        %1468 = vmatpush1.msra.mxu0 %v1437
        %1469 = vmatprep.subr.mxu0 0.0
        %1470 = vmatpush1.msra.mxu0 %v1438
        %1471 = vmatprep.subr.mxu0 0.0
        %1472 = vmatpush1.msra.mxu0 0.0
        %1473 = vmatprep.subr.mxu0 0.0
        %1474 = vmatpush1.msra.mxu0 0.0
        %1475 = vmatprep.subr.mxu0 0.0
        %1476 = vmatpush1.msra.mxu0 0.0
        %1477 = vmatprep.subr.mxu0 0.0
        %1478 = vmatpush1.msra.mxu0 0.0
        %1479 = vmatprep.subr.mxu0 0.0
        %1480 = vmatpush1.msra.mxu0 0.0
        %1481 = vmatprep.subr.mxu0 0.0
        %1482 = vmatpush1.msra.mxu0 0.0
        %1483 = vmatprep.subr.mxu0 0.0
        %1484 = vmatpush1.msra.mxu0 0.0
        %1485 = vmatprep.subr.mxu0 0.0
        %1486 = vmatpush1.msra.mxu0 0.0
        %1487 = vmatprep.subr.mxu0 0.0
        %1488 = vmatpush1.msra.mxu0 0.0
        %1489 = vmatprep.subr.mxu0 0.0
        %1490 = vmatpush1.msra.mxu0 0.0
        %1491 = vmatprep.subr.mxu0 0.0
        %1492 = vmatpush1.msra.mxu0 0.0
        %1493 = vmatprep.subr.mxu0 0.0
        %1494 = vmatpush1.msra.mxu0 0.0
        %1495 = vmatprep.subr.mxu0 0.0
        %1496 = vmatpush1.msra.mxu0 0.0
        %1497 = vmatprep.subr.mxu0 0.0
        %1498 = vmatpush1.msra.mxu0 0.0
        %1499 = vmatprep.subr.mxu0 0.0
        %1500 = vmatpush1.msra.mxu0 0.0
        %1501 = vmatprep.subr.mxu0 0.0
        %1502 = vmatpush1.msra.mxu0 0.0
        %1503 = vmatprep.mubr.f32.mxu0 0.0
        %1504 = vmatmul.mubr.f32.gmra.mrb[0].mxu0 %v1391
        %v1505 = vpop.f32.mrb[0].mxu0
        %v1506 = vadd.f32 0.0, %v1505
        %v1507 = vpop.f32.mrb[0].mxu0
        %1508 = vmatprep.mubr.f32.mxu0 0.0
        %1509 = vmatmul.mubr.f32.gmra.mrb[0].mxu0 %v1392
        %v1510 = vpop.f32.mrb[0].mxu0
        %v1511 = vadd.f32 0.0, %v1510
        %v1512 = vpop.f32.mrb[0].mxu0
        %1513 = vmatprep.mubr.f32.mxu0 0.0
        %1514 = vmatmul.mubr.f32.gmra.mrb[0].mxu0 %v1393
        %v1515 = vpop.f32.mrb[0].mxu0
        %v1516 = vadd.f32 0.0, %v1515
        %v1517 = vpop.f32.mrb[0].mxu0
        %1518 = vmatprep.mubr.f32.mxu0 0.0
        %1519 = vmatmul.mubr.f32.gmra.mrb[0].mxu0 %v1394
        %v1520 = vpop.f32.mrb[0].mxu0
        %v1521 = vadd.f32 0.0, %v1520
        %v1522 = vpop.f32.mrb[0].mxu0
        %1523 = vmatprep.mubr.f32.mxu0 0.0
        %1524 = vmatmul.mubr.f32.gmra.mrb[0].mxu0 %v1395
        %v1525 = vpop.f32.mrb[0].mxu0
        %v1526 = vadd.f32 0.0, %v1525
        %v1527 = vpop.f32.mrb[0].mxu0
        %1528 = vmatprep.mubr.f32.mxu0 0.0
        %1529 = vmatmul.mubr.f32.gmra.mrb[0].mxu0 %v1396
        %v1530 = vpop.f32.mrb[0].mxu0
        %v1531 = vadd.f32 0.0, %v1530
        %v1532 = vpop.f32.mrb[0].mxu0
        %1533 = vmatprep.mubr.f32.mxu0 0.0
        %1534 = vmatmul.mubr.f32.gmra.mrb[0].mxu0 %v1397
        %v1535 = vpop.f32.mrb[0].mxu0
        %v1536 = vadd.f32 0.0, %v1535
        %v1537 = vpop.f32.mrb[0].mxu0
        %1538 = vmatprep.mubr.f32.mxu0 0.0
        %1539 = vmatmul.mubr.f32.gmra.mrb[0].mxu0 %v1398
        %v1540 = vpop.f32.mrb[0].mxu0
        %v1541 = vadd.f32 0.0, %v1540
        %v1542 = vpop.f32.mrb[0].mxu0
        %1543 = vmatprep.mubr.f32.mxu0 0.0
        %1544 = vmatmul.mubr.f32.gmra.mrb[0].mxu0 %v1399
        %v1545 = vpop.f32.mrb[0].mxu0
        %v1546 = vadd.f32 0.0, %v1545
        %v1547 = vpop.f32.mrb[0].mxu0
        %1548 = vmatprep.mubr.f32.mxu0 0.0
        %1549 = vmatmul.mubr.f32.gmra.mrb[0].mxu0 %v1400
        %v1550 = vpop.f32.mrb[0].mxu0
        %v1551 = vadd.f32 0.0, %v1550
        %v1552 = vpop.f32.mrb[0].mxu0
        %1553 = vmatprep.mubr.f32.mxu0 0.0
        %1554 = vmatmul.mubr.f32.gmra.mrb[0].mxu0 %v1401
        %v1555 = vpop.f32.mrb[0].mxu0
        %v1556 = vadd.f32 0.0, %v1555
        %v1557 = vpop.f32.mrb[0].mxu0
        %1558 = vmatprep.mubr.f32.mxu0 0.0
        %1559 = vmatmul.mubr.f32.gmra.mrb[0].mxu0 %v1402
        %v1560 = vpop.f32.mrb[0].mxu0
        %v1561 = vadd.f32 0.0, %v1560
        %v1562 = vpop.f32.mrb[0].mxu0
        %1563 = vmatprep.mubr.f32.mxu0 0.0
        %1564 = vmatmul.mubr.f32.gmra.mrb[0].mxu0 %v1403
        %v1565 = vpop.f32.mrb[0].mxu0
        %v1566 = vadd.f32 0.0, %v1565
        %v1567 = vpop.f32.mrb[0].mxu0
        %1568 = vmatprep.mubr.f32.mxu0 0.0
        %1569 = vmatmul.mubr.f32.gmra.mrb[0].mxu0 %v1404
        %v1570 = vpop.f32.mrb[0].mxu0
        %v1571 = vadd.f32 0.0, %v1570
        %v1572 = vpop.f32.mrb[0].mxu0
        %1573 = vmatprep.mubr.f32.mxu0 0.0
        %1574 = vmatmul.mubr.f32.gmra.mrb[0].mxu0 %v1405
        %v1575 = vpop.f32.mrb[0].mxu0
        %v1576 = vadd.f32 0.0, %v1575
        %v1577 = vpop.f32.mrb[0].mxu0
        %1578 = vmatprep.mubr.f32.mxu0 0.0
        %1579 = vmatmul.mubr.f32.gmra.mrb[0].mxu0 %v1406
        %v1580 = vpop.f32.mrb[0].mxu0
        %v1581 = vadd.f32 0.0, %v1580
        %v1582 = vpop.f32.mrb[0].mxu0
        %1583 = vmatprep.mubr.f32.mxu0 0.0
        %1584 = vmatmul.mubr.f32.gmra.mrb[0].mxu0 %v1407
        %v1585 = vpop.f32.mrb[0].mxu0
        %v1586 = vadd.f32 0.0, %v1585
        %v1587 = vpop.f32.mrb[0].mxu0
        %1588 = vmatprep.mubr.f32.mxu0 0.0
        %1589 = vmatmul.mubr.f32.gmra.mrb[0].mxu0 %v1408
        %v1590 = vpop.f32.mrb[0].mxu0
        %v1591 = vadd.f32 0.0, %v1590
        %v1592 = vpop.f32.mrb[0].mxu0
        %1593 = vmatprep.mubr.f32.mxu0 0.0
        %1594 = vmatmul.mubr.f32.gmra.mrb[0].mxu0 %v1409
        %v1595 = vpop.f32.mrb[0].mxu0
        %v1596 = vadd.f32 0.0, %v1595
        %v1597 = vpop.f32.mrb[0].mxu0
        %1598 = vmatprep.mubr.f32.mxu0 0.0
        %1599 = vmatmul.mubr.f32.gmra.mrb[0].mxu0 %v1410
        %v1600 = vpop.f32.mrb[0].mxu0
        %v1601 = vadd.f32 0.0, %v1600
        %v1602 = vpop.f32.mrb[0].mxu0
        %1603 = vmatprep.mubr.f32.mxu0 0.0
        %1604 = vmatmul.mubr.f32.gmra.mrb[0].mxu0 %v1411
        %v1605 = vpop.f32.mrb[0].mxu0
        %v1606 = vadd.f32 0.0, %v1605
        %v1607 = vpop.f32.mrb[0].mxu0
        %1608 = vmatprep.mubr.f32.mxu0 0.0
        %1609 = vmatmul.mubr.f32.gmra.mrb[0].mxu0 %v1412
        %v1610 = vpop.f32.mrb[0].mxu0
        %v1611 = vadd.f32 0.0, %v1610
        %v1612 = vpop.f32.mrb[0].mxu0
        %1613 = vmatprep.mubr.f32.mxu0 0.0
        %1614 = vmatmul.mubr.f32.gmra.mrb[0].mxu0 %v1413
        %v1615 = vpop.f32.mrb[0].mxu0
        %v1616 = vadd.f32 0.0, %v1615
        %v1617 = vpop.f32.mrb[0].mxu0
        %1618 = vmatprep.mubr.f32.mxu0 0.0
        %1619 = vmatmul.mubr.f32.gmra.mrb[0].mxu0 %v1414
        %v1620 = vpop.f32.mrb[0].mxu0
        %v1621 = vadd.f32 0.0, %v1620
        %v1622 = vpop.f32.mrb[0].mxu0
        %1623 = vmatprep.mubr.f32.mxu0 0.0
        %1624 = vmatmul.mubr.f32.gmra.mrb[0].mxu0 %v1415
        %v1625 = vpop.f32.mrb[0].mxu0
        %v1626 = vadd.f32 0.0, %v1625
        %v1627 = vpop.f32.mrb[0].mxu0
        %1628 = vmatprep.mubr.f32.mxu0 0.0
        %1629 = vmatmul.mubr.f32.gmra.mrb[0].mxu0 %v1416
        %v1630 = vpop.f32.mrb[0].mxu0
        %v1631 = vadd.f32 0.0, %v1630
        %v1632 = vpop.f32.mrb[0].mxu0
        %1633 = vmatprep.mubr.f32.mxu0 0.0
        %1634 = vmatmul.mubr.f32.gmra.mrb[0].mxu0 %v1417
        %v1635 = vpop.f32.mrb[0].mxu0
        %v1636 = vadd.f32 0.0, %v1635
        %v1637 = vpop.f32.mrb[0].mxu0
        %1638 = vmatprep.mubr.f32.mxu0 0.0
        %1639 = vmatmul.mubr.f32.gmra.mrb[0].mxu0 %v1418
        %v1640 = vpop.f32.mrb[0].mxu0
        %v1641 = vadd.f32 0.0, %v1640
        %v1642 = vpop.f32.mrb[0].mxu0
        %1643 = vmatprep.mubr.f32.mxu0 0.0
        %1644 = vmatmul.mubr.f32.gmra.mrb[0].mxu0 %v1419
        %v1645 = vpop.f32.mrb[0].mxu0
        %v1646 = vadd.f32 0.0, %v1645
        %v1647 = vpop.f32.mrb[0].mxu0
        %1648 = vmatprep.mubr.f32.mxu0 0.0
        %1649 = vmatmul.mubr.f32.gmra.mrb[0].mxu0 %v1420
        %v1650 = vpop.f32.mrb[0].mxu0
        %v1651 = vadd.f32 0.0, %v1650
        %v1652 = vpop.f32.mrb[0].mxu0
        %1653 = vmatprep.mubr.f32.mxu0 0.0
        %1654 = vmatmul.mubr.f32.gmra.mrb[0].mxu0 %v1421
        %v1655 = vpop.f32.mrb[0].mxu0
        %v1656 = vadd.f32 0.0, %v1655
        %v1657 = vpop.f32.mrb[0].mxu0
        %1658 = vmatprep.mubr.f32.mxu0 0.0
        %1659 = vmatmul.mubr.f32.gmra.mrb[0].mxu0 %v1422
        %v1660 = vpop.f32.mrb[0].mxu0
        %v1661 = vadd.f32 0.0, %v1660
        %v1662 = vpop.f32.mrb[0].mxu0
        %1663 = vdwg.mxu0
        %v1664 = vadd.f32 %v1359, %v1506
        %v1665 = vadd.f32 %v1360, %v1511
        %v1666 = vadd.f32 %v1361, %v1516
        %v1667 = vadd.f32 %v1362, %v1521
        %v1668 = vadd.f32 %v1363, %v1526
        %v1669 = vadd.f32 %v1364, %v1531
        %v1670 = vadd.f32 %v1365, %v1536
        %v1671 = vadd.f32 %v1366, %v1541
        %v1672 = vadd.f32 %v1367, %v1546
        %v1673 = vadd.f32 %v1368, %v1551
        %v1674 = vadd.f32 %v1369, %v1556
        %v1675 = vadd.f32 %v1370, %v1561
        %v1676 = vadd.f32 %v1371, %v1566
        %v1677 = vadd.f32 %v1372, %v1571
        %v1678 = vadd.f32 %v1373, %v1576
        %v1679 = vadd.f32 %v1374, %v1581
        %v1680 = vadd.f32 %v1375, %v1586
        %v1681 = vadd.f32 %v1376, %v1591
        %v1682 = vadd.f32 %v1377, %v1596
        %v1683 = vadd.f32 %v1378, %v1601
        %v1684 = vadd.f32 %v1379, %v1606
        %v1685 = vadd.f32 %v1380, %v1611
        %v1686 = vadd.f32 %v1381, %v1616
        %v1687 = vadd.f32 %v1382, %v1621
        %v1688 = vadd.f32 %v1383, %v1626
        %v1689 = vadd.f32 %v1384, %v1631
        %v1690 = vadd.f32 %v1385, %v1636
        %v1691 = vadd.f32 %v1386, %v1641
        %v1692 = vadd.f32 %v1387, %v1646
        %v1693 = vadd.f32 %v1388, %v1651
        %v1694 = vadd.f32 %v1389, %v1656
        %v1695 = vadd.f32 %v1390, %v1661
        %v1696 = vld [vmem:[%s475 + $0x1] sm:$0xff]
        %v1697 = vld [vmem:[%s475 + $0x9] sm:$0xff]
        %v1698 = vld [vmem:[%s475 + $0x19] sm:$0xff]
        %v1699 = vld [vmem:[%s475 + $0x21] sm:$0xff]
        %v1700 = vld [vmem:[%s475 + $0x31] sm:$0xff]
        %v1701 = vld [vmem:[%s475 + $0x39] sm:$0xff]
        %v1702 = vld [vmem:[%s475 + $0x49] sm:$0xff]
        %v1703 = vld [vmem:[%s475 + $0x51] sm:$0xff]
        %v1704 = vld [vmem:[%s475 + $0x61] sm:$0xff]
        %v1705 = vld [vmem:[%s475 + $0x69] sm:$0xff]
        %v1706 = vld [vmem:[%s475 + $0x79] sm:$0xff]
        %v1707 = vld [vmem:[%s475 + $0x81] sm:$0xff]
        %v1708 = vld [vmem:[%s475 + $0x91] sm:$0xff]
        %v1709 = vld [vmem:[%s475 + $0x99] sm:$0xff]
        %v1710 = vld [vmem:[%s475 + $0xa9] sm:$0xff]
        %v1711 = vld [vmem:[%s475 + $0xb1] sm:$0xff]
        %v1712 = vld [vmem:[%s475 + $0xc1] sm:$0xff]
        %v1713 = vld [vmem:[%s475 + $0xc9] sm:$0xff]
        %v1714 = vld [vmem:[%s475 + $0xd9] sm:$0xff]
        %v1715 = vld [vmem:[%s475 + $0xe1] sm:$0xff]
        %v1716 = vld [vmem:[%s475 + $0xf1] sm:$0xff]
        %v1717 = vld [vmem:[%s475 + $0xf9] sm:$0xff]
        %v1718 = vld [vmem:[%s475 + $0x109] sm:$0xff]
        %v1719 = vld [vmem:[%s475 + $0x111] sm:$0xff]
        %v1720 = vld [vmem:[%s475 + $0x121] sm:$0xff]
        %v1721 = vld [vmem:[%s475 + $0x129] sm:$0xff]
        %v1722 = vld [vmem:[%s475 + $0x139] sm:$0xff]
        %v1723 = vld [vmem:[%s475 + $0x141] sm:$0xff]
        %v1724 = vld [vmem:[%s475 + $0x151] sm:$0xff]
        %v1725 = vld [vmem:[%s475 + $0x159] sm:$0xff]
        %v1726 = vld [vmem:[%s475 + $0x169] sm:$0xff]
        %v1727 = vld [vmem:[%s475 + $0x171] sm:$0xff]
        %v1728 = vld [vmem:[#allocation6 + $0x200] sm:$0xff]
        %v1729 = vld [vmem:[#allocation6 + $0x208] sm:$0xff]
        %v1730 = vld [vmem:[#allocation6 + $0x210] sm:$0xff]
        %v1731 = vld [vmem:[#allocation6 + $0x218] sm:$0xff]
        %v1732 = vld [vmem:[#allocation6 + $0x220] sm:$0xff]
        %v1733 = vld [vmem:[#allocation6 + $0x228] sm:$0xff]
        %v1734 = vld [vmem:[#allocation6 + $0x230] sm:$0xff]
        %v1735 = vld [vmem:[#allocation6 + $0x238] sm:$0xff]
        %v1736 = vld [vmem:[#allocation6 + $0x240] sm:$0xff]
        %v1737 = vld [vmem:[#allocation6 + $0x248] sm:$0xff]
        %v1738 = vld [vmem:[#allocation6 + $0x250] sm:$0xff]
        %v1739 = vld [vmem:[#allocation6 + $0x258] sm:$0xff]
        %v1740 = vld [vmem:[#allocation6 + $0x260] sm:$0xff]
        %v1741 = vld [vmem:[#allocation6 + $0x268] sm:$0xff]
        %v1742 = vld [vmem:[#allocation6 + $0x270] sm:$0xff]
        %v1743 = vld [vmem:[#allocation6 + $0x278] sm:$0xff]
        %1744 = vmatprep.subr.mxu0 0.0
        %1745 = vmatpush1.msra.mxu0 %v1728
        %1746 = vmatprep.subr.mxu0 0.0
        %1747 = vmatpush1.msra.mxu0 %v1729
        %1748 = vmatprep.subr.mxu0 0.0
        %1749 = vmatpush1.msra.mxu0 %v1730
        %1750 = vmatprep.subr.mxu0 0.0
        %1751 = vmatpush1.msra.mxu0 %v1731
        %1752 = vmatprep.subr.mxu0 0.0
        %1753 = vmatpush1.msra.mxu0 %v1732
        %1754 = vmatprep.subr.mxu0 0.0
        %1755 = vmatpush1.msra.mxu0 %v1733
        %1756 = vmatprep.subr.mxu0 0.0
        %1757 = vmatpush1.msra.mxu0 %v1734
        %1758 = vmatprep.subr.mxu0 0.0
        %1759 = vmatpush1.msra.mxu0 %v1735
        %1760 = vmatprep.subr.mxu0 0.0
        %1761 = vmatpush1.msra.mxu0 %v1736
        %1762 = vmatprep.subr.mxu0 0.0
        %1763 = vmatpush1.msra.mxu0 %v1737
        %1764 = vmatprep.subr.mxu0 0.0
        %1765 = vmatpush1.msra.mxu0 %v1738
        %1766 = vmatprep.subr.mxu0 0.0
        %1767 = vmatpush1.msra.mxu0 %v1739
        %1768 = vmatprep.subr.mxu0 0.0
        %1769 = vmatpush1.msra.mxu0 %v1740
        %1770 = vmatprep.subr.mxu0 0.0
        %1771 = vmatpush1.msra.mxu0 %v1741
        %1772 = vmatprep.subr.mxu0 0.0
        %1773 = vmatpush1.msra.mxu0 %v1742
        %1774 = vmatprep.subr.mxu0 0.0
        %1775 = vmatpush1.msra.mxu0 %v1743
        %1776 = vmatprep.subr.mxu0 0.0
        %1777 = vmatpush1.msra.mxu0 0.0
        %1778 = vmatprep.subr.mxu0 0.0
        %1779 = vmatpush1.msra.mxu0 0.0
        %1780 = vmatprep.subr.mxu0 0.0
        %1781 = vmatpush1.msra.mxu0 0.0
        %1782 = vmatprep.subr.mxu0 0.0
        %1783 = vmatpush1.msra.mxu0 0.0
        %1784 = vmatprep.subr.mxu0 0.0
        %1785 = vmatpush1.msra.mxu0 0.0
        %1786 = vmatprep.subr.mxu0 0.0
        %1787 = vmatpush1.msra.mxu0 0.0
        %1788 = vmatprep.subr.mxu0 0.0
        %1789 = vmatpush1.msra.mxu0 0.0
        %1790 = vmatprep.subr.mxu0 0.0
        %1791 = vmatpush1.msra.mxu0 0.0
        %1792 = vmatprep.subr.mxu0 0.0
        %1793 = vmatpush1.msra.mxu0 0.0
        %1794 = vmatprep.subr.mxu0 0.0
        %1795 = vmatpush1.msra.mxu0 0.0
        %1796 = vmatprep.subr.mxu0 0.0
        %1797 = vmatpush1.msra.mxu0 0.0
        %1798 = vmatprep.subr.mxu0 0.0
        %1799 = vmatpush1.msra.mxu0 0.0
        %1800 = vmatprep.subr.mxu0 0.0
        %1801 = vmatpush1.msra.mxu0 0.0
        %1802 = vmatprep.subr.mxu0 0.0
        %1803 = vmatpush1.msra.mxu0 0.0
        %1804 = vmatprep.subr.mxu0 0.0
        %1805 = vmatpush1.msra.mxu0 0.0
        %1806 = vmatprep.subr.mxu0 0.0
        %1807 = vmatpush1.msra.mxu0 0.0
        %1808 = vmatprep.mubr.f32.mxu0 0.0
        %1809 = vmatmul.mubr.f32.gmra.mrb[0].mxu0 %v1696
        %v1810 = vpop.f32.mrb[0].mxu0
        %v1811 = vadd.f32 0.0, %v1810
        %v1812 = vpop.f32.mrb[0].mxu0
        %1813 = vmatprep.mubr.f32.mxu0 0.0
        %1814 = vmatmul.mubr.f32.gmra.mrb[0].mxu0 %v1697
        %v1815 = vpop.f32.mrb[0].mxu0
        %v1816 = vadd.f32 0.0, %v1815
        %v1817 = vpop.f32.mrb[0].mxu0
        %1818 = vmatprep.mubr.f32.mxu0 0.0
        %1819 = vmatmul.mubr.f32.gmra.mrb[0].mxu0 %v1698
        %v1820 = vpop.f32.mrb[0].mxu0
        %v1821 = vadd.f32 0.0, %v1820
        %v1822 = vpop.f32.mrb[0].mxu0
        %1823 = vmatprep.mubr.f32.mxu0 0.0
        %1824 = vmatmul.mubr.f32.gmra.mrb[0].mxu0 %v1699
        %v1825 = vpop.f32.mrb[0].mxu0
        %v1826 = vadd.f32 0.0, %v1825
        %v1827 = vpop.f32.mrb[0].mxu0
        %1828 = vmatprep.mubr.f32.mxu0 0.0
        %1829 = vmatmul.mubr.f32.gmra.mrb[0].mxu0 %v1700
        %v1830 = vpop.f32.mrb[0].mxu0
        %v1831 = vadd.f32 0.0, %v1830
        %v1832 = vpop.f32.mrb[0].mxu0
        %1833 = vmatprep.mubr.f32.mxu0 0.0
        %1834 = vmatmul.mubr.f32.gmra.mrb[0].mxu0 %v1701
        %v1835 = vpop.f32.mrb[0].mxu0
        %v1836 = vadd.f32 0.0, %v1835
        %v1837 = vpop.f32.mrb[0].mxu0
        %1838 = vmatprep.mubr.f32.mxu0 0.0
        %1839 = vmatmul.mubr.f32.gmra.mrb[0].mxu0 %v1702
        %v1840 = vpop.f32.mrb[0].mxu0
        %v1841 = vadd.f32 0.0, %v1840
        %v1842 = vpop.f32.mrb[0].mxu0
        %1843 = vmatprep.mubr.f32.mxu0 0.0
        %1844 = vmatmul.mubr.f32.gmra.mrb[0].mxu0 %v1703
        %v1845 = vpop.f32.mrb[0].mxu0
        %v1846 = vadd.f32 0.0, %v1845
        %v1847 = vpop.f32.mrb[0].mxu0
        %1848 = vmatprep.mubr.f32.mxu0 0.0
        %1849 = vmatmul.mubr.f32.gmra.mrb[0].mxu0 %v1704
        %v1850 = vpop.f32.mrb[0].mxu0
        %v1851 = vadd.f32 0.0, %v1850
        %v1852 = vpop.f32.mrb[0].mxu0
        %1853 = vmatprep.mubr.f32.mxu0 0.0
        %1854 = vmatmul.mubr.f32.gmra.mrb[0].mxu0 %v1705
        %v1855 = vpop.f32.mrb[0].mxu0
        %v1856 = vadd.f32 0.0, %v1855
        %v1857 = vpop.f32.mrb[0].mxu0
        %1858 = vmatprep.mubr.f32.mxu0 0.0
        %1859 = vmatmul.mubr.f32.gmra.mrb[0].mxu0 %v1706
        %v1860 = vpop.f32.mrb[0].mxu0
        %v1861 = vadd.f32 0.0, %v1860
        %v1862 = vpop.f32.mrb[0].mxu0
        %1863 = vmatprep.mubr.f32.mxu0 0.0
        %1864 = vmatmul.mubr.f32.gmra.mrb[0].mxu0 %v1707
        %v1865 = vpop.f32.mrb[0].mxu0
        %v1866 = vadd.f32 0.0, %v1865
        %v1867 = vpop.f32.mrb[0].mxu0
        %1868 = vmatprep.mubr.f32.mxu0 0.0
        %1869 = vmatmul.mubr.f32.gmra.mrb[0].mxu0 %v1708
        %v1870 = vpop.f32.mrb[0].mxu0
        %v1871 = vadd.f32 0.0, %v1870
        %v1872 = vpop.f32.mrb[0].mxu0
        %1873 = vmatprep.mubr.f32.mxu0 0.0
        %1874 = vmatmul.mubr.f32.gmra.mrb[0].mxu0 %v1709
        %v1875 = vpop.f32.mrb[0].mxu0
        %v1876 = vadd.f32 0.0, %v1875
        %v1877 = vpop.f32.mrb[0].mxu0
        %1878 = vmatprep.mubr.f32.mxu0 0.0
        %1879 = vmatmul.mubr.f32.gmra.mrb[0].mxu0 %v1710
        %v1880 = vpop.f32.mrb[0].mxu0
        %v1881 = vadd.f32 0.0, %v1880
        %v1882 = vpop.f32.mrb[0].mxu0
        %1883 = vmatprep.mubr.f32.mxu0 0.0
        %1884 = vmatmul.mubr.f32.gmra.mrb[0].mxu0 %v1711
        %v1885 = vpop.f32.mrb[0].mxu0
        %v1886 = vadd.f32 0.0, %v1885
        %v1887 = vpop.f32.mrb[0].mxu0
        %1888 = vmatprep.mubr.f32.mxu0 0.0
        %1889 = vmatmul.mubr.f32.gmra.mrb[0].mxu0 %v1712
        %v1890 = vpop.f32.mrb[0].mxu0
        %v1891 = vadd.f32 0.0, %v1890
        %v1892 = vpop.f32.mrb[0].mxu0
        %1893 = vmatprep.mubr.f32.mxu0 0.0
        %1894 = vmatmul.mubr.f32.gmra.mrb[0].mxu0 %v1713
        %v1895 = vpop.f32.mrb[0].mxu0
        %v1896 = vadd.f32 0.0, %v1895
        %v1897 = vpop.f32.mrb[0].mxu0
        %1898 = vmatprep.mubr.f32.mxu0 0.0
        %1899 = vmatmul.mubr.f32.gmra.mrb[0].mxu0 %v1714
        %v1900 = vpop.f32.mrb[0].mxu0
        %v1901 = vadd.f32 0.0, %v1900
        %v1902 = vpop.f32.mrb[0].mxu0
        %1903 = vmatprep.mubr.f32.mxu0 0.0
        %1904 = vmatmul.mubr.f32.gmra.mrb[0].mxu0 %v1715
        %v1905 = vpop.f32.mrb[0].mxu0
        %v1906 = vadd.f32 0.0, %v1905
        %v1907 = vpop.f32.mrb[0].mxu0
        %1908 = vmatprep.mubr.f32.mxu0 0.0
        %1909 = vmatmul.mubr.f32.gmra.mrb[0].mxu0 %v1716
        %v1910 = vpop.f32.mrb[0].mxu0
        %v1911 = vadd.f32 0.0, %v1910
        %v1912 = vpop.f32.mrb[0].mxu0
        %1913 = vmatprep.mubr.f32.mxu0 0.0
        %1914 = vmatmul.mubr.f32.gmra.mrb[0].mxu0 %v1717
        %v1915 = vpop.f32.mrb[0].mxu0
        %v1916 = vadd.f32 0.0, %v1915
        %v1917 = vpop.f32.mrb[0].mxu0
        %1918 = vmatprep.mubr.f32.mxu0 0.0
        %1919 = vmatmul.mubr.f32.gmra.mrb[0].mxu0 %v1718
        %v1920 = vpop.f32.mrb[0].mxu0
        %v1921 = vadd.f32 0.0, %v1920
        %v1922 = vpop.f32.mrb[0].mxu0
        %1923 = vmatprep.mubr.f32.mxu0 0.0
        %1924 = vmatmul.mubr.f32.gmra.mrb[0].mxu0 %v1719
        %v1925 = vpop.f32.mrb[0].mxu0
        %v1926 = vadd.f32 0.0, %v1925
        %v1927 = vpop.f32.mrb[0].mxu0
        %1928 = vmatprep.mubr.f32.mxu0 0.0
        %1929 = vmatmul.mubr.f32.gmra.mrb[0].mxu0 %v1720
        %v1930 = vpop.f32.mrb[0].mxu0
        %v1931 = vadd.f32 0.0, %v1930
        %v1932 = vpop.f32.mrb[0].mxu0
        %1933 = vmatprep.mubr.f32.mxu0 0.0
        %1934 = vmatmul.mubr.f32.gmra.mrb[0].mxu0 %v1721
        %v1935 = vpop.f32.mrb[0].mxu0
        %v1936 = vadd.f32 0.0, %v1935
        %v1937 = vpop.f32.mrb[0].mxu0
        %1938 = vmatprep.mubr.f32.mxu0 0.0
        %1939 = vmatmul.mubr.f32.gmra.mrb[0].mxu0 %v1722
        %v1940 = vpop.f32.mrb[0].mxu0
        %v1941 = vadd.f32 0.0, %v1940
        %v1942 = vpop.f32.mrb[0].mxu0
        %1943 = vmatprep.mubr.f32.mxu0 0.0
        %1944 = vmatmul.mubr.f32.gmra.mrb[0].mxu0 %v1723
        %v1945 = vpop.f32.mrb[0].mxu0
        %v1946 = vadd.f32 0.0, %v1945
        %v1947 = vpop.f32.mrb[0].mxu0
        %1948 = vmatprep.mubr.f32.mxu0 0.0
        %1949 = vmatmul.mubr.f32.gmra.mrb[0].mxu0 %v1724
        %v1950 = vpop.f32.mrb[0].mxu0
        %v1951 = vadd.f32 0.0, %v1950
        %v1952 = vpop.f32.mrb[0].mxu0
        %1953 = vmatprep.mubr.f32.mxu0 0.0
        %1954 = vmatmul.mubr.f32.gmra.mrb[0].mxu0 %v1725
        %v1955 = vpop.f32.mrb[0].mxu0
        %v1956 = vadd.f32 0.0, %v1955
        %v1957 = vpop.f32.mrb[0].mxu0
        %1958 = vmatprep.mubr.f32.mxu0 0.0
        %1959 = vmatmul.mubr.f32.gmra.mrb[0].mxu0 %v1726
        %v1960 = vpop.f32.mrb[0].mxu0
        %v1961 = vadd.f32 0.0, %v1960
        %v1962 = vpop.f32.mrb[0].mxu0
        %1963 = vmatprep.mubr.f32.mxu0 0.0
        %1964 = vmatmul.mubr.f32.gmra.mrb[0].mxu0 %v1727
        %v1965 = vpop.f32.mrb[0].mxu0
        %v1966 = vadd.f32 0.0, %v1965
        %v1967 = vpop.f32.mrb[0].mxu0
        %1968 = vdwg.mxu0
        %v1969 = vadd.f32 %v1664, %v1811
        %v1970 = vadd.f32 %v1665, %v1816
        %v1971 = vadd.f32 %v1666, %v1821
        %v1972 = vadd.f32 %v1667, %v1826
        %v1973 = vadd.f32 %v1668, %v1831
        %v1974 = vadd.f32 %v1669, %v1836
        %v1975 = vadd.f32 %v1670, %v1841
        %v1976 = vadd.f32 %v1671, %v1846
        %v1977 = vadd.f32 %v1672, %v1851
        %v1978 = vadd.f32 %v1673, %v1856
        %v1979 = vadd.f32 %v1674, %v1861
        %v1980 = vadd.f32 %v1675, %v1866
        %v1981 = vadd.f32 %v1676, %v1871
        %v1982 = vadd.f32 %v1677, %v1876
        %v1983 = vadd.f32 %v1678, %v1881
        %v1984 = vadd.f32 %v1679, %v1886
        %v1985 = vadd.f32 %v1680, %v1891
        %v1986 = vadd.f32 %v1681, %v1896
        %v1987 = vadd.f32 %v1682, %v1901
        %v1988 = vadd.f32 %v1683, %v1906
        %v1989 = vadd.f32 %v1684, %v1911
        %v1990 = vadd.f32 %v1685, %v1916
        %v1991 = vadd.f32 %v1686, %v1921
        %v1992 = vadd.f32 %v1687, %v1926
        %v1993 = vadd.f32 %v1688, %v1931
        %v1994 = vadd.f32 %v1689, %v1936
        %v1995 = vadd.f32 %v1690, %v1941
        %v1996 = vadd.f32 %v1691, %v1946
        %v1997 = vadd.f32 %v1692, %v1951
        %v1998 = vadd.f32 %v1693, %v1956
        %v1999 = vadd.f32 %v1694, %v1961
        %v2000 = vadd.f32 %v1695, %v1966
        %v2001 = vld [vmem:[%s475 + $0x2] sm:$0xff]
        %v2002 = vld [vmem:[%s475 + $0xa] sm:$0xff]
        %v2003 = vld [vmem:[%s475 + $0x1a] sm:$0xff]
        %v2004 = vld [vmem:[%s475 + $0x22] sm:$0xff]
        %v2005 = vld [vmem:[%s475 + $0x32] sm:$0xff]
        %v2006 = vld [vmem:[%s475 + $0x3a] sm:$0xff]
        %v2007 = vld [vmem:[%s475 + $0x4a] sm:$0xff]
        %v2008 = vld [vmem:[%s475 + $0x52] sm:$0xff]
        %v2009 = vld [vmem:[%s475 + $0x62] sm:$0xff]
        %v2010 = vld [vmem:[%s475 + $0x6a] sm:$0xff]
        %v2011 = vld [vmem:[%s475 + $0x7a] sm:$0xff]
        %v2012 = vld [vmem:[%s475 + $0x82] sm:$0xff]
        %v2013 = vld [vmem:[%s475 + $0x92] sm:$0xff]
        %v2014 = vld [vmem:[%s475 + $0x9a] sm:$0xff]
        %v2015 = vld [vmem:[%s475 + $0xaa] sm:$0xff]
        %v2016 = vld [vmem:[%s475 + $0xb2] sm:$0xff]
        %v2017 = vld [vmem:[%s475 + $0xc2] sm:$0xff]
        %v2018 = vld [vmem:[%s475 + $0xca] sm:$0xff]
        %v2019 = vld [vmem:[%s475 + $0xda] sm:$0xff]
        %v2020 = vld [vmem:[%s475 + $0xe2] sm:$0xff]
        %v2021 = vld [vmem:[%s475 + $0xf2] sm:$0xff]
        %v2022 = vld [vmem:[%s475 + $0xfa] sm:$0xff]
        %v2023 = vld [vmem:[%s475 + $0x10a] sm:$0xff]
        %v2024 = vld [vmem:[%s475 + $0x112] sm:$0xff]
        %v2025 = vld [vmem:[%s475 + $0x122] sm:$0xff]
        %v2026 = vld [vmem:[%s475 + $0x12a] sm:$0xff]
        %v2027 = vld [vmem:[%s475 + $0x13a] sm:$0xff]
        %v2028 = vld [vmem:[%s475 + $0x142] sm:$0xff]
        %v2029 = vld [vmem:[%s475 + $0x152] sm:$0xff]
        %v2030 = vld [vmem:[%s475 + $0x15a] sm:$0xff]
        %v2031 = vld [vmem:[%s475 + $0x16a] sm:$0xff]
        %v2032 = vld [vmem:[%s475 + $0x172] sm:$0xff]
        %v2033 = vld [vmem:[#allocation6 + $0x280] sm:$0xff]
        %v2034 = vld [vmem:[#allocation6 + $0x288] sm:$0xff]
        %v2035 = vld [vmem:[#allocation6 + $0x290] sm:$0xff]
        %v2036 = vld [vmem:[#allocation6 + $0x298] sm:$0xff]
        %v2037 = vld [vmem:[#allocation6 + $0x2a0] sm:$0xff]
        %v2038 = vld [vmem:[#allocation6 + $0x2a8] sm:$0xff]
        %v2039 = vld [vmem:[#allocation6 + $0x2b0] sm:$0xff]
        %v2040 = vld [vmem:[#allocation6 + $0x2b8] sm:$0xff]
        %v2041 = vld [vmem:[#allocation6 + $0x2c0] sm:$0xff]
        %v2042 = vld [vmem:[#allocation6 + $0x2c8] sm:$0xff]
        %v2043 = vld [vmem:[#allocation6 + $0x2d0] sm:$0xff]
        %v2044 = vld [vmem:[#allocation6 + $0x2d8] sm:$0xff]
        %v2045 = vld [vmem:[#allocation6 + $0x2e0] sm:$0xff]
        %v2046 = vld [vmem:[#allocation6 + $0x2e8] sm:$0xff]
        %v2047 = vld [vmem:[#allocation6 + $0x2f0] sm:$0xff]
        %v2048 = vld [vmem:[#allocation6 + $0x2f8] sm:$0xff]
        %2049 = vmatprep.subr.mxu0 0.0
        %2050 = vmatpush1.msra.mxu0 %v2033
        %2051 = vmatprep.subr.mxu0 0.0
        %2052 = vmatpush1.msra.mxu0 %v2034
        %2053 = vmatprep.subr.mxu0 0.0
        %2054 = vmatpush1.msra.mxu0 %v2035
        %2055 = vmatprep.subr.mxu0 0.0
        %2056 = vmatpush1.msra.mxu0 %v2036
        %2057 = vmatprep.subr.mxu0 0.0
        %2058 = vmatpush1.msra.mxu0 %v2037
        %2059 = vmatprep.subr.mxu0 0.0
        %2060 = vmatpush1.msra.mxu0 %v2038
        %2061 = vmatprep.subr.mxu0 0.0
        %2062 = vmatpush1.msra.mxu0 %v2039
        %2063 = vmatprep.subr.mxu0 0.0
        %2064 = vmatpush1.msra.mxu0 %v2040
        %2065 = vmatprep.subr.mxu0 0.0
        %2066 = vmatpush1.msra.mxu0 %v2041
        %2067 = vmatprep.subr.mxu0 0.0
        %2068 = vmatpush1.msra.mxu0 %v2042
        %2069 = vmatprep.subr.mxu0 0.0
        %2070 = vmatpush1.msra.mxu0 %v2043
        %2071 = vmatprep.subr.mxu0 0.0
        %2072 = vmatpush1.msra.mxu0 %v2044
        %2073 = vmatprep.subr.mxu0 0.0
        %2074 = vmatpush1.msra.mxu0 %v2045
        %2075 = vmatprep.subr.mxu0 0.0
        %2076 = vmatpush1.msra.mxu0 %v2046
        %2077 = vmatprep.subr.mxu0 0.0
        %2078 = vmatpush1.msra.mxu0 %v2047
        %2079 = vmatprep.subr.mxu0 0.0
        %2080 = vmatpush1.msra.mxu0 %v2048
        %2081 = vmatprep.subr.mxu0 0.0
        %2082 = vmatpush1.msra.mxu0 0.0
        %2083 = vmatprep.subr.mxu0 0.0
        %2084 = vmatpush1.msra.mxu0 0.0
        %2085 = vmatprep.subr.mxu0 0.0
        %2086 = vmatpush1.msra.mxu0 0.0
        %2087 = vmatprep.subr.mxu0 0.0
        %2088 = vmatpush1.msra.mxu0 0.0
        %2089 = vmatprep.subr.mxu0 0.0
        %2090 = vmatpush1.msra.mxu0 0.0
        %2091 = vmatprep.subr.mxu0 0.0
        %2092 = vmatpush1.msra.mxu0 0.0
        %2093 = vmatprep.subr.mxu0 0.0
        %2094 = vmatpush1.msra.mxu0 0.0
        %2095 = vmatprep.subr.mxu0 0.0
        %2096 = vmatpush1.msra.mxu0 0.0
        %2097 = vmatprep.subr.mxu0 0.0
        %2098 = vmatpush1.msra.mxu0 0.0
        %2099 = vmatprep.subr.mxu0 0.0
        %2100 = vmatpush1.msra.mxu0 0.0
        %2101 = vmatprep.subr.mxu0 0.0
        %2102 = vmatpush1.msra.mxu0 0.0
        %2103 = vmatprep.subr.mxu0 0.0
        %2104 = vmatpush1.msra.mxu0 0.0
        %2105 = vmatprep.subr.mxu0 0.0
        %2106 = vmatpush1.msra.mxu0 0.0
        %2107 = vmatprep.subr.mxu0 0.0
        %2108 = vmatpush1.msra.mxu0 0.0
        %2109 = vmatprep.subr.mxu0 0.0
        %2110 = vmatpush1.msra.mxu0 0.0
        %2111 = vmatprep.subr.mxu0 0.0
        %2112 = vmatpush1.msra.mxu0 0.0
        %2113 = vmatprep.mubr.f32.mxu0 0.0
        %2114 = vmatmul.mubr.f32.gmra.mrb[0].mxu0 %v2001
        %v2115 = vpop.f32.mrb[0].mxu0
        %v2116 = vadd.f32 0.0, %v2115
        %v2117 = vpop.f32.mrb[0].mxu0
        %2118 = vmatprep.mubr.f32.mxu0 0.0
        %2119 = vmatmul.mubr.f32.gmra.mrb[0].mxu0 %v2002
        %v2120 = vpop.f32.mrb[0].mxu0
        %v2121 = vadd.f32 0.0, %v2120
        %v2122 = vpop.f32.mrb[0].mxu0
        %2123 = vmatprep.mubr.f32.mxu0 0.0
        %2124 = vmatmul.mubr.f32.gmra.mrb[0].mxu0 %v2003
        %v2125 = vpop.f32.mrb[0].mxu0
        %v2126 = vadd.f32 0.0, %v2125
        %v2127 = vpop.f32.mrb[0].mxu0
        %2128 = vmatprep.mubr.f32.mxu0 0.0
        %2129 = vmatmul.mubr.f32.gmra.mrb[0].mxu0 %v2004
        %v2130 = vpop.f32.mrb[0].mxu0
        %v2131 = vadd.f32 0.0, %v2130
        %v2132 = vpop.f32.mrb[0].mxu0
        %2133 = vmatprep.mubr.f32.mxu0 0.0
        %2134 = vmatmul.mubr.f32.gmra.mrb[0].mxu0 %v2005
        %v2135 = vpop.f32.mrb[0].mxu0
        %v2136 = vadd.f32 0.0, %v2135
        %v2137 = vpop.f32.mrb[0].mxu0
        %2138 = vmatprep.mubr.f32.mxu0 0.0
        %2139 = vmatmul.mubr.f32.gmra.mrb[0].mxu0 %v2006
        %v2140 = vpop.f32.mrb[0].mxu0
        %v2141 = vadd.f32 0.0, %v2140
        %v2142 = vpop.f32.mrb[0].mxu0
        %2143 = vmatprep.mubr.f32.mxu0 0.0
        %2144 = vmatmul.mubr.f32.gmra.mrb[0].mxu0 %v2007
        %v2145 = vpop.f32.mrb[0].mxu0
        %v2146 = vadd.f32 0.0, %v2145
        %v2147 = vpop.f32.mrb[0].mxu0
        %2148 = vmatprep.mubr.f32.mxu0 0.0
        %2149 = vmatmul.mubr.f32.gmra.mrb[0].mxu0 %v2008
        %v2150 = vpop.f32.mrb[0].mxu0
        %v2151 = vadd.f32 0.0, %v2150
        %v2152 = vpop.f32.mrb[0].mxu0
        %2153 = vmatprep.mubr.f32.mxu0 0.0
        %2154 = vmatmul.mubr.f32.gmra.mrb[0].mxu0 %v2009
        %v2155 = vpop.f32.mrb[0].mxu0
        %v2156 = vadd.f32 0.0, %v2155
        %v2157 = vpop.f32.mrb[0].mxu0
        %2158 = vmatprep.mubr.f32.mxu0 0.0
        %2159 = vmatmul.mubr.f32.gmra.mrb[0].mxu0 %v2010
        %v2160 = vpop.f32.mrb[0].mxu0
        %v2161 = vadd.f32 0.0, %v2160
        %v2162 = vpop.f32.mrb[0].mxu0
        %2163 = vmatprep.mubr.f32.mxu0 0.0
        %2164 = vmatmul.mubr.f32.gmra.mrb[0].mxu0 %v2011
        %v2165 = vpop.f32.mrb[0].mxu0
        %v2166 = vadd.f32 0.0, %v2165
        %v2167 = vpop.f32.mrb[0].mxu0
        %2168 = vmatprep.mubr.f32.mxu0 0.0
        %2169 = vmatmul.mubr.f32.gmra.mrb[0].mxu0 %v2012
        %v2170 = vpop.f32.mrb[0].mxu0
        %v2171 = vadd.f32 0.0, %v2170
        %v2172 = vpop.f32.mrb[0].mxu0
        %2173 = vmatprep.mubr.f32.mxu0 0.0
        %2174 = vmatmul.mubr.f32.gmra.mrb[0].mxu0 %v2013
        %v2175 = vpop.f32.mrb[0].mxu0
        %v2176 = vadd.f32 0.0, %v2175
        %v2177 = vpop.f32.mrb[0].mxu0
        %2178 = vmatprep.mubr.f32.mxu0 0.0
        %2179 = vmatmul.mubr.f32.gmra.mrb[0].mxu0 %v2014
        %v2180 = vpop.f32.mrb[0].mxu0
        %v2181 = vadd.f32 0.0, %v2180
        %v2182 = vpop.f32.mrb[0].mxu0
        %2183 = vmatprep.mubr.f32.mxu0 0.0
        %2184 = vmatmul.mubr.f32.gmra.mrb[0].mxu0 %v2015
        %v2185 = vpop.f32.mrb[0].mxu0
        %v2186 = vadd.f32 0.0, %v2185
        %v2187 = vpop.f32.mrb[0].mxu0
        %2188 = vmatprep.mubr.f32.mxu0 0.0
        %2189 = vmatmul.mubr.f32.gmra.mrb[0].mxu0 %v2016
        %v2190 = vpop.f32.mrb[0].mxu0
        %v2191 = vadd.f32 0.0, %v2190
        %v2192 = vpop.f32.mrb[0].mxu0
        %2193 = vmatprep.mubr.f32.mxu0 0.0
        %2194 = vmatmul.mubr.f32.gmra.mrb[0].mxu0 %v2017
        %v2195 = vpop.f32.mrb[0].mxu0
        %v2196 = vadd.f32 0.0, %v2195
        %v2197 = vpop.f32.mrb[0].mxu0
        %2198 = vmatprep.mubr.f32.mxu0 0.0
        %2199 = vmatmul.mubr.f32.gmra.mrb[0].mxu0 %v2018
        %v2200 = vpop.f32.mrb[0].mxu0
        %v2201 = vadd.f32 0.0, %v2200
        %v2202 = vpop.f32.mrb[0].mxu0
        %2203 = vmatprep.mubr.f32.mxu0 0.0
        %2204 = vmatmul.mubr.f32.gmra.mrb[0].mxu0 %v2019
        %v2205 = vpop.f32.mrb[0].mxu0
        %v2206 = vadd.f32 0.0, %v2205
        %v2207 = vpop.f32.mrb[0].mxu0
        %2208 = vmatprep.mubr.f32.mxu0 0.0
        %2209 = vmatmul.mubr.f32.gmra.mrb[0].mxu0 %v2020
        %v2210 = vpop.f32.mrb[0].mxu0
        %v2211 = vadd.f32 0.0, %v2210
        %v2212 = vpop.f32.mrb[0].mxu0
        %2213 = vmatprep.mubr.f32.mxu0 0.0
        %2214 = vmatmul.mubr.f32.gmra.mrb[0].mxu0 %v2021
        %v2215 = vpop.f32.mrb[0].mxu0
        %v2216 = vadd.f32 0.0, %v2215
        %v2217 = vpop.f32.mrb[0].mxu0
        %2218 = vmatprep.mubr.f32.mxu0 0.0
        %2219 = vmatmul.mubr.f32.gmra.mrb[0].mxu0 %v2022
        %v2220 = vpop.f32.mrb[0].mxu0
        %v2221 = vadd.f32 0.0, %v2220
        %v2222 = vpop.f32.mrb[0].mxu0
        %2223 = vmatprep.mubr.f32.mxu0 0.0
        %2224 = vmatmul.mubr.f32.gmra.mrb[0].mxu0 %v2023
        %v2225 = vpop.f32.mrb[0].mxu0
        %v2226 = vadd.f32 0.0, %v2225
        %v2227 = vpop.f32.mrb[0].mxu0
        %2228 = vmatprep.mubr.f32.mxu0 0.0
        %2229 = vmatmul.mubr.f32.gmra.mrb[0].mxu0 %v2024
        %v2230 = vpop.f32.mrb[0].mxu0
        %v2231 = vadd.f32 0.0, %v2230
        %v2232 = vpop.f32.mrb[0].mxu0
        %2233 = vmatprep.mubr.f32.mxu0 0.0
        %2234 = vmatmul.mubr.f32.gmra.mrb[0].mxu0 %v2025
        %v2235 = vpop.f32.mrb[0].mxu0
        %v2236 = vadd.f32 0.0, %v2235
        %v2237 = vpop.f32.mrb[0].mxu0
        %2238 = vmatprep.mubr.f32.mxu0 0.0
        %2239 = vmatmul.mubr.f32.gmra.mrb[0].mxu0 %v2026
        %v2240 = vpop.f32.mrb[0].mxu0
        %v2241 = vadd.f32 0.0, %v2240
        %v2242 = vpop.f32.mrb[0].mxu0
        %2243 = vmatprep.mubr.f32.mxu0 0.0
        %2244 = vmatmul.mubr.f32.gmra.mrb[0].mxu0 %v2027
        %v2245 = vpop.f32.mrb[0].mxu0
        %v2246 = vadd.f32 0.0, %v2245
        %v2247 = vpop.f32.mrb[0].mxu0
        %2248 = vmatprep.mubr.f32.mxu0 0.0
        %2249 = vmatmul.mubr.f32.gmra.mrb[0].mxu0 %v2028
        %v2250 = vpop.f32.mrb[0].mxu0
        %v2251 = vadd.f32 0.0, %v2250
        %v2252 = vpop.f32.mrb[0].mxu0
        %2253 = vmatprep.mubr.f32.mxu0 0.0
        %2254 = vmatmul.mubr.f32.gmra.mrb[0].mxu0 %v2029
        %v2255 = vpop.f32.mrb[0].mxu0
        %v2256 = vadd.f32 0.0, %v2255
        %v2257 = vpop.f32.mrb[0].mxu0
        %2258 = vmatprep.mubr.f32.mxu0 0.0
        %2259 = vmatmul.mubr.f32.gmra.mrb[0].mxu0 %v2030
        %v2260 = vpop.f32.mrb[0].mxu0
        %v2261 = vadd.f32 0.0, %v2260
        %v2262 = vpop.f32.mrb[0].mxu0
        %2263 = vmatprep.mubr.f32.mxu0 0.0
        %2264 = vmatmul.mubr.f32.gmra.mrb[0].mxu0 %v2031
        %v2265 = vpop.f32.mrb[0].mxu0
        %v2266 = vadd.f32 0.0, %v2265
        %v2267 = vpop.f32.mrb[0].mxu0
        %2268 = vmatprep.mubr.f32.mxu0 0.0
        %2269 = vmatmul.mubr.f32.gmra.mrb[0].mxu0 %v2032
        %v2270 = vpop.f32.mrb[0].mxu0
        %v2271 = vadd.f32 0.0, %v2270
        %v2272 = vpop.f32.mrb[0].mxu0
        %2273 = vdwg.mxu0
        %v2274 = vadd.f32 %v1969, %v2116
        %v2275 = vadd.f32 %v1970, %v2121
        %v2276 = vadd.f32 %v1971, %v2126
        %v2277 = vadd.f32 %v1972, %v2131
        %v2278 = vadd.f32 %v1973, %v2136
        %v2279 = vadd.f32 %v1974, %v2141
        %v2280 = vadd.f32 %v1975, %v2146
        %v2281 = vadd.f32 %v1976, %v2151
        %v2282 = vadd.f32 %v1977, %v2156
        %v2283 = vadd.f32 %v1978, %v2161
        %v2284 = vadd.f32 %v1979, %v2166
        %v2285 = vadd.f32 %v1980, %v2171
        %v2286 = vadd.f32 %v1981, %v2176
        %v2287 = vadd.f32 %v1982, %v2181
        %v2288 = vadd.f32 %v1983, %v2186
        %v2289 = vadd.f32 %v1984, %v2191
        %v2290 = vadd.f32 %v1985, %v2196
        %v2291 = vadd.f32 %v1986, %v2201
        %v2292 = vadd.f32 %v1987, %v2206
        %v2293 = vadd.f32 %v1988, %v2211
        %v2294 = vadd.f32 %v1989, %v2216
        %v2295 = vadd.f32 %v1990, %v2221
        %v2296 = vadd.f32 %v1991, %v2226
        %v2297 = vadd.f32 %v1992, %v2231
        %v2298 = vadd.f32 %v1993, %v2236
        %v2299 = vadd.f32 %v1994, %v2241
        %v2300 = vadd.f32 %v1995, %v2246
        %v2301 = vadd.f32 %v1996, %v2251
        %v2302 = vadd.f32 %v1997, %v2256
        %v2303 = vadd.f32 %v1998, %v2261
        %v2304 = vadd.f32 %v1999, %v2266
        %v2305 = vadd.f32 %v2000, %v2271
        %s2306 = scalar_lea.vmem [#allocation2], 48
        %v2307 = vld [vmem:[%s2306] sm:$0xff]
        %v2308 = vld [vmem:[%s2306 + $0x8] sm:$0xff]
        %v2309 = vld [vmem:[%s2306 + $0x18] sm:$0xff]
        %v2310 = vld [vmem:[%s2306 + $0x20] sm:$0xff]
        %v2311 = vld [vmem:[%s2306 + $0x30] sm:$0xff]
        %v2312 = vld [vmem:[%s2306 + $0x38] sm:$0xff]
        %v2313 = vld [vmem:[%s2306 + $0x48] sm:$0xff]
        %v2314 = vld [vmem:[%s2306 + $0x50] sm:$0xff]
        %v2315 = vld [vmem:[%s2306 + $0x60] sm:$0xff]
        %v2316 = vld [vmem:[%s2306 + $0x68] sm:$0xff]
        %v2317 = vld [vmem:[%s2306 + $0x78] sm:$0xff]
        %v2318 = vld [vmem:[%s2306 + $0x80] sm:$0xff]
        %v2319 = vld [vmem:[%s2306 + $0x90] sm:$0xff]
        %v2320 = vld [vmem:[%s2306 + $0x98] sm:$0xff]
        %v2321 = vld [vmem:[%s2306 + $0xa8] sm:$0xff]
        %v2322 = vld [vmem:[%s2306 + $0xb0] sm:$0xff]
        %v2323 = vld [vmem:[%s2306 + $0xc0] sm:$0xff]
        %v2324 = vld [vmem:[%s2306 + $0xc8] sm:$0xff]
        %v2325 = vld [vmem:[%s2306 + $0xd8] sm:$0xff]
        %v2326 = vld [vmem:[%s2306 + $0xe0] sm:$0xff]
        %v2327 = vld [vmem:[%s2306 + $0xf0] sm:$0xff]
        %v2328 = vld [vmem:[%s2306 + $0xf8] sm:$0xff]
        %v2329 = vld [vmem:[%s2306 + $0x108] sm:$0xff]
        %v2330 = vld [vmem:[%s2306 + $0x110] sm:$0xff]
        %v2331 = vld [vmem:[%s2306 + $0x120] sm:$0xff]
        %v2332 = vld [vmem:[%s2306 + $0x128] sm:$0xff]
        %v2333 = vld [vmem:[%s2306 + $0x138] sm:$0xff]
        %v2334 = vld [vmem:[%s2306 + $0x140] sm:$0xff]
        %v2335 = vld [vmem:[%s2306 + $0x150] sm:$0xff]
        %v2336 = vld [vmem:[%s2306 + $0x158] sm:$0xff]
        %v2337 = vld [vmem:[%s2306 + $0x168] sm:$0xff]
        %v2338 = vld [vmem:[%s2306 + $0x170] sm:$0xff]
        %v2339 = vld [vmem:[#allocation6 + $0x300] sm:$0xff]
        %v2340 = vld [vmem:[#allocation6 + $0x308] sm:$0xff]
        %v2341 = vld [vmem:[#allocation6 + $0x310] sm:$0xff]
        %v2342 = vld [vmem:[#allocation6 + $0x318] sm:$0xff]
        %v2343 = vld [vmem:[#allocation6 + $0x320] sm:$0xff]
        %v2344 = vld [vmem:[#allocation6 + $0x328] sm:$0xff]
        %v2345 = vld [vmem:[#allocation6 + $0x330] sm:$0xff]
        %v2346 = vld [vmem:[#allocation6 + $0x338] sm:$0xff]
        %v2347 = vld [vmem:[#allocation6 + $0x340] sm:$0xff]
        %v2348 = vld [vmem:[#allocation6 + $0x348] sm:$0xff]
        %v2349 = vld [vmem:[#allocation6 + $0x350] sm:$0xff]
        %v2350 = vld [vmem:[#allocation6 + $0x358] sm:$0xff]
        %v2351 = vld [vmem:[#allocation6 + $0x360] sm:$0xff]
        %v2352 = vld [vmem:[#allocation6 + $0x368] sm:$0xff]
        %v2353 = vld [vmem:[#allocation6 + $0x370] sm:$0xff]
        %v2354 = vld [vmem:[#allocation6 + $0x378] sm:$0xff]
        %2355 = vmatprep.subr.mxu0 0.0
        %2356 = vmatpush1.msra.mxu0 %v2339
        %2357 = vmatprep.subr.mxu0 0.0
        %2358 = vmatpush1.msra.mxu0 %v2340
        %2359 = vmatprep.subr.mxu0 0.0
        %2360 = vmatpush1.msra.mxu0 %v2341
        %2361 = vmatprep.subr.mxu0 0.0
        %2362 = vmatpush1.msra.mxu0 %v2342
        %2363 = vmatprep.subr.mxu0 0.0
        %2364 = vmatpush1.msra.mxu0 %v2343
        %2365 = vmatprep.subr.mxu0 0.0
        %2366 = vmatpush1.msra.mxu0 %v2344
        %2367 = vmatprep.subr.mxu0 0.0
        %2368 = vmatpush1.msra.mxu0 %v2345
        %2369 = vmatprep.subr.mxu0 0.0
        %2370 = vmatpush1.msra.mxu0 %v2346
        %2371 = vmatprep.subr.mxu0 0.0
        %2372 = vmatpush1.msra.mxu0 %v2347
        %2373 = vmatprep.subr.mxu0 0.0
        %2374 = vmatpush1.msra.mxu0 %v2348
        %2375 = vmatprep.subr.mxu0 0.0
        %2376 = vmatpush1.msra.mxu0 %v2349
        %2377 = vmatprep.subr.mxu0 0.0
        %2378 = vmatpush1.msra.mxu0 %v2350
        %2379 = vmatprep.subr.mxu0 0.0
        %2380 = vmatpush1.msra.mxu0 %v2351
        %2381 = vmatprep.subr.mxu0 0.0
        %2382 = vmatpush1.msra.mxu0 %v2352
        %2383 = vmatprep.subr.mxu0 0.0
        %2384 = vmatpush1.msra.mxu0 %v2353
        %2385 = vmatprep.subr.mxu0 0.0
        %2386 = vmatpush1.msra.mxu0 %v2354
        %2387 = vmatprep.subr.mxu0 0.0
        %2388 = vmatpush1.msra.mxu0 0.0
        %2389 = vmatprep.subr.mxu0 0.0
        %2390 = vmatpush1.msra.mxu0 0.0
        %2391 = vmatprep.subr.mxu0 0.0
        %2392 = vmatpush1.msra.mxu0 0.0
        %2393 = vmatprep.subr.mxu0 0.0
        %2394 = vmatpush1.msra.mxu0 0.0
        %2395 = vmatprep.subr.mxu0 0.0
        %2396 = vmatpush1.msra.mxu0 0.0
        %2397 = vmatprep.subr.mxu0 0.0
        %2398 = vmatpush1.msra.mxu0 0.0
        %2399 = vmatprep.subr.mxu0 0.0
        %2400 = vmatpush1.msra.mxu0 0.0
        %2401 = vmatprep.subr.mxu0 0.0
        %2402 = vmatpush1.msra.mxu0 0.0
        %2403 = vmatprep.subr.mxu0 0.0
        %2404 = vmatpush1.msra.mxu0 0.0
        %2405 = vmatprep.subr.mxu0 0.0
        %2406 = vmatpush1.msra.mxu0 0.0
        %2407 = vmatprep.subr.mxu0 0.0
        %2408 = vmatpush1.msra.mxu0 0.0
        %2409 = vmatprep.subr.mxu0 0.0
        %2410 = vmatpush1.msra.mxu0 0.0
        %2411 = vmatprep.subr.mxu0 0.0
        %2412 = vmatpush1.msra.mxu0 0.0
        %2413 = vmatprep.subr.mxu0 0.0
        %2414 = vmatpush1.msra.mxu0 0.0
        %2415 = vmatprep.subr.mxu0 0.0
        %2416 = vmatpush1.msra.mxu0 0.0
        %2417 = vmatprep.subr.mxu0 0.0
        %2418 = vmatpush1.msra.mxu0 0.0
        %2419 = vmatprep.mubr.f32.mxu0 0.0
        %2420 = vmatmul.mubr.f32.gmra.mrb[0].mxu0 %v2307
        %v2421 = vpop.f32.mrb[0].mxu0
        %v2422 = vadd.f32 0.0, %v2421
        %v2423 = vpop.f32.mrb[0].mxu0
        %2424 = vmatprep.mubr.f32.mxu0 0.0
        %2425 = vmatmul.mubr.f32.gmra.mrb[0].mxu0 %v2308
        %v2426 = vpop.f32.mrb[0].mxu0
        %v2427 = vadd.f32 0.0, %v2426
        %v2428 = vpop.f32.mrb[0].mxu0
        %2429 = vmatprep.mubr.f32.mxu0 0.0
        %2430 = vmatmul.mubr.f32.gmra.mrb[0].mxu0 %v2309
        %v2431 = vpop.f32.mrb[0].mxu0
        %v2432 = vadd.f32 0.0, %v2431
        %v2433 = vpop.f32.mrb[0].mxu0
        %2434 = vmatprep.mubr.f32.mxu0 0.0
        %2435 = vmatmul.mubr.f32.gmra.mrb[0].mxu0 %v2310
        %v2436 = vpop.f32.mrb[0].mxu0
        %v2437 = vadd.f32 0.0, %v2436
        %v2438 = vpop.f32.mrb[0].mxu0
        %2439 = vmatprep.mubr.f32.mxu0 0.0
        %2440 = vmatmul.mubr.f32.gmra.mrb[0].mxu0 %v2311
        %v2441 = vpop.f32.mrb[0].mxu0
        %v2442 = vadd.f32 0.0, %v2441
        %v2443 = vpop.f32.mrb[0].mxu0
        %2444 = vmatprep.mubr.f32.mxu0 0.0
        %2445 = vmatmul.mubr.f32.gmra.mrb[0].mxu0 %v2312
        %v2446 = vpop.f32.mrb[0].mxu0
        %v2447 = vadd.f32 0.0, %v2446
        %v2448 = vpop.f32.mrb[0].mxu0
        %2449 = vmatprep.mubr.f32.mxu0 0.0
        %2450 = vmatmul.mubr.f32.gmra.mrb[0].mxu0 %v2313
        %v2451 = vpop.f32.mrb[0].mxu0
        %v2452 = vadd.f32 0.0, %v2451
        %v2453 = vpop.f32.mrb[0].mxu0
        %2454 = vmatprep.mubr.f32.mxu0 0.0
        %2455 = vmatmul.mubr.f32.gmra.mrb[0].mxu0 %v2314
        %v2456 = vpop.f32.mrb[0].mxu0
        %v2457 = vadd.f32 0.0, %v2456
        %v2458 = vpop.f32.mrb[0].mxu0
        %2459 = vmatprep.mubr.f32.mxu0 0.0
        %2460 = vmatmul.mubr.f32.gmra.mrb[0].mxu0 %v2315
        %v2461 = vpop.f32.mrb[0].mxu0
        %v2462 = vadd.f32 0.0, %v2461
        %v2463 = vpop.f32.mrb[0].mxu0
        %2464 = vmatprep.mubr.f32.mxu0 0.0
        %2465 = vmatmul.mubr.f32.gmra.mrb[0].mxu0 %v2316
        %v2466 = vpop.f32.mrb[0].mxu0
        %v2467 = vadd.f32 0.0, %v2466
        %v2468 = vpop.f32.mrb[0].mxu0
        %2469 = vmatprep.mubr.f32.mxu0 0.0
        %2470 = vmatmul.mubr.f32.gmra.mrb[0].mxu0 %v2317
        %v2471 = vpop.f32.mrb[0].mxu0
        %v2472 = vadd.f32 0.0, %v2471
        %v2473 = vpop.f32.mrb[0].mxu0
        %2474 = vmatprep.mubr.f32.mxu0 0.0
        %2475 = vmatmul.mubr.f32.gmra.mrb[0].mxu0 %v2318
        %v2476 = vpop.f32.mrb[0].mxu0
        %v2477 = vadd.f32 0.0, %v2476
        %v2478 = vpop.f32.mrb[0].mxu0
        %2479 = vmatprep.mubr.f32.mxu0 0.0
        %2480 = vmatmul.mubr.f32.gmra.mrb[0].mxu0 %v2319
        %v2481 = vpop.f32.mrb[0].mxu0
        %v2482 = vadd.f32 0.0, %v2481
        %v2483 = vpop.f32.mrb[0].mxu0
        %2484 = vmatprep.mubr.f32.mxu0 0.0
        %2485 = vmatmul.mubr.f32.gmra.mrb[0].mxu0 %v2320
        %v2486 = vpop.f32.mrb[0].mxu0
        %v2487 = vadd.f32 0.0, %v2486
        %v2488 = vpop.f32.mrb[0].mxu0
        %2489 = vmatprep.mubr.f32.mxu0 0.0
        %2490 = vmatmul.mubr.f32.gmra.mrb[0].mxu0 %v2321
        %v2491 = vpop.f32.mrb[0].mxu0
        %v2492 = vadd.f32 0.0, %v2491
        %v2493 = vpop.f32.mrb[0].mxu0
        %2494 = vmatprep.mubr.f32.mxu0 0.0
        %2495 = vmatmul.mubr.f32.gmra.mrb[0].mxu0 %v2322
        %v2496 = vpop.f32.mrb[0].mxu0
        %v2497 = vadd.f32 0.0, %v2496
        %v2498 = vpop.f32.mrb[0].mxu0
        %2499 = vmatprep.mubr.f32.mxu0 0.0
        %2500 = vmatmul.mubr.f32.gmra.mrb[0].mxu0 %v2323
        %v2501 = vpop.f32.mrb[0].mxu0
        %v2502 = vadd.f32 0.0, %v2501
        %v2503 = vpop.f32.mrb[0].mxu0
        %2504 = vmatprep.mubr.f32.mxu0 0.0
        %2505 = vmatmul.mubr.f32.gmra.mrb[0].mxu0 %v2324
        %v2506 = vpop.f32.mrb[0].mxu0
        %v2507 = vadd.f32 0.0, %v2506
        %v2508 = vpop.f32.mrb[0].mxu0
        %2509 = vmatprep.mubr.f32.mxu0 0.0
        %2510 = vmatmul.mubr.f32.gmra.mrb[0].mxu0 %v2325
        %v2511 = vpop.f32.mrb[0].mxu0
        %v2512 = vadd.f32 0.0, %v2511
        %v2513 = vpop.f32.mrb[0].mxu0
        %2514 = vmatprep.mubr.f32.mxu0 0.0
        %2515 = vmatmul.mubr.f32.gmra.mrb[0].mxu0 %v2326
        %v2516 = vpop.f32.mrb[0].mxu0
        %v2517 = vadd.f32 0.0, %v2516
        %v2518 = vpop.f32.mrb[0].mxu0
        %2519 = vmatprep.mubr.f32.mxu0 0.0
        %2520 = vmatmul.mubr.f32.gmra.mrb[0].mxu0 %v2327
        %v2521 = vpop.f32.mrb[0].mxu0
        %v2522 = vadd.f32 0.0, %v2521
        %v2523 = vpop.f32.mrb[0].mxu0
        %2524 = vmatprep.mubr.f32.mxu0 0.0
        %2525 = vmatmul.mubr.f32.gmra.mrb[0].mxu0 %v2328
        %v2526 = vpop.f32.mrb[0].mxu0
        %v2527 = vadd.f32 0.0, %v2526
        %v2528 = vpop.f32.mrb[0].mxu0
        %2529 = vmatprep.mubr.f32.mxu0 0.0
        %2530 = vmatmul.mubr.f32.gmra.mrb[0].mxu0 %v2329
        %v2531 = vpop.f32.mrb[0].mxu0
        %v2532 = vadd.f32 0.0, %v2531
        %v2533 = vpop.f32.mrb[0].mxu0
        %2534 = vmatprep.mubr.f32.mxu0 0.0
        %2535 = vmatmul.mubr.f32.gmra.mrb[0].mxu0 %v2330
        %v2536 = vpop.f32.mrb[0].mxu0
        %v2537 = vadd.f32 0.0, %v2536
        %v2538 = vpop.f32.mrb[0].mxu0
        %2539 = vmatprep.mubr.f32.mxu0 0.0
        %2540 = vmatmul.mubr.f32.gmra.mrb[0].mxu0 %v2331
        %v2541 = vpop.f32.mrb[0].mxu0
        %v2542 = vadd.f32 0.0, %v2541
        %v2543 = vpop.f32.mrb[0].mxu0
        %2544 = vmatprep.mubr.f32.mxu0 0.0
        %2545 = vmatmul.mubr.f32.gmra.mrb[0].mxu0 %v2332
        %v2546 = vpop.f32.mrb[0].mxu0
        %v2547 = vadd.f32 0.0, %v2546
        %v2548 = vpop.f32.mrb[0].mxu0
        %2549 = vmatprep.mubr.f32.mxu0 0.0
        %2550 = vmatmul.mubr.f32.gmra.mrb[0].mxu0 %v2333
        %v2551 = vpop.f32.mrb[0].mxu0
        %v2552 = vadd.f32 0.0, %v2551
        %v2553 = vpop.f32.mrb[0].mxu0
        %2554 = vmatprep.mubr.f32.mxu0 0.0
        %2555 = vmatmul.mubr.f32.gmra.mrb[0].mxu0 %v2334
        %v2556 = vpop.f32.mrb[0].mxu0
        %v2557 = vadd.f32 0.0, %v2556
        %v2558 = vpop.f32.mrb[0].mxu0
        %2559 = vmatprep.mubr.f32.mxu0 0.0
        %2560 = vmatmul.mubr.f32.gmra.mrb[0].mxu0 %v2335
        %v2561 = vpop.f32.mrb[0].mxu0
        %v2562 = vadd.f32 0.0, %v2561
        %v2563 = vpop.f32.mrb[0].mxu0
        %2564 = vmatprep.mubr.f32.mxu0 0.0
        %2565 = vmatmul.mubr.f32.gmra.mrb[0].mxu0 %v2336
        %v2566 = vpop.f32.mrb[0].mxu0
        %v2567 = vadd.f32 0.0, %v2566
        %v2568 = vpop.f32.mrb[0].mxu0
        %2569 = vmatprep.mubr.f32.mxu0 0.0
        %2570 = vmatmul.mubr.f32.gmra.mrb[0].mxu0 %v2337
        %v2571 = vpop.f32.mrb[0].mxu0
        %v2572 = vadd.f32 0.0, %v2571
        %v2573 = vpop.f32.mrb[0].mxu0
        %2574 = vmatprep.mubr.f32.mxu0 0.0
        %2575 = vmatmul.mubr.f32.gmra.mrb[0].mxu0 %v2338
        %v2576 = vpop.f32.mrb[0].mxu0
        %v2577 = vadd.f32 0.0, %v2576
        %v2578 = vpop.f32.mrb[0].mxu0
        %2579 = vdwg.mxu0
        %v2580 = vadd.f32 %v2274, %v2422
        %v2581 = vadd.f32 %v2275, %v2427
        %v2582 = vadd.f32 %v2276, %v2432
        %v2583 = vadd.f32 %v2277, %v2437
        %v2584 = vadd.f32 %v2278, %v2442
        %v2585 = vadd.f32 %v2279, %v2447
        %v2586 = vadd.f32 %v2280, %v2452
        %v2587 = vadd.f32 %v2281, %v2457
        %v2588 = vadd.f32 %v2282, %v2462
        %v2589 = vadd.f32 %v2283, %v2467
        %v2590 = vadd.f32 %v2284, %v2472
        %v2591 = vadd.f32 %v2285, %v2477
        %v2592 = vadd.f32 %v2286, %v2482
        %v2593 = vadd.f32 %v2287, %v2487
        %v2594 = vadd.f32 %v2288, %v2492
        %v2595 = vadd.f32 %v2289, %v2497
        %v2596 = vadd.f32 %v2290, %v2502
        %v2597 = vadd.f32 %v2291, %v2507
        %v2598 = vadd.f32 %v2292, %v2512
        %v2599 = vadd.f32 %v2293, %v2517
        %v2600 = vadd.f32 %v2294, %v2522
        %v2601 = vadd.f32 %v2295, %v2527
        %v2602 = vadd.f32 %v2296, %v2532
        %v2603 = vadd.f32 %v2297, %v2537
        %v2604 = vadd.f32 %v2298, %v2542
        %v2605 = vadd.f32 %v2299, %v2547
        %v2606 = vadd.f32 %v2300, %v2552
        %v2607 = vadd.f32 %v2301, %v2557
        %v2608 = vadd.f32 %v2302, %v2562
        %v2609 = vadd.f32 %v2303, %v2567
        %v2610 = vadd.f32 %v2304, %v2572
        %v2611 = vadd.f32 %v2305, %v2577
        %v2612 = vld [vmem:[%s2306 + $0x1] sm:$0xff]
        %v2613 = vld [vmem:[%s2306 + $0x9] sm:$0xff]
        %v2614 = vld [vmem:[%s2306 + $0x19] sm:$0xff]
        %v2615 = vld [vmem:[%s2306 + $0x21] sm:$0xff]
        %v2616 = vld [vmem:[%s2306 + $0x31] sm:$0xff]
        %v2617 = vld [vmem:[%s2306 + $0x39] sm:$0xff]
        %v2618 = vld [vmem:[%s2306 + $0x49] sm:$0xff]
        %v2619 = vld [vmem:[%s2306 + $0x51] sm:$0xff]
        %v2620 = vld [vmem:[%s2306 + $0x61] sm:$0xff]
        %v2621 = vld [vmem:[%s2306 + $0x69] sm:$0xff]
        %v2622 = vld [vmem:[%s2306 + $0x79] sm:$0xff]
        %v2623 = vld [vmem:[%s2306 + $0x81] sm:$0xff]
        %v2624 = vld [vmem:[%s2306 + $0x91] sm:$0xff]
        %v2625 = vld [vmem:[%s2306 + $0x99] sm:$0xff]
        %v2626 = vld [vmem:[%s2306 + $0xa9] sm:$0xff]
        %v2627 = vld [vmem:[%s2306 + $0xb1] sm:$0xff]
        %v2628 = vld [vmem:[%s2306 + $0xc1] sm:$0xff]
        %v2629 = vld [vmem:[%s2306 + $0xc9] sm:$0xff]
        %v2630 = vld [vmem:[%s2306 + $0xd9] sm:$0xff]
        %v2631 = vld [vmem:[%s2306 + $0xe1] sm:$0xff]
        %v2632 = vld [vmem:[%s2306 + $0xf1] sm:$0xff]
        %v2633 = vld [vmem:[%s2306 + $0xf9] sm:$0xff]
        %v2634 = vld [vmem:[%s2306 + $0x109] sm:$0xff]
        %v2635 = vld [vmem:[%s2306 + $0x111] sm:$0xff]
        %v2636 = vld [vmem:[%s2306 + $0x121] sm:$0xff]
        %v2637 = vld [vmem:[%s2306 + $0x129] sm:$0xff]
        %v2638 = vld [vmem:[%s2306 + $0x139] sm:$0xff]
        %v2639 = vld [vmem:[%s2306 + $0x141] sm:$0xff]
        %v2640 = vld [vmem:[%s2306 + $0x151] sm:$0xff]
        %v2641 = vld [vmem:[%s2306 + $0x159] sm:$0xff]
        %v2642 = vld [vmem:[%s2306 + $0x169] sm:$0xff]
        %v2643 = vld [vmem:[%s2306 + $0x171] sm:$0xff]
        %v2644 = vld [vmem:[#allocation6 + $0x380] sm:$0xff]
        %v2645 = vld [vmem:[#allocation6 + $0x388] sm:$0xff]
        %v2646 = vld [vmem:[#allocation6 + $0x390] sm:$0xff]
        %v2647 = vld [vmem:[#allocation6 + $0x398] sm:$0xff]
        %v2648 = vld [vmem:[#allocation6 + $0x3a0] sm:$0xff]
        %v2649 = vld [vmem:[#allocation6 + $0x3a8] sm:$0xff]
        %v2650 = vld [vmem:[#allocation6 + $0x3b0] sm:$0xff]
        %v2651 = vld [vmem:[#allocation6 + $0x3b8] sm:$0xff]
        %v2652 = vld [vmem:[#allocation6 + $0x3c0] sm:$0xff]
        %v2653 = vld [vmem:[#allocation6 + $0x3c8] sm:$0xff]
        %v2654 = vld [vmem:[#allocation6 + $0x3d0] sm:$0xff]
        %v2655 = vld [vmem:[#allocation6 + $0x3d8] sm:$0xff]
        %v2656 = vld [vmem:[#allocation6 + $0x3e0] sm:$0xff]
        %v2657 = vld [vmem:[#allocation6 + $0x3e8] sm:$0xff]
        %v2658 = vld [vmem:[#allocation6 + $0x3f0] sm:$0xff]
        %v2659 = vld [vmem:[#allocation6 + $0x3f8] sm:$0xff]
        %2660 = vmatprep.subr.mxu0 0.0
        %2661 = vmatpush1.msra.mxu0 %v2644
        %2662 = vmatprep.subr.mxu0 0.0
        %2663 = vmatpush1.msra.mxu0 %v2645
        %2664 = vmatprep.subr.mxu0 0.0
        %2665 = vmatpush1.msra.mxu0 %v2646
        %2666 = vmatprep.subr.mxu0 0.0
        %2667 = vmatpush1.msra.mxu0 %v2647
        %2668 = vmatprep.subr.mxu0 0.0
        %2669 = vmatpush1.msra.mxu0 %v2648
        %2670 = vmatprep.subr.mxu0 0.0
        %2671 = vmatpush1.msra.mxu0 %v2649
        %2672 = vmatprep.subr.mxu0 0.0
        %2673 = vmatpush1.msra.mxu0 %v2650
        %2674 = vmatprep.subr.mxu0 0.0
        %2675 = vmatpush1.msra.mxu0 %v2651
        %2676 = vmatprep.subr.mxu0 0.0
        %2677 = vmatpush1.msra.mxu0 %v2652
        %2678 = vmatprep.subr.mxu0 0.0
        %2679 = vmatpush1.msra.mxu0 %v2653
        %2680 = vmatprep.subr.mxu0 0.0
        %2681 = vmatpush1.msra.mxu0 %v2654
        %2682 = vmatprep.subr.mxu0 0.0
        %2683 = vmatpush1.msra.mxu0 %v2655
        %2684 = vmatprep.subr.mxu0 0.0
        %2685 = vmatpush1.msra.mxu0 %v2656
        %2686 = vmatprep.subr.mxu0 0.0
        %2687 = vmatpush1.msra.mxu0 %v2657
        %2688 = vmatprep.subr.mxu0 0.0
        %2689 = vmatpush1.msra.mxu0 %v2658
        %2690 = vmatprep.subr.mxu0 0.0
        %2691 = vmatpush1.msra.mxu0 %v2659
        %2692 = vmatprep.subr.mxu0 0.0
        %2693 = vmatpush1.msra.mxu0 0.0
        %2694 = vmatprep.subr.mxu0 0.0
        %2695 = vmatpush1.msra.mxu0 0.0
        %2696 = vmatprep.subr.mxu0 0.0
        %2697 = vmatpush1.msra.mxu0 0.0
        %2698 = vmatprep.subr.mxu0 0.0
        %2699 = vmatpush1.msra.mxu0 0.0
        %2700 = vmatprep.subr.mxu0 0.0
        %2701 = vmatpush1.msra.mxu0 0.0
        %2702 = vmatprep.subr.mxu0 0.0
        %2703 = vmatpush1.msra.mxu0 0.0
        %2704 = vmatprep.subr.mxu0 0.0
        %2705 = vmatpush1.msra.mxu0 0.0
        %2706 = vmatprep.subr.mxu0 0.0
        %2707 = vmatpush1.msra.mxu0 0.0
        %2708 = vmatprep.subr.mxu0 0.0
        %2709 = vmatpush1.msra.mxu0 0.0
        %2710 = vmatprep.subr.mxu0 0.0
        %2711 = vmatpush1.msra.mxu0 0.0
        %2712 = vmatprep.subr.mxu0 0.0
        %2713 = vmatpush1.msra.mxu0 0.0
        %2714 = vmatprep.subr.mxu0 0.0
        %2715 = vmatpush1.msra.mxu0 0.0
        %2716 = vmatprep.subr.mxu0 0.0
        %2717 = vmatpush1.msra.mxu0 0.0
        %2718 = vmatprep.subr.mxu0 0.0
        %2719 = vmatpush1.msra.mxu0 0.0
        %2720 = vmatprep.subr.mxu0 0.0
        %2721 = vmatpush1.msra.mxu0 0.0
        %2722 = vmatprep.subr.mxu0 0.0
        %2723 = vmatpush1.msra.mxu0 0.0
        %2724 = vmatprep.mubr.f32.mxu0 0.0
        %2725 = vmatmul.mubr.f32.gmra.mrb[0].mxu0 %v2612
        %v2726 = vpop.f32.mrb[0].mxu0
        %v2727 = vadd.f32 0.0, %v2726
        %v2728 = vpop.f32.mrb[0].mxu0
        %2729 = vmatprep.mubr.f32.mxu0 0.0
        %2730 = vmatmul.mubr.f32.gmra.mrb[0].mxu0 %v2613
        %v2731 = vpop.f32.mrb[0].mxu0
        %v2732 = vadd.f32 0.0, %v2731
        %v2733 = vpop.f32.mrb[0].mxu0
        %2734 = vmatprep.mubr.f32.mxu0 0.0
        %2735 = vmatmul.mubr.f32.gmra.mrb[0].mxu0 %v2614
        %v2736 = vpop.f32.mrb[0].mxu0
        %v2737 = vadd.f32 0.0, %v2736
        %v2738 = vpop.f32.mrb[0].mxu0
        %2739 = vmatprep.mubr.f32.mxu0 0.0
        %2740 = vmatmul.mubr.f32.gmra.mrb[0].mxu0 %v2615
        %v2741 = vpop.f32.mrb[0].mxu0
        %v2742 = vadd.f32 0.0, %v2741
        %v2743 = vpop.f32.mrb[0].mxu0
        %2744 = vmatprep.mubr.f32.mxu0 0.0
        %2745 = vmatmul.mubr.f32.gmra.mrb[0].mxu0 %v2616
        %v2746 = vpop.f32.mrb[0].mxu0
        %v2747 = vadd.f32 0.0, %v2746
        %v2748 = vpop.f32.mrb[0].mxu0
        %2749 = vmatprep.mubr.f32.mxu0 0.0
        %2750 = vmatmul.mubr.f32.gmra.mrb[0].mxu0 %v2617
        %v2751 = vpop.f32.mrb[0].mxu0
        %v2752 = vadd.f32 0.0, %v2751
        %v2753 = vpop.f32.mrb[0].mxu0
        %2754 = vmatprep.mubr.f32.mxu0 0.0
        %2755 = vmatmul.mubr.f32.gmra.mrb[0].mxu0 %v2618
        %v2756 = vpop.f32.mrb[0].mxu0
        %v2757 = vadd.f32 0.0, %v2756
        %v2758 = vpop.f32.mrb[0].mxu0
        %2759 = vmatprep.mubr.f32.mxu0 0.0
        %2760 = vmatmul.mubr.f32.gmra.mrb[0].mxu0 %v2619
        %v2761 = vpop.f32.mrb[0].mxu0
        %v2762 = vadd.f32 0.0, %v2761
        %v2763 = vpop.f32.mrb[0].mxu0
        %2764 = vmatprep.mubr.f32.mxu0 0.0
        %2765 = vmatmul.mubr.f32.gmra.mrb[0].mxu0 %v2620
        %v2766 = vpop.f32.mrb[0].mxu0
        %v2767 = vadd.f32 0.0, %v2766
        %v2768 = vpop.f32.mrb[0].mxu0
        %2769 = vmatprep.mubr.f32.mxu0 0.0
        %2770 = vmatmul.mubr.f32.gmra.mrb[0].mxu0 %v2621
        %v2771 = vpop.f32.mrb[0].mxu0
        %v2772 = vadd.f32 0.0, %v2771
        %v2773 = vpop.f32.mrb[0].mxu0
        %2774 = vmatprep.mubr.f32.mxu0 0.0
        %2775 = vmatmul.mubr.f32.gmra.mrb[0].mxu0 %v2622
        %v2776 = vpop.f32.mrb[0].mxu0
        %v2777 = vadd.f32 0.0, %v2776
        %v2778 = vpop.f32.mrb[0].mxu0
        %2779 = vmatprep.mubr.f32.mxu0 0.0
        %2780 = vmatmul.mubr.f32.gmra.mrb[0].mxu0 %v2623
        %v2781 = vpop.f32.mrb[0].mxu0
        %v2782 = vadd.f32 0.0, %v2781
        %v2783 = vpop.f32.mrb[0].mxu0
        %2784 = vmatprep.mubr.f32.mxu0 0.0
        %2785 = vmatmul.mubr.f32.gmra.mrb[0].mxu0 %v2624
        %v2786 = vpop.f32.mrb[0].mxu0
        %v2787 = vadd.f32 0.0, %v2786
        %v2788 = vpop.f32.mrb[0].mxu0
        %2789 = vmatprep.mubr.f32.mxu0 0.0
        %2790 = vmatmul.mubr.f32.gmra.mrb[0].mxu0 %v2625
        %v2791 = vpop.f32.mrb[0].mxu0
        %v2792 = vadd.f32 0.0, %v2791
        %v2793 = vpop.f32.mrb[0].mxu0
        %2794 = vmatprep.mubr.f32.mxu0 0.0
        %2795 = vmatmul.mubr.f32.gmra.mrb[0].mxu0 %v2626
        %v2796 = vpop.f32.mrb[0].mxu0
        %v2797 = vadd.f32 0.0, %v2796
        %v2798 = vpop.f32.mrb[0].mxu0
        %2799 = vmatprep.mubr.f32.mxu0 0.0
        %2800 = vmatmul.mubr.f32.gmra.mrb[0].mxu0 %v2627
        %v2801 = vpop.f32.mrb[0].mxu0
        %v2802 = vadd.f32 0.0, %v2801
        %v2803 = vpop.f32.mrb[0].mxu0
        %2804 = vmatprep.mubr.f32.mxu0 0.0
        %2805 = vmatmul.mubr.f32.gmra.mrb[0].mxu0 %v2628
        %v2806 = vpop.f32.mrb[0].mxu0
        %v2807 = vadd.f32 0.0, %v2806
        %v2808 = vpop.f32.mrb[0].mxu0
        %2809 = vmatprep.mubr.f32.mxu0 0.0
        %2810 = vmatmul.mubr.f32.gmra.mrb[0].mxu0 %v2629
        %v2811 = vpop.f32.mrb[0].mxu0
        %v2812 = vadd.f32 0.0, %v2811
        %v2813 = vpop.f32.mrb[0].mxu0
        %2814 = vmatprep.mubr.f32.mxu0 0.0
        %2815 = vmatmul.mubr.f32.gmra.mrb[0].mxu0 %v2630
        %v2816 = vpop.f32.mrb[0].mxu0
        %v2817 = vadd.f32 0.0, %v2816
        %v2818 = vpop.f32.mrb[0].mxu0
        %2819 = vmatprep.mubr.f32.mxu0 0.0
        %2820 = vmatmul.mubr.f32.gmra.mrb[0].mxu0 %v2631
        %v2821 = vpop.f32.mrb[0].mxu0
        %v2822 = vadd.f32 0.0, %v2821
        %v2823 = vpop.f32.mrb[0].mxu0
        %2824 = vmatprep.mubr.f32.mxu0 0.0
        %2825 = vmatmul.mubr.f32.gmra.mrb[0].mxu0 %v2632
        %v2826 = vpop.f32.mrb[0].mxu0
        %v2827 = vadd.f32 0.0, %v2826
        %v2828 = vpop.f32.mrb[0].mxu0
        %2829 = vmatprep.mubr.f32.mxu0 0.0
        %2830 = vmatmul.mubr.f32.gmra.mrb[0].mxu0 %v2633
        %v2831 = vpop.f32.mrb[0].mxu0
        %v2832 = vadd.f32 0.0, %v2831
        %v2833 = vpop.f32.mrb[0].mxu0
        %2834 = vmatprep.mubr.f32.mxu0 0.0
        %2835 = vmatmul.mubr.f32.gmra.mrb[0].mxu0 %v2634
        %v2836 = vpop.f32.mrb[0].mxu0
        %v2837 = vadd.f32 0.0, %v2836
        %v2838 = vpop.f32.mrb[0].mxu0
        %2839 = vmatprep.mubr.f32.mxu0 0.0
        %2840 = vmatmul.mubr.f32.gmra.mrb[0].mxu0 %v2635
        %v2841 = vpop.f32.mrb[0].mxu0
        %v2842 = vadd.f32 0.0, %v2841
        %v2843 = vpop.f32.mrb[0].mxu0
        %2844 = vmatprep.mubr.f32.mxu0 0.0
        %2845 = vmatmul.mubr.f32.gmra.mrb[0].mxu0 %v2636
        %v2846 = vpop.f32.mrb[0].mxu0
        %v2847 = vadd.f32 0.0, %v2846
        %v2848 = vpop.f32.mrb[0].mxu0
        %2849 = vmatprep.mubr.f32.mxu0 0.0
        %2850 = vmatmul.mubr.f32.gmra.mrb[0].mxu0 %v2637
        %v2851 = vpop.f32.mrb[0].mxu0
        %v2852 = vadd.f32 0.0, %v2851
        %v2853 = vpop.f32.mrb[0].mxu0
        %2854 = vmatprep.mubr.f32.mxu0 0.0
        %2855 = vmatmul.mubr.f32.gmra.mrb[0].mxu0 %v2638
        %v2856 = vpop.f32.mrb[0].mxu0
        %v2857 = vadd.f32 0.0, %v2856
        %v2858 = vpop.f32.mrb[0].mxu0
        %2859 = vmatprep.mubr.f32.mxu0 0.0
        %2860 = vmatmul.mubr.f32.gmra.mrb[0].mxu0 %v2639
        %v2861 = vpop.f32.mrb[0].mxu0
        %v2862 = vadd.f32 0.0, %v2861
        %v2863 = vpop.f32.mrb[0].mxu0
        %2864 = vmatprep.mubr.f32.mxu0 0.0
        %2865 = vmatmul.mubr.f32.gmra.mrb[0].mxu0 %v2640
        %v2866 = vpop.f32.mrb[0].mxu0
        %v2867 = vadd.f32 0.0, %v2866
        %v2868 = vpop.f32.mrb[0].mxu0
        %2869 = vmatprep.mubr.f32.mxu0 0.0
        %2870 = vmatmul.mubr.f32.gmra.mrb[0].mxu0 %v2641
        %v2871 = vpop.f32.mrb[0].mxu0
        %v2872 = vadd.f32 0.0, %v2871
        %v2873 = vpop.f32.mrb[0].mxu0
        %2874 = vmatprep.mubr.f32.mxu0 0.0
        %2875 = vmatmul.mubr.f32.gmra.mrb[0].mxu0 %v2642
        %v2876 = vpop.f32.mrb[0].mxu0
        %v2877 = vadd.f32 0.0, %v2876
        %v2878 = vpop.f32.mrb[0].mxu0
        %2879 = vmatprep.mubr.f32.mxu0 0.0
        %2880 = vmatmul.mubr.f32.gmra.mrb[0].mxu0 %v2643
        %v2881 = vpop.f32.mrb[0].mxu0
        %v2882 = vadd.f32 0.0, %v2881
        %v2883 = vpop.f32.mrb[0].mxu0
        %2884 = vdwg.mxu0
        %v2885 = vadd.f32 %v2580, %v2727
        %v2886 = vadd.f32 %v2581, %v2732
        %v2887 = vadd.f32 %v2582, %v2737
        %v2888 = vadd.f32 %v2583, %v2742
        %v2889 = vadd.f32 %v2584, %v2747
        %v2890 = vadd.f32 %v2585, %v2752
        %v2891 = vadd.f32 %v2586, %v2757
        %v2892 = vadd.f32 %v2587, %v2762
        %v2893 = vadd.f32 %v2588, %v2767
        %v2894 = vadd.f32 %v2589, %v2772
        %v2895 = vadd.f32 %v2590, %v2777
        %v2896 = vadd.f32 %v2591, %v2782
        %v2897 = vadd.f32 %v2592, %v2787
        %v2898 = vadd.f32 %v2593, %v2792
        %v2899 = vadd.f32 %v2594, %v2797
        %v2900 = vadd.f32 %v2595, %v2802
        %v2901 = vadd.f32 %v2596, %v2807
        %v2902 = vadd.f32 %v2597, %v2812
        %v2903 = vadd.f32 %v2598, %v2817
        %v2904 = vadd.f32 %v2599, %v2822
        %v2905 = vadd.f32 %v2600, %v2827
        %v2906 = vadd.f32 %v2601, %v2832
        %v2907 = vadd.f32 %v2602, %v2837
        %v2908 = vadd.f32 %v2603, %v2842
        %v2909 = vadd.f32 %v2604, %v2847
        %v2910 = vadd.f32 %v2605, %v2852
        %v2911 = vadd.f32 %v2606, %v2857
        %v2912 = vadd.f32 %v2607, %v2862
        %v2913 = vadd.f32 %v2608, %v2867
        %v2914 = vadd.f32 %v2609, %v2872
        %v2915 = vadd.f32 %v2610, %v2877
        %v2916 = vadd.f32 %v2611, %v2882
        %v2917 = vld [vmem:[%s2306 + $0x2] sm:$0xff]
        %v2918 = vld [vmem:[%s2306 + $0xa] sm:$0xff]
        %v2919 = vld [vmem:[%s2306 + $0x1a] sm:$0xff]
        %v2920 = vld [vmem:[%s2306 + $0x22] sm:$0xff]
        %v2921 = vld [vmem:[%s2306 + $0x32] sm:$0xff]
        %v2922 = vld [vmem:[%s2306 + $0x3a] sm:$0xff]
        %v2923 = vld [vmem:[%s2306 + $0x4a] sm:$0xff]
        %v2924 = vld [vmem:[%s2306 + $0x52] sm:$0xff]
        %v2925 = vld [vmem:[%s2306 + $0x62] sm:$0xff]
        %v2926 = vld [vmem:[%s2306 + $0x6a] sm:$0xff]
        %v2927 = vld [vmem:[%s2306 + $0x7a] sm:$0xff]
        %v2928 = vld [vmem:[%s2306 + $0x82] sm:$0xff]
        %v2929 = vld [vmem:[%s2306 + $0x92] sm:$0xff]
        %v2930 = vld [vmem:[%s2306 + $0x9a] sm:$0xff]
        %v2931 = vld [vmem:[%s2306 + $0xaa] sm:$0xff]
        %v2932 = vld [vmem:[%s2306 + $0xb2] sm:$0xff]
        %v2933 = vld [vmem:[%s2306 + $0xc2] sm:$0xff]
        %v2934 = vld [vmem:[%s2306 + $0xca] sm:$0xff]
        %v2935 = vld [vmem:[%s2306 + $0xda] sm:$0xff]
        %v2936 = vld [vmem:[%s2306 + $0xe2] sm:$0xff]
        %v2937 = vld [vmem:[%s2306 + $0xf2] sm:$0xff]
        %v2938 = vld [vmem:[%s2306 + $0xfa] sm:$0xff]
        %v2939 = vld [vmem:[%s2306 + $0x10a] sm:$0xff]
        %v2940 = vld [vmem:[%s2306 + $0x112] sm:$0xff]
        %v2941 = vld [vmem:[%s2306 + $0x122] sm:$0xff]
        %v2942 = vld [vmem:[%s2306 + $0x12a] sm:$0xff]
        %v2943 = vld [vmem:[%s2306 + $0x13a] sm:$0xff]
        %v2944 = vld [vmem:[%s2306 + $0x142] sm:$0xff]
        %v2945 = vld [vmem:[%s2306 + $0x152] sm:$0xff]
        %v2946 = vld [vmem:[%s2306 + $0x15a] sm:$0xff]
        %v2947 = vld [vmem:[%s2306 + $0x16a] sm:$0xff]
        %v2948 = vld [vmem:[%s2306 + $0x172] sm:$0xff]
        %v2949 = vld [vmem:[#allocation6 + $0x400] sm:$0xff]
        %v2950 = vld [vmem:[#allocation6 + $0x408] sm:$0xff]
        %v2951 = vld [vmem:[#allocation6 + $0x410] sm:$0xff]
        %v2952 = vld [vmem:[#allocation6 + $0x418] sm:$0xff]
        %v2953 = vld [vmem:[#allocation6 + $0x420] sm:$0xff]
        %v2954 = vld [vmem:[#allocation6 + $0x428] sm:$0xff]
        %v2955 = vld [vmem:[#allocation6 + $0x430] sm:$0xff]
        %v2956 = vld [vmem:[#allocation6 + $0x438] sm:$0xff]
        %v2957 = vld [vmem:[#allocation6 + $0x440] sm:$0xff]
        %v2958 = vld [vmem:[#allocation6 + $0x448] sm:$0xff]
        %v2959 = vld [vmem:[#allocation6 + $0x450] sm:$0xff]
        %v2960 = vld [vmem:[#allocation6 + $0x458] sm:$0xff]
        %v2961 = vld [vmem:[#allocation6 + $0x460] sm:$0xff]
        %v2962 = vld [vmem:[#allocation6 + $0x468] sm:$0xff]
        %v2963 = vld [vmem:[#allocation6 + $0x470] sm:$0xff]
        %v2964 = vld [vmem:[#allocation6 + $0x478] sm:$0xff]
        %2965 = vmatprep.subr.mxu0 0.0
        %2966 = vmatpush1.msra.mxu0 %v2949
        %2967 = vmatprep.subr.mxu0 0.0
        %2968 = vmatpush1.msra.mxu0 %v2950
        %2969 = vmatprep.subr.mxu0 0.0
        %2970 = vmatpush1.msra.mxu0 %v2951
        %2971 = vmatprep.subr.mxu0 0.0
        %2972 = vmatpush1.msra.mxu0 %v2952
        %2973 = vmatprep.subr.mxu0 0.0
        %2974 = vmatpush1.msra.mxu0 %v2953
        %2975 = vmatprep.subr.mxu0 0.0
        %2976 = vmatpush1.msra.mxu0 %v2954
        %2977 = vmatprep.subr.mxu0 0.0
        %2978 = vmatpush1.msra.mxu0 %v2955
        %2979 = vmatprep.subr.mxu0 0.0
        %2980 = vmatpush1.msra.mxu0 %v2956
        %2981 = vmatprep.subr.mxu0 0.0
        %2982 = vmatpush1.msra.mxu0 %v2957
        %2983 = vmatprep.subr.mxu0 0.0
        %2984 = vmatpush1.msra.mxu0 %v2958
        %2985 = vmatprep.subr.mxu0 0.0
        %2986 = vmatpush1.msra.mxu0 %v2959
        %2987 = vmatprep.subr.mxu0 0.0
        %2988 = vmatpush1.msra.mxu0 %v2960
        %2989 = vmatprep.subr.mxu0 0.0
        %2990 = vmatpush1.msra.mxu0 %v2961
        %2991 = vmatprep.subr.mxu0 0.0
        %2992 = vmatpush1.msra.mxu0 %v2962
        %2993 = vmatprep.subr.mxu0 0.0
        %2994 = vmatpush1.msra.mxu0 %v2963
        %2995 = vmatprep.subr.mxu0 0.0
        %2996 = vmatpush1.msra.mxu0 %v2964
        %2997 = vmatprep.subr.mxu0 0.0
        %2998 = vmatpush1.msra.mxu0 0.0
        %2999 = vmatprep.subr.mxu0 0.0
        %3000 = vmatpush1.msra.mxu0 0.0
        %3001 = vmatprep.subr.mxu0 0.0
        %3002 = vmatpush1.msra.mxu0 0.0
        %3003 = vmatprep.subr.mxu0 0.0
        %3004 = vmatpush1.msra.mxu0 0.0
        %3005 = vmatprep.subr.mxu0 0.0
        %3006 = vmatpush1.msra.mxu0 0.0
        %3007 = vmatprep.subr.mxu0 0.0
        %3008 = vmatpush1.msra.mxu0 0.0
        %3009 = vmatprep.subr.mxu0 0.0
        %3010 = vmatpush1.msra.mxu0 0.0
        %3011 = vmatprep.subr.mxu0 0.0
        %3012 = vmatpush1.msra.mxu0 0.0
        %3013 = vmatprep.subr.mxu0 0.0
        %3014 = vmatpush1.msra.mxu0 0.0
        %3015 = vmatprep.subr.mxu0 0.0
        %3016 = vmatpush1.msra.mxu0 0.0
        %3017 = vmatprep.subr.mxu0 0.0
        %3018 = vmatpush1.msra.mxu0 0.0
        %3019 = vmatprep.subr.mxu0 0.0
        %3020 = vmatpush1.msra.mxu0 0.0
        %3021 = vmatprep.subr.mxu0 0.0
        %3022 = vmatpush1.msra.mxu0 0.0
        %3023 = vmatprep.subr.mxu0 0.0
        %3024 = vmatpush1.msra.mxu0 0.0
        %3025 = vmatprep.subr.mxu0 0.0
        %3026 = vmatpush1.msra.mxu0 0.0
        %3027 = vmatprep.subr.mxu0 0.0
        %3028 = vmatpush1.msra.mxu0 0.0
        %3029 = vmatprep.mubr.f32.mxu0 0.0
        %3030 = vmatmul.mubr.f32.gmra.mrb[0].mxu0 %v2917
        %v3031 = vpop.f32.mrb[0].mxu0
        %v3032 = vadd.f32 0.0, %v3031
        %v3033 = vpop.f32.mrb[0].mxu0
        %3034 = vmatprep.mubr.f32.mxu0 0.0
        %3035 = vmatmul.mubr.f32.gmra.mrb[0].mxu0 %v2918
        %v3036 = vpop.f32.mrb[0].mxu0
        %v3037 = vadd.f32 0.0, %v3036
        %v3038 = vpop.f32.mrb[0].mxu0
        %3039 = vmatprep.mubr.f32.mxu0 0.0
        %3040 = vmatmul.mubr.f32.gmra.mrb[0].mxu0 %v2919
        %v3041 = vpop.f32.mrb[0].mxu0
        %v3042 = vadd.f32 0.0, %v3041
        %v3043 = vpop.f32.mrb[0].mxu0
        %3044 = vmatprep.mubr.f32.mxu0 0.0
        %3045 = vmatmul.mubr.f32.gmra.mrb[0].mxu0 %v2920
        %v3046 = vpop.f32.mrb[0].mxu0
        %v3047 = vadd.f32 0.0, %v3046
        %v3048 = vpop.f32.mrb[0].mxu0
        %3049 = vmatprep.mubr.f32.mxu0 0.0
        %3050 = vmatmul.mubr.f32.gmra.mrb[0].mxu0 %v2921
        %v3051 = vpop.f32.mrb[0].mxu0
        %v3052 = vadd.f32 0.0, %v3051
        %v3053 = vpop.f32.mrb[0].mxu0
        %3054 = vmatprep.mubr.f32.mxu0 0.0
        %3055 = vmatmul.mubr.f32.gmra.mrb[0].mxu0 %v2922
        %v3056 = vpop.f32.mrb[0].mxu0
        %v3057 = vadd.f32 0.0, %v3056
        %v3058 = vpop.f32.mrb[0].mxu0
        %3059 = vmatprep.mubr.f32.mxu0 0.0
        %3060 = vmatmul.mubr.f32.gmra.mrb[0].mxu0 %v2923
        %v3061 = vpop.f32.mrb[0].mxu0
        %v3062 = vadd.f32 0.0, %v3061
        %v3063 = vpop.f32.mrb[0].mxu0
        %3064 = vmatprep.mubr.f32.mxu0 0.0
        %3065 = vmatmul.mubr.f32.gmra.mrb[0].mxu0 %v2924
        %v3066 = vpop.f32.mrb[0].mxu0
        %v3067 = vadd.f32 0.0, %v3066
        %v3068 = vpop.f32.mrb[0].mxu0
        %3069 = vmatprep.mubr.f32.mxu0 0.0
        %3070 = vmatmul.mubr.f32.gmra.mrb[0].mxu0 %v2925
        %v3071 = vpop.f32.mrb[0].mxu0
        %v3072 = vadd.f32 0.0, %v3071
        %v3073 = vpop.f32.mrb[0].mxu0
        %3074 = vmatprep.mubr.f32.mxu0 0.0
        %3075 = vmatmul.mubr.f32.gmra.mrb[0].mxu0 %v2926
        %v3076 = vpop.f32.mrb[0].mxu0
        %v3077 = vadd.f32 0.0, %v3076
        %v3078 = vpop.f32.mrb[0].mxu0
        %3079 = vmatprep.mubr.f32.mxu0 0.0
        %3080 = vmatmul.mubr.f32.gmra.mrb[0].mxu0 %v2927
        %v3081 = vpop.f32.mrb[0].mxu0
        %v3082 = vadd.f32 0.0, %v3081
        %v3083 = vpop.f32.mrb[0].mxu0
        %3084 = vmatprep.mubr.f32.mxu0 0.0
        %3085 = vmatmul.mubr.f32.gmra.mrb[0].mxu0 %v2928
        %v3086 = vpop.f32.mrb[0].mxu0
        %v3087 = vadd.f32 0.0, %v3086
        %v3088 = vpop.f32.mrb[0].mxu0
        %3089 = vmatprep.mubr.f32.mxu0 0.0
        %3090 = vmatmul.mubr.f32.gmra.mrb[0].mxu0 %v2929
        %v3091 = vpop.f32.mrb[0].mxu0
        %v3092 = vadd.f32 0.0, %v3091
        %v3093 = vpop.f32.mrb[0].mxu0
        %3094 = vmatprep.mubr.f32.mxu0 0.0
        %3095 = vmatmul.mubr.f32.gmra.mrb[0].mxu0 %v2930
        %v3096 = vpop.f32.mrb[0].mxu0
        %v3097 = vadd.f32 0.0, %v3096
        %v3098 = vpop.f32.mrb[0].mxu0
        %3099 = vmatprep.mubr.f32.mxu0 0.0
        %3100 = vmatmul.mubr.f32.gmra.mrb[0].mxu0 %v2931
        %v3101 = vpop.f32.mrb[0].mxu0
        %v3102 = vadd.f32 0.0, %v3101
        %v3103 = vpop.f32.mrb[0].mxu0
        %3104 = vmatprep.mubr.f32.mxu0 0.0
        %3105 = vmatmul.mubr.f32.gmra.mrb[0].mxu0 %v2932
        %v3106 = vpop.f32.mrb[0].mxu0
        %v3107 = vadd.f32 0.0, %v3106
        %v3108 = vpop.f32.mrb[0].mxu0
        %3109 = vmatprep.mubr.f32.mxu0 0.0
        %3110 = vmatmul.mubr.f32.gmra.mrb[0].mxu0 %v2933
        %v3111 = vpop.f32.mrb[0].mxu0
        %v3112 = vadd.f32 0.0, %v3111
        %v3113 = vpop.f32.mrb[0].mxu0
        %3114 = vmatprep.mubr.f32.mxu0 0.0
        %3115 = vmatmul.mubr.f32.gmra.mrb[0].mxu0 %v2934
        %v3116 = vpop.f32.mrb[0].mxu0
        %v3117 = vadd.f32 0.0, %v3116
        %v3118 = vpop.f32.mrb[0].mxu0
        %3119 = vmatprep.mubr.f32.mxu0 0.0
        %3120 = vmatmul.mubr.f32.gmra.mrb[0].mxu0 %v2935
        %v3121 = vpop.f32.mrb[0].mxu0
        %v3122 = vadd.f32 0.0, %v3121
        %v3123 = vpop.f32.mrb[0].mxu0
        %3124 = vmatprep.mubr.f32.mxu0 0.0
        %3125 = vmatmul.mubr.f32.gmra.mrb[0].mxu0 %v2936
        %v3126 = vpop.f32.mrb[0].mxu0
        %v3127 = vadd.f32 0.0, %v3126
        %v3128 = vpop.f32.mrb[0].mxu0
        %3129 = vmatprep.mubr.f32.mxu0 0.0
        %3130 = vmatmul.mubr.f32.gmra.mrb[0].mxu0 %v2937
        %v3131 = vpop.f32.mrb[0].mxu0
        %v3132 = vadd.f32 0.0, %v3131
        %v3133 = vpop.f32.mrb[0].mxu0
        %3134 = vmatprep.mubr.f32.mxu0 0.0
        %3135 = vmatmul.mubr.f32.gmra.mrb[0].mxu0 %v2938
        %v3136 = vpop.f32.mrb[0].mxu0
        %v3137 = vadd.f32 0.0, %v3136
        %v3138 = vpop.f32.mrb[0].mxu0
        %3139 = vmatprep.mubr.f32.mxu0 0.0
        %3140 = vmatmul.mubr.f32.gmra.mrb[0].mxu0 %v2939
        %v3141 = vpop.f32.mrb[0].mxu0
        %v3142 = vadd.f32 0.0, %v3141
        %v3143 = vpop.f32.mrb[0].mxu0
        %3144 = vmatprep.mubr.f32.mxu0 0.0
        %3145 = vmatmul.mubr.f32.gmra.mrb[0].mxu0 %v2940
        %v3146 = vpop.f32.mrb[0].mxu0
        %v3147 = vadd.f32 0.0, %v3146
        %v3148 = vpop.f32.mrb[0].mxu0
        %3149 = vmatprep.mubr.f32.mxu0 0.0
        %3150 = vmatmul.mubr.f32.gmra.mrb[0].mxu0 %v2941
        %v3151 = vpop.f32.mrb[0].mxu0
        %v3152 = vadd.f32 0.0, %v3151
        %v3153 = vpop.f32.mrb[0].mxu0
        %3154 = vmatprep.mubr.f32.mxu0 0.0
        %3155 = vmatmul.mubr.f32.gmra.mrb[0].mxu0 %v2942
        %v3156 = vpop.f32.mrb[0].mxu0
        %v3157 = vadd.f32 0.0, %v3156
        %v3158 = vpop.f32.mrb[0].mxu0
        %3159 = vmatprep.mubr.f32.mxu0 0.0
        %3160 = vmatmul.mubr.f32.gmra.mrb[0].mxu0 %v2943
        %v3161 = vpop.f32.mrb[0].mxu0
        %v3162 = vadd.f32 0.0, %v3161
        %v3163 = vpop.f32.mrb[0].mxu0
        %3164 = vmatprep.mubr.f32.mxu0 0.0
        %3165 = vmatmul.mubr.f32.gmra.mrb[0].mxu0 %v2944
        %v3166 = vpop.f32.mrb[0].mxu0
        %v3167 = vadd.f32 0.0, %v3166
        %v3168 = vpop.f32.mrb[0].mxu0
        %3169 = vmatprep.mubr.f32.mxu0 0.0
        %3170 = vmatmul.mubr.f32.gmra.mrb[0].mxu0 %v2945
        %v3171 = vpop.f32.mrb[0].mxu0
        %v3172 = vadd.f32 0.0, %v3171
        %v3173 = vpop.f32.mrb[0].mxu0
        %3174 = vmatprep.mubr.f32.mxu0 0.0
        %3175 = vmatmul.mubr.f32.gmra.mrb[0].mxu0 %v2946
        %v3176 = vpop.f32.mrb[0].mxu0
        %v3177 = vadd.f32 0.0, %v3176
        %v3178 = vpop.f32.mrb[0].mxu0
        %3179 = vmatprep.mubr.f32.mxu0 0.0
        %3180 = vmatmul.mubr.f32.gmra.mrb[0].mxu0 %v2947
        %v3181 = vpop.f32.mrb[0].mxu0
        %v3182 = vadd.f32 0.0, %v3181
        %v3183 = vpop.f32.mrb[0].mxu0
        %3184 = vmatprep.mubr.f32.mxu0 0.0
        %3185 = vmatmul.mubr.f32.gmra.mrb[0].mxu0 %v2948
        %v3186 = vpop.f32.mrb[0].mxu0
        %v3187 = vadd.f32 0.0, %v3186
        %v3188 = vpop.f32.mrb[0].mxu0
        %3189 = vdwg.mxu0
        %v3190 = vadd.f32 %v2885, %v3032
        %v3191 = vadd.f32 %v2886, %v3037
        %v3192 = vadd.f32 %v2887, %v3042
        %v3193 = vadd.f32 %v2888, %v3047
        %v3194 = vadd.f32 %v2889, %v3052
        %v3195 = vadd.f32 %v2890, %v3057
        %v3196 = vadd.f32 %v2891, %v3062
        %v3197 = vadd.f32 %v2892, %v3067
        %v3198 = vadd.f32 %v2893, %v3072
        %v3199 = vadd.f32 %v2894, %v3077
        %v3200 = vadd.f32 %v2895, %v3082
        %v3201 = vadd.f32 %v2896, %v3087
        %v3202 = vadd.f32 %v2897, %v3092
        %v3203 = vadd.f32 %v2898, %v3097
        %v3204 = vadd.f32 %v2899, %v3102
        %v3205 = vadd.f32 %v2900, %v3107
        %v3206 = vadd.f32 %v2901, %v3112
        %v3207 = vadd.f32 %v2902, %v3117
        %v3208 = vadd.f32 %v2903, %v3122
        %v3209 = vadd.f32 %v2904, %v3127
        %v3210 = vadd.f32 %v2905, %v3132
        %v3211 = vadd.f32 %v2906, %v3137
        %v3212 = vadd.f32 %v2907, %v3142
        %v3213 = vadd.f32 %v2908, %v3147
        %v3214 = vadd.f32 %v2909, %v3152
        %v3215 = vadd.f32 %v2910, %v3157
        %v3216 = vadd.f32 %v2911, %v3162
        %v3217 = vadd.f32 %v2912, %v3167
        %v3218 = vadd.f32 %v2913, %v3172
        %v3219 = vadd.f32 %v2914, %v3177
        %v3220 = vadd.f32 %v2915, %v3182
        %v3221 = vadd.f32 %v2916, %v3187
        %v3222 = vld [vmem:[%s4] sm:$0x1]
        %v3224 = vlaneseq
        %v3225 = vshrl.u32 %v3224, 7
        %v3226 = vsub.s32 0, %v3225
        %v3227 = vrot.slane %v3222, %v3226
        %v3229 = vmul.f32 %v3190, %v3227
        %v3230 = vmul.f32 %v3191, %v3227
        %v3231 = vmul.f32 %v3192, %v3227
        %v3232 = vmul.f32 %v3193, %v3227
        %v3233 = vmul.f32 %v3194, %v3227
        %v3234 = vmul.f32 %v3195, %v3227
        %v3235 = vmul.f32 %v3196, %v3227
        %v3236 = vmul.f32 %v3197, %v3227
        %v3237 = vmul.f32 %v3198, %v3227
        %v3238 = vmul.f32 %v3199, %v3227
        %v3239 = vmul.f32 %v3200, %v3227
        %v3240 = vmul.f32 %v3201, %v3227
        %v3241 = vmul.f32 %v3202, %v3227
        %v3242 = vmul.f32 %v3203, %v3227
        %v3243 = vmul.f32 %v3204, %v3227
        %v3244 = vmul.f32 %v3205, %v3227
        %v3245 = vmul.f32 %v3206, %v3227
        %v3246 = vmul.f32 %v3207, %v3227
        %v3247 = vmul.f32 %v3208, %v3227
        %v3248 = vmul.f32 %v3209, %v3227
        %v3249 = vmul.f32 %v3210, %v3227
        %v3250 = vmul.f32 %v3211, %v3227
        %v3251 = vmul.f32 %v3212, %v3227
        %v3252 = vmul.f32 %v3213, %v3227
        %v3253 = vmul.f32 %v3214, %v3227
        %v3254 = vmul.f32 %v3215, %v3227
        %v3255 = vmul.f32 %v3216, %v3227
        %v3256 = vmul.f32 %v3217, %v3227
        %v3257 = vmul.f32 %v3218, %v3227
        %v3258 = vmul.f32 %v3219, %v3227
        %v3259 = vmul.f32 %v3220, %v3227
        %v3260 = vmul.f32 %v3221, %v3227
        %v3261 = vld [vmem:[%s5] sm:$0x1]
        %v3263 = vlaneseq
        %v3264 = vshrl.u32 %v3263, 7
        %v3265 = vsub.s32 0, %v3264
        %v3266 = vrot.slane %v3261, %v3265
        %v3268 = vadd.f32 %v3229, %v3266
        %v3269 = vadd.f32 %v3230, %v3266
        %v3270 = vadd.f32 %v3231, %v3266
        %v3271 = vadd.f32 %v3232, %v3266
        %v3272 = vadd.f32 %v3233, %v3266
        %v3273 = vadd.f32 %v3234, %v3266
        %v3274 = vadd.f32 %v3235, %v3266
        %v3275 = vadd.f32 %v3236, %v3266
        %v3276 = vadd.f32 %v3237, %v3266
        %v3277 = vadd.f32 %v3238, %v3266
        %v3278 = vadd.f32 %v3239, %v3266
        %v3279 = vadd.f32 %v3240, %v3266
        %v3280 = vadd.f32 %v3241, %v3266
        %v3281 = vadd.f32 %v3242, %v3266
        %v3282 = vadd.f32 %v3243, %v3266
        %v3283 = vadd.f32 %v3244, %v3266
        %v3284 = vadd.f32 %v3245, %v3266
        %v3285 = vadd.f32 %v3246, %v3266
        %v3286 = vadd.f32 %v3247, %v3266
        %v3287 = vadd.f32 %v3248, %v3266
        %v3288 = vadd.f32 %v3249, %v3266
        %v3289 = vadd.f32 %v3250, %v3266
        %v3290 = vadd.f32 %v3251, %v3266
        %v3291 = vadd.f32 %v3252, %v3266
        %v3292 = vadd.f32 %v3253, %v3266
        %v3293 = vadd.f32 %v3254, %v3266
        %v3294 = vadd.f32 %v3255, %v3266
        %v3295 = vadd.f32 %v3256, %v3266
        %v3296 = vadd.f32 %v3257, %v3266
        %v3297 = vadd.f32 %v3258, %v3266
        %v3298 = vadd.f32 %v3259, %v3266
        %v3299 = vadd.f32 %v3260, %v3266
        %v3300 = vmax.f32 %v3268, 0.0
        %v3301 = vmax.f32 %v3269, 0.0
        %v3302 = vmax.f32 %v3270, 0.0
        %v3303 = vmax.f32 %v3271, 0.0
        %v3304 = vmax.f32 %v3272, 0.0
        %v3305 = vmax.f32 %v3273, 0.0
        %v3306 = vmax.f32 %v3274, 0.0
        %v3307 = vmax.f32 %v3275, 0.0
        %v3308 = vmax.f32 %v3276, 0.0
        %v3309 = vmax.f32 %v3277, 0.0
        %v3310 = vmax.f32 %v3278, 0.0
        %v3311 = vmax.f32 %v3279, 0.0
        %v3312 = vmax.f32 %v3280, 0.0
        %v3313 = vmax.f32 %v3281, 0.0
        %v3314 = vmax.f32 %v3282, 0.0
        %v3315 = vmax.f32 %v3283, 0.0
        %v3316 = vmax.f32 %v3284, 0.0
        %v3317 = vmax.f32 %v3285, 0.0
        %v3318 = vmax.f32 %v3286, 0.0
        %v3319 = vmax.f32 %v3287, 0.0
        %v3320 = vmax.f32 %v3288, 0.0
        %v3321 = vmax.f32 %v3289, 0.0
        %v3322 = vmax.f32 %v3290, 0.0
        %v3323 = vmax.f32 %v3291, 0.0
        %v3324 = vmax.f32 %v3292, 0.0
        %v3325 = vmax.f32 %v3293, 0.0
        %v3326 = vmax.f32 %v3294, 0.0
        %v3327 = vmax.f32 %v3295, 0.0
        %v3328 = vmax.f32 %v3296, 0.0
        %v3329 = vmax.f32 %v3297, 0.0
        %v3330 = vmax.f32 %v3298, 0.0
        %v3331 = vmax.f32 %v3299, 0.0
        %3332 = vst [vmem:[#allocation2] sm:$0xff] 0.0
        %3333 = vst [vmem:[#allocation2 + $0x8] sm:$0xff] 0.0
        %3334 = vst [vmem:[#allocation2 + $0x10] sm:$0x3] 0.0
        %3335 = vst [vmem:[%s471] sm:$0xff] 0.0
        %3336 = vst [vmem:[%s471 + $0x8] sm:$0xff] 0.0
        %3337 = vst [vmem:[%s471 + $0x10] sm:$0x3] 0.0
        %3338 = vst [vmem:[%s475] sm:$0x1] 0.0
        %3339 = vst [vmem:[%s475 + $0x18] sm:$0x1] 0.0
        %3340 = vst [vmem:[%s475 + $0x30] sm:$0x1] 0.0
        %3341 = vst [vmem:[%s475 + $0x48] sm:$0x1] 0.0
        %3342 = vst [vmem:[%s475 + $0x60] sm:$0x1] 0.0
        %3343 = vst [vmem:[%s475 + $0x78] sm:$0x1] 0.0
        %3344 = vst [vmem:[%s475 + $0x90] sm:$0x1] 0.0
        %3345 = vst [vmem:[%s475 + $0xa8] sm:$0x1] 0.0
        %3346 = vst [vmem:[%s475 + $0xc0] sm:$0x1] 0.0
        %3347 = vst [vmem:[%s475 + $0xd8] sm:$0x1] 0.0
        %3348 = vst [vmem:[%s475 + $0xf0] sm:$0x1] 0.0
        %3349 = vst [vmem:[%s475 + $0x108] sm:$0x1] 0.0
        %3350 = vst [vmem:[%s475 + $0x120] sm:$0x1] 0.0
        %3351 = vst [vmem:[%s475 + $0x138] sm:$0x1] 0.0
        %3352 = vst [vmem:[%s475 + $0x150] sm:$0x1] 0.0
        %3353 = vst [vmem:[%s475 + $0x168] sm:$0x1] 0.0
        %3354 = vst [vmem:[%s475 + $0x11] sm:$0x1] 0.0
        %3355 = vst [vmem:[%s475 + $0x29] sm:$0x1] 0.0
        %3356 = vst [vmem:[%s475 + $0x41] sm:$0x1] 0.0
        %3357 = vst [vmem:[%s475 + $0x59] sm:$0x1] 0.0
        %3358 = vst [vmem:[%s475 + $0x71] sm:$0x1] 0.0
        %3359 = vst [vmem:[%s475 + $0x89] sm:$0x1] 0.0
        %3360 = vst [vmem:[%s475 + $0xa1] sm:$0x1] 0.0
        %3361 = vst [vmem:[%s475 + $0xb9] sm:$0x1] 0.0
        %3362 = vst [vmem:[%s475 + $0xd1] sm:$0x1] 0.0
        %3363 = vst [vmem:[%s475 + $0xe9] sm:$0x1] 0.0
        %3364 = vst [vmem:[%s475 + $0x101] sm:$0x1] 0.0
        %3365 = vst [vmem:[%s475 + $0x119] sm:$0x1] 0.0
        %3366 = vst [vmem:[%s475 + $0x131] sm:$0x1] 0.0
        %3367 = vst [vmem:[%s475 + $0x149] sm:$0x1] 0.0
        %3368 = vst [vmem:[%s475 + $0x161] sm:$0x1] 0.0
        %3369 = vst [vmem:[%s475 + $0x179] sm:$0x1] 0.0
        %3370 = vst [vmem:[%s475 + $0x1] sm:$0xff] %v3300
        %3371 = vst [vmem:[%s475 + $0x9] sm:$0xff] %v3301
        %3372 = vst [vmem:[%s475 + $0x19] sm:$0xff] %v3302
        %3373 = vst [vmem:[%s475 + $0x21] sm:$0xff] %v3303
        %3374 = vst [vmem:[%s475 + $0x31] sm:$0xff] %v3304
        %3375 = vst [vmem:[%s475 + $0x39] sm:$0xff] %v3305
        %3376 = vst [vmem:[%s475 + $0x49] sm:$0xff] %v3306
        %3377 = vst [vmem:[%s475 + $0x51] sm:$0xff] %v3307
        %3378 = vst [vmem:[%s475 + $0x61] sm:$0xff] %v3308
        %3379 = vst [vmem:[%s475 + $0x69] sm:$0xff] %v3309
        %3380 = vst [vmem:[%s475 + $0x79] sm:$0xff] %v3310
        %3381 = vst [vmem:[%s475 + $0x81] sm:$0xff] %v3311
        %3382 = vst [vmem:[%s475 + $0x91] sm:$0xff] %v3312
        %3383 = vst [vmem:[%s475 + $0x99] sm:$0xff] %v3313
        %3384 = vst [vmem:[%s475 + $0xa9] sm:$0xff] %v3314
        %3385 = vst [vmem:[%s475 + $0xb1] sm:$0xff] %v3315
        %3386 = vst [vmem:[%s475 + $0xc1] sm:$0xff] %v3316
        %3387 = vst [vmem:[%s475 + $0xc9] sm:$0xff] %v3317
        %3388 = vst [vmem:[%s475 + $0xd9] sm:$0xff] %v3318
        %3389 = vst [vmem:[%s475 + $0xe1] sm:$0xff] %v3319
        %3390 = vst [vmem:[%s475 + $0xf1] sm:$0xff] %v3320
        %3391 = vst [vmem:[%s475 + $0xf9] sm:$0xff] %v3321
        %3392 = vst [vmem:[%s475 + $0x109] sm:$0xff] %v3322
        %3393 = vst [vmem:[%s475 + $0x111] sm:$0xff] %v3323
        %3394 = vst [vmem:[%s475 + $0x121] sm:$0xff] %v3324
        %3395 = vst [vmem:[%s475 + $0x129] sm:$0xff] %v3325
        %3396 = vst [vmem:[%s475 + $0x139] sm:$0xff] %v3326
        %3397 = vst [vmem:[%s475 + $0x141] sm:$0xff] %v3327
        %3398 = vst [vmem:[%s475 + $0x151] sm:$0xff] %v3328
        %3399 = vst [vmem:[%s475 + $0x159] sm:$0xff] %v3329
        %3400 = vst [vmem:[%s475 + $0x169] sm:$0xff] %v3330
        %3401 = vst [vmem:[%s475 + $0x171] sm:$0xff] %v3331
        %v3402 = vld [vmem:[#allocation2] sm:$0xff]
        %v3403 = vld [vmem:[#allocation2 + $0x8] sm:$0xff]
        %v3404 = vld [vmem:[#allocation2 + $0x18] sm:$0xff]
        %v3405 = vld [vmem:[#allocation2 + $0x20] sm:$0xff]
        %v3406 = vld [vmem:[#allocation2 + $0x30] sm:$0xff]
        %v3407 = vld [vmem:[#allocation2 + $0x38] sm:$0xff]
        %v3408 = vld [vmem:[#allocation2 + $0x48] sm:$0xff]
        %v3409 = vld [vmem:[#allocation2 + $0x50] sm:$0xff]
        %v3410 = vld [vmem:[#allocation2 + $0x60] sm:$0xff]
        %v3411 = vld [vmem:[#allocation2 + $0x68] sm:$0xff]
        %v3412 = vld [vmem:[#allocation2 + $0x78] sm:$0xff]
        %v3413 = vld [vmem:[#allocation2 + $0x80] sm:$0xff]
        %v3414 = vld [vmem:[#allocation2 + $0x90] sm:$0xff]
        %v3415 = vld [vmem:[#allocation2 + $0x98] sm:$0xff]
        %v3416 = vld [vmem:[#allocation2 + $0xa8] sm:$0xff]
        %v3417 = vld [vmem:[#allocation2 + $0xb0] sm:$0xff]
        %v3418 = vld [vmem:[#allocation2 + $0xc0] sm:$0xff]
        %v3419 = vld [vmem:[#allocation2 + $0xc8] sm:$0xff]
        %v3420 = vld [vmem:[#allocation2 + $0xd8] sm:$0xff]
        %v3421 = vld [vmem:[#allocation2 + $0xe0] sm:$0xff]
        %v3422 = vld [vmem:[#allocation2 + $0xf0] sm:$0xff]
        %v3423 = vld [vmem:[#allocation2 + $0xf8] sm:$0xff]
        %v3424 = vld [vmem:[#allocation2 + $0x108] sm:$0xff]
        %v3425 = vld [vmem:[#allocation2 + $0x110] sm:$0xff]
        %v3426 = vld [vmem:[#allocation2 + $0x120] sm:$0xff]
        %v3427 = vld [vmem:[#allocation2 + $0x128] sm:$0xff]
        %v3428 = vld [vmem:[#allocation2 + $0x138] sm:$0xff]
        %v3429 = vld [vmem:[#allocation2 + $0x140] sm:$0xff]
        %v3430 = vld [vmem:[#allocation2 + $0x150] sm:$0xff]
        %v3431 = vld [vmem:[#allocation2 + $0x158] sm:$0xff]
        %v3432 = vld [vmem:[#allocation2 + $0x168] sm:$0xff]
        %v3433 = vld [vmem:[#allocation2 + $0x170] sm:$0xff]
        %v3434 = vld [vmem:[#allocation8] sm:$0xff]
        %v3435 = vld [vmem:[#allocation8 + $0x8] sm:$0xff]
        %v3436 = vld [vmem:[#allocation8 + $0x10] sm:$0xff]
        %v3437 = vld [vmem:[#allocation8 + $0x18] sm:$0xff]
        %v3438 = vld [vmem:[#allocation8 + $0x20] sm:$0xff]
        %v3439 = vld [vmem:[#allocation8 + $0x28] sm:$0xff]
        %v3440 = vld [vmem:[#allocation8 + $0x30] sm:$0xff]
        %v3441 = vld [vmem:[#allocation8 + $0x38] sm:$0xff]
        %v3442 = vld [vmem:[#allocation8 + $0x40] sm:$0xff]
        %v3443 = vld [vmem:[#allocation8 + $0x48] sm:$0xff]
        %v3444 = vld [vmem:[#allocation8 + $0x50] sm:$0xff]
        %v3445 = vld [vmem:[#allocation8 + $0x58] sm:$0xff]
        %v3446 = vld [vmem:[#allocation8 + $0x60] sm:$0xff]
        %v3447 = vld [vmem:[#allocation8 + $0x68] sm:$0xff]
        %v3448 = vld [vmem:[#allocation8 + $0x70] sm:$0xff]
        %v3449 = vld [vmem:[#allocation8 + $0x78] sm:$0xff]
        %v3450 = vld [vmem:[#allocation2 + $0x1] sm:$0xff]
        %v3451 = vld [vmem:[#allocation2 + $0x9] sm:$0xff]
        %v3452 = vld [vmem:[#allocation2 + $0x19] sm:$0xff]
        %v3453 = vld [vmem:[#allocation2 + $0x21] sm:$0xff]
        %v3454 = vld [vmem:[#allocation2 + $0x31] sm:$0xff]
        %v3455 = vld [vmem:[#allocation2 + $0x39] sm:$0xff]
        %v3456 = vld [vmem:[#allocation2 + $0x49] sm:$0xff]
        %v3457 = vld [vmem:[#allocation2 + $0x51] sm:$0xff]
        %v3458 = vld [vmem:[#allocation2 + $0x61] sm:$0xff]
        %v3459 = vld [vmem:[#allocation2 + $0x69] sm:$0xff]
        %v3460 = vld [vmem:[#allocation2 + $0x79] sm:$0xff]
        %v3461 = vld [vmem:[#allocation2 + $0x81] sm:$0xff]
        %v3462 = vld [vmem:[#allocation2 + $0x91] sm:$0xff]
        %v3463 = vld [vmem:[#allocation2 + $0x99] sm:$0xff]
        %v3464 = vld [vmem:[#allocation2 + $0xa9] sm:$0xff]
        %v3465 = vld [vmem:[#allocation2 + $0xb1] sm:$0xff]
        %v3466 = vld [vmem:[#allocation2 + $0xc1] sm:$0xff]
        %v3467 = vld [vmem:[#allocation2 + $0xc9] sm:$0xff]
        %v3468 = vld [vmem:[#allocation2 + $0xd9] sm:$0xff]
        %v3469 = vld [vmem:[#allocation2 + $0xe1] sm:$0xff]
        %v3470 = vld [vmem:[#allocation2 + $0xf1] sm:$0xff]
        %v3471 = vld [vmem:[#allocation2 + $0xf9] sm:$0xff]
        %v3472 = vld [vmem:[#allocation2 + $0x109] sm:$0xff]
        %v3473 = vld [vmem:[#allocation2 + $0x111] sm:$0xff]
        %v3474 = vld [vmem:[#allocation2 + $0x121] sm:$0xff]
        %v3475 = vld [vmem:[#allocation2 + $0x129] sm:$0xff]
        %v3476 = vld [vmem:[#allocation2 + $0x139] sm:$0xff]
        %v3477 = vld [vmem:[#allocation2 + $0x141] sm:$0xff]
        %v3478 = vld [vmem:[#allocation2 + $0x151] sm:$0xff]
        %v3479 = vld [vmem:[#allocation2 + $0x159] sm:$0xff]
        %v3480 = vld [vmem:[#allocation2 + $0x169] sm:$0xff]
        %v3481 = vld [vmem:[#allocation2 + $0x171] sm:$0xff]
        %v3482 = vld [vmem:[#allocation8 + $0x80] sm:$0xff]
        %v3483 = vld [vmem:[#allocation8 + $0x88] sm:$0xff]
        %v3484 = vld [vmem:[#allocation8 + $0x90] sm:$0xff]
        %v3485 = vld [vmem:[#allocation8 + $0x98] sm:$0xff]
        %v3486 = vld [vmem:[#allocation8 + $0xa0] sm:$0xff]
        %v3487 = vld [vmem:[#allocation8 + $0xa8] sm:$0xff]
        %v3488 = vld [vmem:[#allocation8 + $0xb0] sm:$0xff]
        %v3489 = vld [vmem:[#allocation8 + $0xb8] sm:$0xff]
        %v3490 = vld [vmem:[#allocation8 + $0xc0] sm:$0xff]
        %v3491 = vld [vmem:[#allocation8 + $0xc8] sm:$0xff]
        %v3492 = vld [vmem:[#allocation8 + $0xd0] sm:$0xff]
        %v3493 = vld [vmem:[#allocation8 + $0xd8] sm:$0xff]
        %v3494 = vld [vmem:[#allocation8 + $0xe0] sm:$0xff]
        %v3495 = vld [vmem:[#allocation8 + $0xe8] sm:$0xff]
        %v3496 = vld [vmem:[#allocation8 + $0xf0] sm:$0xff]
        %v3497 = vld [vmem:[#allocation8 + $0xf8] sm:$0xff]
        %3498 = vmatprep.subr.mxu0 0.0
        %3499 = vmatpush1.msra.mxu0 %v3482
        %3500 = vmatprep.subr.mxu0 0.0
        %3501 = vmatpush1.msra.mxu0 %v3483
        %3502 = vmatprep.subr.mxu0 0.0
        %3503 = vmatpush1.msra.mxu0 %v3484
        %3504 = vmatprep.subr.mxu0 0.0
        %3505 = vmatpush1.msra.mxu0 %v3485
        %3506 = vmatprep.subr.mxu0 0.0
        %3507 = vmatpush1.msra.mxu0 %v3486
        %3508 = vmatprep.subr.mxu0 0.0
        %3509 = vmatpush1.msra.mxu0 %v3487
        %3510 = vmatprep.subr.mxu0 0.0
        %3511 = vmatpush1.msra.mxu0 %v3488
        %3512 = vmatprep.subr.mxu0 0.0
        %3513 = vmatpush1.msra.mxu0 %v3489
        %3514 = vmatprep.subr.mxu0 0.0
        %3515 = vmatpush1.msra.mxu0 %v3490
        %3516 = vmatprep.subr.mxu0 0.0
        %3517 = vmatpush1.msra.mxu0 %v3491
        %3518 = vmatprep.subr.mxu0 0.0
        %3519 = vmatpush1.msra.mxu0 %v3492
        %3520 = vmatprep.subr.mxu0 0.0
        %3521 = vmatpush1.msra.mxu0 %v3493
        %3522 = vmatprep.subr.mxu0 0.0
        %3523 = vmatpush1.msra.mxu0 %v3494
        %3524 = vmatprep.subr.mxu0 0.0
        %3525 = vmatpush1.msra.mxu0 %v3495
        %3526 = vmatprep.subr.mxu0 0.0
        %3527 = vmatpush1.msra.mxu0 %v3496
        %3528 = vmatprep.subr.mxu0 0.0
        %3529 = vmatpush1.msra.mxu0 %v3497
        %3530 = vmatprep.subr.mxu0 0.0
        %3531 = vmatpush1.msra.mxu0 0.0
        %3532 = vmatprep.subr.mxu0 0.0
        %3533 = vmatpush1.msra.mxu0 0.0
        %3534 = vmatprep.subr.mxu0 0.0
        %3535 = vmatpush1.msra.mxu0 0.0
        %3536 = vmatprep.subr.mxu0 0.0
        %3537 = vmatpush1.msra.mxu0 0.0
        %3538 = vmatprep.subr.mxu0 0.0
        %3539 = vmatpush1.msra.mxu0 0.0
        %3540 = vmatprep.subr.mxu0 0.0
        %3541 = vmatpush1.msra.mxu0 0.0
        %3542 = vmatprep.subr.mxu0 0.0
        %3543 = vmatpush1.msra.mxu0 0.0
        %3544 = vmatprep.subr.mxu0 0.0
        %3545 = vmatpush1.msra.mxu0 0.0
        %3546 = vmatprep.subr.mxu0 0.0
        %3547 = vmatpush1.msra.mxu0 0.0
        %3548 = vmatprep.subr.mxu0 0.0
        %3549 = vmatpush1.msra.mxu0 0.0
        %3550 = vmatprep.subr.mxu0 0.0
        %3551 = vmatpush1.msra.mxu0 0.0
        %3552 = vmatprep.subr.mxu0 0.0
        %3553 = vmatpush1.msra.mxu0 0.0
        %3554 = vmatprep.subr.mxu0 0.0
        %3555 = vmatpush1.msra.mxu0 0.0
        %3556 = vmatprep.subr.mxu0 0.0
        %3557 = vmatpush1.msra.mxu0 0.0
        %3558 = vmatprep.subr.mxu0 0.0
        %3559 = vmatpush1.msra.mxu0 0.0
        %3560 = vmatprep.subr.mxu0 0.0
        %3561 = vmatpush1.msra.mxu0 0.0
        %3562 = vmatprep.mubr.f32.mxu0 0.0
        %3563 = vmatmul.mubr.f32.gmra.mrb[0].mxu0 %v3450
        %v3564 = vpop.f32.mrb[0].mxu0
        %v3565 = vadd.f32 0.0, %v3564
        %v3566 = vpop.f32.mrb[0].mxu0
        %3567 = vmatprep.mubr.f32.mxu0 0.0
        %3568 = vmatmul.mubr.f32.gmra.mrb[0].mxu0 %v3451
        %v3569 = vpop.f32.mrb[0].mxu0
        %v3570 = vadd.f32 0.0, %v3569
        %v3571 = vpop.f32.mrb[0].mxu0
        %3572 = vmatprep.mubr.f32.mxu0 0.0
        %3573 = vmatmul.mubr.f32.gmra.mrb[0].mxu0 %v3452
        %v3574 = vpop.f32.mrb[0].mxu0
        %v3575 = vadd.f32 0.0, %v3574
        %v3576 = vpop.f32.mrb[0].mxu0
        %3577 = vmatprep.mubr.f32.mxu0 0.0
        %3578 = vmatmul.mubr.f32.gmra.mrb[0].mxu0 %v3453
        %v3579 = vpop.f32.mrb[0].mxu0
        %v3580 = vadd.f32 0.0, %v3579
        %v3581 = vpop.f32.mrb[0].mxu0
        %3582 = vmatprep.mubr.f32.mxu0 0.0
        %3583 = vmatmul.mubr.f32.gmra.mrb[0].mxu0 %v3454
        %v3584 = vpop.f32.mrb[0].mxu0
        %v3585 = vadd.f32 0.0, %v3584
        %v3586 = vpop.f32.mrb[0].mxu0
        %3587 = vmatprep.mubr.f32.mxu0 0.0
        %3588 = vmatmul.mubr.f32.gmra.mrb[0].mxu0 %v3455
        %v3589 = vpop.f32.mrb[0].mxu0
        %v3590 = vadd.f32 0.0, %v3589
        %v3591 = vpop.f32.mrb[0].mxu0
        %3592 = vmatprep.mubr.f32.mxu0 0.0
        %3593 = vmatmul.mubr.f32.gmra.mrb[0].mxu0 %v3456
        %v3594 = vpop.f32.mrb[0].mxu0
        %v3595 = vadd.f32 0.0, %v3594
        %v3596 = vpop.f32.mrb[0].mxu0
        %3597 = vmatprep.mubr.f32.mxu0 0.0
        %3598 = vmatmul.mubr.f32.gmra.mrb[0].mxu0 %v3457
        %v3599 = vpop.f32.mrb[0].mxu0
        %v3600 = vadd.f32 0.0, %v3599
        %v3601 = vpop.f32.mrb[0].mxu0
        %3602 = vmatprep.mubr.f32.mxu0 0.0
        %3603 = vmatmul.mubr.f32.gmra.mrb[0].mxu0 %v3458
        %v3604 = vpop.f32.mrb[0].mxu0
        %v3605 = vadd.f32 0.0, %v3604
        %v3606 = vpop.f32.mrb[0].mxu0
        %3607 = vmatprep.mubr.f32.mxu0 0.0
        %3608 = vmatmul.mubr.f32.gmra.mrb[0].mxu0 %v3459
        %v3609 = vpop.f32.mrb[0].mxu0
        %v3610 = vadd.f32 0.0, %v3609
        %v3611 = vpop.f32.mrb[0].mxu0
        %3612 = vmatprep.mubr.f32.mxu0 0.0
        %3613 = vmatmul.mubr.f32.gmra.mrb[0].mxu0 %v3460
        %v3614 = vpop.f32.mrb[0].mxu0
        %v3615 = vadd.f32 0.0, %v3614
        %v3616 = vpop.f32.mrb[0].mxu0
        %3617 = vmatprep.mubr.f32.mxu0 0.0
        %3618 = vmatmul.mubr.f32.gmra.mrb[0].mxu0 %v3461
        %v3619 = vpop.f32.mrb[0].mxu0
        %v3620 = vadd.f32 0.0, %v3619
        %v3621 = vpop.f32.mrb[0].mxu0
        %3622 = vmatprep.mubr.f32.mxu0 0.0
        %3623 = vmatmul.mubr.f32.gmra.mrb[0].mxu0 %v3462
        %v3624 = vpop.f32.mrb[0].mxu0
        %v3625 = vadd.f32 0.0, %v3624
        %v3626 = vpop.f32.mrb[0].mxu0
        %3627 = vmatprep.mubr.f32.mxu0 0.0
        %3628 = vmatmul.mubr.f32.gmra.mrb[0].mxu0 %v3463
        %v3629 = vpop.f32.mrb[0].mxu0
        %v3630 = vadd.f32 0.0, %v3629
        %v3631 = vpop.f32.mrb[0].mxu0
        %3632 = vmatprep.mubr.f32.mxu0 0.0
        %3633 = vmatmul.mubr.f32.gmra.mrb[0].mxu0 %v3464
        %v3634 = vpop.f32.mrb[0].mxu0
        %v3635 = vadd.f32 0.0, %v3634
        %v3636 = vpop.f32.mrb[0].mxu0
        %3637 = vmatprep.mubr.f32.mxu0 0.0
        %3638 = vmatmul.mubr.f32.gmra.mrb[0].mxu0 %v3465
        %v3639 = vpop.f32.mrb[0].mxu0
        %v3640 = vadd.f32 0.0, %v3639
        %v3641 = vpop.f32.mrb[0].mxu0
        %3642 = vmatprep.mubr.f32.mxu0 0.0
        %3643 = vmatmul.mubr.f32.gmra.mrb[0].mxu0 %v3466
        %v3644 = vpop.f32.mrb[0].mxu0
        %v3645 = vadd.f32 0.0, %v3644
        %v3646 = vpop.f32.mrb[0].mxu0
        %3647 = vmatprep.mubr.f32.mxu0 0.0
        %3648 = vmatmul.mubr.f32.gmra.mrb[0].mxu0 %v3467
        %v3649 = vpop.f32.mrb[0].mxu0
        %v3650 = vadd.f32 0.0, %v3649
        %v3651 = vpop.f32.mrb[0].mxu0
        %3652 = vmatprep.mubr.f32.mxu0 0.0
        %3653 = vmatmul.mubr.f32.gmra.mrb[0].mxu0 %v3468
        %v3654 = vpop.f32.mrb[0].mxu0
        %v3655 = vadd.f32 0.0, %v3654
        %v3656 = vpop.f32.mrb[0].mxu0
        %3657 = vmatprep.mubr.f32.mxu0 0.0
        %3658 = vmatmul.mubr.f32.gmra.mrb[0].mxu0 %v3469
        %v3659 = vpop.f32.mrb[0].mxu0
        %v3660 = vadd.f32 0.0, %v3659
        %v3661 = vpop.f32.mrb[0].mxu0
        %3662 = vmatprep.mubr.f32.mxu0 0.0
        %3663 = vmatmul.mubr.f32.gmra.mrb[0].mxu0 %v3470
        %v3664 = vpop.f32.mrb[0].mxu0
        %v3665 = vadd.f32 0.0, %v3664
        %v3666 = vpop.f32.mrb[0].mxu0
        %3667 = vmatprep.mubr.f32.mxu0 0.0
        %3668 = vmatmul.mubr.f32.gmra.mrb[0].mxu0 %v3471
        %v3669 = vpop.f32.mrb[0].mxu0
        %v3670 = vadd.f32 0.0, %v3669
        %v3671 = vpop.f32.mrb[0].mxu0
        %3672 = vmatprep.mubr.f32.mxu0 0.0
        %3673 = vmatmul.mubr.f32.gmra.mrb[0].mxu0 %v3472
        %v3674 = vpop.f32.mrb[0].mxu0
        %v3675 = vadd.f32 0.0, %v3674
        %v3676 = vpop.f32.mrb[0].mxu0
        %3677 = vmatprep.mubr.f32.mxu0 0.0
        %3678 = vmatmul.mubr.f32.gmra.mrb[0].mxu0 %v3473
        %v3679 = vpop.f32.mrb[0].mxu0
        %v3680 = vadd.f32 0.0, %v3679
        %v3681 = vpop.f32.mrb[0].mxu0
        %3682 = vmatprep.mubr.f32.mxu0 0.0
        %3683 = vmatmul.mubr.f32.gmra.mrb[0].mxu0 %v3474
        %v3684 = vpop.f32.mrb[0].mxu0
        %v3685 = vadd.f32 0.0, %v3684
        %v3686 = vpop.f32.mrb[0].mxu0
        %3687 = vmatprep.mubr.f32.mxu0 0.0
        %3688 = vmatmul.mubr.f32.gmra.mrb[0].mxu0 %v3475
        %v3689 = vpop.f32.mrb[0].mxu0
        %v3690 = vadd.f32 0.0, %v3689
        %v3691 = vpop.f32.mrb[0].mxu0
        %3692 = vmatprep.mubr.f32.mxu0 0.0
        %3693 = vmatmul.mubr.f32.gmra.mrb[0].mxu0 %v3476
        %v3694 = vpop.f32.mrb[0].mxu0
        %v3695 = vadd.f32 0.0, %v3694
        %v3696 = vpop.f32.mrb[0].mxu0
        %3697 = vmatprep.mubr.f32.mxu0 0.0
        %3698 = vmatmul.mubr.f32.gmra.mrb[0].mxu0 %v3477
        %v3699 = vpop.f32.mrb[0].mxu0
        %v3700 = vadd.f32 0.0, %v3699
        %v3701 = vpop.f32.mrb[0].mxu0
        %3702 = vmatprep.mubr.f32.mxu0 0.0
        %3703 = vmatmul.mubr.f32.gmra.mrb[0].mxu0 %v3478
        %v3704 = vpop.f32.mrb[0].mxu0
        %v3705 = vadd.f32 0.0, %v3704
        %v3706 = vpop.f32.mrb[0].mxu0
        %3707 = vmatprep.mubr.f32.mxu0 0.0
        %3708 = vmatmul.mubr.f32.gmra.mrb[0].mxu0 %v3479
        %v3709 = vpop.f32.mrb[0].mxu0
        %v3710 = vadd.f32 0.0, %v3709
        %v3711 = vpop.f32.mrb[0].mxu0
        %3712 = vmatprep.mubr.f32.mxu0 0.0
        %3713 = vmatmul.mubr.f32.gmra.mrb[0].mxu0 %v3480
        %v3714 = vpop.f32.mrb[0].mxu0
        %v3715 = vadd.f32 0.0, %v3714
        %v3716 = vpop.f32.mrb[0].mxu0
        %3717 = vmatprep.mubr.f32.mxu0 0.0
        %3718 = vmatmul.mubr.f32.gmra.mrb[0].mxu0 %v3481
        %v3719 = vpop.f32.mrb[0].mxu0
        %v3720 = vadd.f32 0.0, %v3719
        %v3721 = vpop.f32.mrb[0].mxu0
        %3722 = vdwg.mxu0
        %3723 = vmatprep.subr.mxu0 0.0
        %3724 = vmatpush1.msra.mxu0 %v3434
        %3725 = vmatprep.subr.mxu0 0.0
        %3726 = vmatpush1.msra.mxu0 %v3435
        %3727 = vmatprep.subr.mxu0 0.0
        %3728 = vmatpush1.msra.mxu0 %v3436
        %3729 = vmatprep.subr.mxu0 0.0
        %3730 = vmatpush1.msra.mxu0 %v3437
        %3731 = vmatprep.subr.mxu0 0.0
        %3732 = vmatpush1.msra.mxu0 %v3438
        %3733 = vmatprep.subr.mxu0 0.0
        %3734 = vmatpush1.msra.mxu0 %v3439
        %3735 = vmatprep.subr.mxu0 0.0
        %3736 = vmatpush1.msra.mxu0 %v3440
        %3737 = vmatprep.subr.mxu0 0.0
        %3738 = vmatpush1.msra.mxu0 %v3441
        %3739 = vmatprep.subr.mxu0 0.0
        %3740 = vmatpush1.msra.mxu0 %v3442
        %3741 = vmatprep.subr.mxu0 0.0
        %3742 = vmatpush1.msra.mxu0 %v3443
        %3743 = vmatprep.subr.mxu0 0.0
        %3744 = vmatpush1.msra.mxu0 %v3444
        %3745 = vmatprep.subr.mxu0 0.0
        %3746 = vmatpush1.msra.mxu0 %v3445
        %3747 = vmatprep.subr.mxu0 0.0
        %3748 = vmatpush1.msra.mxu0 %v3446
        %3749 = vmatprep.subr.mxu0 0.0
        %3750 = vmatpush1.msra.mxu0 %v3447
        %3751 = vmatprep.subr.mxu0 0.0
        %3752 = vmatpush1.msra.mxu0 %v3448
        %3753 = vmatprep.subr.mxu0 0.0
        %3754 = vmatpush1.msra.mxu0 %v3449
        %3755 = vmatprep.subr.mxu0 0.0
        %3756 = vmatpush1.msra.mxu0 0.0
        %3757 = vmatprep.subr.mxu0 0.0
        %3758 = vmatpush1.msra.mxu0 0.0
        %3759 = vmatprep.subr.mxu0 0.0
        %3760 = vmatpush1.msra.mxu0 0.0
        %3761 = vmatprep.subr.mxu0 0.0
        %3762 = vmatpush1.msra.mxu0 0.0
        %3763 = vmatprep.subr.mxu0 0.0
        %3764 = vmatpush1.msra.mxu0 0.0
        %3765 = vmatprep.subr.mxu0 0.0
        %3766 = vmatpush1.msra.mxu0 0.0
        %3767 = vmatprep.subr.mxu0 0.0
        %3768 = vmatpush1.msra.mxu0 0.0
        %3769 = vmatprep.subr.mxu0 0.0
        %3770 = vmatpush1.msra.mxu0 0.0
        %3771 = vmatprep.subr.mxu0 0.0
        %3772 = vmatpush1.msra.mxu0 0.0
        %3773 = vmatprep.subr.mxu0 0.0
        %3774 = vmatpush1.msra.mxu0 0.0
        %3775 = vmatprep.subr.mxu0 0.0
        %3776 = vmatpush1.msra.mxu0 0.0
        %3777 = vmatprep.subr.mxu0 0.0
        %3778 = vmatpush1.msra.mxu0 0.0
        %3779 = vmatprep.subr.mxu0 0.0
        %3780 = vmatpush1.msra.mxu0 0.0
        %3781 = vmatprep.subr.mxu0 0.0
        %3782 = vmatpush1.msra.mxu0 0.0
        %3783 = vmatprep.subr.mxu0 0.0
        %3784 = vmatpush1.msra.mxu0 0.0
        %3785 = vmatprep.subr.mxu0 0.0
        %3786 = vmatpush1.msra.mxu0 0.0
        %3787 = vmatprep.mubr.f32.mxu0 0.0
        %3788 = vmatmul.mubr.f32.gmra.mrb[0].mxu0 %v3402
        %v3789 = vpop.f32.mrb[0].mxu0
        %v3790 = vadd.f32 %v3565, %v3789
        %v3791 = vpop.f32.mrb[0].mxu0
        %3792 = vmatprep.mubr.f32.mxu0 0.0
        %3793 = vmatmul.mubr.f32.gmra.mrb[0].mxu0 %v3403
        %v3794 = vpop.f32.mrb[0].mxu0
        %v3795 = vadd.f32 %v3570, %v3794
        %v3796 = vpop.f32.mrb[0].mxu0
        %3797 = vmatprep.mubr.f32.mxu0 0.0
        %3798 = vmatmul.mubr.f32.gmra.mrb[0].mxu0 %v3404
        %v3799 = vpop.f32.mrb[0].mxu0
        %v3800 = vadd.f32 %v3575, %v3799
        %v3801 = vpop.f32.mrb[0].mxu0
        %3802 = vmatprep.mubr.f32.mxu0 0.0
        %3803 = vmatmul.mubr.f32.gmra.mrb[0].mxu0 %v3405
        %v3804 = vpop.f32.mrb[0].mxu0
        %v3805 = vadd.f32 %v3580, %v3804
        %v3806 = vpop.f32.mrb[0].mxu0
        %3807 = vmatprep.mubr.f32.mxu0 0.0
        %3808 = vmatmul.mubr.f32.gmra.mrb[0].mxu0 %v3406
        %v3809 = vpop.f32.mrb[0].mxu0
        %v3810 = vadd.f32 %v3585, %v3809
        %v3811 = vpop.f32.mrb[0].mxu0
        %3812 = vmatprep.mubr.f32.mxu0 0.0
        %3813 = vmatmul.mubr.f32.gmra.mrb[0].mxu0 %v3407
        %v3814 = vpop.f32.mrb[0].mxu0
        %v3815 = vadd.f32 %v3590, %v3814
        %v3816 = vpop.f32.mrb[0].mxu0
        %3817 = vmatprep.mubr.f32.mxu0 0.0
        %3818 = vmatmul.mubr.f32.gmra.mrb[0].mxu0 %v3408
        %v3819 = vpop.f32.mrb[0].mxu0
        %v3820 = vadd.f32 %v3595, %v3819
        %v3821 = vpop.f32.mrb[0].mxu0
        %3822 = vmatprep.mubr.f32.mxu0 0.0
        %3823 = vmatmul.mubr.f32.gmra.mrb[0].mxu0 %v3409
        %v3824 = vpop.f32.mrb[0].mxu0
        %v3825 = vadd.f32 %v3600, %v3824
        %v3826 = vpop.f32.mrb[0].mxu0
        %3827 = vmatprep.mubr.f32.mxu0 0.0
        %3828 = vmatmul.mubr.f32.gmra.mrb[0].mxu0 %v3410
        %v3829 = vpop.f32.mrb[0].mxu0
        %v3830 = vadd.f32 %v3605, %v3829
        %v3831 = vpop.f32.mrb[0].mxu0
        %3832 = vmatprep.mubr.f32.mxu0 0.0
        %3833 = vmatmul.mubr.f32.gmra.mrb[0].mxu0 %v3411
        %v3834 = vpop.f32.mrb[0].mxu0
        %v3835 = vadd.f32 %v3610, %v3834
        %v3836 = vpop.f32.mrb[0].mxu0
        %3837 = vmatprep.mubr.f32.mxu0 0.0
        %3838 = vmatmul.mubr.f32.gmra.mrb[0].mxu0 %v3412
        %v3839 = vpop.f32.mrb[0].mxu0
        %v3840 = vadd.f32 %v3615, %v3839
        %v3841 = vpop.f32.mrb[0].mxu0
        %3842 = vmatprep.mubr.f32.mxu0 0.0
        %3843 = vmatmul.mubr.f32.gmra.mrb[0].mxu0 %v3413
        %v3844 = vpop.f32.mrb[0].mxu0
        %v3845 = vadd.f32 %v3620, %v3844
        %v3846 = vpop.f32.mrb[0].mxu0
        %3847 = vmatprep.mubr.f32.mxu0 0.0
        %3848 = vmatmul.mubr.f32.gmra.mrb[0].mxu0 %v3414
        %v3849 = vpop.f32.mrb[0].mxu0
        %v3850 = vadd.f32 %v3625, %v3849
        %v3851 = vpop.f32.mrb[0].mxu0
        %3852 = vmatprep.mubr.f32.mxu0 0.0
        %3853 = vmatmul.mubr.f32.gmra.mrb[0].mxu0 %v3415
        %v3854 = vpop.f32.mrb[0].mxu0
        %v3855 = vadd.f32 %v3630, %v3854
        %v3856 = vpop.f32.mrb[0].mxu0
        %3857 = vmatprep.mubr.f32.mxu0 0.0
        %3858 = vmatmul.mubr.f32.gmra.mrb[0].mxu0 %v3416
        %v3859 = vpop.f32.mrb[0].mxu0
        %v3860 = vadd.f32 %v3635, %v3859
        %v3861 = vpop.f32.mrb[0].mxu0
        %3862 = vmatprep.mubr.f32.mxu0 0.0
        %3863 = vmatmul.mubr.f32.gmra.mrb[0].mxu0 %v3417
        %v3864 = vpop.f32.mrb[0].mxu0
        %v3865 = vadd.f32 %v3640, %v3864
        %v3866 = vpop.f32.mrb[0].mxu0
        %3867 = vmatprep.mubr.f32.mxu0 0.0
        %3868 = vmatmul.mubr.f32.gmra.mrb[0].mxu0 %v3418
        %v3869 = vpop.f32.mrb[0].mxu0
        %v3870 = vadd.f32 %v3645, %v3869
        %v3871 = vpop.f32.mrb[0].mxu0
        %3872 = vmatprep.mubr.f32.mxu0 0.0
        %3873 = vmatmul.mubr.f32.gmra.mrb[0].mxu0 %v3419
        %v3874 = vpop.f32.mrb[0].mxu0
        %v3875 = vadd.f32 %v3650, %v3874
        %v3876 = vpop.f32.mrb[0].mxu0
        %3877 = vmatprep.mubr.f32.mxu0 0.0
        %3878 = vmatmul.mubr.f32.gmra.mrb[0].mxu0 %v3420
        %v3879 = vpop.f32.mrb[0].mxu0
        %v3880 = vadd.f32 %v3655, %v3879
        %v3881 = vpop.f32.mrb[0].mxu0
        %3882 = vmatprep.mubr.f32.mxu0 0.0
        %3883 = vmatmul.mubr.f32.gmra.mrb[0].mxu0 %v3421
        %v3884 = vpop.f32.mrb[0].mxu0
        %v3885 = vadd.f32 %v3660, %v3884
        %v3886 = vpop.f32.mrb[0].mxu0
        %3887 = vmatprep.mubr.f32.mxu0 0.0
        %3888 = vmatmul.mubr.f32.gmra.mrb[0].mxu0 %v3422
        %v3889 = vpop.f32.mrb[0].mxu0
        %v3890 = vadd.f32 %v3665, %v3889
        %v3891 = vpop.f32.mrb[0].mxu0
        %3892 = vmatprep.mubr.f32.mxu0 0.0
        %3893 = vmatmul.mubr.f32.gmra.mrb[0].mxu0 %v3423
        %v3894 = vpop.f32.mrb[0].mxu0
        %v3895 = vadd.f32 %v3670, %v3894
        %v3896 = vpop.f32.mrb[0].mxu0
        %3897 = vmatprep.mubr.f32.mxu0 0.0
        %3898 = vmatmul.mubr.f32.gmra.mrb[0].mxu0 %v3424
        %v3899 = vpop.f32.mrb[0].mxu0
        %v3900 = vadd.f32 %v3675, %v3899
        %v3901 = vpop.f32.mrb[0].mxu0
        %3902 = vmatprep.mubr.f32.mxu0 0.0
        %3903 = vmatmul.mubr.f32.gmra.mrb[0].mxu0 %v3425
        %v3904 = vpop.f32.mrb[0].mxu0
        %v3905 = vadd.f32 %v3680, %v3904
        %v3906 = vpop.f32.mrb[0].mxu0
        %3907 = vmatprep.mubr.f32.mxu0 0.0
        %3908 = vmatmul.mubr.f32.gmra.mrb[0].mxu0 %v3426
        %v3909 = vpop.f32.mrb[0].mxu0
        %v3910 = vadd.f32 %v3685, %v3909
        %v3911 = vpop.f32.mrb[0].mxu0
        %3912 = vmatprep.mubr.f32.mxu0 0.0
        %3913 = vmatmul.mubr.f32.gmra.mrb[0].mxu0 %v3427
        %v3914 = vpop.f32.mrb[0].mxu0
        %v3915 = vadd.f32 %v3690, %v3914
        %v3916 = vpop.f32.mrb[0].mxu0
        %3917 = vmatprep.mubr.f32.mxu0 0.0
        %3918 = vmatmul.mubr.f32.gmra.mrb[0].mxu0 %v3428
        %v3919 = vpop.f32.mrb[0].mxu0
        %v3920 = vadd.f32 %v3695, %v3919
        %v3921 = vpop.f32.mrb[0].mxu0
        %3922 = vmatprep.mubr.f32.mxu0 0.0
        %3923 = vmatmul.mubr.f32.gmra.mrb[0].mxu0 %v3429
        %v3924 = vpop.f32.mrb[0].mxu0
        %v3925 = vadd.f32 %v3700, %v3924
        %v3926 = vpop.f32.mrb[0].mxu0
        %3927 = vmatprep.mubr.f32.mxu0 0.0
        %3928 = vmatmul.mubr.f32.gmra.mrb[0].mxu0 %v3430
        %v3929 = vpop.f32.mrb[0].mxu0
        %v3930 = vadd.f32 %v3705, %v3929
        %v3931 = vpop.f32.mrb[0].mxu0
        %3932 = vmatprep.mubr.f32.mxu0 0.0
        %3933 = vmatmul.mubr.f32.gmra.mrb[0].mxu0 %v3431
        %v3934 = vpop.f32.mrb[0].mxu0
        %v3935 = vadd.f32 %v3710, %v3934
        %v3936 = vpop.f32.mrb[0].mxu0
        %3937 = vmatprep.mubr.f32.mxu0 0.0
        %3938 = vmatmul.mubr.f32.gmra.mrb[0].mxu0 %v3432
        %v3939 = vpop.f32.mrb[0].mxu0
        %v3940 = vadd.f32 %v3715, %v3939
        %v3941 = vpop.f32.mrb[0].mxu0
        %3942 = vmatprep.mubr.f32.mxu0 0.0
        %3943 = vmatmul.mubr.f32.gmra.mrb[0].mxu0 %v3433
        %v3944 = vpop.f32.mrb[0].mxu0
        %v3945 = vadd.f32 %v3720, %v3944
        %v3946 = vpop.f32.mrb[0].mxu0
        %3947 = vdwg.mxu0
        %v3948 = vld [vmem:[#allocation2 + $0x2] sm:$0xff]
        %v3949 = vld [vmem:[#allocation2 + $0xa] sm:$0xff]
        %v3950 = vld [vmem:[#allocation2 + $0x1a] sm:$0xff]
        %v3951 = vld [vmem:[#allocation2 + $0x22] sm:$0xff]
        %v3952 = vld [vmem:[#allocation2 + $0x32] sm:$0xff]
        %v3953 = vld [vmem:[#allocation2 + $0x3a] sm:$0xff]
        %v3954 = vld [vmem:[#allocation2 + $0x4a] sm:$0xff]
        %v3955 = vld [vmem:[#allocation2 + $0x52] sm:$0xff]
        %v3956 = vld [vmem:[#allocation2 + $0x62] sm:$0xff]
        %v3957 = vld [vmem:[#allocation2 + $0x6a] sm:$0xff]
        %v3958 = vld [vmem:[#allocation2 + $0x7a] sm:$0xff]
        %v3959 = vld [vmem:[#allocation2 + $0x82] sm:$0xff]
        %v3960 = vld [vmem:[#allocation2 + $0x92] sm:$0xff]
        %v3961 = vld [vmem:[#allocation2 + $0x9a] sm:$0xff]
        %v3962 = vld [vmem:[#allocation2 + $0xaa] sm:$0xff]
        %v3963 = vld [vmem:[#allocation2 + $0xb2] sm:$0xff]
        %v3964 = vld [vmem:[#allocation2 + $0xc2] sm:$0xff]
        %v3965 = vld [vmem:[#allocation2 + $0xca] sm:$0xff]
        %v3966 = vld [vmem:[#allocation2 + $0xda] sm:$0xff]
        %v3967 = vld [vmem:[#allocation2 + $0xe2] sm:$0xff]
        %v3968 = vld [vmem:[#allocation2 + $0xf2] sm:$0xff]
        %v3969 = vld [vmem:[#allocation2 + $0xfa] sm:$0xff]
        %v3970 = vld [vmem:[#allocation2 + $0x10a] sm:$0xff]
        %v3971 = vld [vmem:[#allocation2 + $0x112] sm:$0xff]
        %v3972 = vld [vmem:[#allocation2 + $0x122] sm:$0xff]
        %v3973 = vld [vmem:[#allocation2 + $0x12a] sm:$0xff]
        %v3974 = vld [vmem:[#allocation2 + $0x13a] sm:$0xff]
        %v3975 = vld [vmem:[#allocation2 + $0x142] sm:$0xff]
        %v3976 = vld [vmem:[#allocation2 + $0x152] sm:$0xff]
        %v3977 = vld [vmem:[#allocation2 + $0x15a] sm:$0xff]
        %v3978 = vld [vmem:[#allocation2 + $0x16a] sm:$0xff]
        %v3979 = vld [vmem:[#allocation2 + $0x172] sm:$0xff]
        %v3980 = vld [vmem:[#allocation8 + $0x100] sm:$0xff]
        %v3981 = vld [vmem:[#allocation8 + $0x108] sm:$0xff]
        %v3982 = vld [vmem:[#allocation8 + $0x110] sm:$0xff]
        %v3983 = vld [vmem:[#allocation8 + $0x118] sm:$0xff]
        %v3984 = vld [vmem:[#allocation8 + $0x120] sm:$0xff]
        %v3985 = vld [vmem:[#allocation8 + $0x128] sm:$0xff]
        %v3986 = vld [vmem:[#allocation8 + $0x130] sm:$0xff]
        %v3987 = vld [vmem:[#allocation8 + $0x138] sm:$0xff]
        %v3988 = vld [vmem:[#allocation8 + $0x140] sm:$0xff]
        %v3989 = vld [vmem:[#allocation8 + $0x148] sm:$0xff]
        %v3990 = vld [vmem:[#allocation8 + $0x150] sm:$0xff]
        %v3991 = vld [vmem:[#allocation8 + $0x158] sm:$0xff]
        %v3992 = vld [vmem:[#allocation8 + $0x160] sm:$0xff]
        %v3993 = vld [vmem:[#allocation8 + $0x168] sm:$0xff]
        %v3994 = vld [vmem:[#allocation8 + $0x170] sm:$0xff]
        %v3995 = vld [vmem:[#allocation8 + $0x178] sm:$0xff]
        %3996 = vmatprep.subr.mxu0 0.0
        %3997 = vmatpush1.msra.mxu0 %v3980
        %3998 = vmatprep.subr.mxu0 0.0
        %3999 = vmatpush1.msra.mxu0 %v3981
        %4000 = vmatprep.subr.mxu0 0.0
        %4001 = vmatpush1.msra.mxu0 %v3982
        %4002 = vmatprep.subr.mxu0 0.0
        %4003 = vmatpush1.msra.mxu0 %v3983
        %4004 = vmatprep.subr.mxu0 0.0
        %4005 = vmatpush1.msra.mxu0 %v3984
        %4006 = vmatprep.subr.mxu0 0.0
        %4007 = vmatpush1.msra.mxu0 %v3985
        %4008 = vmatprep.subr.mxu0 0.0
        %4009 = vmatpush1.msra.mxu0 %v3986
        %4010 = vmatprep.subr.mxu0 0.0
        %4011 = vmatpush1.msra.mxu0 %v3987
        %4012 = vmatprep.subr.mxu0 0.0
        %4013 = vmatpush1.msra.mxu0 %v3988
        %4014 = vmatprep.subr.mxu0 0.0
        %4015 = vmatpush1.msra.mxu0 %v3989
        %4016 = vmatprep.subr.mxu0 0.0
        %4017 = vmatpush1.msra.mxu0 %v3990
        %4018 = vmatprep.subr.mxu0 0.0
        %4019 = vmatpush1.msra.mxu0 %v3991
        %4020 = vmatprep.subr.mxu0 0.0
        %4021 = vmatpush1.msra.mxu0 %v3992
        %4022 = vmatprep.subr.mxu0 0.0
        %4023 = vmatpush1.msra.mxu0 %v3993
        %4024 = vmatprep.subr.mxu0 0.0
        %4025 = vmatpush1.msra.mxu0 %v3994
        %4026 = vmatprep.subr.mxu0 0.0
        %4027 = vmatpush1.msra.mxu0 %v3995
        %4028 = vmatprep.subr.mxu0 0.0
        %4029 = vmatpush1.msra.mxu0 0.0
        %4030 = vmatprep.subr.mxu0 0.0
        %4031 = vmatpush1.msra.mxu0 0.0
        %4032 = vmatprep.subr.mxu0 0.0
        %4033 = vmatpush1.msra.mxu0 0.0
        %4034 = vmatprep.subr.mxu0 0.0
        %4035 = vmatpush1.msra.mxu0 0.0
        %4036 = vmatprep.subr.mxu0 0.0
        %4037 = vmatpush1.msra.mxu0 0.0
        %4038 = vmatprep.subr.mxu0 0.0
        %4039 = vmatpush1.msra.mxu0 0.0
        %4040 = vmatprep.subr.mxu0 0.0
        %4041 = vmatpush1.msra.mxu0 0.0
        %4042 = vmatprep.subr.mxu0 0.0
        %4043 = vmatpush1.msra.mxu0 0.0
        %4044 = vmatprep.subr.mxu0 0.0
        %4045 = vmatpush1.msra.mxu0 0.0
        %4046 = vmatprep.subr.mxu0 0.0
        %4047 = vmatpush1.msra.mxu0 0.0
        %4048 = vmatprep.subr.mxu0 0.0
        %4049 = vmatpush1.msra.mxu0 0.0
        %4050 = vmatprep.subr.mxu0 0.0
        %4051 = vmatpush1.msra.mxu0 0.0
        %4052 = vmatprep.subr.mxu0 0.0
        %4053 = vmatpush1.msra.mxu0 0.0
        %4054 = vmatprep.subr.mxu0 0.0
        %4055 = vmatpush1.msra.mxu0 0.0
        %4056 = vmatprep.subr.mxu0 0.0
        %4057 = vmatpush1.msra.mxu0 0.0
        %4058 = vmatprep.subr.mxu0 0.0
        %4059 = vmatpush1.msra.mxu0 0.0
        %4060 = vmatprep.mubr.f32.mxu0 0.0
        %4061 = vmatmul.mubr.f32.gmra.mrb[0].mxu0 %v3948
        %v4062 = vpop.f32.mrb[0].mxu0
        %v4063 = vadd.f32 0.0, %v4062
        %v4064 = vpop.f32.mrb[0].mxu0
        %4065 = vmatprep.mubr.f32.mxu0 0.0
        %4066 = vmatmul.mubr.f32.gmra.mrb[0].mxu0 %v3949
        %v4067 = vpop.f32.mrb[0].mxu0
        %v4068 = vadd.f32 0.0, %v4067
        %v4069 = vpop.f32.mrb[0].mxu0
        %4070 = vmatprep.mubr.f32.mxu0 0.0
        %4071 = vmatmul.mubr.f32.gmra.mrb[0].mxu0 %v3950
        %v4072 = vpop.f32.mrb[0].mxu0
        %v4073 = vadd.f32 0.0, %v4072
        %v4074 = vpop.f32.mrb[0].mxu0
        %4075 = vmatprep.mubr.f32.mxu0 0.0
        %4076 = vmatmul.mubr.f32.gmra.mrb[0].mxu0 %v3951
        %v4077 = vpop.f32.mrb[0].mxu0
        %v4078 = vadd.f32 0.0, %v4077
        %v4079 = vpop.f32.mrb[0].mxu0
        %4080 = vmatprep.mubr.f32.mxu0 0.0
        %4081 = vmatmul.mubr.f32.gmra.mrb[0].mxu0 %v3952
        %v4082 = vpop.f32.mrb[0].mxu0
        %v4083 = vadd.f32 0.0, %v4082
        %v4084 = vpop.f32.mrb[0].mxu0
        %4085 = vmatprep.mubr.f32.mxu0 0.0
        %4086 = vmatmul.mubr.f32.gmra.mrb[0].mxu0 %v3953
        %v4087 = vpop.f32.mrb[0].mxu0
        %v4088 = vadd.f32 0.0, %v4087
        %v4089 = vpop.f32.mrb[0].mxu0
        %4090 = vmatprep.mubr.f32.mxu0 0.0
        %4091 = vmatmul.mubr.f32.gmra.mrb[0].mxu0 %v3954
        %v4092 = vpop.f32.mrb[0].mxu0
        %v4093 = vadd.f32 0.0, %v4092
        %v4094 = vpop.f32.mrb[0].mxu0
        %4095 = vmatprep.mubr.f32.mxu0 0.0
        %4096 = vmatmul.mubr.f32.gmra.mrb[0].mxu0 %v3955
        %v4097 = vpop.f32.mrb[0].mxu0
        %v4098 = vadd.f32 0.0, %v4097
        %v4099 = vpop.f32.mrb[0].mxu0
        %4100 = vmatprep.mubr.f32.mxu0 0.0
        %4101 = vmatmul.mubr.f32.gmra.mrb[0].mxu0 %v3956
        %v4102 = vpop.f32.mrb[0].mxu0
        %v4103 = vadd.f32 0.0, %v4102
        %v4104 = vpop.f32.mrb[0].mxu0
        %4105 = vmatprep.mubr.f32.mxu0 0.0
        %4106 = vmatmul.mubr.f32.gmra.mrb[0].mxu0 %v3957
        %v4107 = vpop.f32.mrb[0].mxu0
        %v4108 = vadd.f32 0.0, %v4107
        %v4109 = vpop.f32.mrb[0].mxu0
        %4110 = vmatprep.mubr.f32.mxu0 0.0
        %4111 = vmatmul.mubr.f32.gmra.mrb[0].mxu0 %v3958
        %v4112 = vpop.f32.mrb[0].mxu0
        %v4113 = vadd.f32 0.0, %v4112
        %v4114 = vpop.f32.mrb[0].mxu0
        %4115 = vmatprep.mubr.f32.mxu0 0.0
        %4116 = vmatmul.mubr.f32.gmra.mrb[0].mxu0 %v3959
        %v4117 = vpop.f32.mrb[0].mxu0
        %v4118 = vadd.f32 0.0, %v4117
        %v4119 = vpop.f32.mrb[0].mxu0
        %4120 = vmatprep.mubr.f32.mxu0 0.0
        %4121 = vmatmul.mubr.f32.gmra.mrb[0].mxu0 %v3960
        %v4122 = vpop.f32.mrb[0].mxu0
        %v4123 = vadd.f32 0.0, %v4122
        %v4124 = vpop.f32.mrb[0].mxu0
        %4125 = vmatprep.mubr.f32.mxu0 0.0
        %4126 = vmatmul.mubr.f32.gmra.mrb[0].mxu0 %v3961
        %v4127 = vpop.f32.mrb[0].mxu0
        %v4128 = vadd.f32 0.0, %v4127
        %v4129 = vpop.f32.mrb[0].mxu0
        %4130 = vmatprep.mubr.f32.mxu0 0.0
        %4131 = vmatmul.mubr.f32.gmra.mrb[0].mxu0 %v3962
        %v4132 = vpop.f32.mrb[0].mxu0
        %v4133 = vadd.f32 0.0, %v4132
        %v4134 = vpop.f32.mrb[0].mxu0
        %4135 = vmatprep.mubr.f32.mxu0 0.0
        %4136 = vmatmul.mubr.f32.gmra.mrb[0].mxu0 %v3963
        %v4137 = vpop.f32.mrb[0].mxu0
        %v4138 = vadd.f32 0.0, %v4137
        %v4139 = vpop.f32.mrb[0].mxu0
        %4140 = vmatprep.mubr.f32.mxu0 0.0
        %4141 = vmatmul.mubr.f32.gmra.mrb[0].mxu0 %v3964
        %v4142 = vpop.f32.mrb[0].mxu0
        %v4143 = vadd.f32 0.0, %v4142
        %v4144 = vpop.f32.mrb[0].mxu0
        %4145 = vmatprep.mubr.f32.mxu0 0.0
        %4146 = vmatmul.mubr.f32.gmra.mrb[0].mxu0 %v3965
        %v4147 = vpop.f32.mrb[0].mxu0
        %v4148 = vadd.f32 0.0, %v4147
        %v4149 = vpop.f32.mrb[0].mxu0
        %4150 = vmatprep.mubr.f32.mxu0 0.0
        %4151 = vmatmul.mubr.f32.gmra.mrb[0].mxu0 %v3966
        %v4152 = vpop.f32.mrb[0].mxu0
        %v4153 = vadd.f32 0.0, %v4152
        %v4154 = vpop.f32.mrb[0].mxu0
        %4155 = vmatprep.mubr.f32.mxu0 0.0
        %4156 = vmatmul.mubr.f32.gmra.mrb[0].mxu0 %v3967
        %v4157 = vpop.f32.mrb[0].mxu0
        %v4158 = vadd.f32 0.0, %v4157
        %v4159 = vpop.f32.mrb[0].mxu0
        %4160 = vmatprep.mubr.f32.mxu0 0.0
        %4161 = vmatmul.mubr.f32.gmra.mrb[0].mxu0 %v3968
        %v4162 = vpop.f32.mrb[0].mxu0
        %v4163 = vadd.f32 0.0, %v4162
        %v4164 = vpop.f32.mrb[0].mxu0
        %4165 = vmatprep.mubr.f32.mxu0 0.0
        %4166 = vmatmul.mubr.f32.gmra.mrb[0].mxu0 %v3969
        %v4167 = vpop.f32.mrb[0].mxu0
        %v4168 = vadd.f32 0.0, %v4167
        %v4169 = vpop.f32.mrb[0].mxu0
        %4170 = vmatprep.mubr.f32.mxu0 0.0
        %4171 = vmatmul.mubr.f32.gmra.mrb[0].mxu0 %v3970
        %v4172 = vpop.f32.mrb[0].mxu0
        %v4173 = vadd.f32 0.0, %v4172
        %v4174 = vpop.f32.mrb[0].mxu0
        %4175 = vmatprep.mubr.f32.mxu0 0.0
        %4176 = vmatmul.mubr.f32.gmra.mrb[0].mxu0 %v3971
        %v4177 = vpop.f32.mrb[0].mxu0
        %v4178 = vadd.f32 0.0, %v4177
        %v4179 = vpop.f32.mrb[0].mxu0
        %4180 = vmatprep.mubr.f32.mxu0 0.0
        %4181 = vmatmul.mubr.f32.gmra.mrb[0].mxu0 %v3972
        %v4182 = vpop.f32.mrb[0].mxu0
        %v4183 = vadd.f32 0.0, %v4182
        %v4184 = vpop.f32.mrb[0].mxu0
        %4185 = vmatprep.mubr.f32.mxu0 0.0
        %4186 = vmatmul.mubr.f32.gmra.mrb[0].mxu0 %v3973
        %v4187 = vpop.f32.mrb[0].mxu0
        %v4188 = vadd.f32 0.0, %v4187
        %v4189 = vpop.f32.mrb[0].mxu0
        %4190 = vmatprep.mubr.f32.mxu0 0.0
        %4191 = vmatmul.mubr.f32.gmra.mrb[0].mxu0 %v3974
        %v4192 = vpop.f32.mrb[0].mxu0
        %v4193 = vadd.f32 0.0, %v4192
        %v4194 = vpop.f32.mrb[0].mxu0
        %4195 = vmatprep.mubr.f32.mxu0 0.0
        %4196 = vmatmul.mubr.f32.gmra.mrb[0].mxu0 %v3975
        %v4197 = vpop.f32.mrb[0].mxu0
        %v4198 = vadd.f32 0.0, %v4197
        %v4199 = vpop.f32.mrb[0].mxu0
        %4200 = vmatprep.mubr.f32.mxu0 0.0
        %4201 = vmatmul.mubr.f32.gmra.mrb[0].mxu0 %v3976
        %v4202 = vpop.f32.mrb[0].mxu0
        %v4203 = vadd.f32 0.0, %v4202
        %v4204 = vpop.f32.mrb[0].mxu0
        %4205 = vmatprep.mubr.f32.mxu0 0.0
        %4206 = vmatmul.mubr.f32.gmra.mrb[0].mxu0 %v3977
        %v4207 = vpop.f32.mrb[0].mxu0
        %v4208 = vadd.f32 0.0, %v4207
        %v4209 = vpop.f32.mrb[0].mxu0
        %4210 = vmatprep.mubr.f32.mxu0 0.0
        %4211 = vmatmul.mubr.f32.gmra.mrb[0].mxu0 %v3978
        %v4212 = vpop.f32.mrb[0].mxu0
        %v4213 = vadd.f32 0.0, %v4212
        %v4214 = vpop.f32.mrb[0].mxu0
        %4215 = vmatprep.mubr.f32.mxu0 0.0
        %4216 = vmatmul.mubr.f32.gmra.mrb[0].mxu0 %v3979
        %v4217 = vpop.f32.mrb[0].mxu0
        %v4218 = vadd.f32 0.0, %v4217
        %v4219 = vpop.f32.mrb[0].mxu0
        %4220 = vdwg.mxu0
        %v4221 = vadd.f32 %v3790, %v4063
        %v4222 = vadd.f32 %v3795, %v4068
        %v4223 = vadd.f32 %v3800, %v4073
        %v4224 = vadd.f32 %v3805, %v4078
        %v4225 = vadd.f32 %v3810, %v4083
        %v4226 = vadd.f32 %v3815, %v4088
        %v4227 = vadd.f32 %v3820, %v4093
        %v4228 = vadd.f32 %v3825, %v4098
        %v4229 = vadd.f32 %v3830, %v4103
        %v4230 = vadd.f32 %v3835, %v4108
        %v4231 = vadd.f32 %v3840, %v4113
        %v4232 = vadd.f32 %v3845, %v4118
        %v4233 = vadd.f32 %v3850, %v4123
        %v4234 = vadd.f32 %v3855, %v4128
        %v4235 = vadd.f32 %v3860, %v4133
        %v4236 = vadd.f32 %v3865, %v4138
        %v4237 = vadd.f32 %v3870, %v4143
        %v4238 = vadd.f32 %v3875, %v4148
        %v4239 = vadd.f32 %v3880, %v4153
        %v4240 = vadd.f32 %v3885, %v4158
        %v4241 = vadd.f32 %v3890, %v4163
        %v4242 = vadd.f32 %v3895, %v4168
        %v4243 = vadd.f32 %v3900, %v4173
        %v4244 = vadd.f32 %v3905, %v4178
        %v4245 = vadd.f32 %v3910, %v4183
        %v4246 = vadd.f32 %v3915, %v4188
        %v4247 = vadd.f32 %v3920, %v4193
        %v4248 = vadd.f32 %v3925, %v4198
        %v4249 = vadd.f32 %v3930, %v4203
        %v4250 = vadd.f32 %v3935, %v4208
        %v4251 = vadd.f32 %v3940, %v4213
        %v4252 = vadd.f32 %v3945, %v4218
        %v4253 = vld [vmem:[%s475] sm:$0xff]
        %v4254 = vld [vmem:[%s475 + $0x8] sm:$0xff]
        %v4255 = vld [vmem:[%s475 + $0x18] sm:$0xff]
        %v4256 = vld [vmem:[%s475 + $0x20] sm:$0xff]
        %v4257 = vld [vmem:[%s475 + $0x30] sm:$0xff]
        %v4258 = vld [vmem:[%s475 + $0x38] sm:$0xff]
        %v4259 = vld [vmem:[%s475 + $0x48] sm:$0xff]
        %v4260 = vld [vmem:[%s475 + $0x50] sm:$0xff]
        %v4261 = vld [vmem:[%s475 + $0x60] sm:$0xff]
        %v4262 = vld [vmem:[%s475 + $0x68] sm:$0xff]
        %v4263 = vld [vmem:[%s475 + $0x78] sm:$0xff]
        %v4264 = vld [vmem:[%s475 + $0x80] sm:$0xff]
        %v4265 = vld [vmem:[%s475 + $0x90] sm:$0xff]
        %v4266 = vld [vmem:[%s475 + $0x98] sm:$0xff]
        %v4267 = vld [vmem:[%s475 + $0xa8] sm:$0xff]
        %v4268 = vld [vmem:[%s475 + $0xb0] sm:$0xff]
        %v4269 = vld [vmem:[%s475 + $0xc0] sm:$0xff]
        %v4270 = vld [vmem:[%s475 + $0xc8] sm:$0xff]
        %v4271 = vld [vmem:[%s475 + $0xd8] sm:$0xff]
        %v4272 = vld [vmem:[%s475 + $0xe0] sm:$0xff]
        %v4273 = vld [vmem:[%s475 + $0xf0] sm:$0xff]
        %v4274 = vld [vmem:[%s475 + $0xf8] sm:$0xff]
        %v4275 = vld [vmem:[%s475 + $0x108] sm:$0xff]
        %v4276 = vld [vmem:[%s475 + $0x110] sm:$0xff]
        %v4277 = vld [vmem:[%s475 + $0x120] sm:$0xff]
        %v4278 = vld [vmem:[%s475 + $0x128] sm:$0xff]
        %v4279 = vld [vmem:[%s475 + $0x138] sm:$0xff]
        %v4280 = vld [vmem:[%s475 + $0x140] sm:$0xff]
        %v4281 = vld [vmem:[%s475 + $0x150] sm:$0xff]
        %v4282 = vld [vmem:[%s475 + $0x158] sm:$0xff]
        %v4283 = vld [vmem:[%s475 + $0x168] sm:$0xff]
        %v4284 = vld [vmem:[%s475 + $0x170] sm:$0xff]
        %v4285 = vld [vmem:[#allocation8 + $0x180] sm:$0xff]
        %v4286 = vld [vmem:[#allocation8 + $0x188] sm:$0xff]
        %v4287 = vld [vmem:[#allocation8 + $0x190] sm:$0xff]
        %v4288 = vld [vmem:[#allocation8 + $0x198] sm:$0xff]
        %v4289 = vld [vmem:[#allocation8 + $0x1a0] sm:$0xff]
        %v4290 = vld [vmem:[#allocation8 + $0x1a8] sm:$0xff]
        %v4291 = vld [vmem:[#allocation8 + $0x1b0] sm:$0xff]
        %v4292 = vld [vmem:[#allocation8 + $0x1b8] sm:$0xff]
        %v4293 = vld [vmem:[#allocation8 + $0x1c0] sm:$0xff]
        %v4294 = vld [vmem:[#allocation8 + $0x1c8] sm:$0xff]
        %v4295 = vld [vmem:[#allocation8 + $0x1d0] sm:$0xff]
        %v4296 = vld [vmem:[#allocation8 + $0x1d8] sm:$0xff]
        %v4297 = vld [vmem:[#allocation8 + $0x1e0] sm:$0xff]
        %v4298 = vld [vmem:[#allocation8 + $0x1e8] sm:$0xff]
        %v4299 = vld [vmem:[#allocation8 + $0x1f0] sm:$0xff]
        %v4300 = vld [vmem:[#allocation8 + $0x1f8] sm:$0xff]
        %4301 = vmatprep.subr.mxu0 0.0
        %4302 = vmatpush1.msra.mxu0 %v4285
        %4303 = vmatprep.subr.mxu0 0.0
        %4304 = vmatpush1.msra.mxu0 %v4286
        %4305 = vmatprep.subr.mxu0 0.0
        %4306 = vmatpush1.msra.mxu0 %v4287
        %4307 = vmatprep.subr.mxu0 0.0
        %4308 = vmatpush1.msra.mxu0 %v4288
        %4309 = vmatprep.subr.mxu0 0.0
        %4310 = vmatpush1.msra.mxu0 %v4289
        %4311 = vmatprep.subr.mxu0 0.0
        %4312 = vmatpush1.msra.mxu0 %v4290
        %4313 = vmatprep.subr.mxu0 0.0
        %4314 = vmatpush1.msra.mxu0 %v4291
        %4315 = vmatprep.subr.mxu0 0.0
        %4316 = vmatpush1.msra.mxu0 %v4292
        %4317 = vmatprep.subr.mxu0 0.0
        %4318 = vmatpush1.msra.mxu0 %v4293
        %4319 = vmatprep.subr.mxu0 0.0
        %4320 = vmatpush1.msra.mxu0 %v4294
        %4321 = vmatprep.subr.mxu0 0.0
        %4322 = vmatpush1.msra.mxu0 %v4295
        %4323 = vmatprep.subr.mxu0 0.0
        %4324 = vmatpush1.msra.mxu0 %v4296
        %4325 = vmatprep.subr.mxu0 0.0
        %4326 = vmatpush1.msra.mxu0 %v4297
        %4327 = vmatprep.subr.mxu0 0.0
        %4328 = vmatpush1.msra.mxu0 %v4298
        %4329 = vmatprep.subr.mxu0 0.0
        %4330 = vmatpush1.msra.mxu0 %v4299
        %4331 = vmatprep.subr.mxu0 0.0
        %4332 = vmatpush1.msra.mxu0 %v4300
        %4333 = vmatprep.subr.mxu0 0.0
        %4334 = vmatpush1.msra.mxu0 0.0
        %4335 = vmatprep.subr.mxu0 0.0
        %4336 = vmatpush1.msra.mxu0 0.0
        %4337 = vmatprep.subr.mxu0 0.0
        %4338 = vmatpush1.msra.mxu0 0.0
        %4339 = vmatprep.subr.mxu0 0.0
        %4340 = vmatpush1.msra.mxu0 0.0
        %4341 = vmatprep.subr.mxu0 0.0
        %4342 = vmatpush1.msra.mxu0 0.0
        %4343 = vmatprep.subr.mxu0 0.0
        %4344 = vmatpush1.msra.mxu0 0.0
        %4345 = vmatprep.subr.mxu0 0.0
        %4346 = vmatpush1.msra.mxu0 0.0
        %4347 = vmatprep.subr.mxu0 0.0
        %4348 = vmatpush1.msra.mxu0 0.0
        %4349 = vmatprep.subr.mxu0 0.0
        %4350 = vmatpush1.msra.mxu0 0.0
        %4351 = vmatprep.subr.mxu0 0.0
        %4352 = vmatpush1.msra.mxu0 0.0
        %4353 = vmatprep.subr.mxu0 0.0
        %4354 = vmatpush1.msra.mxu0 0.0
        %4355 = vmatprep.subr.mxu0 0.0
        %4356 = vmatpush1.msra.mxu0 0.0
        %4357 = vmatprep.subr.mxu0 0.0
        %4358 = vmatpush1.msra.mxu0 0.0
        %4359 = vmatprep.subr.mxu0 0.0
        %4360 = vmatpush1.msra.mxu0 0.0
        %4361 = vmatprep.subr.mxu0 0.0
        %4362 = vmatpush1.msra.mxu0 0.0
        %4363 = vmatprep.subr.mxu0 0.0
        %4364 = vmatpush1.msra.mxu0 0.0
        %4365 = vmatprep.mubr.f32.mxu0 0.0
        %4366 = vmatmul.mubr.f32.gmra.mrb[0].mxu0 %v4253
        %v4367 = vpop.f32.mrb[0].mxu0
        %v4368 = vadd.f32 0.0, %v4367
        %v4369 = vpop.f32.mrb[0].mxu0
        %4370 = vmatprep.mubr.f32.mxu0 0.0
        %4371 = vmatmul.mubr.f32.gmra.mrb[0].mxu0 %v4254
        %v4372 = vpop.f32.mrb[0].mxu0
        %v4373 = vadd.f32 0.0, %v4372
        %v4374 = vpop.f32.mrb[0].mxu0
        %4375 = vmatprep.mubr.f32.mxu0 0.0
        %4376 = vmatmul.mubr.f32.gmra.mrb[0].mxu0 %v4255
        %v4377 = vpop.f32.mrb[0].mxu0
        %v4378 = vadd.f32 0.0, %v4377
        %v4379 = vpop.f32.mrb[0].mxu0
        %4380 = vmatprep.mubr.f32.mxu0 0.0
        %4381 = vmatmul.mubr.f32.gmra.mrb[0].mxu0 %v4256
        %v4382 = vpop.f32.mrb[0].mxu0
        %v4383 = vadd.f32 0.0, %v4382
        %v4384 = vpop.f32.mrb[0].mxu0
        %4385 = vmatprep.mubr.f32.mxu0 0.0
        %4386 = vmatmul.mubr.f32.gmra.mrb[0].mxu0 %v4257
        %v4387 = vpop.f32.mrb[0].mxu0
        %v4388 = vadd.f32 0.0, %v4387
        %v4389 = vpop.f32.mrb[0].mxu0
        %4390 = vmatprep.mubr.f32.mxu0 0.0
        %4391 = vmatmul.mubr.f32.gmra.mrb[0].mxu0 %v4258
        %v4392 = vpop.f32.mrb[0].mxu0
        %v4393 = vadd.f32 0.0, %v4392
        %v4394 = vpop.f32.mrb[0].mxu0
        %4395 = vmatprep.mubr.f32.mxu0 0.0
        %4396 = vmatmul.mubr.f32.gmra.mrb[0].mxu0 %v4259
        %v4397 = vpop.f32.mrb[0].mxu0
        %v4398 = vadd.f32 0.0, %v4397
        %v4399 = vpop.f32.mrb[0].mxu0
        %4400 = vmatprep.mubr.f32.mxu0 0.0
        %4401 = vmatmul.mubr.f32.gmra.mrb[0].mxu0 %v4260
        %v4402 = vpop.f32.mrb[0].mxu0
        %v4403 = vadd.f32 0.0, %v4402
        %v4404 = vpop.f32.mrb[0].mxu0
        %4405 = vmatprep.mubr.f32.mxu0 0.0
        %4406 = vmatmul.mubr.f32.gmra.mrb[0].mxu0 %v4261
        %v4407 = vpop.f32.mrb[0].mxu0
        %v4408 = vadd.f32 0.0, %v4407
        %v4409 = vpop.f32.mrb[0].mxu0
        %4410 = vmatprep.mubr.f32.mxu0 0.0
        %4411 = vmatmul.mubr.f32.gmra.mrb[0].mxu0 %v4262
        %v4412 = vpop.f32.mrb[0].mxu0
        %v4413 = vadd.f32 0.0, %v4412
        %v4414 = vpop.f32.mrb[0].mxu0
        %4415 = vmatprep.mubr.f32.mxu0 0.0
        %4416 = vmatmul.mubr.f32.gmra.mrb[0].mxu0 %v4263
        %v4417 = vpop.f32.mrb[0].mxu0
        %v4418 = vadd.f32 0.0, %v4417
        %v4419 = vpop.f32.mrb[0].mxu0
        %4420 = vmatprep.mubr.f32.mxu0 0.0
        %4421 = vmatmul.mubr.f32.gmra.mrb[0].mxu0 %v4264
        %v4422 = vpop.f32.mrb[0].mxu0
        %v4423 = vadd.f32 0.0, %v4422
        %v4424 = vpop.f32.mrb[0].mxu0
        %4425 = vmatprep.mubr.f32.mxu0 0.0
        %4426 = vmatmul.mubr.f32.gmra.mrb[0].mxu0 %v4265
        %v4427 = vpop.f32.mrb[0].mxu0
        %v4428 = vadd.f32 0.0, %v4427
        %v4429 = vpop.f32.mrb[0].mxu0
        %4430 = vmatprep.mubr.f32.mxu0 0.0
        %4431 = vmatmul.mubr.f32.gmra.mrb[0].mxu0 %v4266
        %v4432 = vpop.f32.mrb[0].mxu0
        %v4433 = vadd.f32 0.0, %v4432
        %v4434 = vpop.f32.mrb[0].mxu0
        %4435 = vmatprep.mubr.f32.mxu0 0.0
        %4436 = vmatmul.mubr.f32.gmra.mrb[0].mxu0 %v4267
        %v4437 = vpop.f32.mrb[0].mxu0
        %v4438 = vadd.f32 0.0, %v4437
        %v4439 = vpop.f32.mrb[0].mxu0
        %4440 = vmatprep.mubr.f32.mxu0 0.0
        %4441 = vmatmul.mubr.f32.gmra.mrb[0].mxu0 %v4268
        %v4442 = vpop.f32.mrb[0].mxu0
        %v4443 = vadd.f32 0.0, %v4442
        %v4444 = vpop.f32.mrb[0].mxu0
        %4445 = vmatprep.mubr.f32.mxu0 0.0
        %4446 = vmatmul.mubr.f32.gmra.mrb[0].mxu0 %v4269
        %v4447 = vpop.f32.mrb[0].mxu0
        %v4448 = vadd.f32 0.0, %v4447
        %v4449 = vpop.f32.mrb[0].mxu0
        %4450 = vmatprep.mubr.f32.mxu0 0.0
        %4451 = vmatmul.mubr.f32.gmra.mrb[0].mxu0 %v4270
        %v4452 = vpop.f32.mrb[0].mxu0
        %v4453 = vadd.f32 0.0, %v4452
        %v4454 = vpop.f32.mrb[0].mxu0
        %4455 = vmatprep.mubr.f32.mxu0 0.0
        %4456 = vmatmul.mubr.f32.gmra.mrb[0].mxu0 %v4271
        %v4457 = vpop.f32.mrb[0].mxu0
        %v4458 = vadd.f32 0.0, %v4457
        %v4459 = vpop.f32.mrb[0].mxu0
        %4460 = vmatprep.mubr.f32.mxu0 0.0
        %4461 = vmatmul.mubr.f32.gmra.mrb[0].mxu0 %v4272
        %v4462 = vpop.f32.mrb[0].mxu0
        %v4463 = vadd.f32 0.0, %v4462
        %v4464 = vpop.f32.mrb[0].mxu0
        %4465 = vmatprep.mubr.f32.mxu0 0.0
        %4466 = vmatmul.mubr.f32.gmra.mrb[0].mxu0 %v4273
        %v4467 = vpop.f32.mrb[0].mxu0
        %v4468 = vadd.f32 0.0, %v4467
        %v4469 = vpop.f32.mrb[0].mxu0
        %4470 = vmatprep.mubr.f32.mxu0 0.0
        %4471 = vmatmul.mubr.f32.gmra.mrb[0].mxu0 %v4274
        %v4472 = vpop.f32.mrb[0].mxu0
        %v4473 = vadd.f32 0.0, %v4472
        %v4474 = vpop.f32.mrb[0].mxu0
        %4475 = vmatprep.mubr.f32.mxu0 0.0
        %4476 = vmatmul.mubr.f32.gmra.mrb[0].mxu0 %v4275
        %v4477 = vpop.f32.mrb[0].mxu0
        %v4478 = vadd.f32 0.0, %v4477
        %v4479 = vpop.f32.mrb[0].mxu0
        %4480 = vmatprep.mubr.f32.mxu0 0.0
        %4481 = vmatmul.mubr.f32.gmra.mrb[0].mxu0 %v4276
        %v4482 = vpop.f32.mrb[0].mxu0
        %v4483 = vadd.f32 0.0, %v4482
        %v4484 = vpop.f32.mrb[0].mxu0
        %4485 = vmatprep.mubr.f32.mxu0 0.0
        %4486 = vmatmul.mubr.f32.gmra.mrb[0].mxu0 %v4277
        %v4487 = vpop.f32.mrb[0].mxu0
        %v4488 = vadd.f32 0.0, %v4487
        %v4489 = vpop.f32.mrb[0].mxu0
        %4490 = vmatprep.mubr.f32.mxu0 0.0
        %4491 = vmatmul.mubr.f32.gmra.mrb[0].mxu0 %v4278
        %v4492 = vpop.f32.mrb[0].mxu0
        %v4493 = vadd.f32 0.0, %v4492
        %v4494 = vpop.f32.mrb[0].mxu0
        %4495 = vmatprep.mubr.f32.mxu0 0.0
        %4496 = vmatmul.mubr.f32.gmra.mrb[0].mxu0 %v4279
        %v4497 = vpop.f32.mrb[0].mxu0
        %v4498 = vadd.f32 0.0, %v4497
        %v4499 = vpop.f32.mrb[0].mxu0
        %4500 = vmatprep.mubr.f32.mxu0 0.0
        %4501 = vmatmul.mubr.f32.gmra.mrb[0].mxu0 %v4280
        %v4502 = vpop.f32.mrb[0].mxu0
        %v4503 = vadd.f32 0.0, %v4502
        %v4504 = vpop.f32.mrb[0].mxu0
        %4505 = vmatprep.mubr.f32.mxu0 0.0
        %4506 = vmatmul.mubr.f32.gmra.mrb[0].mxu0 %v4281
        %v4507 = vpop.f32.mrb[0].mxu0
        %v4508 = vadd.f32 0.0, %v4507
        %v4509 = vpop.f32.mrb[0].mxu0
        %4510 = vmatprep.mubr.f32.mxu0 0.0
        %4511 = vmatmul.mubr.f32.gmra.mrb[0].mxu0 %v4282
        %v4512 = vpop.f32.mrb[0].mxu0
        %v4513 = vadd.f32 0.0, %v4512
        %v4514 = vpop.f32.mrb[0].mxu0
        %4515 = vmatprep.mubr.f32.mxu0 0.0
        %4516 = vmatmul.mubr.f32.gmra.mrb[0].mxu0 %v4283
        %v4517 = vpop.f32.mrb[0].mxu0
        %v4518 = vadd.f32 0.0, %v4517
        %v4519 = vpop.f32.mrb[0].mxu0
        %4520 = vmatprep.mubr.f32.mxu0 0.0
        %4521 = vmatmul.mubr.f32.gmra.mrb[0].mxu0 %v4284
        %v4522 = vpop.f32.mrb[0].mxu0
        %v4523 = vadd.f32 0.0, %v4522
        %v4524 = vpop.f32.mrb[0].mxu0
        %4525 = vdwg.mxu0
        %v4526 = vadd.f32 %v4221, %v4368
        %v4527 = vadd.f32 %v4222, %v4373
        %v4528 = vadd.f32 %v4223, %v4378
        %v4529 = vadd.f32 %v4224, %v4383
        %v4530 = vadd.f32 %v4225, %v4388
        %v4531 = vadd.f32 %v4226, %v4393
        %v4532 = vadd.f32 %v4227, %v4398
        %v4533 = vadd.f32 %v4228, %v4403
        %v4534 = vadd.f32 %v4229, %v4408
        %v4535 = vadd.f32 %v4230, %v4413
        %v4536 = vadd.f32 %v4231, %v4418
        %v4537 = vadd.f32 %v4232, %v4423
        %v4538 = vadd.f32 %v4233, %v4428
        %v4539 = vadd.f32 %v4234, %v4433
        %v4540 = vadd.f32 %v4235, %v4438
        %v4541 = vadd.f32 %v4236, %v4443
        %v4542 = vadd.f32 %v4237, %v4448
        %v4543 = vadd.f32 %v4238, %v4453
        %v4544 = vadd.f32 %v4239, %v4458
        %v4545 = vadd.f32 %v4240, %v4463
        %v4546 = vadd.f32 %v4241, %v4468
        %v4547 = vadd.f32 %v4242, %v4473
        %v4548 = vadd.f32 %v4243, %v4478
        %v4549 = vadd.f32 %v4244, %v4483
        %v4550 = vadd.f32 %v4245, %v4488
        %v4551 = vadd.f32 %v4246, %v4493
        %v4552 = vadd.f32 %v4247, %v4498
        %v4553 = vadd.f32 %v4248, %v4503
        %v4554 = vadd.f32 %v4249, %v4508
        %v4555 = vadd.f32 %v4250, %v4513
        %v4556 = vadd.f32 %v4251, %v4518
        %v4557 = vadd.f32 %v4252, %v4523
        %v4558 = vld [vmem:[%s475 + $0x1] sm:$0xff]
        %v4559 = vld [vmem:[%s475 + $0x9] sm:$0xff]
        %v4560 = vld [vmem:[%s475 + $0x19] sm:$0xff]
        %v4561 = vld [vmem:[%s475 + $0x21] sm:$0xff]
        %v4562 = vld [vmem:[%s475 + $0x31] sm:$0xff]
        %v4563 = vld [vmem:[%s475 + $0x39] sm:$0xff]
        %v4564 = vld [vmem:[%s475 + $0x49] sm:$0xff]
        %v4565 = vld [vmem:[%s475 + $0x51] sm:$0xff]
        %v4566 = vld [vmem:[%s475 + $0x61] sm:$0xff]
        %v4567 = vld [vmem:[%s475 + $0x69] sm:$0xff]
        %v4568 = vld [vmem:[%s475 + $0x79] sm:$0xff]
        %v4569 = vld [vmem:[%s475 + $0x81] sm:$0xff]
        %v4570 = vld [vmem:[%s475 + $0x91] sm:$0xff]
        %v4571 = vld [vmem:[%s475 + $0x99] sm:$0xff]
        %v4572 = vld [vmem:[%s475 + $0xa9] sm:$0xff]
        %v4573 = vld [vmem:[%s475 + $0xb1] sm:$0xff]
        %v4574 = vld [vmem:[%s475 + $0xc1] sm:$0xff]
        %v4575 = vld [vmem:[%s475 + $0xc9] sm:$0xff]
        %v4576 = vld [vmem:[%s475 + $0xd9] sm:$0xff]
        %v4577 = vld [vmem:[%s475 + $0xe1] sm:$0xff]
        %v4578 = vld [vmem:[%s475 + $0xf1] sm:$0xff]
        %v4579 = vld [vmem:[%s475 + $0xf9] sm:$0xff]
        %v4580 = vld [vmem:[%s475 + $0x109] sm:$0xff]
        %v4581 = vld [vmem:[%s475 + $0x111] sm:$0xff]
        %v4582 = vld [vmem:[%s475 + $0x121] sm:$0xff]
        %v4583 = vld [vmem:[%s475 + $0x129] sm:$0xff]
        %v4584 = vld [vmem:[%s475 + $0x139] sm:$0xff]
        %v4585 = vld [vmem:[%s475 + $0x141] sm:$0xff]
        %v4586 = vld [vmem:[%s475 + $0x151] sm:$0xff]
        %v4587 = vld [vmem:[%s475 + $0x159] sm:$0xff]
        %v4588 = vld [vmem:[%s475 + $0x169] sm:$0xff]
        %v4589 = vld [vmem:[%s475 + $0x171] sm:$0xff]
        %v4590 = vld [vmem:[#allocation8 + $0x200] sm:$0xff]
        %v4591 = vld [vmem:[#allocation8 + $0x208] sm:$0xff]
        %v4592 = vld [vmem:[#allocation8 + $0x210] sm:$0xff]
        %v4593 = vld [vmem:[#allocation8 + $0x218] sm:$0xff]
        %v4594 = vld [vmem:[#allocation8 + $0x220] sm:$0xff]
        %v4595 = vld [vmem:[#allocation8 + $0x228] sm:$0xff]
        %v4596 = vld [vmem:[#allocation8 + $0x230] sm:$0xff]
        %v4597 = vld [vmem:[#allocation8 + $0x238] sm:$0xff]
        %v4598 = vld [vmem:[#allocation8 + $0x240] sm:$0xff]
        %v4599 = vld [vmem:[#allocation8 + $0x248] sm:$0xff]
        %v4600 = vld [vmem:[#allocation8 + $0x250] sm:$0xff]
        %v4601 = vld [vmem:[#allocation8 + $0x258] sm:$0xff]
        %v4602 = vld [vmem:[#allocation8 + $0x260] sm:$0xff]
        %v4603 = vld [vmem:[#allocation8 + $0x268] sm:$0xff]
        %v4604 = vld [vmem:[#allocation8 + $0x270] sm:$0xff]
        %v4605 = vld [vmem:[#allocation8 + $0x278] sm:$0xff]
        %4606 = vmatprep.subr.mxu0 0.0
        %4607 = vmatpush1.msra.mxu0 %v4590
        %4608 = vmatprep.subr.mxu0 0.0
        %4609 = vmatpush1.msra.mxu0 %v4591
        %4610 = vmatprep.subr.mxu0 0.0
        %4611 = vmatpush1.msra.mxu0 %v4592
        %4612 = vmatprep.subr.mxu0 0.0
        %4613 = vmatpush1.msra.mxu0 %v4593
        %4614 = vmatprep.subr.mxu0 0.0
        %4615 = vmatpush1.msra.mxu0 %v4594
        %4616 = vmatprep.subr.mxu0 0.0
        %4617 = vmatpush1.msra.mxu0 %v4595
        %4618 = vmatprep.subr.mxu0 0.0
        %4619 = vmatpush1.msra.mxu0 %v4596
        %4620 = vmatprep.subr.mxu0 0.0
        %4621 = vmatpush1.msra.mxu0 %v4597
        %4622 = vmatprep.subr.mxu0 0.0
        %4623 = vmatpush1.msra.mxu0 %v4598
        %4624 = vmatprep.subr.mxu0 0.0
        %4625 = vmatpush1.msra.mxu0 %v4599
        %4626 = vmatprep.subr.mxu0 0.0
        %4627 = vmatpush1.msra.mxu0 %v4600
        %4628 = vmatprep.subr.mxu0 0.0
        %4629 = vmatpush1.msra.mxu0 %v4601
        %4630 = vmatprep.subr.mxu0 0.0
        %4631 = vmatpush1.msra.mxu0 %v4602
        %4632 = vmatprep.subr.mxu0 0.0
        %4633 = vmatpush1.msra.mxu0 %v4603
        %4634 = vmatprep.subr.mxu0 0.0
        %4635 = vmatpush1.msra.mxu0 %v4604
        %4636 = vmatprep.subr.mxu0 0.0
        %4637 = vmatpush1.msra.mxu0 %v4605
        %4638 = vmatprep.subr.mxu0 0.0
        %4639 = vmatpush1.msra.mxu0 0.0
        %4640 = vmatprep.subr.mxu0 0.0
        %4641 = vmatpush1.msra.mxu0 0.0
        %4642 = vmatprep.subr.mxu0 0.0
        %4643 = vmatpush1.msra.mxu0 0.0
        %4644 = vmatprep.subr.mxu0 0.0
        %4645 = vmatpush1.msra.mxu0 0.0
        %4646 = vmatprep.subr.mxu0 0.0
        %4647 = vmatpush1.msra.mxu0 0.0
        %4648 = vmatprep.subr.mxu0 0.0
        %4649 = vmatpush1.msra.mxu0 0.0
        %4650 = vmatprep.subr.mxu0 0.0
        %4651 = vmatpush1.msra.mxu0 0.0
        %4652 = vmatprep.subr.mxu0 0.0
        %4653 = vmatpush1.msra.mxu0 0.0
        %4654 = vmatprep.subr.mxu0 0.0
        %4655 = vmatpush1.msra.mxu0 0.0
        %4656 = vmatprep.subr.mxu0 0.0
        %4657 = vmatpush1.msra.mxu0 0.0
        %4658 = vmatprep.subr.mxu0 0.0
        %4659 = vmatpush1.msra.mxu0 0.0
        %4660 = vmatprep.subr.mxu0 0.0
        %4661 = vmatpush1.msra.mxu0 0.0
        %4662 = vmatprep.subr.mxu0 0.0
        %4663 = vmatpush1.msra.mxu0 0.0
        %4664 = vmatprep.subr.mxu0 0.0
        %4665 = vmatpush1.msra.mxu0 0.0
        %4666 = vmatprep.subr.mxu0 0.0
        %4667 = vmatpush1.msra.mxu0 0.0
        %4668 = vmatprep.subr.mxu0 0.0
        %4669 = vmatpush1.msra.mxu0 0.0
        %4670 = vmatprep.mubr.f32.mxu0 0.0
        %4671 = vmatmul.mubr.f32.gmra.mrb[0].mxu0 %v4558
        %v4672 = vpop.f32.mrb[0].mxu0
        %v4673 = vadd.f32 0.0, %v4672
        %v4674 = vpop.f32.mrb[0].mxu0
        %4675 = vmatprep.mubr.f32.mxu0 0.0
        %4676 = vmatmul.mubr.f32.gmra.mrb[0].mxu0 %v4559
        %v4677 = vpop.f32.mrb[0].mxu0
        %v4678 = vadd.f32 0.0, %v4677
        %v4679 = vpop.f32.mrb[0].mxu0
        %4680 = vmatprep.mubr.f32.mxu0 0.0
        %4681 = vmatmul.mubr.f32.gmra.mrb[0].mxu0 %v4560
        %v4682 = vpop.f32.mrb[0].mxu0
        %v4683 = vadd.f32 0.0, %v4682
        %v4684 = vpop.f32.mrb[0].mxu0
        %4685 = vmatprep.mubr.f32.mxu0 0.0
        %4686 = vmatmul.mubr.f32.gmra.mrb[0].mxu0 %v4561
        %v4687 = vpop.f32.mrb[0].mxu0
        %v4688 = vadd.f32 0.0, %v4687
        %v4689 = vpop.f32.mrb[0].mxu0
        %4690 = vmatprep.mubr.f32.mxu0 0.0
        %4691 = vmatmul.mubr.f32.gmra.mrb[0].mxu0 %v4562
        %v4692 = vpop.f32.mrb[0].mxu0
        %v4693 = vadd.f32 0.0, %v4692
        %v4694 = vpop.f32.mrb[0].mxu0
        %4695 = vmatprep.mubr.f32.mxu0 0.0
        %4696 = vmatmul.mubr.f32.gmra.mrb[0].mxu0 %v4563
        %v4697 = vpop.f32.mrb[0].mxu0
        %v4698 = vadd.f32 0.0, %v4697
        %v4699 = vpop.f32.mrb[0].mxu0
        %4700 = vmatprep.mubr.f32.mxu0 0.0
        %4701 = vmatmul.mubr.f32.gmra.mrb[0].mxu0 %v4564
        %v4702 = vpop.f32.mrb[0].mxu0
        %v4703 = vadd.f32 0.0, %v4702
        %v4704 = vpop.f32.mrb[0].mxu0
        %4705 = vmatprep.mubr.f32.mxu0 0.0
        %4706 = vmatmul.mubr.f32.gmra.mrb[0].mxu0 %v4565
        %v4707 = vpop.f32.mrb[0].mxu0
        %v4708 = vadd.f32 0.0, %v4707
        %v4709 = vpop.f32.mrb[0].mxu0
        %4710 = vmatprep.mubr.f32.mxu0 0.0
        %4711 = vmatmul.mubr.f32.gmra.mrb[0].mxu0 %v4566
        %v4712 = vpop.f32.mrb[0].mxu0
        %v4713 = vadd.f32 0.0, %v4712
        %v4714 = vpop.f32.mrb[0].mxu0
        %4715 = vmatprep.mubr.f32.mxu0 0.0
        %4716 = vmatmul.mubr.f32.gmra.mrb[0].mxu0 %v4567
        %v4717 = vpop.f32.mrb[0].mxu0
        %v4718 = vadd.f32 0.0, %v4717
        %v4719 = vpop.f32.mrb[0].mxu0
        %4720 = vmatprep.mubr.f32.mxu0 0.0
        %4721 = vmatmul.mubr.f32.gmra.mrb[0].mxu0 %v4568
        %v4722 = vpop.f32.mrb[0].mxu0
        %v4723 = vadd.f32 0.0, %v4722
        %v4724 = vpop.f32.mrb[0].mxu0
        %4725 = vmatprep.mubr.f32.mxu0 0.0
        %4726 = vmatmul.mubr.f32.gmra.mrb[0].mxu0 %v4569
        %v4727 = vpop.f32.mrb[0].mxu0
        %v4728 = vadd.f32 0.0, %v4727
        %v4729 = vpop.f32.mrb[0].mxu0
        %4730 = vmatprep.mubr.f32.mxu0 0.0
        %4731 = vmatmul.mubr.f32.gmra.mrb[0].mxu0 %v4570
        %v4732 = vpop.f32.mrb[0].mxu0
        %v4733 = vadd.f32 0.0, %v4732
        %v4734 = vpop.f32.mrb[0].mxu0
        %4735 = vmatprep.mubr.f32.mxu0 0.0
        %4736 = vmatmul.mubr.f32.gmra.mrb[0].mxu0 %v4571
        %v4737 = vpop.f32.mrb[0].mxu0
        %v4738 = vadd.f32 0.0, %v4737
        %v4739 = vpop.f32.mrb[0].mxu0
        %4740 = vmatprep.mubr.f32.mxu0 0.0
        %4741 = vmatmul.mubr.f32.gmra.mrb[0].mxu0 %v4572
        %v4742 = vpop.f32.mrb[0].mxu0
        %v4743 = vadd.f32 0.0, %v4742
        %v4744 = vpop.f32.mrb[0].mxu0
        %4745 = vmatprep.mubr.f32.mxu0 0.0
        %4746 = vmatmul.mubr.f32.gmra.mrb[0].mxu0 %v4573
        %v4747 = vpop.f32.mrb[0].mxu0
        %v4748 = vadd.f32 0.0, %v4747
        %v4749 = vpop.f32.mrb[0].mxu0
        %4750 = vmatprep.mubr.f32.mxu0 0.0
        %4751 = vmatmul.mubr.f32.gmra.mrb[0].mxu0 %v4574
        %v4752 = vpop.f32.mrb[0].mxu0
        %v4753 = vadd.f32 0.0, %v4752
        %v4754 = vpop.f32.mrb[0].mxu0
        %4755 = vmatprep.mubr.f32.mxu0 0.0
        %4756 = vmatmul.mubr.f32.gmra.mrb[0].mxu0 %v4575
        %v4757 = vpop.f32.mrb[0].mxu0
        %v4758 = vadd.f32 0.0, %v4757
        %v4759 = vpop.f32.mrb[0].mxu0
        %4760 = vmatprep.mubr.f32.mxu0 0.0
        %4761 = vmatmul.mubr.f32.gmra.mrb[0].mxu0 %v4576
        %v4762 = vpop.f32.mrb[0].mxu0
        %v4763 = vadd.f32 0.0, %v4762
        %v4764 = vpop.f32.mrb[0].mxu0
        %4765 = vmatprep.mubr.f32.mxu0 0.0
        %4766 = vmatmul.mubr.f32.gmra.mrb[0].mxu0 %v4577
        %v4767 = vpop.f32.mrb[0].mxu0
        %v4768 = vadd.f32 0.0, %v4767
        %v4769 = vpop.f32.mrb[0].mxu0
        %4770 = vmatprep.mubr.f32.mxu0 0.0
        %4771 = vmatmul.mubr.f32.gmra.mrb[0].mxu0 %v4578
        %v4772 = vpop.f32.mrb[0].mxu0
        %v4773 = vadd.f32 0.0, %v4772
        %v4774 = vpop.f32.mrb[0].mxu0
        %4775 = vmatprep.mubr.f32.mxu0 0.0
        %4776 = vmatmul.mubr.f32.gmra.mrb[0].mxu0 %v4579
        %v4777 = vpop.f32.mrb[0].mxu0
        %v4778 = vadd.f32 0.0, %v4777
        %v4779 = vpop.f32.mrb[0].mxu0
        %4780 = vmatprep.mubr.f32.mxu0 0.0
        %4781 = vmatmul.mubr.f32.gmra.mrb[0].mxu0 %v4580
        %v4782 = vpop.f32.mrb[0].mxu0
        %v4783 = vadd.f32 0.0, %v4782
        %v4784 = vpop.f32.mrb[0].mxu0
        %4785 = vmatprep.mubr.f32.mxu0 0.0
        %4786 = vmatmul.mubr.f32.gmra.mrb[0].mxu0 %v4581
        %v4787 = vpop.f32.mrb[0].mxu0
        %v4788 = vadd.f32 0.0, %v4787
        %v4789 = vpop.f32.mrb[0].mxu0
        %4790 = vmatprep.mubr.f32.mxu0 0.0
        %4791 = vmatmul.mubr.f32.gmra.mrb[0].mxu0 %v4582
        %v4792 = vpop.f32.mrb[0].mxu0
        %v4793 = vadd.f32 0.0, %v4792
        %v4794 = vpop.f32.mrb[0].mxu0
        %4795 = vmatprep.mubr.f32.mxu0 0.0
        %4796 = vmatmul.mubr.f32.gmra.mrb[0].mxu0 %v4583
        %v4797 = vpop.f32.mrb[0].mxu0
        %v4798 = vadd.f32 0.0, %v4797
        %v4799 = vpop.f32.mrb[0].mxu0
        %4800 = vmatprep.mubr.f32.mxu0 0.0
        %4801 = vmatmul.mubr.f32.gmra.mrb[0].mxu0 %v4584
        %v4802 = vpop.f32.mrb[0].mxu0
        %v4803 = vadd.f32 0.0, %v4802
        %v4804 = vpop.f32.mrb[0].mxu0
        %4805 = vmatprep.mubr.f32.mxu0 0.0
        %4806 = vmatmul.mubr.f32.gmra.mrb[0].mxu0 %v4585
        %v4807 = vpop.f32.mrb[0].mxu0
        %v4808 = vadd.f32 0.0, %v4807
        %v4809 = vpop.f32.mrb[0].mxu0
        %4810 = vmatprep.mubr.f32.mxu0 0.0
        %4811 = vmatmul.mubr.f32.gmra.mrb[0].mxu0 %v4586
        %v4812 = vpop.f32.mrb[0].mxu0
        %v4813 = vadd.f32 0.0, %v4812
        %v4814 = vpop.f32.mrb[0].mxu0
        %4815 = vmatprep.mubr.f32.mxu0 0.0
        %4816 = vmatmul.mubr.f32.gmra.mrb[0].mxu0 %v4587
        %v4817 = vpop.f32.mrb[0].mxu0
        %v4818 = vadd.f32 0.0, %v4817
        %v4819 = vpop.f32.mrb[0].mxu0
        %4820 = vmatprep.mubr.f32.mxu0 0.0
        %4821 = vmatmul.mubr.f32.gmra.mrb[0].mxu0 %v4588
        %v4822 = vpop.f32.mrb[0].mxu0
        %v4823 = vadd.f32 0.0, %v4822
        %v4824 = vpop.f32.mrb[0].mxu0
        %4825 = vmatprep.mubr.f32.mxu0 0.0
        %4826 = vmatmul.mubr.f32.gmra.mrb[0].mxu0 %v4589
        %v4827 = vpop.f32.mrb[0].mxu0
        %v4828 = vadd.f32 0.0, %v4827
        %v4829 = vpop.f32.mrb[0].mxu0
        %4830 = vdwg.mxu0
        %v4831 = vadd.f32 %v4526, %v4673
        %v4832 = vadd.f32 %v4527, %v4678
        %v4833 = vadd.f32 %v4528, %v4683
        %v4834 = vadd.f32 %v4529, %v4688
        %v4835 = vadd.f32 %v4530, %v4693
        %v4836 = vadd.f32 %v4531, %v4698
        %v4837 = vadd.f32 %v4532, %v4703
        %v4838 = vadd.f32 %v4533, %v4708
        %v4839 = vadd.f32 %v4534, %v4713
        %v4840 = vadd.f32 %v4535, %v4718
        %v4841 = vadd.f32 %v4536, %v4723
        %v4842 = vadd.f32 %v4537, %v4728
        %v4843 = vadd.f32 %v4538, %v4733
        %v4844 = vadd.f32 %v4539, %v4738
        %v4845 = vadd.f32 %v4540, %v4743
        %v4846 = vadd.f32 %v4541, %v4748
        %v4847 = vadd.f32 %v4542, %v4753
        %v4848 = vadd.f32 %v4543, %v4758
        %v4849 = vadd.f32 %v4544, %v4763
        %v4850 = vadd.f32 %v4545, %v4768
        %v4851 = vadd.f32 %v4546, %v4773
        %v4852 = vadd.f32 %v4547, %v4778
        %v4853 = vadd.f32 %v4548, %v4783
        %v4854 = vadd.f32 %v4549, %v4788
        %v4855 = vadd.f32 %v4550, %v4793
        %v4856 = vadd.f32 %v4551, %v4798
        %v4857 = vadd.f32 %v4552, %v4803
        %v4858 = vadd.f32 %v4553, %v4808
        %v4859 = vadd.f32 %v4554, %v4813
        %v4860 = vadd.f32 %v4555, %v4818
        %v4861 = vadd.f32 %v4556, %v4823
        %v4862 = vadd.f32 %v4557, %v4828
        %v4863 = vld [vmem:[%s475 + $0x2] sm:$0xff]
        %v4864 = vld [vmem:[%s475 + $0xa] sm:$0xff]
        %v4865 = vld [vmem:[%s475 + $0x1a] sm:$0xff]
        %v4866 = vld [vmem:[%s475 + $0x22] sm:$0xff]
        %v4867 = vld [vmem:[%s475 + $0x32] sm:$0xff]
        %v4868 = vld [vmem:[%s475 + $0x3a] sm:$0xff]
        %v4869 = vld [vmem:[%s475 + $0x4a] sm:$0xff]
        %v4870 = vld [vmem:[%s475 + $0x52] sm:$0xff]
        %v4871 = vld [vmem:[%s475 + $0x62] sm:$0xff]
        %v4872 = vld [vmem:[%s475 + $0x6a] sm:$0xff]
        %v4873 = vld [vmem:[%s475 + $0x7a] sm:$0xff]
        %v4874 = vld [vmem:[%s475 + $0x82] sm:$0xff]
        %v4875 = vld [vmem:[%s475 + $0x92] sm:$0xff]
        %v4876 = vld [vmem:[%s475 + $0x9a] sm:$0xff]
        %v4877 = vld [vmem:[%s475 + $0xaa] sm:$0xff]
        %v4878 = vld [vmem:[%s475 + $0xb2] sm:$0xff]
        %v4879 = vld [vmem:[%s475 + $0xc2] sm:$0xff]
        %v4880 = vld [vmem:[%s475 + $0xca] sm:$0xff]
        %v4881 = vld [vmem:[%s475 + $0xda] sm:$0xff]
        %v4882 = vld [vmem:[%s475 + $0xe2] sm:$0xff]
        %v4883 = vld [vmem:[%s475 + $0xf2] sm:$0xff]
        %v4884 = vld [vmem:[%s475 + $0xfa] sm:$0xff]
        %v4885 = vld [vmem:[%s475 + $0x10a] sm:$0xff]
        %v4886 = vld [vmem:[%s475 + $0x112] sm:$0xff]
        %v4887 = vld [vmem:[%s475 + $0x122] sm:$0xff]
        %v4888 = vld [vmem:[%s475 + $0x12a] sm:$0xff]
        %v4889 = vld [vmem:[%s475 + $0x13a] sm:$0xff]
        %v4890 = vld [vmem:[%s475 + $0x142] sm:$0xff]
        %v4891 = vld [vmem:[%s475 + $0x152] sm:$0xff]
        %v4892 = vld [vmem:[%s475 + $0x15a] sm:$0xff]
        %v4893 = vld [vmem:[%s475 + $0x16a] sm:$0xff]
        %v4894 = vld [vmem:[%s475 + $0x172] sm:$0xff]
        %v4895 = vld [vmem:[#allocation8 + $0x280] sm:$0xff]
        %v4896 = vld [vmem:[#allocation8 + $0x288] sm:$0xff]
        %v4897 = vld [vmem:[#allocation8 + $0x290] sm:$0xff]
        %v4898 = vld [vmem:[#allocation8 + $0x298] sm:$0xff]
        %v4899 = vld [vmem:[#allocation8 + $0x2a0] sm:$0xff]
        %v4900 = vld [vmem:[#allocation8 + $0x2a8] sm:$0xff]
        %v4901 = vld [vmem:[#allocation8 + $0x2b0] sm:$0xff]
        %v4902 = vld [vmem:[#allocation8 + $0x2b8] sm:$0xff]
        %v4903 = vld [vmem:[#allocation8 + $0x2c0] sm:$0xff]
        %v4904 = vld [vmem:[#allocation8 + $0x2c8] sm:$0xff]
        %v4905 = vld [vmem:[#allocation8 + $0x2d0] sm:$0xff]
        %v4906 = vld [vmem:[#allocation8 + $0x2d8] sm:$0xff]
        %v4907 = vld [vmem:[#allocation8 + $0x2e0] sm:$0xff]
        %v4908 = vld [vmem:[#allocation8 + $0x2e8] sm:$0xff]
        %v4909 = vld [vmem:[#allocation8 + $0x2f0] sm:$0xff]
        %v4910 = vld [vmem:[#allocation8 + $0x2f8] sm:$0xff]
        %4911 = vmatprep.subr.mxu0 0.0
        %4912 = vmatpush1.msra.mxu0 %v4895
        %4913 = vmatprep.subr.mxu0 0.0
        %4914 = vmatpush1.msra.mxu0 %v4896
        %4915 = vmatprep.subr.mxu0 0.0
        %4916 = vmatpush1.msra.mxu0 %v4897
        %4917 = vmatprep.subr.mxu0 0.0
        %4918 = vmatpush1.msra.mxu0 %v4898
        %4919 = vmatprep.subr.mxu0 0.0
        %4920 = vmatpush1.msra.mxu0 %v4899
        %4921 = vmatprep.subr.mxu0 0.0
        %4922 = vmatpush1.msra.mxu0 %v4900
        %4923 = vmatprep.subr.mxu0 0.0
        %4924 = vmatpush1.msra.mxu0 %v4901
        %4925 = vmatprep.subr.mxu0 0.0
        %4926 = vmatpush1.msra.mxu0 %v4902
        %4927 = vmatprep.subr.mxu0 0.0
        %4928 = vmatpush1.msra.mxu0 %v4903
        %4929 = vmatprep.subr.mxu0 0.0
        %4930 = vmatpush1.msra.mxu0 %v4904
        %4931 = vmatprep.subr.mxu0 0.0
        %4932 = vmatpush1.msra.mxu0 %v4905
        %4933 = vmatprep.subr.mxu0 0.0
        %4934 = vmatpush1.msra.mxu0 %v4906
        %4935 = vmatprep.subr.mxu0 0.0
        %4936 = vmatpush1.msra.mxu0 %v4907
        %4937 = vmatprep.subr.mxu0 0.0
        %4938 = vmatpush1.msra.mxu0 %v4908
        %4939 = vmatprep.subr.mxu0 0.0
        %4940 = vmatpush1.msra.mxu0 %v4909
        %4941 = vmatprep.subr.mxu0 0.0
        %4942 = vmatpush1.msra.mxu0 %v4910
        %4943 = vmatprep.subr.mxu0 0.0
        %4944 = vmatpush1.msra.mxu0 0.0
        %4945 = vmatprep.subr.mxu0 0.0
        %4946 = vmatpush1.msra.mxu0 0.0
        %4947 = vmatprep.subr.mxu0 0.0
        %4948 = vmatpush1.msra.mxu0 0.0
        %4949 = vmatprep.subr.mxu0 0.0
        %4950 = vmatpush1.msra.mxu0 0.0
        %4951 = vmatprep.subr.mxu0 0.0
        %4952 = vmatpush1.msra.mxu0 0.0
        %4953 = vmatprep.subr.mxu0 0.0
        %4954 = vmatpush1.msra.mxu0 0.0
        %4955 = vmatprep.subr.mxu0 0.0
        %4956 = vmatpush1.msra.mxu0 0.0
        %4957 = vmatprep.subr.mxu0 0.0
        %4958 = vmatpush1.msra.mxu0 0.0
        %4959 = vmatprep.subr.mxu0 0.0
        %4960 = vmatpush1.msra.mxu0 0.0
        %4961 = vmatprep.subr.mxu0 0.0
        %4962 = vmatpush1.msra.mxu0 0.0
        %4963 = vmatprep.subr.mxu0 0.0
        %4964 = vmatpush1.msra.mxu0 0.0
        %4965 = vmatprep.subr.mxu0 0.0
        %4966 = vmatpush1.msra.mxu0 0.0
        %4967 = vmatprep.subr.mxu0 0.0
        %4968 = vmatpush1.msra.mxu0 0.0
        %4969 = vmatprep.subr.mxu0 0.0
        %4970 = vmatpush1.msra.mxu0 0.0
        %4971 = vmatprep.subr.mxu0 0.0
        %4972 = vmatpush1.msra.mxu0 0.0
        %4973 = vmatprep.subr.mxu0 0.0
        %4974 = vmatpush1.msra.mxu0 0.0
        %4975 = vmatprep.mubr.f32.mxu0 0.0
        %4976 = vmatmul.mubr.f32.gmra.mrb[0].mxu0 %v4863
        %v4977 = vpop.f32.mrb[0].mxu0
        %v4978 = vadd.f32 0.0, %v4977
        %v4979 = vpop.f32.mrb[0].mxu0
        %4980 = vmatprep.mubr.f32.mxu0 0.0
        %4981 = vmatmul.mubr.f32.gmra.mrb[0].mxu0 %v4864
        %v4982 = vpop.f32.mrb[0].mxu0
        %v4983 = vadd.f32 0.0, %v4982
        %v4984 = vpop.f32.mrb[0].mxu0
        %4985 = vmatprep.mubr.f32.mxu0 0.0
        %4986 = vmatmul.mubr.f32.gmra.mrb[0].mxu0 %v4865
        %v4987 = vpop.f32.mrb[0].mxu0
        %v4988 = vadd.f32 0.0, %v4987
        %v4989 = vpop.f32.mrb[0].mxu0
        %4990 = vmatprep.mubr.f32.mxu0 0.0
        %4991 = vmatmul.mubr.f32.gmra.mrb[0].mxu0 %v4866
        %v4992 = vpop.f32.mrb[0].mxu0
        %v4993 = vadd.f32 0.0, %v4992
        %v4994 = vpop.f32.mrb[0].mxu0
        %4995 = vmatprep.mubr.f32.mxu0 0.0
        %4996 = vmatmul.mubr.f32.gmra.mrb[0].mxu0 %v4867
        %v4997 = vpop.f32.mrb[0].mxu0
        %v4998 = vadd.f32 0.0, %v4997
        %v4999 = vpop.f32.mrb[0].mxu0
        %5000 = vmatprep.mubr.f32.mxu0 0.0
        %5001 = vmatmul.mubr.f32.gmra.mrb[0].mxu0 %v4868
        %v5002 = vpop.f32.mrb[0].mxu0
        %v5003 = vadd.f32 0.0, %v5002
        %v5004 = vpop.f32.mrb[0].mxu0
        %5005 = vmatprep.mubr.f32.mxu0 0.0
        %5006 = vmatmul.mubr.f32.gmra.mrb[0].mxu0 %v4869
        %v5007 = vpop.f32.mrb[0].mxu0
        %v5008 = vadd.f32 0.0, %v5007
        %v5009 = vpop.f32.mrb[0].mxu0
        %5010 = vmatprep.mubr.f32.mxu0 0.0
        %5011 = vmatmul.mubr.f32.gmra.mrb[0].mxu0 %v4870
        %v5012 = vpop.f32.mrb[0].mxu0
        %v5013 = vadd.f32 0.0, %v5012
        %v5014 = vpop.f32.mrb[0].mxu0
        %5015 = vmatprep.mubr.f32.mxu0 0.0
        %5016 = vmatmul.mubr.f32.gmra.mrb[0].mxu0 %v4871
        %v5017 = vpop.f32.mrb[0].mxu0
        %v5018 = vadd.f32 0.0, %v5017
        %v5019 = vpop.f32.mrb[0].mxu0
        %5020 = vmatprep.mubr.f32.mxu0 0.0
        %5021 = vmatmul.mubr.f32.gmra.mrb[0].mxu0 %v4872
        %v5022 = vpop.f32.mrb[0].mxu0
        %v5023 = vadd.f32 0.0, %v5022
        %v5024 = vpop.f32.mrb[0].mxu0
        %5025 = vmatprep.mubr.f32.mxu0 0.0
        %5026 = vmatmul.mubr.f32.gmra.mrb[0].mxu0 %v4873
        %v5027 = vpop.f32.mrb[0].mxu0
        %v5028 = vadd.f32 0.0, %v5027
        %v5029 = vpop.f32.mrb[0].mxu0
        %5030 = vmatprep.mubr.f32.mxu0 0.0
        %5031 = vmatmul.mubr.f32.gmra.mrb[0].mxu0 %v4874
        %v5032 = vpop.f32.mrb[0].mxu0
        %v5033 = vadd.f32 0.0, %v5032
        %v5034 = vpop.f32.mrb[0].mxu0
        %5035 = vmatprep.mubr.f32.mxu0 0.0
        %5036 = vmatmul.mubr.f32.gmra.mrb[0].mxu0 %v4875
        %v5037 = vpop.f32.mrb[0].mxu0
        %v5038 = vadd.f32 0.0, %v5037
        %v5039 = vpop.f32.mrb[0].mxu0
        %5040 = vmatprep.mubr.f32.mxu0 0.0
        %5041 = vmatmul.mubr.f32.gmra.mrb[0].mxu0 %v4876
        %v5042 = vpop.f32.mrb[0].mxu0
        %v5043 = vadd.f32 0.0, %v5042
        %v5044 = vpop.f32.mrb[0].mxu0
        %5045 = vmatprep.mubr.f32.mxu0 0.0
        %5046 = vmatmul.mubr.f32.gmra.mrb[0].mxu0 %v4877
        %v5047 = vpop.f32.mrb[0].mxu0
        %v5048 = vadd.f32 0.0, %v5047
        %v5049 = vpop.f32.mrb[0].mxu0
        %5050 = vmatprep.mubr.f32.mxu0 0.0
        %5051 = vmatmul.mubr.f32.gmra.mrb[0].mxu0 %v4878
        %v5052 = vpop.f32.mrb[0].mxu0
        %v5053 = vadd.f32 0.0, %v5052
        %v5054 = vpop.f32.mrb[0].mxu0
        %5055 = vmatprep.mubr.f32.mxu0 0.0
        %5056 = vmatmul.mubr.f32.gmra.mrb[0].mxu0 %v4879
        %v5057 = vpop.f32.mrb[0].mxu0
        %v5058 = vadd.f32 0.0, %v5057
        %v5059 = vpop.f32.mrb[0].mxu0
        %5060 = vmatprep.mubr.f32.mxu0 0.0
        %5061 = vmatmul.mubr.f32.gmra.mrb[0].mxu0 %v4880
        %v5062 = vpop.f32.mrb[0].mxu0
        %v5063 = vadd.f32 0.0, %v5062
        %v5064 = vpop.f32.mrb[0].mxu0
        %5065 = vmatprep.mubr.f32.mxu0 0.0
        %5066 = vmatmul.mubr.f32.gmra.mrb[0].mxu0 %v4881
        %v5067 = vpop.f32.mrb[0].mxu0
        %v5068 = vadd.f32 0.0, %v5067
        %v5069 = vpop.f32.mrb[0].mxu0
        %5070 = vmatprep.mubr.f32.mxu0 0.0
        %5071 = vmatmul.mubr.f32.gmra.mrb[0].mxu0 %v4882
        %v5072 = vpop.f32.mrb[0].mxu0
        %v5073 = vadd.f32 0.0, %v5072
        %v5074 = vpop.f32.mrb[0].mxu0
        %5075 = vmatprep.mubr.f32.mxu0 0.0
        %5076 = vmatmul.mubr.f32.gmra.mrb[0].mxu0 %v4883
        %v5077 = vpop.f32.mrb[0].mxu0
        %v5078 = vadd.f32 0.0, %v5077
        %v5079 = vpop.f32.mrb[0].mxu0
        %5080 = vmatprep.mubr.f32.mxu0 0.0
        %5081 = vmatmul.mubr.f32.gmra.mrb[0].mxu0 %v4884
        %v5082 = vpop.f32.mrb[0].mxu0
        %v5083 = vadd.f32 0.0, %v5082
        %v5084 = vpop.f32.mrb[0].mxu0
        %5085 = vmatprep.mubr.f32.mxu0 0.0
        %5086 = vmatmul.mubr.f32.gmra.mrb[0].mxu0 %v4885
        %v5087 = vpop.f32.mrb[0].mxu0
        %v5088 = vadd.f32 0.0, %v5087
        %v5089 = vpop.f32.mrb[0].mxu0
        %5090 = vmatprep.mubr.f32.mxu0 0.0
        %5091 = vmatmul.mubr.f32.gmra.mrb[0].mxu0 %v4886
        %v5092 = vpop.f32.mrb[0].mxu0
        %v5093 = vadd.f32 0.0, %v5092
        %v5094 = vpop.f32.mrb[0].mxu0
        %5095 = vmatprep.mubr.f32.mxu0 0.0
        %5096 = vmatmul.mubr.f32.gmra.mrb[0].mxu0 %v4887
        %v5097 = vpop.f32.mrb[0].mxu0
        %v5098 = vadd.f32 0.0, %v5097
        %v5099 = vpop.f32.mrb[0].mxu0
        %5100 = vmatprep.mubr.f32.mxu0 0.0
        %5101 = vmatmul.mubr.f32.gmra.mrb[0].mxu0 %v4888
        %v5102 = vpop.f32.mrb[0].mxu0
        %v5103 = vadd.f32 0.0, %v5102
        %v5104 = vpop.f32.mrb[0].mxu0
        %5105 = vmatprep.mubr.f32.mxu0 0.0
        %5106 = vmatmul.mubr.f32.gmra.mrb[0].mxu0 %v4889
        %v5107 = vpop.f32.mrb[0].mxu0
        %v5108 = vadd.f32 0.0, %v5107
        %v5109 = vpop.f32.mrb[0].mxu0
        %5110 = vmatprep.mubr.f32.mxu0 0.0
        %5111 = vmatmul.mubr.f32.gmra.mrb[0].mxu0 %v4890
        %v5112 = vpop.f32.mrb[0].mxu0
        %v5113 = vadd.f32 0.0, %v5112
        %v5114 = vpop.f32.mrb[0].mxu0
        %5115 = vmatprep.mubr.f32.mxu0 0.0
        %5116 = vmatmul.mubr.f32.gmra.mrb[0].mxu0 %v4891
        %v5117 = vpop.f32.mrb[0].mxu0
        %v5118 = vadd.f32 0.0, %v5117
        %v5119 = vpop.f32.mrb[0].mxu0
        %5120 = vmatprep.mubr.f32.mxu0 0.0
        %5121 = vmatmul.mubr.f32.gmra.mrb[0].mxu0 %v4892
        %v5122 = vpop.f32.mrb[0].mxu0
        %v5123 = vadd.f32 0.0, %v5122
        %v5124 = vpop.f32.mrb[0].mxu0
        %5125 = vmatprep.mubr.f32.mxu0 0.0
        %5126 = vmatmul.mubr.f32.gmra.mrb[0].mxu0 %v4893
        %v5127 = vpop.f32.mrb[0].mxu0
        %v5128 = vadd.f32 0.0, %v5127
        %v5129 = vpop.f32.mrb[0].mxu0
        %5130 = vmatprep.mubr.f32.mxu0 0.0
        %5131 = vmatmul.mubr.f32.gmra.mrb[0].mxu0 %v4894
        %v5132 = vpop.f32.mrb[0].mxu0
        %v5133 = vadd.f32 0.0, %v5132
        %v5134 = vpop.f32.mrb[0].mxu0
        %5135 = vdwg.mxu0
        %v5136 = vadd.f32 %v4831, %v4978
        %v5137 = vadd.f32 %v4832, %v4983
        %v5138 = vadd.f32 %v4833, %v4988
        %v5139 = vadd.f32 %v4834, %v4993
        %v5140 = vadd.f32 %v4835, %v4998
        %v5141 = vadd.f32 %v4836, %v5003
        %v5142 = vadd.f32 %v4837, %v5008
        %v5143 = vadd.f32 %v4838, %v5013
        %v5144 = vadd.f32 %v4839, %v5018
        %v5145 = vadd.f32 %v4840, %v5023
        %v5146 = vadd.f32 %v4841, %v5028
        %v5147 = vadd.f32 %v4842, %v5033
        %v5148 = vadd.f32 %v4843, %v5038
        %v5149 = vadd.f32 %v4844, %v5043
        %v5150 = vadd.f32 %v4845, %v5048
        %v5151 = vadd.f32 %v4846, %v5053
        %v5152 = vadd.f32 %v4847, %v5058
        %v5153 = vadd.f32 %v4848, %v5063
        %v5154 = vadd.f32 %v4849, %v5068
        %v5155 = vadd.f32 %v4850, %v5073
        %v5156 = vadd.f32 %v4851, %v5078
        %v5157 = vadd.f32 %v4852, %v5083
        %v5158 = vadd.f32 %v4853, %v5088
        %v5159 = vadd.f32 %v4854, %v5093
        %v5160 = vadd.f32 %v4855, %v5098
        %v5161 = vadd.f32 %v4856, %v5103
        %v5162 = vadd.f32 %v4857, %v5108
        %v5163 = vadd.f32 %v4858, %v5113
        %v5164 = vadd.f32 %v4859, %v5118
        %v5165 = vadd.f32 %v4860, %v5123
        %v5166 = vadd.f32 %v4861, %v5128
        %v5167 = vadd.f32 %v4862, %v5133
        %v5168 = vld [vmem:[%s2306] sm:$0xff]
        %v5169 = vld [vmem:[%s2306 + $0x8] sm:$0xff]
        %v5170 = vld [vmem:[%s2306 + $0x18] sm:$0xff]
        %v5171 = vld [vmem:[%s2306 + $0x20] sm:$0xff]
        %v5172 = vld [vmem:[%s2306 + $0x30] sm:$0xff]
        %v5173 = vld [vmem:[%s2306 + $0x38] sm:$0xff]
        %v5174 = vld [vmem:[%s2306 + $0x48] sm:$0xff]
        %v5175 = vld [vmem:[%s2306 + $0x50] sm:$0xff]
        %v5176 = vld [vmem:[%s2306 + $0x60] sm:$0xff]
        %v5177 = vld [vmem:[%s2306 + $0x68] sm:$0xff]
        %v5178 = vld [vmem:[%s2306 + $0x78] sm:$0xff]
        %v5179 = vld [vmem:[%s2306 + $0x80] sm:$0xff]
        %v5180 = vld [vmem:[%s2306 + $0x90] sm:$0xff]
        %v5181 = vld [vmem:[%s2306 + $0x98] sm:$0xff]
        %v5182 = vld [vmem:[%s2306 + $0xa8] sm:$0xff]
        %v5183 = vld [vmem:[%s2306 + $0xb0] sm:$0xff]
        %v5184 = vld [vmem:[%s2306 + $0xc0] sm:$0xff]
        %v5185 = vld [vmem:[%s2306 + $0xc8] sm:$0xff]
        %v5186 = vld [vmem:[%s2306 + $0xd8] sm:$0xff]
        %v5187 = vld [vmem:[%s2306 + $0xe0] sm:$0xff]
        %v5188 = vld [vmem:[%s2306 + $0xf0] sm:$0xff]
        %v5189 = vld [vmem:[%s2306 + $0xf8] sm:$0xff]
        %v5190 = vld [vmem:[%s2306 + $0x108] sm:$0xff]
        %v5191 = vld [vmem:[%s2306 + $0x110] sm:$0xff]
        %v5192 = vld [vmem:[%s2306 + $0x120] sm:$0xff]
        %v5193 = vld [vmem:[%s2306 + $0x128] sm:$0xff]
        %v5194 = vld [vmem:[%s2306 + $0x138] sm:$0xff]
        %v5195 = vld [vmem:[%s2306 + $0x140] sm:$0xff]
        %v5196 = vld [vmem:[%s2306 + $0x150] sm:$0xff]
        %v5197 = vld [vmem:[%s2306 + $0x158] sm:$0xff]
        %v5198 = vld [vmem:[%s2306 + $0x168] sm:$0xff]
        %v5199 = vld [vmem:[%s2306 + $0x170] sm:$0xff]
        %v5200 = vld [vmem:[#allocation8 + $0x300] sm:$0xff]
        %v5201 = vld [vmem:[#allocation8 + $0x308] sm:$0xff]
        %v5202 = vld [vmem:[#allocation8 + $0x310] sm:$0xff]
        %v5203 = vld [vmem:[#allocation8 + $0x318] sm:$0xff]
        %v5204 = vld [vmem:[#allocation8 + $0x320] sm:$0xff]
        %v5205 = vld [vmem:[#allocation8 + $0x328] sm:$0xff]
        %v5206 = vld [vmem:[#allocation8 + $0x330] sm:$0xff]
        %v5207 = vld [vmem:[#allocation8 + $0x338] sm:$0xff]
        %v5208 = vld [vmem:[#allocation8 + $0x340] sm:$0xff]
        %v5209 = vld [vmem:[#allocation8 + $0x348] sm:$0xff]
        %v5210 = vld [vmem:[#allocation8 + $0x350] sm:$0xff]
        %v5211 = vld [vmem:[#allocation8 + $0x358] sm:$0xff]
        %v5212 = vld [vmem:[#allocation8 + $0x360] sm:$0xff]
        %v5213 = vld [vmem:[#allocation8 + $0x368] sm:$0xff]
        %v5214 = vld [vmem:[#allocation8 + $0x370] sm:$0xff]
        %v5215 = vld [vmem:[#allocation8 + $0x378] sm:$0xff]
        %5216 = vmatprep.subr.mxu0 0.0
        %5217 = vmatpush1.msra.mxu0 %v5200
        %5218 = vmatprep.subr.mxu0 0.0
        %5219 = vmatpush1.msra.mxu0 %v5201
        %5220 = vmatprep.subr.mxu0 0.0
        %5221 = vmatpush1.msra.mxu0 %v5202
        %5222 = vmatprep.subr.mxu0 0.0
        %5223 = vmatpush1.msra.mxu0 %v5203
        %5224 = vmatprep.subr.mxu0 0.0
        %5225 = vmatpush1.msra.mxu0 %v5204
        %5226 = vmatprep.subr.mxu0 0.0
        %5227 = vmatpush1.msra.mxu0 %v5205
        %5228 = vmatprep.subr.mxu0 0.0
        %5229 = vmatpush1.msra.mxu0 %v5206
        %5230 = vmatprep.subr.mxu0 0.0
        %5231 = vmatpush1.msra.mxu0 %v5207
        %5232 = vmatprep.subr.mxu0 0.0
        %5233 = vmatpush1.msra.mxu0 %v5208
        %5234 = vmatprep.subr.mxu0 0.0
        %5235 = vmatpush1.msra.mxu0 %v5209
        %5236 = vmatprep.subr.mxu0 0.0
        %5237 = vmatpush1.msra.mxu0 %v5210
        %5238 = vmatprep.subr.mxu0 0.0
        %5239 = vmatpush1.msra.mxu0 %v5211
        %5240 = vmatprep.subr.mxu0 0.0
        %5241 = vmatpush1.msra.mxu0 %v5212
        %5242 = vmatprep.subr.mxu0 0.0
        %5243 = vmatpush1.msra.mxu0 %v5213
        %5244 = vmatprep.subr.mxu0 0.0
        %5245 = vmatpush1.msra.mxu0 %v5214
        %5246 = vmatprep.subr.mxu0 0.0
        %5247 = vmatpush1.msra.mxu0 %v5215
        %5248 = vmatprep.subr.mxu0 0.0
        %5249 = vmatpush1.msra.mxu0 0.0
        %5250 = vmatprep.subr.mxu0 0.0
        %5251 = vmatpush1.msra.mxu0 0.0
        %5252 = vmatprep.subr.mxu0 0.0
        %5253 = vmatpush1.msra.mxu0 0.0
        %5254 = vmatprep.subr.mxu0 0.0
        %5255 = vmatpush1.msra.mxu0 0.0
        %5256 = vmatprep.subr.mxu0 0.0
        %5257 = vmatpush1.msra.mxu0 0.0
        %5258 = vmatprep.subr.mxu0 0.0
        %5259 = vmatpush1.msra.mxu0 0.0
        %5260 = vmatprep.subr.mxu0 0.0
        %5261 = vmatpush1.msra.mxu0 0.0
        %5262 = vmatprep.subr.mxu0 0.0
        %5263 = vmatpush1.msra.mxu0 0.0
        %5264 = vmatprep.subr.mxu0 0.0
        %5265 = vmatpush1.msra.mxu0 0.0
        %5266 = vmatprep.subr.mxu0 0.0
        %5267 = vmatpush1.msra.mxu0 0.0
        %5268 = vmatprep.subr.mxu0 0.0
        %5269 = vmatpush1.msra.mxu0 0.0
        %5270 = vmatprep.subr.mxu0 0.0
        %5271 = vmatpush1.msra.mxu0 0.0
        %5272 = vmatprep.subr.mxu0 0.0
        %5273 = vmatpush1.msra.mxu0 0.0
        %5274 = vmatprep.subr.mxu0 0.0
        %5275 = vmatpush1.msra.mxu0 0.0
        %5276 = vmatprep.subr.mxu0 0.0
        %5277 = vmatpush1.msra.mxu0 0.0
        %5278 = vmatprep.subr.mxu0 0.0
        %5279 = vmatpush1.msra.mxu0 0.0
        %5280 = vmatprep.mubr.f32.mxu0 0.0
        %5281 = vmatmul.mubr.f32.gmra.mrb[0].mxu0 %v5168
        %v5282 = vpop.f32.mrb[0].mxu0
        %v5283 = vadd.f32 0.0, %v5282
        %v5284 = vpop.f32.mrb[0].mxu0
        %5285 = vmatprep.mubr.f32.mxu0 0.0
        %5286 = vmatmul.mubr.f32.gmra.mrb[0].mxu0 %v5169
        %v5287 = vpop.f32.mrb[0].mxu0
        %v5288 = vadd.f32 0.0, %v5287
        %v5289 = vpop.f32.mrb[0].mxu0
        %5290 = vmatprep.mubr.f32.mxu0 0.0
        %5291 = vmatmul.mubr.f32.gmra.mrb[0].mxu0 %v5170
        %v5292 = vpop.f32.mrb[0].mxu0
        %v5293 = vadd.f32 0.0, %v5292
        %v5294 = vpop.f32.mrb[0].mxu0
        %5295 = vmatprep.mubr.f32.mxu0 0.0
        %5296 = vmatmul.mubr.f32.gmra.mrb[0].mxu0 %v5171
        %v5297 = vpop.f32.mrb[0].mxu0
        %v5298 = vadd.f32 0.0, %v5297
        %v5299 = vpop.f32.mrb[0].mxu0
        %5300 = vmatprep.mubr.f32.mxu0 0.0
        %5301 = vmatmul.mubr.f32.gmra.mrb[0].mxu0 %v5172
        %v5302 = vpop.f32.mrb[0].mxu0
        %v5303 = vadd.f32 0.0, %v5302
        %v5304 = vpop.f32.mrb[0].mxu0
        %5305 = vmatprep.mubr.f32.mxu0 0.0
        %5306 = vmatmul.mubr.f32.gmra.mrb[0].mxu0 %v5173
        %v5307 = vpop.f32.mrb[0].mxu0
        %v5308 = vadd.f32 0.0, %v5307
        %v5309 = vpop.f32.mrb[0].mxu0
        %5310 = vmatprep.mubr.f32.mxu0 0.0
        %5311 = vmatmul.mubr.f32.gmra.mrb[0].mxu0 %v5174
        %v5312 = vpop.f32.mrb[0].mxu0
        %v5313 = vadd.f32 0.0, %v5312
        %v5314 = vpop.f32.mrb[0].mxu0
        %5315 = vmatprep.mubr.f32.mxu0 0.0
        %5316 = vmatmul.mubr.f32.gmra.mrb[0].mxu0 %v5175
        %v5317 = vpop.f32.mrb[0].mxu0
        %v5318 = vadd.f32 0.0, %v5317
        %v5319 = vpop.f32.mrb[0].mxu0
        %5320 = vmatprep.mubr.f32.mxu0 0.0
        %5321 = vmatmul.mubr.f32.gmra.mrb[0].mxu0 %v5176
        %v5322 = vpop.f32.mrb[0].mxu0
        %v5323 = vadd.f32 0.0, %v5322
        %v5324 = vpop.f32.mrb[0].mxu0
        %5325 = vmatprep.mubr.f32.mxu0 0.0
        %5326 = vmatmul.mubr.f32.gmra.mrb[0].mxu0 %v5177
        %v5327 = vpop.f32.mrb[0].mxu0
        %v5328 = vadd.f32 0.0, %v5327
        %v5329 = vpop.f32.mrb[0].mxu0
        %5330 = vmatprep.mubr.f32.mxu0 0.0
        %5331 = vmatmul.mubr.f32.gmra.mrb[0].mxu0 %v5178
        %v5332 = vpop.f32.mrb[0].mxu0
        %v5333 = vadd.f32 0.0, %v5332
        %v5334 = vpop.f32.mrb[0].mxu0
        %5335 = vmatprep.mubr.f32.mxu0 0.0
        %5336 = vmatmul.mubr.f32.gmra.mrb[0].mxu0 %v5179
        %v5337 = vpop.f32.mrb[0].mxu0
        %v5338 = vadd.f32 0.0, %v5337
        %v5339 = vpop.f32.mrb[0].mxu0
        %5340 = vmatprep.mubr.f32.mxu0 0.0
        %5341 = vmatmul.mubr.f32.gmra.mrb[0].mxu0 %v5180
        %v5342 = vpop.f32.mrb[0].mxu0
        %v5343 = vadd.f32 0.0, %v5342
        %v5344 = vpop.f32.mrb[0].mxu0
        %5345 = vmatprep.mubr.f32.mxu0 0.0
        %5346 = vmatmul.mubr.f32.gmra.mrb[0].mxu0 %v5181
        %v5347 = vpop.f32.mrb[0].mxu0
        %v5348 = vadd.f32 0.0, %v5347
        %v5349 = vpop.f32.mrb[0].mxu0
        %5350 = vmatprep.mubr.f32.mxu0 0.0
        %5351 = vmatmul.mubr.f32.gmra.mrb[0].mxu0 %v5182
        %v5352 = vpop.f32.mrb[0].mxu0
        %v5353 = vadd.f32 0.0, %v5352
        %v5354 = vpop.f32.mrb[0].mxu0
        %5355 = vmatprep.mubr.f32.mxu0 0.0
        %5356 = vmatmul.mubr.f32.gmra.mrb[0].mxu0 %v5183
        %v5357 = vpop.f32.mrb[0].mxu0
        %v5358 = vadd.f32 0.0, %v5357
        %v5359 = vpop.f32.mrb[0].mxu0
        %5360 = vmatprep.mubr.f32.mxu0 0.0
        %5361 = vmatmul.mubr.f32.gmra.mrb[0].mxu0 %v5184
        %v5362 = vpop.f32.mrb[0].mxu0
        %v5363 = vadd.f32 0.0, %v5362
        %v5364 = vpop.f32.mrb[0].mxu0
        %5365 = vmatprep.mubr.f32.mxu0 0.0
        %5366 = vmatmul.mubr.f32.gmra.mrb[0].mxu0 %v5185
        %v5367 = vpop.f32.mrb[0].mxu0
        %v5368 = vadd.f32 0.0, %v5367
        %v5369 = vpop.f32.mrb[0].mxu0
        %5370 = vmatprep.mubr.f32.mxu0 0.0
        %5371 = vmatmul.mubr.f32.gmra.mrb[0].mxu0 %v5186
        %v5372 = vpop.f32.mrb[0].mxu0
        %v5373 = vadd.f32 0.0, %v5372
        %v5374 = vpop.f32.mrb[0].mxu0
        %5375 = vmatprep.mubr.f32.mxu0 0.0
        %5376 = vmatmul.mubr.f32.gmra.mrb[0].mxu0 %v5187
        %v5377 = vpop.f32.mrb[0].mxu0
        %v5378 = vadd.f32 0.0, %v5377
        %v5379 = vpop.f32.mrb[0].mxu0
        %5380 = vmatprep.mubr.f32.mxu0 0.0
        %5381 = vmatmul.mubr.f32.gmra.mrb[0].mxu0 %v5188
        %v5382 = vpop.f32.mrb[0].mxu0
        %v5383 = vadd.f32 0.0, %v5382
        %v5384 = vpop.f32.mrb[0].mxu0
        %5385 = vmatprep.mubr.f32.mxu0 0.0
        %5386 = vmatmul.mubr.f32.gmra.mrb[0].mxu0 %v5189
        %v5387 = vpop.f32.mrb[0].mxu0
        %v5388 = vadd.f32 0.0, %v5387
        %v5389 = vpop.f32.mrb[0].mxu0
        %5390 = vmatprep.mubr.f32.mxu0 0.0
        %5391 = vmatmul.mubr.f32.gmra.mrb[0].mxu0 %v5190
        %v5392 = vpop.f32.mrb[0].mxu0
        %v5393 = vadd.f32 0.0, %v5392
        %v5394 = vpop.f32.mrb[0].mxu0
        %5395 = vmatprep.mubr.f32.mxu0 0.0
        %5396 = vmatmul.mubr.f32.gmra.mrb[0].mxu0 %v5191
        %v5397 = vpop.f32.mrb[0].mxu0
        %v5398 = vadd.f32 0.0, %v5397
        %v5399 = vpop.f32.mrb[0].mxu0
        %5400 = vmatprep.mubr.f32.mxu0 0.0
        %5401 = vmatmul.mubr.f32.gmra.mrb[0].mxu0 %v5192
        %v5402 = vpop.f32.mrb[0].mxu0
        %v5403 = vadd.f32 0.0, %v5402
        %v5404 = vpop.f32.mrb[0].mxu0
        %5405 = vmatprep.mubr.f32.mxu0 0.0
        %5406 = vmatmul.mubr.f32.gmra.mrb[0].mxu0 %v5193
        %v5407 = vpop.f32.mrb[0].mxu0
        %v5408 = vadd.f32 0.0, %v5407
        %v5409 = vpop.f32.mrb[0].mxu0
        %5410 = vmatprep.mubr.f32.mxu0 0.0
        %5411 = vmatmul.mubr.f32.gmra.mrb[0].mxu0 %v5194
        %v5412 = vpop.f32.mrb[0].mxu0
        %v5413 = vadd.f32 0.0, %v5412
        %v5414 = vpop.f32.mrb[0].mxu0
        %5415 = vmatprep.mubr.f32.mxu0 0.0
        %5416 = vmatmul.mubr.f32.gmra.mrb[0].mxu0 %v5195
        %v5417 = vpop.f32.mrb[0].mxu0
        %v5418 = vadd.f32 0.0, %v5417
        %v5419 = vpop.f32.mrb[0].mxu0
        %5420 = vmatprep.mubr.f32.mxu0 0.0
        %5421 = vmatmul.mubr.f32.gmra.mrb[0].mxu0 %v5196
        %v5422 = vpop.f32.mrb[0].mxu0
        %v5423 = vadd.f32 0.0, %v5422
        %v5424 = vpop.f32.mrb[0].mxu0
        %5425 = vmatprep.mubr.f32.mxu0 0.0
        %5426 = vmatmul.mubr.f32.gmra.mrb[0].mxu0 %v5197
        %v5427 = vpop.f32.mrb[0].mxu0
        %v5428 = vadd.f32 0.0, %v5427
        %v5429 = vpop.f32.mrb[0].mxu0
        %5430 = vmatprep.mubr.f32.mxu0 0.0
        %5431 = vmatmul.mubr.f32.gmra.mrb[0].mxu0 %v5198
        %v5432 = vpop.f32.mrb[0].mxu0
        %v5433 = vadd.f32 0.0, %v5432
        %v5434 = vpop.f32.mrb[0].mxu0
        %5435 = vmatprep.mubr.f32.mxu0 0.0
        %5436 = vmatmul.mubr.f32.gmra.mrb[0].mxu0 %v5199
        %v5437 = vpop.f32.mrb[0].mxu0
        %v5438 = vadd.f32 0.0, %v5437
        %v5439 = vpop.f32.mrb[0].mxu0
        %5440 = vdwg.mxu0
        %v5441 = vadd.f32 %v5136, %v5283
        %v5442 = vadd.f32 %v5137, %v5288
        %v5443 = vadd.f32 %v5138, %v5293
        %v5444 = vadd.f32 %v5139, %v5298
        %v5445 = vadd.f32 %v5140, %v5303
        %v5446 = vadd.f32 %v5141, %v5308
        %v5447 = vadd.f32 %v5142, %v5313
        %v5448 = vadd.f32 %v5143, %v5318
        %v5449 = vadd.f32 %v5144, %v5323
        %v5450 = vadd.f32 %v5145, %v5328
        %v5451 = vadd.f32 %v5146, %v5333
        %v5452 = vadd.f32 %v5147, %v5338
        %v5453 = vadd.f32 %v5148, %v5343
        %v5454 = vadd.f32 %v5149, %v5348
        %v5455 = vadd.f32 %v5150, %v5353
        %v5456 = vadd.f32 %v5151, %v5358
        %v5457 = vadd.f32 %v5152, %v5363
        %v5458 = vadd.f32 %v5153, %v5368
        %v5459 = vadd.f32 %v5154, %v5373
        %v5460 = vadd.f32 %v5155, %v5378
        %v5461 = vadd.f32 %v5156, %v5383
        %v5462 = vadd.f32 %v5157, %v5388
        %v5463 = vadd.f32 %v5158, %v5393
        %v5464 = vadd.f32 %v5159, %v5398
        %v5465 = vadd.f32 %v5160, %v5403
        %v5466 = vadd.f32 %v5161, %v5408
        %v5467 = vadd.f32 %v5162, %v5413
        %v5468 = vadd.f32 %v5163, %v5418
        %v5469 = vadd.f32 %v5164, %v5423
        %v5470 = vadd.f32 %v5165, %v5428
        %v5471 = vadd.f32 %v5166, %v5433
        %v5472 = vadd.f32 %v5167, %v5438
        %v5473 = vld [vmem:[%s2306 + $0x1] sm:$0xff]
        %v5474 = vld [vmem:[%s2306 + $0x9] sm:$0xff]
        %v5475 = vld [vmem:[%s2306 + $0x19] sm:$0xff]
        %v5476 = vld [vmem:[%s2306 + $0x21] sm:$0xff]
        %v5477 = vld [vmem:[%s2306 + $0x31] sm:$0xff]
        %v5478 = vld [vmem:[%s2306 + $0x39] sm:$0xff]
        %v5479 = vld [vmem:[%s2306 + $0x49] sm:$0xff]
        %v5480 = vld [vmem:[%s2306 + $0x51] sm:$0xff]
        %v5481 = vld [vmem:[%s2306 + $0x61] sm:$0xff]
        %v5482 = vld [vmem:[%s2306 + $0x69] sm:$0xff]
        %v5483 = vld [vmem:[%s2306 + $0x79] sm:$0xff]
        %v5484 = vld [vmem:[%s2306 + $0x81] sm:$0xff]
        %v5485 = vld [vmem:[%s2306 + $0x91] sm:$0xff]
        %v5486 = vld [vmem:[%s2306 + $0x99] sm:$0xff]
        %v5487 = vld [vmem:[%s2306 + $0xa9] sm:$0xff]
        %v5488 = vld [vmem:[%s2306 + $0xb1] sm:$0xff]
        %v5489 = vld [vmem:[%s2306 + $0xc1] sm:$0xff]
        %v5490 = vld [vmem:[%s2306 + $0xc9] sm:$0xff]
        %v5491 = vld [vmem:[%s2306 + $0xd9] sm:$0xff]
        %v5492 = vld [vmem:[%s2306 + $0xe1] sm:$0xff]
        %v5493 = vld [vmem:[%s2306 + $0xf1] sm:$0xff]
        %v5494 = vld [vmem:[%s2306 + $0xf9] sm:$0xff]
        %v5495 = vld [vmem:[%s2306 + $0x109] sm:$0xff]
        %v5496 = vld [vmem:[%s2306 + $0x111] sm:$0xff]
        %v5497 = vld [vmem:[%s2306 + $0x121] sm:$0xff]
        %v5498 = vld [vmem:[%s2306 + $0x129] sm:$0xff]
        %v5499 = vld [vmem:[%s2306 + $0x139] sm:$0xff]
        %v5500 = vld [vmem:[%s2306 + $0x141] sm:$0xff]
        %v5501 = vld [vmem:[%s2306 + $0x151] sm:$0xff]
        %v5502 = vld [vmem:[%s2306 + $0x159] sm:$0xff]
        %v5503 = vld [vmem:[%s2306 + $0x169] sm:$0xff]
        %v5504 = vld [vmem:[%s2306 + $0x171] sm:$0xff]
        %v5505 = vld [vmem:[#allocation8 + $0x380] sm:$0xff]
        %v5506 = vld [vmem:[#allocation8 + $0x388] sm:$0xff]
        %v5507 = vld [vmem:[#allocation8 + $0x390] sm:$0xff]
        %v5508 = vld [vmem:[#allocation8 + $0x398] sm:$0xff]
        %v5509 = vld [vmem:[#allocation8 + $0x3a0] sm:$0xff]
        %v5510 = vld [vmem:[#allocation8 + $0x3a8] sm:$0xff]
        %v5511 = vld [vmem:[#allocation8 + $0x3b0] sm:$0xff]
        %v5512 = vld [vmem:[#allocation8 + $0x3b8] sm:$0xff]
        %v5513 = vld [vmem:[#allocation8 + $0x3c0] sm:$0xff]
        %v5514 = vld [vmem:[#allocation8 + $0x3c8] sm:$0xff]
        %v5515 = vld [vmem:[#allocation8 + $0x3d0] sm:$0xff]
        %v5516 = vld [vmem:[#allocation8 + $0x3d8] sm:$0xff]
        %v5517 = vld [vmem:[#allocation8 + $0x3e0] sm:$0xff]
        %v5518 = vld [vmem:[#allocation8 + $0x3e8] sm:$0xff]
        %v5519 = vld [vmem:[#allocation8 + $0x3f0] sm:$0xff]
        %v5520 = vld [vmem:[#allocation8 + $0x3f8] sm:$0xff]
        %5521 = vmatprep.subr.mxu0 0.0
        %5522 = vmatpush1.msra.mxu0 %v5505
        %5523 = vmatprep.subr.mxu0 0.0
        %5524 = vmatpush1.msra.mxu0 %v5506
        %5525 = vmatprep.subr.mxu0 0.0
        %5526 = vmatpush1.msra.mxu0 %v5507
        %5527 = vmatprep.subr.mxu0 0.0
        %5528 = vmatpush1.msra.mxu0 %v5508
        %5529 = vmatprep.subr.mxu0 0.0
        %5530 = vmatpush1.msra.mxu0 %v5509
        %5531 = vmatprep.subr.mxu0 0.0
        %5532 = vmatpush1.msra.mxu0 %v5510
        %5533 = vmatprep.subr.mxu0 0.0
        %5534 = vmatpush1.msra.mxu0 %v5511
        %5535 = vmatprep.subr.mxu0 0.0
        %5536 = vmatpush1.msra.mxu0 %v5512
        %5537 = vmatprep.subr.mxu0 0.0
        %5538 = vmatpush1.msra.mxu0 %v5513
        %5539 = vmatprep.subr.mxu0 0.0
        %5540 = vmatpush1.msra.mxu0 %v5514
        %5541 = vmatprep.subr.mxu0 0.0
        %5542 = vmatpush1.msra.mxu0 %v5515
        %5543 = vmatprep.subr.mxu0 0.0
        %5544 = vmatpush1.msra.mxu0 %v5516
        %5545 = vmatprep.subr.mxu0 0.0
        %5546 = vmatpush1.msra.mxu0 %v5517
        %5547 = vmatprep.subr.mxu0 0.0
        %5548 = vmatpush1.msra.mxu0 %v5518
        %5549 = vmatprep.subr.mxu0 0.0
        %5550 = vmatpush1.msra.mxu0 %v5519
        %5551 = vmatprep.subr.mxu0 0.0
        %5552 = vmatpush1.msra.mxu0 %v5520
        %5553 = vmatprep.subr.mxu0 0.0
        %5554 = vmatpush1.msra.mxu0 0.0
        %5555 = vmatprep.subr.mxu0 0.0
        %5556 = vmatpush1.msra.mxu0 0.0
        %5557 = vmatprep.subr.mxu0 0.0
        %5558 = vmatpush1.msra.mxu0 0.0
        %5559 = vmatprep.subr.mxu0 0.0
        %5560 = vmatpush1.msra.mxu0 0.0
        %5561 = vmatprep.subr.mxu0 0.0
        %5562 = vmatpush1.msra.mxu0 0.0
        %5563 = vmatprep.subr.mxu0 0.0
        %5564 = vmatpush1.msra.mxu0 0.0
        %5565 = vmatprep.subr.mxu0 0.0
        %5566 = vmatpush1.msra.mxu0 0.0
        %5567 = vmatprep.subr.mxu0 0.0
        %5568 = vmatpush1.msra.mxu0 0.0
        %5569 = vmatprep.subr.mxu0 0.0
        %5570 = vmatpush1.msra.mxu0 0.0
        %5571 = vmatprep.subr.mxu0 0.0
        %5572 = vmatpush1.msra.mxu0 0.0
        %5573 = vmatprep.subr.mxu0 0.0
        %5574 = vmatpush1.msra.mxu0 0.0
        %5575 = vmatprep.subr.mxu0 0.0
        %5576 = vmatpush1.msra.mxu0 0.0
        %5577 = vmatprep.subr.mxu0 0.0
        %5578 = vmatpush1.msra.mxu0 0.0
        %5579 = vmatprep.subr.mxu0 0.0
        %5580 = vmatpush1.msra.mxu0 0.0
        %5581 = vmatprep.subr.mxu0 0.0
        %5582 = vmatpush1.msra.mxu0 0.0
        %5583 = vmatprep.subr.mxu0 0.0
        %5584 = vmatpush1.msra.mxu0 0.0
        %5585 = vmatprep.mubr.f32.mxu0 0.0
        %5586 = vmatmul.mubr.f32.gmra.mrb[0].mxu0 %v5473
        %v5587 = vpop.f32.mrb[0].mxu0
        %v5588 = vadd.f32 0.0, %v5587
        %v5589 = vpop.f32.mrb[0].mxu0
        %5590 = vmatprep.mubr.f32.mxu0 0.0
        %5591 = vmatmul.mubr.f32.gmra.mrb[0].mxu0 %v5474
        %v5592 = vpop.f32.mrb[0].mxu0
        %v5593 = vadd.f32 0.0, %v5592
        %v5594 = vpop.f32.mrb[0].mxu0
        %5595 = vmatprep.mubr.f32.mxu0 0.0
        %5596 = vmatmul.mubr.f32.gmra.mrb[0].mxu0 %v5475
        %v5597 = vpop.f32.mrb[0].mxu0
        %v5598 = vadd.f32 0.0, %v5597
        %v5599 = vpop.f32.mrb[0].mxu0
        %5600 = vmatprep.mubr.f32.mxu0 0.0
        %5601 = vmatmul.mubr.f32.gmra.mrb[0].mxu0 %v5476
        %v5602 = vpop.f32.mrb[0].mxu0
        %v5603 = vadd.f32 0.0, %v5602
        %v5604 = vpop.f32.mrb[0].mxu0
        %5605 = vmatprep.mubr.f32.mxu0 0.0
        %5606 = vmatmul.mubr.f32.gmra.mrb[0].mxu0 %v5477
        %v5607 = vpop.f32.mrb[0].mxu0
        %v5608 = vadd.f32 0.0, %v5607
        %v5609 = vpop.f32.mrb[0].mxu0
        %5610 = vmatprep.mubr.f32.mxu0 0.0
        %5611 = vmatmul.mubr.f32.gmra.mrb[0].mxu0 %v5478
        %v5612 = vpop.f32.mrb[0].mxu0
        %v5613 = vadd.f32 0.0, %v5612
        %v5614 = vpop.f32.mrb[0].mxu0
        %5615 = vmatprep.mubr.f32.mxu0 0.0
        %5616 = vmatmul.mubr.f32.gmra.mrb[0].mxu0 %v5479
        %v5617 = vpop.f32.mrb[0].mxu0
        %v5618 = vadd.f32 0.0, %v5617
        %v5619 = vpop.f32.mrb[0].mxu0
        %5620 = vmatprep.mubr.f32.mxu0 0.0
        %5621 = vmatmul.mubr.f32.gmra.mrb[0].mxu0 %v5480
        %v5622 = vpop.f32.mrb[0].mxu0
        %v5623 = vadd.f32 0.0, %v5622
        %v5624 = vpop.f32.mrb[0].mxu0
        %5625 = vmatprep.mubr.f32.mxu0 0.0
        %5626 = vmatmul.mubr.f32.gmra.mrb[0].mxu0 %v5481
        %v5627 = vpop.f32.mrb[0].mxu0
        %v5628 = vadd.f32 0.0, %v5627
        %v5629 = vpop.f32.mrb[0].mxu0
        %5630 = vmatprep.mubr.f32.mxu0 0.0
        %5631 = vmatmul.mubr.f32.gmra.mrb[0].mxu0 %v5482
        %v5632 = vpop.f32.mrb[0].mxu0
        %v5633 = vadd.f32 0.0, %v5632
        %v5634 = vpop.f32.mrb[0].mxu0
        %5635 = vmatprep.mubr.f32.mxu0 0.0
        %5636 = vmatmul.mubr.f32.gmra.mrb[0].mxu0 %v5483
        %v5637 = vpop.f32.mrb[0].mxu0
        %v5638 = vadd.f32 0.0, %v5637
        %v5639 = vpop.f32.mrb[0].mxu0
        %5640 = vmatprep.mubr.f32.mxu0 0.0
        %5641 = vmatmul.mubr.f32.gmra.mrb[0].mxu0 %v5484
        %v5642 = vpop.f32.mrb[0].mxu0
        %v5643 = vadd.f32 0.0, %v5642
        %v5644 = vpop.f32.mrb[0].mxu0
        %5645 = vmatprep.mubr.f32.mxu0 0.0
        %5646 = vmatmul.mubr.f32.gmra.mrb[0].mxu0 %v5485
        %v5647 = vpop.f32.mrb[0].mxu0
        %v5648 = vadd.f32 0.0, %v5647
        %v5649 = vpop.f32.mrb[0].mxu0
        %5650 = vmatprep.mubr.f32.mxu0 0.0
        %5651 = vmatmul.mubr.f32.gmra.mrb[0].mxu0 %v5486
        %v5652 = vpop.f32.mrb[0].mxu0
        %v5653 = vadd.f32 0.0, %v5652
        %v5654 = vpop.f32.mrb[0].mxu0
        %5655 = vmatprep.mubr.f32.mxu0 0.0
        %5656 = vmatmul.mubr.f32.gmra.mrb[0].mxu0 %v5487
        %v5657 = vpop.f32.mrb[0].mxu0
        %v5658 = vadd.f32 0.0, %v5657
        %v5659 = vpop.f32.mrb[0].mxu0
        %5660 = vmatprep.mubr.f32.mxu0 0.0
        %5661 = vmatmul.mubr.f32.gmra.mrb[0].mxu0 %v5488
        %v5662 = vpop.f32.mrb[0].mxu0
        %v5663 = vadd.f32 0.0, %v5662
        %v5664 = vpop.f32.mrb[0].mxu0
        %5665 = vmatprep.mubr.f32.mxu0 0.0
        %5666 = vmatmul.mubr.f32.gmra.mrb[0].mxu0 %v5489
        %v5667 = vpop.f32.mrb[0].mxu0
        %v5668 = vadd.f32 0.0, %v5667
        %v5669 = vpop.f32.mrb[0].mxu0
        %5670 = vmatprep.mubr.f32.mxu0 0.0
        %5671 = vmatmul.mubr.f32.gmra.mrb[0].mxu0 %v5490
        %v5672 = vpop.f32.mrb[0].mxu0
        %v5673 = vadd.f32 0.0, %v5672
        %v5674 = vpop.f32.mrb[0].mxu0
        %5675 = vmatprep.mubr.f32.mxu0 0.0
        %5676 = vmatmul.mubr.f32.gmra.mrb[0].mxu0 %v5491
        %v5677 = vpop.f32.mrb[0].mxu0
        %v5678 = vadd.f32 0.0, %v5677
        %v5679 = vpop.f32.mrb[0].mxu0
        %5680 = vmatprep.mubr.f32.mxu0 0.0
        %5681 = vmatmul.mubr.f32.gmra.mrb[0].mxu0 %v5492
        %v5682 = vpop.f32.mrb[0].mxu0
        %v5683 = vadd.f32 0.0, %v5682
        %v5684 = vpop.f32.mrb[0].mxu0
        %5685 = vmatprep.mubr.f32.mxu0 0.0
        %5686 = vmatmul.mubr.f32.gmra.mrb[0].mxu0 %v5493
        %v5687 = vpop.f32.mrb[0].mxu0
        %v5688 = vadd.f32 0.0, %v5687
        %v5689 = vpop.f32.mrb[0].mxu0
        %5690 = vmatprep.mubr.f32.mxu0 0.0
        %5691 = vmatmul.mubr.f32.gmra.mrb[0].mxu0 %v5494
        %v5692 = vpop.f32.mrb[0].mxu0
        %v5693 = vadd.f32 0.0, %v5692
        %v5694 = vpop.f32.mrb[0].mxu0
        %5695 = vmatprep.mubr.f32.mxu0 0.0
        %5696 = vmatmul.mubr.f32.gmra.mrb[0].mxu0 %v5495
        %v5697 = vpop.f32.mrb[0].mxu0
        %v5698 = vadd.f32 0.0, %v5697
        %v5699 = vpop.f32.mrb[0].mxu0
        %5700 = vmatprep.mubr.f32.mxu0 0.0
        %5701 = vmatmul.mubr.f32.gmra.mrb[0].mxu0 %v5496
        %v5702 = vpop.f32.mrb[0].mxu0
        %v5703 = vadd.f32 0.0, %v5702
        %v5704 = vpop.f32.mrb[0].mxu0
        %5705 = vmatprep.mubr.f32.mxu0 0.0
        %5706 = vmatmul.mubr.f32.gmra.mrb[0].mxu0 %v5497
        %v5707 = vpop.f32.mrb[0].mxu0
        %v5708 = vadd.f32 0.0, %v5707
        %v5709 = vpop.f32.mrb[0].mxu0
        %5710 = vmatprep.mubr.f32.mxu0 0.0
        %5711 = vmatmul.mubr.f32.gmra.mrb[0].mxu0 %v5498
        %v5712 = vpop.f32.mrb[0].mxu0
        %v5713 = vadd.f32 0.0, %v5712
        %v5714 = vpop.f32.mrb[0].mxu0
        %5715 = vmatprep.mubr.f32.mxu0 0.0
        %5716 = vmatmul.mubr.f32.gmra.mrb[0].mxu0 %v5499
        %v5717 = vpop.f32.mrb[0].mxu0
        %v5718 = vadd.f32 0.0, %v5717
        %v5719 = vpop.f32.mrb[0].mxu0
        %5720 = vmatprep.mubr.f32.mxu0 0.0
        %5721 = vmatmul.mubr.f32.gmra.mrb[0].mxu0 %v5500
        %v5722 = vpop.f32.mrb[0].mxu0
        %v5723 = vadd.f32 0.0, %v5722
        %v5724 = vpop.f32.mrb[0].mxu0
        %5725 = vmatprep.mubr.f32.mxu0 0.0
        %5726 = vmatmul.mubr.f32.gmra.mrb[0].mxu0 %v5501
        %v5727 = vpop.f32.mrb[0].mxu0
        %v5728 = vadd.f32 0.0, %v5727
        %v5729 = vpop.f32.mrb[0].mxu0
        %5730 = vmatprep.mubr.f32.mxu0 0.0
        %5731 = vmatmul.mubr.f32.gmra.mrb[0].mxu0 %v5502
        %v5732 = vpop.f32.mrb[0].mxu0
        %v5733 = vadd.f32 0.0, %v5732
        %v5734 = vpop.f32.mrb[0].mxu0
        %5735 = vmatprep.mubr.f32.mxu0 0.0
        %5736 = vmatmul.mubr.f32.gmra.mrb[0].mxu0 %v5503
        %v5737 = vpop.f32.mrb[0].mxu0
        %v5738 = vadd.f32 0.0, %v5737
        %v5739 = vpop.f32.mrb[0].mxu0
        %5740 = vmatprep.mubr.f32.mxu0 0.0
        %5741 = vmatmul.mubr.f32.gmra.mrb[0].mxu0 %v5504
        %v5742 = vpop.f32.mrb[0].mxu0
        %v5743 = vadd.f32 0.0, %v5742
        %v5744 = vpop.f32.mrb[0].mxu0
        %5745 = vdwg.mxu0
        %v5746 = vadd.f32 %v5441, %v5588
        %v5747 = vadd.f32 %v5442, %v5593
        %v5748 = vadd.f32 %v5443, %v5598
        %v5749 = vadd.f32 %v5444, %v5603
        %v5750 = vadd.f32 %v5445, %v5608
        %v5751 = vadd.f32 %v5446, %v5613
        %v5752 = vadd.f32 %v5447, %v5618
        %v5753 = vadd.f32 %v5448, %v5623
        %v5754 = vadd.f32 %v5449, %v5628
        %v5755 = vadd.f32 %v5450, %v5633
        %v5756 = vadd.f32 %v5451, %v5638
        %v5757 = vadd.f32 %v5452, %v5643
        %v5758 = vadd.f32 %v5453, %v5648
        %v5759 = vadd.f32 %v5454, %v5653
        %v5760 = vadd.f32 %v5455, %v5658
        %v5761 = vadd.f32 %v5456, %v5663
        %v5762 = vadd.f32 %v5457, %v5668
        %v5763 = vadd.f32 %v5458, %v5673
        %v5764 = vadd.f32 %v5459, %v5678
        %v5765 = vadd.f32 %v5460, %v5683
        %v5766 = vadd.f32 %v5461, %v5688
        %v5767 = vadd.f32 %v5462, %v5693
        %v5768 = vadd.f32 %v5463, %v5698
        %v5769 = vadd.f32 %v5464, %v5703
        %v5770 = vadd.f32 %v5465, %v5708
        %v5771 = vadd.f32 %v5466, %v5713
        %v5772 = vadd.f32 %v5467, %v5718
        %v5773 = vadd.f32 %v5468, %v5723
        %v5774 = vadd.f32 %v5469, %v5728
        %v5775 = vadd.f32 %v5470, %v5733
        %v5776 = vadd.f32 %v5471, %v5738
        %v5777 = vadd.f32 %v5472, %v5743
        %v5778 = vld [vmem:[%s2306 + $0x2] sm:$0xff]
        %v5779 = vld [vmem:[%s2306 + $0xa] sm:$0xff]
        %v5780 = vld [vmem:[%s2306 + $0x1a] sm:$0xff]
        %v5781 = vld [vmem:[%s2306 + $0x22] sm:$0xff]
        %v5782 = vld [vmem:[%s2306 + $0x32] sm:$0xff]
        %v5783 = vld [vmem:[%s2306 + $0x3a] sm:$0xff]
        %v5784 = vld [vmem:[%s2306 + $0x4a] sm:$0xff]
        %v5785 = vld [vmem:[%s2306 + $0x52] sm:$0xff]
        %v5786 = vld [vmem:[%s2306 + $0x62] sm:$0xff]
        %v5787 = vld [vmem:[%s2306 + $0x6a] sm:$0xff]
        %v5788 = vld [vmem:[%s2306 + $0x7a] sm:$0xff]
        %v5789 = vld [vmem:[%s2306 + $0x82] sm:$0xff]
        %v5790 = vld [vmem:[%s2306 + $0x92] sm:$0xff]
        %v5791 = vld [vmem:[%s2306 + $0x9a] sm:$0xff]
        %v5792 = vld [vmem:[%s2306 + $0xaa] sm:$0xff]
        %v5793 = vld [vmem:[%s2306 + $0xb2] sm:$0xff]
        %v5794 = vld [vmem:[%s2306 + $0xc2] sm:$0xff]
        %v5795 = vld [vmem:[%s2306 + $0xca] sm:$0xff]
        %v5796 = vld [vmem:[%s2306 + $0xda] sm:$0xff]
        %v5797 = vld [vmem:[%s2306 + $0xe2] sm:$0xff]
        %v5798 = vld [vmem:[%s2306 + $0xf2] sm:$0xff]
        %v5799 = vld [vmem:[%s2306 + $0xfa] sm:$0xff]
        %v5800 = vld [vmem:[%s2306 + $0x10a] sm:$0xff]
        %v5801 = vld [vmem:[%s2306 + $0x112] sm:$0xff]
        %v5802 = vld [vmem:[%s2306 + $0x122] sm:$0xff]
        %v5803 = vld [vmem:[%s2306 + $0x12a] sm:$0xff]
        %v5804 = vld [vmem:[%s2306 + $0x13a] sm:$0xff]
        %v5805 = vld [vmem:[%s2306 + $0x142] sm:$0xff]
        %v5806 = vld [vmem:[%s2306 + $0x152] sm:$0xff]
        %v5807 = vld [vmem:[%s2306 + $0x15a] sm:$0xff]
        %v5808 = vld [vmem:[%s2306 + $0x16a] sm:$0xff]
        %v5809 = vld [vmem:[%s2306 + $0x172] sm:$0xff]
        %v5810 = vld [vmem:[#allocation8 + $0x400] sm:$0xff]
        %v5811 = vld [vmem:[#allocation8 + $0x408] sm:$0xff]
        %v5812 = vld [vmem:[#allocation8 + $0x410] sm:$0xff]
        %v5813 = vld [vmem:[#allocation8 + $0x418] sm:$0xff]
        %v5814 = vld [vmem:[#allocation8 + $0x420] sm:$0xff]
        %v5815 = vld [vmem:[#allocation8 + $0x428] sm:$0xff]
        %v5816 = vld [vmem:[#allocation8 + $0x430] sm:$0xff]
        %v5817 = vld [vmem:[#allocation8 + $0x438] sm:$0xff]
        %v5818 = vld [vmem:[#allocation8 + $0x440] sm:$0xff]
        %v5819 = vld [vmem:[#allocation8 + $0x448] sm:$0xff]
        %v5820 = vld [vmem:[#allocation8 + $0x450] sm:$0xff]
        %v5821 = vld [vmem:[#allocation8 + $0x458] sm:$0xff]
        %v5822 = vld [vmem:[#allocation8 + $0x460] sm:$0xff]
        %v5823 = vld [vmem:[#allocation8 + $0x468] sm:$0xff]
        %v5824 = vld [vmem:[#allocation8 + $0x470] sm:$0xff]
        %v5825 = vld [vmem:[#allocation8 + $0x478] sm:$0xff]
        %5826 = vmatprep.subr.mxu0 0.0
        %5827 = vmatpush1.msra.mxu0 %v5810
        %5828 = vmatprep.subr.mxu0 0.0
        %5829 = vmatpush1.msra.mxu0 %v5811
        %5830 = vmatprep.subr.mxu0 0.0
        %5831 = vmatpush1.msra.mxu0 %v5812
        %5832 = vmatprep.subr.mxu0 0.0
        %5833 = vmatpush1.msra.mxu0 %v5813
        %5834 = vmatprep.subr.mxu0 0.0
        %5835 = vmatpush1.msra.mxu0 %v5814
        %5836 = vmatprep.subr.mxu0 0.0
        %5837 = vmatpush1.msra.mxu0 %v5815
        %5838 = vmatprep.subr.mxu0 0.0
        %5839 = vmatpush1.msra.mxu0 %v5816
        %5840 = vmatprep.subr.mxu0 0.0
        %5841 = vmatpush1.msra.mxu0 %v5817
        %5842 = vmatprep.subr.mxu0 0.0
        %5843 = vmatpush1.msra.mxu0 %v5818
        %5844 = vmatprep.subr.mxu0 0.0
        %5845 = vmatpush1.msra.mxu0 %v5819
        %5846 = vmatprep.subr.mxu0 0.0
        %5847 = vmatpush1.msra.mxu0 %v5820
        %5848 = vmatprep.subr.mxu0 0.0
        %5849 = vmatpush1.msra.mxu0 %v5821
        %5850 = vmatprep.subr.mxu0 0.0
        %5851 = vmatpush1.msra.mxu0 %v5822
        %5852 = vmatprep.subr.mxu0 0.0
        %5853 = vmatpush1.msra.mxu0 %v5823
        %5854 = vmatprep.subr.mxu0 0.0
        %5855 = vmatpush1.msra.mxu0 %v5824
        %5856 = vmatprep.subr.mxu0 0.0
        %5857 = vmatpush1.msra.mxu0 %v5825
        %5858 = vmatprep.subr.mxu0 0.0
        %5859 = vmatpush1.msra.mxu0 0.0
        %5860 = vmatprep.subr.mxu0 0.0
        %5861 = vmatpush1.msra.mxu0 0.0
        %5862 = vmatprep.subr.mxu0 0.0
        %5863 = vmatpush1.msra.mxu0 0.0
        %5864 = vmatprep.subr.mxu0 0.0
        %5865 = vmatpush1.msra.mxu0 0.0
        %5866 = vmatprep.subr.mxu0 0.0
        %5867 = vmatpush1.msra.mxu0 0.0
        %5868 = vmatprep.subr.mxu0 0.0
        %5869 = vmatpush1.msra.mxu0 0.0
        %5870 = vmatprep.subr.mxu0 0.0
        %5871 = vmatpush1.msra.mxu0 0.0
        %5872 = vmatprep.subr.mxu0 0.0
        %5873 = vmatpush1.msra.mxu0 0.0
        %5874 = vmatprep.subr.mxu0 0.0
        %5875 = vmatpush1.msra.mxu0 0.0
        %5876 = vmatprep.subr.mxu0 0.0
        %5877 = vmatpush1.msra.mxu0 0.0
        %5878 = vmatprep.subr.mxu0 0.0
        %5879 = vmatpush1.msra.mxu0 0.0
        %5880 = vmatprep.subr.mxu0 0.0
        %5881 = vmatpush1.msra.mxu0 0.0
        %5882 = vmatprep.subr.mxu0 0.0
        %5883 = vmatpush1.msra.mxu0 0.0
        %5884 = vmatprep.subr.mxu0 0.0
        %5885 = vmatpush1.msra.mxu0 0.0
        %5886 = vmatprep.subr.mxu0 0.0
        %5887 = vmatpush1.msra.mxu0 0.0
        %5888 = vmatprep.subr.mxu0 0.0
        %5889 = vmatpush1.msra.mxu0 0.0
        %5890 = vmatprep.mubr.f32.mxu0 0.0
        %5891 = vmatmul.mubr.f32.gmra.mrb[0].mxu0 %v5778
        %v5892 = vpop.f32.mrb[0].mxu0
        %v5893 = vadd.f32 0.0, %v5892
        %v5894 = vpop.f32.mrb[0].mxu0
        %5895 = vmatprep.mubr.f32.mxu0 0.0
        %5896 = vmatmul.mubr.f32.gmra.mrb[0].mxu0 %v5779
        %v5897 = vpop.f32.mrb[0].mxu0
        %v5898 = vadd.f32 0.0, %v5897
        %v5899 = vpop.f32.mrb[0].mxu0
        %5900 = vmatprep.mubr.f32.mxu0 0.0
        %5901 = vmatmul.mubr.f32.gmra.mrb[0].mxu0 %v5780
        %v5902 = vpop.f32.mrb[0].mxu0
        %v5903 = vadd.f32 0.0, %v5902
        %v5904 = vpop.f32.mrb[0].mxu0
        %5905 = vmatprep.mubr.f32.mxu0 0.0
        %5906 = vmatmul.mubr.f32.gmra.mrb[0].mxu0 %v5781
        %v5907 = vpop.f32.mrb[0].mxu0
        %v5908 = vadd.f32 0.0, %v5907
        %v5909 = vpop.f32.mrb[0].mxu0
        %5910 = vmatprep.mubr.f32.mxu0 0.0
        %5911 = vmatmul.mubr.f32.gmra.mrb[0].mxu0 %v5782
        %v5912 = vpop.f32.mrb[0].mxu0
        %v5913 = vadd.f32 0.0, %v5912
        %v5914 = vpop.f32.mrb[0].mxu0
        %5915 = vmatprep.mubr.f32.mxu0 0.0
        %5916 = vmatmul.mubr.f32.gmra.mrb[0].mxu0 %v5783
        %v5917 = vpop.f32.mrb[0].mxu0
        %v5918 = vadd.f32 0.0, %v5917
        %v5919 = vpop.f32.mrb[0].mxu0
        %5920 = vmatprep.mubr.f32.mxu0 0.0
        %5921 = vmatmul.mubr.f32.gmra.mrb[0].mxu0 %v5784
        %v5922 = vpop.f32.mrb[0].mxu0
        %v5923 = vadd.f32 0.0, %v5922
        %v5924 = vpop.f32.mrb[0].mxu0
        %5925 = vmatprep.mubr.f32.mxu0 0.0
        %5926 = vmatmul.mubr.f32.gmra.mrb[0].mxu0 %v5785
        %v5927 = vpop.f32.mrb[0].mxu0
        %v5928 = vadd.f32 0.0, %v5927
        %v5929 = vpop.f32.mrb[0].mxu0
        %5930 = vmatprep.mubr.f32.mxu0 0.0
        %5931 = vmatmul.mubr.f32.gmra.mrb[0].mxu0 %v5786
        %v5932 = vpop.f32.mrb[0].mxu0
        %v5933 = vadd.f32 0.0, %v5932
        %v5934 = vpop.f32.mrb[0].mxu0
        %5935 = vmatprep.mubr.f32.mxu0 0.0
        %5936 = vmatmul.mubr.f32.gmra.mrb[0].mxu0 %v5787
        %v5937 = vpop.f32.mrb[0].mxu0
        %v5938 = vadd.f32 0.0, %v5937
        %v5939 = vpop.f32.mrb[0].mxu0
        %5940 = vmatprep.mubr.f32.mxu0 0.0
        %5941 = vmatmul.mubr.f32.gmra.mrb[0].mxu0 %v5788
        %v5942 = vpop.f32.mrb[0].mxu0
        %v5943 = vadd.f32 0.0, %v5942
        %v5944 = vpop.f32.mrb[0].mxu0
        %5945 = vmatprep.mubr.f32.mxu0 0.0
        %5946 = vmatmul.mubr.f32.gmra.mrb[0].mxu0 %v5789
        %v5947 = vpop.f32.mrb[0].mxu0
        %v5948 = vadd.f32 0.0, %v5947
        %v5949 = vpop.f32.mrb[0].mxu0
        %5950 = vmatprep.mubr.f32.mxu0 0.0
        %5951 = vmatmul.mubr.f32.gmra.mrb[0].mxu0 %v5790
        %v5952 = vpop.f32.mrb[0].mxu0
        %v5953 = vadd.f32 0.0, %v5952
        %v5954 = vpop.f32.mrb[0].mxu0
        %5955 = vmatprep.mubr.f32.mxu0 0.0
        %5956 = vmatmul.mubr.f32.gmra.mrb[0].mxu0 %v5791
        %v5957 = vpop.f32.mrb[0].mxu0
        %v5958 = vadd.f32 0.0, %v5957
        %v5959 = vpop.f32.mrb[0].mxu0
        %5960 = vmatprep.mubr.f32.mxu0 0.0
        %5961 = vmatmul.mubr.f32.gmra.mrb[0].mxu0 %v5792
        %v5962 = vpop.f32.mrb[0].mxu0
        %v5963 = vadd.f32 0.0, %v5962
        %v5964 = vpop.f32.mrb[0].mxu0
        %5965 = vmatprep.mubr.f32.mxu0 0.0
        %5966 = vmatmul.mubr.f32.gmra.mrb[0].mxu0 %v5793
        %v5967 = vpop.f32.mrb[0].mxu0
        %v5968 = vadd.f32 0.0, %v5967
        %v5969 = vpop.f32.mrb[0].mxu0
        %5970 = vmatprep.mubr.f32.mxu0 0.0
        %5971 = vmatmul.mubr.f32.gmra.mrb[0].mxu0 %v5794
        %v5972 = vpop.f32.mrb[0].mxu0
        %v5973 = vadd.f32 0.0, %v5972
        %v5974 = vpop.f32.mrb[0].mxu0
        %5975 = vmatprep.mubr.f32.mxu0 0.0
        %5976 = vmatmul.mubr.f32.gmra.mrb[0].mxu0 %v5795
        %v5977 = vpop.f32.mrb[0].mxu0
        %v5978 = vadd.f32 0.0, %v5977
        %v5979 = vpop.f32.mrb[0].mxu0
        %5980 = vmatprep.mubr.f32.mxu0 0.0
        %5981 = vmatmul.mubr.f32.gmra.mrb[0].mxu0 %v5796
        %v5982 = vpop.f32.mrb[0].mxu0
        %v5983 = vadd.f32 0.0, %v5982
        %v5984 = vpop.f32.mrb[0].mxu0
        %5985 = vmatprep.mubr.f32.mxu0 0.0
        %5986 = vmatmul.mubr.f32.gmra.mrb[0].mxu0 %v5797
        %v5987 = vpop.f32.mrb[0].mxu0
        %v5988 = vadd.f32 0.0, %v5987
        %v5989 = vpop.f32.mrb[0].mxu0
        %5990 = vmatprep.mubr.f32.mxu0 0.0
        %5991 = vmatmul.mubr.f32.gmra.mrb[0].mxu0 %v5798
        %v5992 = vpop.f32.mrb[0].mxu0
        %v5993 = vadd.f32 0.0, %v5992
        %v5994 = vpop.f32.mrb[0].mxu0
        %5995 = vmatprep.mubr.f32.mxu0 0.0
        %5996 = vmatmul.mubr.f32.gmra.mrb[0].mxu0 %v5799
        %v5997 = vpop.f32.mrb[0].mxu0
        %v5998 = vadd.f32 0.0, %v5997
        %v5999 = vpop.f32.mrb[0].mxu0
        %6000 = vmatprep.mubr.f32.mxu0 0.0
        %6001 = vmatmul.mubr.f32.gmra.mrb[0].mxu0 %v5800
        %v6002 = vpop.f32.mrb[0].mxu0
        %v6003 = vadd.f32 0.0, %v6002
        %v6004 = vpop.f32.mrb[0].mxu0
        %6005 = vmatprep.mubr.f32.mxu0 0.0
        %6006 = vmatmul.mubr.f32.gmra.mrb[0].mxu0 %v5801
        %v6007 = vpop.f32.mrb[0].mxu0
        %v6008 = vadd.f32 0.0, %v6007
        %v6009 = vpop.f32.mrb[0].mxu0
        %6010 = vmatprep.mubr.f32.mxu0 0.0
        %6011 = vmatmul.mubr.f32.gmra.mrb[0].mxu0 %v5802
        %v6012 = vpop.f32.mrb[0].mxu0
        %v6013 = vadd.f32 0.0, %v6012
        %v6014 = vpop.f32.mrb[0].mxu0
        %6015 = vmatprep.mubr.f32.mxu0 0.0
        %6016 = vmatmul.mubr.f32.gmra.mrb[0].mxu0 %v5803
        %v6017 = vpop.f32.mrb[0].mxu0
        %v6018 = vadd.f32 0.0, %v6017
        %v6019 = vpop.f32.mrb[0].mxu0
        %6020 = vmatprep.mubr.f32.mxu0 0.0
        %6021 = vmatmul.mubr.f32.gmra.mrb[0].mxu0 %v5804
        %v6022 = vpop.f32.mrb[0].mxu0
        %v6023 = vadd.f32 0.0, %v6022
        %v6024 = vpop.f32.mrb[0].mxu0
        %6025 = vmatprep.mubr.f32.mxu0 0.0
        %6026 = vmatmul.mubr.f32.gmra.mrb[0].mxu0 %v5805
        %v6027 = vpop.f32.mrb[0].mxu0
        %v6028 = vadd.f32 0.0, %v6027
        %v6029 = vpop.f32.mrb[0].mxu0
        %6030 = vmatprep.mubr.f32.mxu0 0.0
        %6031 = vmatmul.mubr.f32.gmra.mrb[0].mxu0 %v5806
        %v6032 = vpop.f32.mrb[0].mxu0
        %v6033 = vadd.f32 0.0, %v6032
        %v6034 = vpop.f32.mrb[0].mxu0
        %6035 = vmatprep.mubr.f32.mxu0 0.0
        %6036 = vmatmul.mubr.f32.gmra.mrb[0].mxu0 %v5807
        %v6037 = vpop.f32.mrb[0].mxu0
        %v6038 = vadd.f32 0.0, %v6037
        %v6039 = vpop.f32.mrb[0].mxu0
        %6040 = vmatprep.mubr.f32.mxu0 0.0
        %6041 = vmatmul.mubr.f32.gmra.mrb[0].mxu0 %v5808
        %v6042 = vpop.f32.mrb[0].mxu0
        %v6043 = vadd.f32 0.0, %v6042
        %v6044 = vpop.f32.mrb[0].mxu0
        %6045 = vmatprep.mubr.f32.mxu0 0.0
        %6046 = vmatmul.mubr.f32.gmra.mrb[0].mxu0 %v5809
        %v6047 = vpop.f32.mrb[0].mxu0
        %v6048 = vadd.f32 0.0, %v6047
        %v6049 = vpop.f32.mrb[0].mxu0
        %6050 = vdwg.mxu0
        %v6051 = vadd.f32 %v5746, %v5893
        %v6052 = vadd.f32 %v5747, %v5898
        %v6053 = vadd.f32 %v5748, %v5903
        %v6054 = vadd.f32 %v5749, %v5908
        %v6055 = vadd.f32 %v5750, %v5913
        %v6056 = vadd.f32 %v5751, %v5918
        %v6057 = vadd.f32 %v5752, %v5923
        %v6058 = vadd.f32 %v5753, %v5928
        %v6059 = vadd.f32 %v5754, %v5933
        %v6060 = vadd.f32 %v5755, %v5938
        %v6061 = vadd.f32 %v5756, %v5943
        %v6062 = vadd.f32 %v5757, %v5948
        %v6063 = vadd.f32 %v5758, %v5953
        %v6064 = vadd.f32 %v5759, %v5958
        %v6065 = vadd.f32 %v5760, %v5963
        %v6066 = vadd.f32 %v5761, %v5968
        %v6067 = vadd.f32 %v5762, %v5973
        %v6068 = vadd.f32 %v5763, %v5978
        %v6069 = vadd.f32 %v5764, %v5983
        %v6070 = vadd.f32 %v5765, %v5988
        %v6071 = vadd.f32 %v5766, %v5993
        %v6072 = vadd.f32 %v5767, %v5998
        %v6073 = vadd.f32 %v5768, %v6003
        %v6074 = vadd.f32 %v5769, %v6008
        %v6075 = vadd.f32 %v5770, %v6013
        %v6076 = vadd.f32 %v5771, %v6018
        %v6077 = vadd.f32 %v5772, %v6023
        %v6078 = vadd.f32 %v5773, %v6028
        %v6079 = vadd.f32 %v5774, %v6033
        %v6080 = vadd.f32 %v5775, %v6038
        %v6081 = vadd.f32 %v5776, %v6043
        %v6082 = vadd.f32 %v5777, %v6048
        %v6083 = vld [vmem:[%s287] sm:$0xff]
        %v6084 = vld [vmem:[%s287 + $0x8] sm:$0xff]
        %v6085 = vld [vmem:[%s287 + $0x10] sm:$0xff]
        %v6086 = vld [vmem:[%s287 + $0x18] sm:$0xff]
        %v6087 = vld [vmem:[%s287 + $0x20] sm:$0xff]
        %v6088 = vld [vmem:[%s287 + $0x28] sm:$0xff]
        %v6089 = vld [vmem:[%s287 + $0x30] sm:$0xff]
        %v6090 = vld [vmem:[%s287 + $0x38] sm:$0xff]
        %v6091 = vld [vmem:[%s287 + $0x40] sm:$0xff]
        %v6092 = vld [vmem:[%s287 + $0x48] sm:$0xff]
        %v6093 = vld [vmem:[%s287 + $0x50] sm:$0xff]
        %v6094 = vld [vmem:[%s287 + $0x58] sm:$0xff]
        %v6095 = vld [vmem:[%s287 + $0x60] sm:$0xff]
        %v6096 = vld [vmem:[%s287 + $0x68] sm:$0xff]
        %v6097 = vld [vmem:[%s287 + $0x70] sm:$0xff]
        %v6098 = vld [vmem:[%s287 + $0x78] sm:$0xff]
        %v6099 = vld [vmem:[%s287 + $0x80] sm:$0xff]
        %v6100 = vld [vmem:[%s287 + $0x88] sm:$0xff]
        %v6101 = vld [vmem:[%s287 + $0x90] sm:$0xff]
        %v6102 = vld [vmem:[%s287 + $0x98] sm:$0xff]
        %v6103 = vld [vmem:[%s287 + $0xa0] sm:$0xff]
        %v6104 = vld [vmem:[%s287 + $0xa8] sm:$0xff]
        %v6105 = vld [vmem:[%s287 + $0xb0] sm:$0xff]
        %v6106 = vld [vmem:[%s287 + $0xb8] sm:$0xff]
        %v6107 = vld [vmem:[%s287 + $0xc0] sm:$0xff]
        %v6108 = vld [vmem:[%s287 + $0xc8] sm:$0xff]
        %v6109 = vld [vmem:[%s287 + $0xd0] sm:$0xff]
        %v6110 = vld [vmem:[%s287 + $0xd8] sm:$0xff]
        %v6111 = vld [vmem:[%s287 + $0xe0] sm:$0xff]
        %v6112 = vld [vmem:[%s287 + $0xe8] sm:$0xff]
        %v6113 = vld [vmem:[%s287 + $0xf0] sm:$0xff]
        %v6114 = vld [vmem:[%s287 + $0xf8] sm:$0xff]
        %v6115 = vadd.f32 %v6051, %v6083
        %v6116 = vadd.f32 %v6052, %v6084
        %v6117 = vadd.f32 %v6053, %v6085
        %v6118 = vadd.f32 %v6054, %v6086
        %v6119 = vadd.f32 %v6055, %v6087
        %v6120 = vadd.f32 %v6056, %v6088
        %v6121 = vadd.f32 %v6057, %v6089
        %v6122 = vadd.f32 %v6058, %v6090
        %v6123 = vadd.f32 %v6059, %v6091
        %v6124 = vadd.f32 %v6060, %v6092
        %v6125 = vadd.f32 %v6061, %v6093
        %v6126 = vadd.f32 %v6062, %v6094
        %v6127 = vadd.f32 %v6063, %v6095
        %v6128 = vadd.f32 %v6064, %v6096
        %v6129 = vadd.f32 %v6065, %v6097
        %v6130 = vadd.f32 %v6066, %v6098
        %v6131 = vadd.f32 %v6067, %v6099
        %v6132 = vadd.f32 %v6068, %v6100
        %v6133 = vadd.f32 %v6069, %v6101
        %v6134 = vadd.f32 %v6070, %v6102
        %v6135 = vadd.f32 %v6071, %v6103
        %v6136 = vadd.f32 %v6072, %v6104
        %v6137 = vadd.f32 %v6073, %v6105
        %v6138 = vadd.f32 %v6074, %v6106
        %v6139 = vadd.f32 %v6075, %v6107
        %v6140 = vadd.f32 %v6076, %v6108
        %v6141 = vadd.f32 %v6077, %v6109
        %v6142 = vadd.f32 %v6078, %v6110
        %v6143 = vadd.f32 %v6079, %v6111
        %v6144 = vadd.f32 %v6080, %v6112
        %v6145 = vadd.f32 %v6081, %v6113
        %v6146 = vadd.f32 %v6082, %v6114
        %6147 = vst [vmem:[%s325] sm:$0xff] %v6115
        %6148 = vst [vmem:[%s325 + $0x8] sm:$0xff] %v6116
        %6149 = vst [vmem:[%s325 + $0x10] sm:$0xff] %v6117
        %6150 = vst [vmem:[%s325 + $0x18] sm:$0xff] %v6118
        %6151 = vst [vmem:[%s325 + $0x20] sm:$0xff] %v6119
        %6152 = vst [vmem:[%s325 + $0x28] sm:$0xff] %v6120
        %6153 = vst [vmem:[%s325 + $0x30] sm:$0xff] %v6121
        %6154 = vst [vmem:[%s325 + $0x38] sm:$0xff] %v6122
        %6155 = vst [vmem:[%s325 + $0x40] sm:$0xff] %v6123
        %6156 = vst [vmem:[%s325 + $0x48] sm:$0xff] %v6124
        %6157 = vst [vmem:[%s325 + $0x50] sm:$0xff] %v6125
        %6158 = vst [vmem:[%s325 + $0x58] sm:$0xff] %v6126
        %6159 = vst [vmem:[%s325 + $0x60] sm:$0xff] %v6127
        %6160 = vst [vmem:[%s325 + $0x68] sm:$0xff] %v6128
        %6161 = vst [vmem:[%s325 + $0x70] sm:$0xff] %v6129
        %6162 = vst [vmem:[%s325 + $0x78] sm:$0xff] %v6130
        %6163 = vst [vmem:[%s325 + $0x80] sm:$0xff] %v6131
        %6164 = vst [vmem:[%s325 + $0x88] sm:$0xff] %v6132
        %6165 = vst [vmem:[%s325 + $0x90] sm:$0xff] %v6133
        %6166 = vst [vmem:[%s325 + $0x98] sm:$0xff] %v6134
        %6167 = vst [vmem:[%s325 + $0xa0] sm:$0xff] %v6135
        %6168 = vst [vmem:[%s325 + $0xa8] sm:$0xff] %v6136
        %6169 = vst [vmem:[%s325 + $0xb0] sm:$0xff] %v6137
        %6170 = vst [vmem:[%s325 + $0xb8] sm:$0xff] %v6138
        %6171 = vst [vmem:[%s325 + $0xc0] sm:$0xff] %v6139
        %6172 = vst [vmem:[%s325 + $0xc8] sm:$0xff] %v6140
        %6173 = vst [vmem:[%s325 + $0xd0] sm:$0xff] %v6141
        %6174 = vst [vmem:[%s325 + $0xd8] sm:$0xff] %v6142
        %6175 = vst [vmem:[%s325 + $0xe0] sm:$0xff] %v6143
        %6176 = vst [vmem:[%s325 + $0xe8] sm:$0xff] %v6144
        %6177 = vst [vmem:[%s325 + $0xf0] sm:$0xff] %v6145
        %6178 = vst [vmem:[%s325 + $0xf8] sm:$0xff] %v6146
        %s6179 = sand.u32 %s185, 1
        %s6180 = scalar_lea.sflag [#allocation5], %s6179
        %s6181 = sand.u32 %s185, 1
        %s6182 = smul.addr %s6181, 256
        %s6183 = scalar_lea.vmem [#allocation9], %s6182
        // Predicated region
        $region61: #{tpu_custom_call.1} parent=47 // pred_check
          %p6184 = pneg %p195
        $region62: #{tpu_custom_call.1} parent=47 // pred_check_branch
          %6186 = sbr.rel (%p6184) target = $region64
        $region63: #{tpu_custom_call.1} parent=47 // pred_region
          %s6188 = ssub.s32 4096, 4096
          %6189 = vsyncadd %s6180, %s6188
          %s6190 = smul.addr %s25, 32
          %s6191 = smul.addr %s6190, 128
          %s6192 = scalar_lea.hbm %s7, %s6191
          %s6193 = sshll.u32 %s6183, 4
          %s6194 = int_to_ptr.vmem [resolvable:$true] %s6193
          %6199 = dma.vmem_to_hbm [thread:$0]  %s6194, 4096, %s6192, %s6180, 128, 128, 8
        $region64: #{tpu_custom_call.1} parent=47 // pred_fallthru
          _
      $region48: #{tpu_custom_call.1} parent=5 // pred_fallthru
        _
      %p6200 = scmp.le.s32.totalorder 2, %s20
      // Predicated region
      $region65: #{tpu_custom_call.1} parent=5 // pred_check
        %p6201 = pneg %p6200
      $region66: #{tpu_custom_call.1} parent=5 // pred_check_branch
        %6203 = sbr.rel (%p6201) target = $region68
      $region67: #{tpu_custom_call.1} parent=5 // pred_region
        %s6204 = ssub.s32 %s20, 2
        // Predicated region
        $region69: #{tpu_custom_call.1} parent=67 // pred_check
          %p6205 = pneg %p201
        $region70: #{tpu_custom_call.1} parent=67 // pred_check_branch
          %6207 = sbr.rel (%p6205) target = $region72
        $region71: #{tpu_custom_call.1} parent=67 // pred_region
          %s6208 = sand.u32 %s186, 1
          %s6209 = scalar_lea.sflag [#allocation5], %s6208
          %s6210 = sand.u32 %s186, 1
          %s6211 = smul.addr %s6210, 256
          %s6212 = scalar_lea.vmem [#allocation9], %s6211
          %6213 = dma.done %s6209, 4096
        $region72: #{tpu_custom_call.1} parent=67 // pred_fallthru
          _
      $region68: #{tpu_custom_call.1} parent=5 // pred_fallthru
        _
    $region6: #{tpu_custom_call.1} parent=1 // loop_footer
      %s24 = sadd.s32 1, %s20
    $region7: #{tpu_custom_call.1} parent=1 // loop_footer_branch
      %19 = sbr.rel target = $region3
    $region8: #{tpu_custom_call.1} parent=1 // loop_exit
      _
    %6214 = vsyncpa [#allocation4], 1
    %s6215 = scalar_lea.sflag [#allocation4], 1
    %6216 = vsyncpa %s6215, 1
    %6217 = vsyncpa [#allocation7], 1
    %6218 = vsyncpa [#allocation5], 1
    %s6219 = scalar_lea.sflag [#allocation5], 1
    %6220 = vsyncpa %s6219, 1

</llo_original>
